<compile_context>
chip_gen: v7x
topology: tpu7x:2x2x1
jax: 0.10.0
libtpu: 0.0.40
codegen_flags: <defaults>
</compile_context>

<pallas_src>
from collections import namedtuple
from functools import partial

import jax
import jax.numpy as jnp
from jax.experimental import pallas as pl
from jax.experimental.pallas import tpu as pltpu


# ----------------------------------------------------------------------------- tiling / budgets

_TM_TARGET = 512   # rows per tile (memory-roofline knee; sweep 256/512/1024 at real scale)
_GRAN = 16         # sublane granularity (16 keeps bf16 blocks natively packed)


def _select_budgets():
    """Generation-aware (row-dependent VMEM block budget, scoped-VMEM limit)."""
    try:
        vmem = int(pltpu.get_tpu_info().vmem_capacity_bytes)
    except Exception:
        vmem = 64 * 1024 * 1024
    if vmem >= 100 * 1024 * 1024:                    # v5e / v6e: 128 MiB physical VMEM
        return 24 * 1024 * 1024, 64 * 1024 * 1024
    return 14 * 1024 * 1024, 44 * 1024 * 1024        # v7x: 64 MiB physical VMEM


_ROW_BUDGET, _VMEM_LIMIT = _select_budgets()


def _round_up(x, m):
    return (x + m - 1) // m * m


def _pick_tile(M, row_bytes, fixed_bytes=0):
    """Pick a row tile TM (multiple of 16) and padded row count Mp.

    Preference: (a) TM divides M exactly (no pad / out[:M] HBM round trip),
                (b) >= 2 grid iterations so both v7x TensorCores are fed,
                (c) as large as the per-generation VMEM budget allows (<= _TM_TARGET).
    """
    budget = max(_ROW_BUDGET - fixed_bytes, 1 << 20)
    cap = max(_GRAN, (budget // max(row_bytes, 1)) // _GRAN * _GRAN)
    target = max(_GRAN, min(_TM_TARGET, cap))
    if M >= _GRAN and M % _GRAN == 0:
        divs = [d for d in range(_GRAN, min(target, M) + 1, _GRAN) if M % d == 0]
        if divs:
            two = [d for d in divs if M // d >= 2]
            return (max(two) if two else max(divs)), M
    Mp = _round_up(max(M, 1), _GRAN)
    tm = min(target, Mp)
    if Mp // tm < 2 and Mp >= 2 * _GRAN:
        tm = max(_GRAN, _round_up((Mp + 1) // 2, _GRAN))
    Mp = _round_up(Mp, tm)
    return tm, Mp


def _pad_rows(a, Mp, axis, value=0.0):
    M = a.shape[axis]
    if Mp == M:
        return a
    pad = [(0, 0)] * a.ndim
    pad[axis] = (0, Mp - M)
    return jnp.pad(a, pad, constant_values=value)


# ----------------------------------------------------------------------------- patch extraction

def extract_patches(x, k, stride, pad, dil=1):
    """x: (N,H,W,C) bf16 -> ((N*Ho*Wo, k*k*C), Ho, Wo).

    Tap-major / channel-minor im2col so the whole conv is ONE contraction over K = k*k*C
    (fills the MXU instead of per-tap dots).  The interleave is done wrapper-side, never
    inside the kernel (no cross-tile transpose in VMEM).
    """
    N, H, W, C = x.shape
    if k == 1 and stride == 1 and pad == 0:
        return x.reshape(N * H * W, C), H, W
    xp = jnp.pad(x, ((0, 0), (pad, pad), (pad, pad), (0, 0)))
    Ho = (H + 2 * pad - dil * (k - 1) - 1) // stride + 1
    Wo = (W + 2 * pad - dil * (k - 1) - 1) // stride + 1
    taps = []
    for i in range(k):
        for j in range(k):
            taps.append(xp[:, i * dil: i * dil + (Ho - 1) * stride + 1: stride,
                              j * dil: j * dil + (Wo - 1) * stride + 1: stride, :])
    return jnp.concatenate(taps, axis=-1).reshape(N * Ho * Wo, k * k * C), Ho, Wo


def extract_patch_planes(x, k, stride, pad, pad_value=0.0):
    """Pool-only layout: x (N,H,W,C) -> ((k*k, N*Ho*Wo, C), Ho, Wo); tap axis leading."""
    N, H, W, C = x.shape
    xp = jnp.pad(x, ((0, 0), (pad, pad), (pad, pad), (0, 0)), constant_values=pad_value)
    Ho = (H + 2 * pad - k) // stride + 1
    Wo = (W + 2 * pad - k) // stride + 1
    planes = []
    for i in range(k):
        for j in range(k):
            planes.append(xp[:, i: i + (Ho - 1) * stride + 1: stride,
                              j: j + (Wo - 1) * stride + 1: stride, :])
    return jnp.stack(planes, axis=0).reshape(k * k, N * Ho * Wo, C), Ho, Wo


def _avg_pool_rcounts(H, W, k, s, pad):
    """Reciprocal of valid element counts (count_include_pad=False), shape (Ho, Wo)."""
    def line(L):
        n_out = (L + 2 * pad - k) // s + 1
        start = jnp.arange(n_out) * s - pad
        lo = jnp.maximum(start, 0)
        hi = jnp.minimum(start + k - 1, L - 1)
        return (hi - lo + 1).astype(jnp.float32)
    ch, cw = line(H), line(W)
    return 1.0 / (ch[:, None] * cw[None, :])


# ----------------------------------------------------------------------------- Pallas kernels

def _matmul_bias_kernel(x_ref, w_ref, b_ref, o_ref):
    # x: (TM, K) bf16 | w: (K, Cout) bf16 (BN scale folded) | b: (1, Cout) f32 | o: (TM, Cout) bf16
    acc = jnp.dot(x_ref[...], w_ref[...], preferred_element_type=jnp.float32)
    o_ref[...] = (acc + b_ref[...]).astype(o_ref.dtype)


def pallas_matmul_bias(x, w, b):
    """conv-as-im2col matmul + folded-BN bias; one MXU dot per row tile."""
    M, K = x.shape
    Cout = w.shape[-1]
    row_bytes = 2 * K * 2 + 2 * Cout * 2               # double-buffered bf16 in/out blocks
    fixed = 2 * K * Cout * 2 + 2 * Cout * 4            # resident weight + bias
    TM, Mp = _pick_tile(M, row_bytes, fixed)
    xp = _pad_rows(x, Mp, axis=0)
    out = pl.pallas_call(
        _matmul_bias_kernel,
        out_shape=jax.ShapeDtypeStruct((Mp, Cout), jnp.bfloat16),
        grid_spec=pltpu.PrefetchScalarGridSpec(
            num_scalar_prefetch=0,
            grid=(Mp // TM,),
            in_specs=[
                pl.BlockSpec((TM, K), lambda i: (i, 0)),
                pl.BlockSpec((K, Cout), lambda i: (0, 0)),
                pl.BlockSpec((1, Cout), lambda i: (0, 0)),
            ],
            out_specs=pl.BlockSpec((TM, Cout), lambda i: (i, 0)),
        ),
        compiler_params=pltpu.CompilerParams(
            dimension_semantics=("parallel",), vmem_limit_bytes=_VMEM_LIMIT),
    )(xp, w, b.reshape(1, Cout).astype(jnp.float32))
    return out if Mp == M else out[:M]


def _fr_kernel(x_ref, w_ref, b_ref, o_ref):
    acc = jnp.dot(x_ref[0], w_ref[0], preferred_element_type=jnp.float32)
    o_ref[0] = (acc + b_ref[0]).astype(o_ref.dtype)


def pallas_factorized_reduce(x1, x2, w12, b12):
    """Two 1x1(stride2)-conv branches as one pallas_call (leading grid axis of 2)."""
    M, Cin = x1.shape
    half = w12.shape[-1]
    xs = jnp.stack([x1, x2], axis=0)                   # (2, M, Cin) bf16
    row_bytes = 2 * Cin * 2 + 2 * half * 2
    fixed = 2 * 2 * Cin * half * 2
    TM, Mp = _pick_tile(M, row_bytes, fixed)
    xs = _pad_rows(xs, Mp, axis=1)
    out = pl.pallas_call(
        _fr_kernel,
        out_shape=jax.ShapeDtypeStruct((2, Mp, half), jnp.bfloat16),
        grid_spec=pltpu.PrefetchScalarGridSpec(
            num_scalar_prefetch=0,
            grid=(2, Mp // TM),
            in_specs=[
                pl.BlockSpec((1, TM, Cin), lambda b, i: (b, i, 0)),
                pl.BlockSpec((1, Cin, half), lambda b, i: (b, 0, 0)),
                pl.BlockSpec((1, 1, half), lambda b, i: (b, 0, 0)),
            ],
            out_specs=pl.BlockSpec((1, TM, half), lambda b, i: (b, i, 0)),
        ),
        compiler_params=pltpu.CompilerParams(
            dimension_semantics=("parallel", "parallel"), vmem_limit_bytes=_VMEM_LIMIT),
    )(xs, w12, b12.astype(jnp.float32))
    o = out if Mp == M else out[:, :M]
    return jnp.concatenate([o[0], o[1]], axis=-1)      # (M, 2*half)


def _pool_kernel(*refs, kk, mode):
    if mode == "avg":
        x_ref, rc_ref, s_ref, b_ref, o_ref = refs
        acc = x_ref[0].astype(jnp.float32)
        for t in range(1, kk):
            acc = acc + x_ref[t].astype(jnp.float32)
        acc = acc * rc_ref[...]          # reciprocal valid-counts precomputed host-side
    else:
        x_ref, s_ref, b_ref, o_ref = refs
        acc = x_ref[0]
        for t in range(1, kk):
            acc = jnp.maximum(acc, x_ref[t])
        acc = acc.astype(jnp.float32)
    o_ref[...] = (acc * s_ref[...] + b_ref[...]).astype(o_ref.dtype)


def pallas_pool(planes, rcnt, scale, bias, mode):
    """max/avg pool over taps + folded BN.  planes (KK,M,C) bf16 -> (M,C) bf16.
    TODO(synk): lane-dense (M*C/128,128) in/out views when C < 128."""
    KK, M, C = planes.shape
    row_bytes = 2 * KK * C * 2 + 2 * C * 2 + 2 * 4
    TM, Mp = _pick_tile(M, row_bytes)
    planes = _pad_rows(planes, Mp, axis=1)             # 0.0 row padding stays finite through BN
    in_specs = [pl.BlockSpec((KK, TM, C), lambda i: (0, i, 0))]
    args = [planes]
    if mode == "avg":
        in_specs.append(pl.BlockSpec((TM, 1), lambda i: (i, 0)))
        args.append(_pad_rows(rcnt, Mp, axis=0, value=1.0))
    in_specs += [pl.BlockSpec((1, C), lambda i: (0, 0)),
                 pl.BlockSpec((1, C), lambda i: (0, 0))]
    args += [scale.reshape(1, C).astype(jnp.float32),
             bias.reshape(1, C).astype(jnp.float32)]
    out = pl.pallas_call(
        partial(_pool_kernel, kk=KK, mode=mode),
        out_shape=jax.ShapeDtypeStruct((Mp, C), jnp.bfloat16),
        grid_spec=pltpu.PrefetchScalarGridSpec(
            num_scalar_prefetch=0,
            grid=(Mp // TM,),
            in_specs=in_specs,
            out_specs=pl.BlockSpec((TM, C), lambda i: (i, 0)),
        ),
        compiler_params=pltpu.CompilerParams(
            dimension_semantics=("parallel",), vmem_limit_bytes=_VMEM_LIMIT),
    )(*args)
    return out if Mp == M else out[:M]


# ----------------------------------------------------------------------------- parameters

class ParamFactory:
    def __init__(self, key):
        self.key = key
        self.count = 0

    def _next(self):
        self.count += 1
        return jax.random.fold_in(self.key, self.count)

    def conv(self, shape):
        return 0.1 * jax.random.normal(self._next(), shape, dtype=jnp.float32)

    def vec(self, n):
        return 0.1 * jax.random.normal(self._next(), (n,), dtype=jnp.float32)

    def bn(self, C, eps=1e-5):
        k = self._next()
        gamma = 1.0 + 0.1 * jax.random.normal(jax.random.fold_in(k, 0), (C,), jnp.float32)
        beta = 0.1 * jax.random.normal(jax.random.fold_in(k, 1), (C,), jnp.float32)
        mean = 0.1 * jax.random.normal(jax.random.fold_in(k, 2), (C,), jnp.float32)
        var = 1.0 + 0.1 * jnp.abs(jax.random.normal(jax.random.fold_in(k, 3), (C,), jnp.float32))
        scale = gamma / jnp.sqrt(var + eps)
        bias = beta - mean * scale
        return scale, bias


# ----------------------------------------------------------------------------- ops (NHWC, bf16)

class StdConvP:  # (optional ReLU) - Conv - BN; taps fused into K, BN scale folded into weight
    def __init__(self, pf, C_in, C_out, k, stride, pad, relu_in=True):
        self.k, self.stride, self.pad, self.relu_in = k, stride, pad, relu_in
        w = pf.conv((k * k, C_in, C_out))
        scale, bias = pf.bn(C_out)
        self.w = (w * scale[None, None, :]).reshape(k * k * C_in, C_out).astype(jnp.bfloat16)
        self.bias = bias

    def __call__(self, x):
        N = x.shape[0]
        if self.relu_in:
            x = jnp.maximum(x, 0)        # hoisted ReLU (fuses into the XLA pad/concat)
        patches, Ho, Wo = extract_patches(x, self.k, self.stride, self.pad)
        out = pallas_matmul_bias(patches, self.w, self.bias)
        return out.reshape(N, Ho, Wo, -1)


class DilConvP:
    """ReLU - depthwise (dilated) conv - pointwise conv - BN.

    No nonlinearity between dw and pw, so they are precomposed into a single conv weight
    W[k,ci,co] = wd[k,ci] * wp[ci,co] (BN scale folded): the whole op is ONE MXU dot per
    tile with contraction K = k*k*C_in, same kernel as StdConv.
    """
    def __init__(self, pf, C_in, C_out, k, stride, pad, dil):
        self.k, self.stride, self.pad, self.dil = k, stride, pad, dil
        wd = pf.conv((k * k, C_in))            # depthwise (per-channel, per-tap)
        wp = pf.conv((C_in, C_out))            # pointwise
        scale, bias = pf.bn(C_out)
        w = wd[:, :, None] * wp[None, :, :] * scale[None, None, :]
        self.w = w.reshape(k * k * C_in, C_out).astype(jnp.bfloat16)
        self.bias = bias

    def __call__(self, x):
        N = x.shape[0]
        x = jnp.maximum(x, 0)                  # hoisted ReLU
        patches, Ho, Wo = extract_patches(x, self.k, self.stride, self.pad, self.dil)
        out = pallas_matmul_bias(patches, self.w, self.bias)
        return out.reshape(N, Ho, Wo, -1)


class SepConvP:  # DilConv(dil=1, stride) then DilConv(dil=1, stride=1)
    def __init__(self, pf, C_in, C_out, k, stride, pad):
        self.c1 = DilConvP(pf, C_in, C_in, k, stride, pad, 1)
        self.c2 = DilConvP(pf, C_in, C_out, k, 1, pad, 1)

    def __call__(self, x):
        return self.c2(self.c1(x))


class FactorizedReduceP:  # ReLU - two 1x1 stride-2 convs - concat - BN (one batched kernel)
    def __init__(self, pf, C_in, C_out):
        half = C_out // 2
        w1 = pf.conv((C_in, half))
        w2 = pf.conv((C_in, half))
        scale, bias = pf.bn(C_out)
        self.w12 = jnp.stack([w1 * scale[:half][None, :],
                              w2 * scale[half:][None, :]], axis=0).astype(jnp.bfloat16)
        self.b12 = jnp.stack([bias[:half], bias[half:]], axis=0).reshape(2, 1, half)

    def __call__(self, x):
        # assumes even H and W (holds for every shape this model produces)
        N, H, W, C = x.shape
        xr = jnp.maximum(x, 0)
        x1 = xr[:, ::2, ::2, :]
        x2 = xr[:, 1::2, 1::2, :]
        # TODO(synk): in-kernel parity extraction (strided pl.ds on a pl.ANY input) would
        #             avoid materializing the two strided slices in HBM.
        Ho, Wo = x1.shape[1], x1.shape[2]
        out = pallas_factorized_reduce(x1.reshape(-1, C), x2.reshape(-1, C),
                                       self.w12, self.b12)
        return out.reshape(N, Ho, Wo, -1)


class PoolBNP:  # max/avg 3x3 pool - BN (avg: count_include_pad=False, analytic counts)
    def __init__(self, pf, pool_type, C, k, stride, pad):
        self.mode = pool_type
        self.k, self.stride, self.pad = k, stride, pad
        self.scale, self.bias = pf.bn(C)

    def __call__(self, x):
        N, H, W, C = x.shape
        pad_val = -1e30 if self.mode == "max" else 0.0
        planes, Ho, Wo = extract_patch_planes(x, self.k, self.stride, self.pad,
                                              pad_value=pad_val)
        rcnt = None
        if self.mode == "avg":
            rc = _avg_pool_rcounts(H, W, self.k, self.stride, self.pad)    # (Ho, Wo)
            rcnt = jnp.broadcast_to(rc[None], (N, Ho, Wo)).reshape(N * Ho * Wo, 1)
        out = pallas_pool(planes, rcnt, self.scale, self.bias, self.mode)
        return out.reshape(N, Ho, Wo, C)


def make_op(pf, name, C, stride):
    # DropPath_ wrapper is identity in eval mode; omitted.
    if name == "skip_connect":
        return (lambda x: x) if stride == 1 else FactorizedReduceP(pf, C, C)
    if name == "sep_conv_3x3":
        return SepConvP(pf, C, C, 3, stride, 1)
    if name == "sep_conv_5x5":
        return SepConvP(pf, C, C, 5, stride, 2)
    if name == "dil_conv_3x3":
        return DilConvP(pf, C, C, 3, stride, 2, 2)
    if name == "dil_conv_5x5":
        return DilConvP(pf, C, C, 5, stride, 4, 2)
    if name == "max_pool_3x3":
        return PoolBNP(pf, "max", C, 3, stride, 1)
    if name == "avg_pool_3x3":
        return PoolBNP(pf, "avg", C, 3, stride, 1)
    if name == "none":
        # clean zeros (no x*0 path, no NaN propagation)
        return lambda x: jnp.zeros_like(x if stride == 1 else x[:, ::stride, ::stride, :])
    # TODO(synk): conv_7x1_1x7 / sep_conv_7x7 not required by the chosen genotype.
    raise NotImplementedError(name)


# ----------------------------------------------------------------------------- model

Genotype = namedtuple("Genotype", "normal normal_concat reduce reduce_concat")


class AugmentCellP:
    def __init__(self, pf, genotype, C_pp, C_p, C, reduction_p, reduction):
        self.preproc0 = (FactorizedReduceP(pf, C_pp, C) if reduction_p
                         else StdConvP(pf, C_pp, C, 1, 1, 0))
        self.preproc1 = StdConvP(pf, C_p, C, 1, 1, 0)
        gene = genotype.reduce if reduction else genotype.normal
        self.concat = genotype.reduce_concat if reduction else genotype.normal_concat
        self.dag = []
        for edges in gene:
            row = []
            for op_name, s_idx in edges:
                stride = 2 if reduction and s_idx < 2 else 1
                row.append((make_op(pf, op_name, C, stride), s_idx))
            self.dag.append(row)

    def __call__(self, s0, s1):
        s0 = self.preproc0(s0)
        s1 = self.preproc1(s1)
        states = [s0, s1]
        for row in self.dag:
            s_cur = sum(op(states[s_idx]) for op, s_idx in row)
            states.append(s_cur)
        return jnp.concatenate([states[i] for i in self.concat], axis=-1)


class AugmentCNNImageNetP:
    def __init__(self, pf, input_size, C_in, C, n_classes, n_layers, auxiliary, genotype):
        self.n_classes = n_classes
        self.aux_pos = 2 * n_layers // 3 if auxiliary else -1
        # stem0: Conv(C_in,C//2,3,s2,p1) - BN - ReLU - Conv(C//2,C,3,s2,p1) - BN
        self.stem0_c1 = StdConvP(pf, C_in, C // 2, 3, 2, 1, relu_in=False)
        self.stem0_c2 = StdConvP(pf, C // 2, C, 3, 2, 1, relu_in=True)
        # stem1: ReLU - Conv(C,C,3,s2,p1) - BN
        self.stem1_c = StdConvP(pf, C, C, 3, 2, 1, relu_in=True)

        C_pp, C_p, C_curr = C, C, C
        self.cells = []
        reduction_prev = True
        for i in range(n_layers):
            if i in [n_layers // 3, 2 * n_layers // 3]:
                C_curr *= 2
                reduction = True
            else:
                reduction = False
            cell = AugmentCellP(pf, genotype, C_pp, C_p, C_curr, reduction_prev, reduction)
            reduction_prev = reduction
            self.cells.append(cell)
            C_pp, C_p = C_p, len(cell.concat) * C_curr
        # auxiliary head is training-only; eval forward returns logits only.
        self.w_lin = pf.conv((C_p, n_classes))        # tiny Linear stays f32 in XLA
        self.b_lin = pf.vec(n_classes)

    def __call__(self, x_nchw):
        # external layout is (N, C, H, W) f32 like PyTorch; internal is NHWC bf16.
        x = jnp.transpose(x_nchw, (0, 2, 3, 1)).astype(jnp.bfloat16)
        s0 = self.stem0_c1(x)
        s0 = self.stem0_c2(s0)
        s1 = self.stem1_c(s0)
        for cell in self.cells:
            s0, s1 = s1, cell(s0, s1)
        feat = jnp.mean(s1.astype(jnp.float32), axis=(1, 2))   # AdaptiveAvgPool2d(1)+flatten
        return feat @ self.w_lin + self.b_lin                  # aux_pos == -1 -> logits only


# ----------------------------------------------------------------------------- main

if __name__ == "__main__":
    genotype = Genotype(
        normal=[[("sep_conv_3x3", 0), ("skip_connect", 1)],
                [("dil_conv_3x3", 0), ("max_pool_3x3", 1)]],
        normal_concat=[2, 3],
        reduce=[[("max_pool_3x3", 0), ("skip_connect", 1)],
                [("avg_pool_3x3", 0), ("sep_conv_3x3", 1)]],
        reduce_concat=[2, 3],
    )

    key = jax.random.PRNGKey(0)
    pf = ParamFactory(jax.random.fold_in(key, 1))

    input_size, C_in, C, n_classes, n_layers = 32, 3, 8, 10, 3
    model = AugmentCNNImageNetP(pf, input_size, C_in, C, n_classes, n_layers,
                                auxiliary=False, genotype=genotype)

    x = jax.random.normal(jax.random.fold_in(key, 2),
                          (2, C_in, input_size, input_size), dtype=jnp.float32)

    forward = jax.jit(lambda inp: model(inp))
    logits = jax.block_until_ready(forward(x))
    assert logits.shape == (2, n_classes)
    assert bool(jnp.all(jnp.isfinite(logits)))
    print("KERNEL_OK")
</pallas_src>

<mosaic_0001>
module attributes {stable_mosaic.version = 11 : i64} {
  func.func @_matmul_bias_kernel(%arg0: i32, %arg1: memref<256x27xbf16, #tpu.memory_space<vmem>>, %arg2: memref<27x4xbf16, #tpu.memory_space<vmem>>, %arg3: memref<1x4xf32, #tpu.memory_space<vmem>>, %arg4: memref<256x4xbf16, #tpu.memory_space<vmem>>) attributes {dimension_semantics = [#tpu.dimension_semantics<parallel>], iteration_bounds = array<i64: 2>, scalar_prefetch = 0 : i64, scratch_operands = 0 : i64, tpu.core_type = #tpu.core_type<tc>, window_params = [{transform_indices = @transform_0, window_bounds = array<i64: 256, 27>}, {pipeline_mode = #tpu.pipeline_mode<synchronous>, transform_indices = @transform_1, window_bounds = array<i64: 27, 4>}, {pipeline_mode = #tpu.pipeline_mode<synchronous>, transform_indices = @transform_2, window_bounds = array<i64: 1, 4>}, {transform_indices = @transform_3, window_bounds = array<i64: 256, 4>}]} {
    %c0 = arith.constant 0 : index
    %c0_0 = arith.constant 0 : index
    %0 = vector.load %arg1[%c0, %c0_0] : memref<256x27xbf16, #tpu.memory_space<vmem>>, vector<256x27xbf16>
    %c0_1 = arith.constant 0 : index
    %c0_2 = arith.constant 0 : index
    %1 = vector.load %arg2[%c0_1, %c0_2] : memref<27x4xbf16, #tpu.memory_space<vmem>>, vector<27x4xbf16>
    %cst = arith.constant dense<0.000000e+00> : vector<256x4xf32>
    %2 = tpu.matmul %0, %1, %cst {dimension_numbers = #tpu.dot_dimension_numbers<[1], [0], [0], [1], [0, 0, 1, 1], [], []>} : vector<256x27xbf16>, vector<27x4xbf16>, vector<256x4xf32> -> vector<256x4xf32>
    %c0_3 = arith.constant 0 : index
    %c0_4 = arith.constant 0 : index
    %3 = vector.load %arg3[%c0_3, %c0_4] : memref<1x4xf32, #tpu.memory_space<vmem>>, vector<1x4xf32>
    %4 = vector.broadcast %3 : vector<1x4xf32> to vector<256x4xf32>
    %5 = arith.addf %2, %4 : vector<256x4xf32>
    %6 = arith.truncf %5 : vector<256x4xf32> to vector<256x4xbf16>
    %c0_5 = arith.constant 0 : index
    %c0_6 = arith.constant 0 : index
    %7 = vector.load %arg4[%c0_5, %c0_6] : memref<256x4xbf16, #tpu.memory_space<vmem>>, vector<256x4xbf16>
    tpu.vector_store %arg4[%c0_5, %c0_6], %6 {strides = array<i32>} : memref<256x4xbf16, #tpu.memory_space<vmem>>, vector<256x4xbf16>,
    return
  }
  func.func @transform_0(%arg0: i32) -> (i32, i32) {
    %c0_i32 = arith.constant 0 : i32
    %c0_i32_0 = arith.constant 0 : i32
    return %arg0, %c0_i32 : i32, i32
  }
  func.func @transform_1(%arg0: i32) -> (i32, i32) {
    %c0_i32 = arith.constant 0 : i32
    %c0_i32_0 = arith.constant 0 : i32
    %c0_i32_1 = arith.constant 0 : i32
    return %c0_i32, %c0_i32_0 : i32, i32
  }
  func.func @transform_2(%arg0: i32) -> (i32, i32) {
    %c0_i32 = arith.constant 0 : i32
    %c0_i32_0 = arith.constant 0 : i32
    %c0_i32_1 = arith.constant 0 : i32
    return %c0_i32, %c0_i32_0 : i32, i32
  }
  func.func @transform_3(%arg0: i32) -> (i32, i32) {
    %c0_i32 = arith.constant 0 : i32
    %c0_i32_0 = arith.constant 0 : i32
    return %arg0, %c0_i32 : i32, i32
  }
}

module attributes {stable_mosaic.version = 11 : i64} {
  func.func @_matmul_bias_kernel(%arg0: i32, %arg1: memref<64x36xbf16, #tpu.memory_space<vmem>>, %arg2: memref<36x8xbf16, #tpu.memory_space<vmem>>, %arg3: memref<1x8xf32, #tpu.memory_space<vmem>>, %arg4: memref<64x8xbf16, #tpu.memory_space<vmem>>) attributes {dimension_semantics = [#tpu.dimension_semantics<parallel>], iteration_bounds = array<i64: 2>, scalar_prefetch = 0 : i64, scratch_operands = 0 : i64, tpu.core_type = #tpu.core_type<tc>, window_params = [{transform_indices = @transform_0, window_bounds = array<i64: 64, 36>}, {pipeline_mode = #tpu.pipeline_mode<synchronous>, transform_indices = @transform_1, window_bounds = array<i64: 36, 8>}, {pipeline_mode = #tpu.pipeline_mode<synchronous>, transform_indices = @transform_2, window_bounds = array<i64: 1, 8>}, {transform_indices = @transform_3, window_bounds = array<i64: 64, 8>}]} {
    %c0 = arith.constant 0 : index
    %c0_0 = arith.constant 0 : index
    %0 = vector.load %arg1[%c0, %c0_0] : memref<64x36xbf16, #tpu.memory_space<vmem>>, vector<64x36xbf16>
    %c0_1 = arith.constant 0 : index
    %c0_2 = arith.constant 0 : index
    %1 = vector.load %arg2[%c0_1, %c0_2] : memref<36x8xbf16, #tpu.memory_space<vmem>>, vector<36x8xbf16>
    %cst = arith.constant dense<0.000000e+00> : vector<64x8xf32>
    %2 = tpu.matmul %0, %1, %cst {dimension_numbers = #tpu.dot_dimension_numbers<[1], [0], [0], [1], [0, 0, 1, 1], [], []>} : vector<64x36xbf16>, vector<36x8xbf16>, vector<64x8xf32> -> vector<64x8xf32>
    %c0_3 = arith.constant 0 : index
    %c0_4 = arith.constant 0 : index
    %3 = vector.load %arg3[%c0_3, %c0_4] : memref<1x8xf32, #tpu.memory_space<vmem>>, vector<1x8xf32>
    %4 = vector.broadcast %3 : vector<1x8xf32> to vector<64x8xf32>
    %5 = arith.addf %2, %4 : vector<64x8xf32>
    %6 = arith.truncf %5 : vector<64x8xf32> to vector<64x8xbf16>
    %c0_5 = arith.constant 0 : index
    %c0_6 = arith.constant 0 : index
    %7 = vector.load %arg4[%c0_5, %c0_6] : memref<64x8xbf16, #tpu.memory_space<vmem>>, vector<64x8xbf16>
    tpu.vector_store %arg4[%c0_5, %c0_6], %6 {strides = array<i32>} : memref<64x8xbf16, #tpu.memory_space<vmem>>, vector<64x8xbf16>,
    return
  }
  func.func @transform_0(%arg0: i32) -> (i32, i32) {
    %c0_i32 = arith.constant 0 : i32
    %c0_i32_0 = arith.constant 0 : i32
    return %arg0, %c0_i32 : i32, i32
  }
  func.func @transform_1(%arg0: i32) -> (i32, i32) {
    %c0_i32 = arith.constant 0 : i32
    %c0_i32_0 = arith.constant 0 : i32
    %c0_i32_1 = arith.constant 0 : i32
    return %c0_i32, %c0_i32_0 : i32, i32
  }
  func.func @transform_2(%arg0: i32) -> (i32, i32) {
    %c0_i32 = arith.constant 0 : i32
    %c0_i32_0 = arith.constant 0 : i32
    %c0_i32_1 = arith.constant 0 : i32
    return %c0_i32, %c0_i32_0 : i32, i32
  }
  func.func @transform_3(%arg0: i32) -> (i32, i32) {
    %c0_i32 = arith.constant 0 : i32
    %c0_i32_0 = arith.constant 0 : i32
    return %arg0, %c0_i32 : i32, i32
  }
}

module attributes {stable_mosaic.version = 11 : i64} {
  func.func @_matmul_bias_kernel(%arg0: i32, %arg1: memref<16x72xbf16, #tpu.memory_space<vmem>>, %arg2: memref<72x8xbf16, #tpu.memory_space<vmem>>, %arg3: memref<1x8xf32, #tpu.memory_space<vmem>>, %arg4: memref<16x8xbf16, #tpu.memory_space<vmem>>) attributes {dimension_semantics = [#tpu.dimension_semantics<parallel>], iteration_bounds = array<i64: 2>, scalar_prefetch = 0 : i64, scratch_operands = 0 : i64, tpu.core_type = #tpu.core_type<tc>, window_params = [{transform_indices = @transform_0, window_bounds = array<i64: 16, 72>}, {pipeline_mode = #tpu.pipeline_mode<synchronous>, transform_indices = @transform_1, window_bounds = array<i64: 72, 8>}, {pipeline_mode = #tpu.pipeline_mode<synchronous>, transform_indices = @transform_2, window_bounds = array<i64: 1, 8>}, {transform_indices = @transform_3, window_bounds = array<i64: 16, 8>}]} {
    %c0 = arith.constant 0 : index
    %c0_0 = arith.constant 0 : index
    %0 = vector.load %arg1[%c0, %c0_0] : memref<16x72xbf16, #tpu.memory_space<vmem>>, vector<16x72xbf16>
    %c0_1 = arith.constant 0 : index
    %c0_2 = arith.constant 0 : index
    %1 = vector.load %arg2[%c0_1, %c0_2] : memref<72x8xbf16, #tpu.memory_space<vmem>>, vector<72x8xbf16>
    %cst = arith.constant dense<0.000000e+00> : vector<16x8xf32>
    %2 = tpu.matmul %0, %1, %cst {dimension_numbers = #tpu.dot_dimension_numbers<[1], [0], [0], [1], [0, 0, 1, 1], [], []>} : vector<16x72xbf16>, vector<72x8xbf16>, vector<16x8xf32> -> vector<16x8xf32>
    %c0_3 = arith.constant 0 : index
    %c0_4 = arith.constant 0 : index
    %3 = vector.load %arg3[%c0_3, %c0_4] : memref<1x8xf32, #tpu.memory_space<vmem>>, vector<1x8xf32>
    %4 = vector.broadcast %3 : vector<1x8xf32> to vector<16x8xf32>
    %5 = arith.addf %2, %4 : vector<16x8xf32>
    %6 = arith.truncf %5 : vector<16x8xf32> to vector<16x8xbf16>
    %c0_5 = arith.constant 0 : index
    %c0_6 = arith.constant 0 : index
    %7 = vector.load %arg4[%c0_5, %c0_6] : memref<16x8xbf16, #tpu.memory_space<vmem>>, vector<16x8xbf16>
    tpu.vector_store %arg4[%c0_5, %c0_6], %6 {strides = array<i32>} : memref<16x8xbf16, #tpu.memory_space<vmem>>, vector<16x8xbf16>,
    return
  }
  func.func @transform_0(%arg0: i32) -> (i32, i32) {
    %c0_i32 = arith.constant 0 : i32
    %c0_i32_0 = arith.constant 0 : i32
    return %arg0, %c0_i32 : i32, i32
  }
  func.func @transform_1(%arg0: i32) -> (i32, i32) {
    %c0_i32 = arith.constant 0 : i32
    %c0_i32_0 = arith.constant 0 : i32
    %c0_i32_1 = arith.constant 0 : i32
    return %c0_i32, %c0_i32_0 : i32, i32
  }
  func.func @transform_2(%arg0: i32) -> (i32, i32) {
    %c0_i32 = arith.constant 0 : i32
    %c0_i32_0 = arith.constant 0 : i32
    %c0_i32_1 = arith.constant 0 : i32
    return %c0_i32, %c0_i32_0 : i32, i32
  }
  func.func @transform_3(%arg0: i32) -> (i32, i32) {
    %c0_i32 = arith.constant 0 : i32
    %c0_i32_0 = arith.constant 0 : i32
    return %arg0, %c0_i32 : i32, i32
  }
}

module attributes {stable_mosaic.version = 11 : i64} {
  func.func @_matmul_bias_kernel(%arg0: i32, %arg1: memref<16x8xbf16, #tpu.memory_space<vmem>>, %arg2: memref<8x8xbf16, #tpu.memory_space<vmem>>, %arg3: memref<1x8xf32, #tpu.memory_space<vmem>>, %arg4: memref<16x8xbf16, #tpu.memory_space<vmem>>) attributes {dimension_semantics = [#tpu.dimension_semantics<parallel>], iteration_bounds = array<i64: 2>, scalar_prefetch = 0 : i64, scratch_operands = 0 : i64, tpu.core_type = #tpu.core_type<tc>, window_params = [{transform_indices = @transform_0, window_bounds = array<i64: 16, 8>}, {pipeline_mode = #tpu.pipeline_mode<synchronous>, transform_indices = @transform_1, window_bounds = array<i64: 8, 8>}, {pipeline_mode = #tpu.pipeline_mode<synchronous>, transform_indices = @transform_2, window_bounds = array<i64: 1, 8>}, {transform_indices = @transform_3, window_bounds = array<i64: 16, 8>}]} {
    %c0 = arith.constant 0 : index
    %c0_0 = arith.constant 0 : index
    %0 = vector.load %arg1[%c0, %c0_0] : memref<16x8xbf16, #tpu.memory_space<vmem>>, vector<16x8xbf16>
    %c0_1 = arith.constant 0 : index
    %c0_2 = arith.constant 0 : index
    %1 = vector.load %arg2[%c0_1, %c0_2] : memref<8x8xbf16, #tpu.memory_space<vmem>>, vector<8x8xbf16>
    %cst = arith.constant dense<0.000000e+00> : vector<16x8xf32>
    %2 = tpu.matmul %0, %1, %cst {dimension_numbers = #tpu.dot_dimension_numbers<[1], [0], [0], [1], [0, 0, 1, 1], [], []>} : vector<16x8xbf16>, vector<8x8xbf16>, vector<16x8xf32> -> vector<16x8xf32>
    %c0_3 = arith.constant 0 : index
    %c0_4 = arith.constant 0 : index
    %3 = vector.load %arg3[%c0_3, %c0_4] : memref<1x8xf32, #tpu.memory_space<vmem>>, vector<1x8xf32>
    %4 = vector.broadcast %3 : vector<1x8xf32> to vector<16x8xf32>
    %5 = arith.addf %2, %4 : vector<16x8xf32>
    %6 = arith.truncf %5 : vector<16x8xf32> to vector<16x8xbf16>
    %c0_5 = arith.constant 0 : index
    %c0_6 = arith.constant 0 : index
    %7 = vector.load %arg4[%c0_5, %c0_6] : memref<16x8xbf16, #tpu.memory_space<vmem>>, vector<16x8xbf16>
    tpu.vector_store %arg4[%c0_5, %c0_6], %6 {strides = array<i32>} : memref<16x8xbf16, #tpu.memory_space<vmem>>, vector<16x8xbf16>,
    return
  }
  func.func @transform_0(%arg0: i32) -> (i32, i32) {
    %c0_i32 = arith.constant 0 : i32
    %c0_i32_0 = arith.constant 0 : i32
    return %arg0, %c0_i32 : i32, i32
  }
  func.func @transform_1(%arg0: i32) -> (i32, i32) {
    %c0_i32 = arith.constant 0 : i32
    %c0_i32_0 = arith.constant 0 : i32
    %c0_i32_1 = arith.constant 0 : i32
    return %c0_i32, %c0_i32_0 : i32, i32
  }
  func.func @transform_2(%arg0: i32) -> (i32, i32) {
    %c0_i32 = arith.constant 0 : i32
    %c0_i32_0 = arith.constant 0 : i32
    %c0_i32_1 = arith.constant 0 : i32
    return %c0_i32, %c0_i32_0 : i32, i32
  }
  func.func @transform_3(%arg0: i32) -> (i32, i32) {
    %c0_i32 = arith.constant 0 : i32
    %c0_i32_0 = arith.constant 0 : i32
    return %arg0, %c0_i32 : i32, i32
  }
}

module attributes {stable_mosaic.version = 11 : i64} {
  func.func @_fr_kernel(%arg0: i32, %arg1: i32, %arg2: memref<1x16x8xbf16, #tpu.memory_space<vmem>>, %arg3: memref<1x8x4xbf16, #tpu.memory_space<vmem>>, %arg4: memref<1x1x4xf32, #tpu.memory_space<vmem>>, %arg5: memref<1x16x4xbf16, #tpu.memory_space<vmem>>) attributes {dimension_semantics = [#tpu.dimension_semantics<parallel>, #tpu.dimension_semantics<parallel>], iteration_bounds = array<i64: 2, 2>, scalar_prefetch = 0 : i64, scratch_operands = 0 : i64, tpu.core_type = #tpu.core_type<tc>, window_params = [{transform_indices = @transform_0, window_bounds = array<i64: 1, 16, 8>}, {transform_indices = @transform_1, window_bounds = array<i64: 1, 8, 4>}, {transform_indices = @transform_2, window_bounds = array<i64: 1, 1, 4>}, {transform_indices = @transform_3, window_bounds = array<i64: 1, 16, 4>}]} {
    %c0 = arith.constant 0 : index
    %c0_0 = arith.constant 0 : index
    %c0_1 = arith.constant 0 : index
    %0 = vector.load %arg2[%c0, %c0_0, %c0_1] : memref<1x16x8xbf16, #tpu.memory_space<vmem>>, vector<1x16x8xbf16>
    %1 = vector.shape_cast %0 : vector<1x16x8xbf16> to vector<16x8xbf16>
    %c0_2 = arith.constant 0 : index
    %c0_3 = arith.constant 0 : index
    %c0_4 = arith.constant 0 : index
    %2 = vector.load %arg3[%c0_2, %c0_3, %c0_4] : memref<1x8x4xbf16, #tpu.memory_space<vmem>>, vector<1x8x4xbf16>
    %3 = vector.shape_cast %2 : vector<1x8x4xbf16> to vector<8x4xbf16>
    %cst = arith.constant dense<0.000000e+00> : vector<16x4xf32>
    %4 = tpu.matmul %1, %3, %cst {dimension_numbers = #tpu.dot_dimension_numbers<[1], [0], [0], [1], [0, 0, 1, 1], [], []>} : vector<16x8xbf16>, vector<8x4xbf16>, vector<16x4xf32> -> vector<16x4xf32>
    %c0_5 = arith.constant 0 : index
    %c0_6 = arith.constant 0 : index
    %c0_7 = arith.constant 0 : index
    %5 = vector.load %arg4[%c0_5, %c0_6, %c0_7] : memref<1x1x4xf32, #tpu.memory_space<vmem>>, vector<1x1x4xf32>
    %6 = vector.shape_cast %5 : vector<1x1x4xf32> to vector<1x4xf32>
    %7 = vector.broadcast %6 : vector<1x4xf32> to vector<16x4xf32>
    %8 = arith.addf %4, %7 : vector<16x4xf32>
    %9 = arith.truncf %8 : vector<16x4xf32> to vector<16x4xbf16>
    %c0_8 = arith.constant 0 : index
    %c0_9 = arith.constant 0 : index
    %c0_10 = arith.constant 0 : index
    %10 = vector.load %arg5[%c0_8, %c0_9, %c0_10] : memref<1x16x4xbf16, #tpu.memory_space<vmem>>, vector<1x16x4xbf16>
    %11 = vector.shape_cast %10 : vector<1x16x4xbf16> to vector<16x4xbf16>
    %12 = vector.shape_cast %9 : vector<16x4xbf16> to vector<1x16x4xbf16>
    tpu.vector_store %arg5[%c0_8, %c0_9, %c0_10], %12 {strides = array<i32>} : memref<1x16x4xbf16, #tpu.memory_space<vmem>>, vector<1x16x4xbf16>,
    return
  }
  func.func @transform_0(%arg0: i32, %arg1: i32) -> (i32, i32, i32) {
    %c0_i32 = arith.constant 0 : i32
    %c0_i32_0 = arith.constant 0 : i32
    return %arg0, %arg1, %c0_i32 : i32, i32, i32
  }
  func.func @transform_1(%arg0: i32, %arg1: i32) -> (i32, i32, i32) {
    %c0_i32 = arith.constant 0 : i32
    %c0_i32_0 = arith.constant 0 : i32
    %c0_i32_1 = arith.constant 0 : i32
    return %arg0, %c0_i32, %c0_i32_0 : i32, i32, i32
  }
  func.func @transform_2(%arg0: i32, %arg1: i32) -> (i32, i32, i32) {
    %c0_i32 = arith.constant 0 : i32
    %c0_i32_0 = arith.constant 0 : i32
    %c0_i32_1 = arith.constant 0 : i32
    return %arg0, %c0_i32, %c0_i32_0 : i32, i32, i32
  }
  func.func @transform_3(%arg0: i32, %arg1: i32) -> (i32, i32, i32) {
    %c0_i32 = arith.constant 0 : i32
    %c0_i32_0 = arith.constant 0 : i32
    return %arg0, %arg1, %c0_i32 : i32, i32, i32
  }
}

module attributes {stable_mosaic.version = 11 : i64} {
  func.func @_pool_kernel(%arg0: i32, %arg1: memref<9x16x8xbf16, #tpu.memory_space<vmem>>, %arg2: memref<1x8xf32, #tpu.memory_space<vmem>>, %arg3: memref<1x8xf32, #tpu.memory_space<vmem>>, %arg4: memref<16x8xbf16, #tpu.memory_space<vmem>>) attributes {dimension_semantics = [#tpu.dimension_semantics<parallel>], iteration_bounds = array<i64: 2>, scalar_prefetch = 0 : i64, scratch_operands = 0 : i64, tpu.core_type = #tpu.core_type<tc>, window_params = [{transform_indices = @transform_0, window_bounds = array<i64: 9, 16, 8>}, {pipeline_mode = #tpu.pipeline_mode<synchronous>, transform_indices = @transform_1, window_bounds = array<i64: 1, 8>}, {pipeline_mode = #tpu.pipeline_mode<synchronous>, transform_indices = @transform_2, window_bounds = array<i64: 1, 8>}, {transform_indices = @transform_3, window_bounds = array<i64: 16, 8>}]} {
    %c0 = arith.constant 0 : index
    %c0_0 = arith.constant 0 : index
    %c0_1 = arith.constant 0 : index
    %0 = vector.load %arg1[%c0, %c0_0, %c0_1] : memref<9x16x8xbf16, #tpu.memory_space<vmem>>, vector<1x16x8xbf16>
    %1 = vector.shape_cast %0 : vector<1x16x8xbf16> to vector<16x8xbf16>
    %c1 = arith.constant 1 : index
    %c0_2 = arith.constant 0 : index
    %c0_3 = arith.constant 0 : index
    %2 = vector.load %arg1[%c1, %c0_2, %c0_3] : memref<9x16x8xbf16, #tpu.memory_space<vmem>>, vector<1x16x8xbf16>
    %3 = vector.shape_cast %2 : vector<1x16x8xbf16> to vector<16x8xbf16>
    %4 = arith.maximumf %1, %3 : vector<16x8xbf16>
    %c2 = arith.constant 2 : index
    %c0_4 = arith.constant 0 : index
    %c0_5 = arith.constant 0 : index
    %5 = vector.load %arg1[%c2, %c0_4, %c0_5] : memref<9x16x8xbf16, #tpu.memory_space<vmem>>, vector<1x16x8xbf16>
    %6 = vector.shape_cast %5 : vector<1x16x8xbf16> to vector<16x8xbf16>
    %7 = arith.maximumf %4, %6 : vector<16x8xbf16>
    %c3 = arith.constant 3 : index
    %c0_6 = arith.constant 0 : index
    %c0_7 = arith.constant 0 : index
    %8 = vector.load %arg1[%c3, %c0_6, %c0_7] : memref<9x16x8xbf16, #tpu.memory_space<vmem>>, vector<1x16x8xbf16>
    %9 = vector.shape_cast %8 : vector<1x16x8xbf16> to vector<16x8xbf16>
    %10 = arith.maximumf %7, %9 : vector<16x8xbf16>
    %c4 = arith.constant 4 : index
    %c0_8 = arith.constant 0 : index
    %c0_9 = arith.constant 0 : index
    %11 = vector.load %arg1[%c4, %c0_8, %c0_9] : memref<9x16x8xbf16, #tpu.memory_space<vmem>>, vector<1x16x8xbf16>
    %12 = vector.shape_cast %11 : vector<1x16x8xbf16> to vector<16x8xbf16>
    %13 = arith.maximumf %10, %12 : vector<16x8xbf16>
    %c5 = arith.constant 5 : index
    %c0_10 = arith.constant 0 : index
    %c0_11 = arith.constant 0 : index
    %14 = vector.load %arg1[%c5, %c0_10, %c0_11] : memref<9x16x8xbf16, #tpu.memory_space<vmem>>, vector<1x16x8xbf16>
    %15 = vector.shape_cast %14 : vector<1x16x8xbf16> to vector<16x8xbf16>
    %16 = arith.maximumf %13, %15 : vector<16x8xbf16>
    %c6 = arith.constant 6 : index
    %c0_12 = arith.constant 0 : index
    %c0_13 = arith.constant 0 : index
    %17 = vector.load %arg1[%c6, %c0_12, %c0_13] : memref<9x16x8xbf16, #tpu.memory_space<vmem>>, vector<1x16x8xbf16>
    %18 = vector.shape_cast %17 : vector<1x16x8xbf16> to vector<16x8xbf16>
    %19 = arith.maximumf %16, %18 : vector<16x8xbf16>
    %c7 = arith.constant 7 : index
    %c0_14 = arith.constant 0 : index
    %c0_15 = arith.constant 0 : index
    %20 = vector.load %arg1[%c7, %c0_14, %c0_15] : memref<9x16x8xbf16, #tpu.memory_space<vmem>>, vector<1x16x8xbf16>
    %21 = vector.shape_cast %20 : vector<1x16x8xbf16> to vector<16x8xbf16>
    %22 = arith.maximumf %19, %21 : vector<16x8xbf16>
    %c8 = arith.constant 8 : index
    %c0_16 = arith.constant 0 : index
    %c0_17 = arith.constant 0 : index
    %23 = vector.load %arg1[%c8, %c0_16, %c0_17] : memref<9x16x8xbf16, #tpu.memory_space<vmem>>, vector<1x16x8xbf16>
    %24 = vector.shape_cast %23 : vector<1x16x8xbf16> to vector<16x8xbf16>
    %25 = arith.maximumf %22, %24 : vector<16x8xbf16>
    %26 = arith.extf %25 : vector<16x8xbf16> to vector<16x8xf32>
    %c0_18 = arith.constant 0 : index
    %c0_19 = arith.constant 0 : index
    %27 = vector.load %arg2[%c0_18, %c0_19] : memref<1x8xf32, #tpu.memory_space<vmem>>, vector<1x8xf32>
    %28 = vector.broadcast %27 : vector<1x8xf32> to vector<16x8xf32>
    %29 = arith.mulf %26, %28 : vector<16x8xf32>
    %c0_20 = arith.constant 0 : index
    %c0_21 = arith.constant 0 : index
    %30 = vector.load %arg3[%c0_20, %c0_21] : memref<1x8xf32, #tpu.memory_space<vmem>>, vector<1x8xf32>
    %31 = vector.broadcast %30 : vector<1x8xf32> to vector<16x8xf32>
    %32 = arith.addf %29, %31 : vector<16x8xf32>
    %33 = arith.truncf %32 : vector<16x8xf32> to vector<16x8xbf16>
    %c0_22 = arith.constant 0 : index
    %c0_23 = arith.constant 0 : index
    %34 = vector.load %arg4[%c0_22, %c0_23] : memref<16x8xbf16, #tpu.memory_space<vmem>>, vector<16x8xbf16>
    tpu.vector_store %arg4[%c0_22, %c0_23], %33 {strides = array<i32>} : memref<16x8xbf16, #tpu.memory_space<vmem>>, vector<16x8xbf16>,
    return
  }
  func.func @transform_0(%arg0: i32) -> (i32, i32, i32) {
    %c0_i32 = arith.constant 0 : i32
    %c0_i32_0 = arith.constant 0 : i32
    %c0_i32_1 = arith.constant 0 : i32
    return %c0_i32, %arg0, %c0_i32_0 : i32, i32, i32
  }
  func.func @transform_1(%arg0: i32) -> (i32, i32) {
    %c0_i32 = arith.constant 0 : i32
    %c0_i32_0 = arith.constant 0 : i32
    %c0_i32_1 = arith.constant 0 : i32
    return %c0_i32, %c0_i32_0 : i32, i32
  }
  func.func @transform_2(%arg0: i32) -> (i32, i32) {
    %c0_i32 = arith.constant 0 : i32
    %c0_i32_0 = arith.constant 0 : i32
    %c0_i32_1 = arith.constant 0 : i32
    return %c0_i32, %c0_i32_0 : i32, i32
  }
  func.func @transform_3(%arg0: i32) -> (i32, i32) {
    %c0_i32 = arith.constant 0 : i32
    %c0_i32_0 = arith.constant 0 : i32
    return %arg0, %c0_i32 : i32, i32
  }
}

module attributes {stable_mosaic.version = 11 : i64} {
  func.func @_matmul_bias_kernel(%arg0: i32, %arg1: memref<16x16xbf16, #tpu.memory_space<vmem>>, %arg2: memref<16x16xbf16, #tpu.memory_space<vmem>>, %arg3: memref<1x16xf32, #tpu.memory_space<vmem>>, %arg4: memref<16x16xbf16, #tpu.memory_space<vmem>>) attributes {dimension_semantics = [#tpu.dimension_semantics<parallel>], iteration_bounds = array<i64: 2>, scalar_prefetch = 0 : i64, scratch_operands = 0 : i64, tpu.core_type = #tpu.core_type<tc>, window_params = [{transform_indices = @transform_0, window_bounds = array<i64: 16, 16>}, {pipeline_mode = #tpu.pipeline_mode<synchronous>, transform_indices = @transform_1, window_bounds = array<i64: 16, 16>}, {pipeline_mode = #tpu.pipeline_mode<synchronous>, transform_indices = @transform_2, window_bounds = array<i64: 1, 16>}, {transform_indices = @transform_3, window_bounds = array<i64: 16, 16>}]} {
    %c0 = arith.constant 0 : index
    %c0_0 = arith.constant 0 : index
    %0 = vector.load %arg1[%c0, %c0_0] : memref<16x16xbf16, #tpu.memory_space<vmem>>, vector<16x16xbf16>
    %c0_1 = arith.constant 0 : index
    %c0_2 = arith.constant 0 : index
    %1 = vector.load %arg2[%c0_1, %c0_2] : memref<16x16xbf16, #tpu.memory_space<vmem>>, vector<16x16xbf16>
    %cst = arith.constant dense<0.000000e+00> : vector<16x16xf32>
    %2 = tpu.matmul %0, %1, %cst {dimension_numbers = #tpu.dot_dimension_numbers<[1], [0], [0], [1], [0, 0, 1, 1], [], []>} : vector<16x16xbf16>, vector<16x16xbf16>, vector<16x16xf32> -> vector<16x16xf32>
    %c0_3 = arith.constant 0 : index
    %c0_4 = arith.constant 0 : index
    %3 = vector.load %arg3[%c0_3, %c0_4] : memref<1x16xf32, #tpu.memory_space<vmem>>, vector<1x16xf32>
    %4 = vector.broadcast %3 : vector<1x16xf32> to vector<16x16xf32>
    %5 = arith.addf %2, %4 : vector<16x16xf32>
    %6 = arith.truncf %5 : vector<16x16xf32> to vector<16x16xbf16>
    %c0_5 = arith.constant 0 : index
    %c0_6 = arith.constant 0 : index
    %7 = vector.load %arg4[%c0_5, %c0_6] : memref<16x16xbf16, #tpu.memory_space<vmem>>, vector<16x16xbf16>
    tpu.vector_store %arg4[%c0_5, %c0_6], %6 {strides = array<i32>} : memref<16x16xbf16, #tpu.memory_space<vmem>>, vector<16x16xbf16>,
    return
  }
  func.func @transform_0(%arg0: i32) -> (i32, i32) {
    %c0_i32 = arith.constant 0 : i32
    %c0_i32_0 = arith.constant 0 : i32
    return %arg0, %c0_i32 : i32, i32
  }
  func.func @transform_1(%arg0: i32) -> (i32, i32) {
    %c0_i32 = arith.constant 0 : i32
    %c0_i32_0 = arith.constant 0 : i32
    %c0_i32_1 = arith.constant 0 : i32
    return %c0_i32, %c0_i32_0 : i32, i32
  }
  func.func @transform_2(%arg0: i32) -> (i32, i32) {
    %c0_i32 = arith.constant 0 : i32
    %c0_i32_0 = arith.constant 0 : i32
    %c0_i32_1 = arith.constant 0 : i32
    return %c0_i32, %c0_i32_0 : i32, i32
  }
  func.func @transform_3(%arg0: i32) -> (i32, i32) {
    %c0_i32 = arith.constant 0 : i32
    %c0_i32_0 = arith.constant 0 : i32
    return %arg0, %c0_i32 : i32, i32
  }
}

module attributes {stable_mosaic.version = 11 : i64} {
  func.func @_fr_kernel(%arg0: i32, %arg1: i32, %arg2: memref<1x16x16xbf16, #tpu.memory_space<vmem>>, %arg3: memref<1x16x8xbf16, #tpu.memory_space<vmem>>, %arg4: memref<1x1x8xf32, #tpu.memory_space<vmem>>, %arg5: memref<1x16x8xbf16, #tpu.memory_space<vmem>>) attributes {dimension_semantics = [#tpu.dimension_semantics<parallel>, #tpu.dimension_semantics<parallel>], iteration_bounds = array<i64: 2, 1>, scalar_prefetch = 0 : i64, scratch_operands = 0 : i64, tpu.core_type = #tpu.core_type<tc>, window_params = [{transform_indices = @transform_0, window_bounds = array<i64: 1, 16, 16>}, {transform_indices = @transform_1, window_bounds = array<i64: 1, 16, 8>}, {transform_indices = @transform_2, window_bounds = array<i64: 1, 1, 8>}, {transform_indices = @transform_3, window_bounds = array<i64: 1, 16, 8>}]} {
    %c0 = arith.constant 0 : index
    %c0_0 = arith.constant 0 : index
    %c0_1 = arith.constant 0 : index
    %0 = vector.load %arg2[%c0, %c0_0, %c0_1] : memref<1x16x16xbf16, #tpu.memory_space<vmem>>, vector<1x16x16xbf16>
    %1 = vector.shape_cast %0 : vector<1x16x16xbf16> to vector<16x16xbf16>
    %c0_2 = arith.constant 0 : index
    %c0_3 = arith.constant 0 : index
    %c0_4 = arith.constant 0 : index
    %2 = vector.load %arg3[%c0_2, %c0_3, %c0_4] : memref<1x16x8xbf16, #tpu.memory_space<vmem>>, vector<1x16x8xbf16>
    %3 = vector.shape_cast %2 : vector<1x16x8xbf16> to vector<16x8xbf16>
    %cst = arith.constant dense<0.000000e+00> : vector<16x8xf32>
    %4 = tpu.matmul %1, %3, %cst {dimension_numbers = #tpu.dot_dimension_numbers<[1], [0], [0], [1], [0, 0, 1, 1], [], []>} : vector<16x16xbf16>, vector<16x8xbf16>, vector<16x8xf32> -> vector<16x8xf32>
    %c0_5 = arith.constant 0 : index
    %c0_6 = arith.constant 0 : index
    %c0_7 = arith.constant 0 : index
    %5 = vector.load %arg4[%c0_5, %c0_6, %c0_7] : memref<1x1x8xf32, #tpu.memory_space<vmem>>, vector<1x1x8xf32>
    %6 = vector.shape_cast %5 : vector<1x1x8xf32> to vector<1x8xf32>
    %7 = vector.broadcast %6 : vector<1x8xf32> to vector<16x8xf32>
    %8 = arith.addf %4, %7 : vector<16x8xf32>
    %9 = arith.truncf %8 : vector<16x8xf32> to vector<16x8xbf16>
    %c0_8 = arith.constant 0 : index
    %c0_9 = arith.constant 0 : index
    %c0_10 = arith.constant 0 : index
    %10 = vector.load %arg5[%c0_8, %c0_9, %c0_10] : memref<1x16x8xbf16, #tpu.memory_space<vmem>>, vector<1x16x8xbf16>
    %11 = vector.shape_cast %10 : vector<1x16x8xbf16> to vector<16x8xbf16>
    %12 = vector.shape_cast %9 : vector<16x8xbf16> to vector<1x16x8xbf16>
    tpu.vector_store %arg5[%c0_8, %c0_9, %c0_10], %12 {strides = array<i32>} : memref<1x16x8xbf16, #tpu.memory_space<vmem>>, vector<1x16x8xbf16>,
    return
  }
  func.func @transform_0(%arg0: i32, %arg1: i32) -> (i32, i32, i32) {
    %c0_i32 = arith.constant 0 : i32
    %c0_i32_0 = arith.constant 0 : i32
    return %arg0, %arg1, %c0_i32 : i32, i32, i32
  }
  func.func @transform_1(%arg0: i32, %arg1: i32) -> (i32, i32, i32) {
    %c0_i32 = arith.constant 0 : i32
    %c0_i32_0 = arith.constant 0 : i32
    %c0_i32_1 = arith.constant 0 : i32
    return %arg0, %c0_i32, %c0_i32_0 : i32, i32, i32
  }
  func.func @transform_2(%arg0: i32, %arg1: i32) -> (i32, i32, i32) {
    %c0_i32 = arith.constant 0 : i32
    %c0_i32_0 = arith.constant 0 : i32
    %c0_i32_1 = arith.constant 0 : i32
    return %arg0, %c0_i32, %c0_i32_0 : i32, i32, i32
  }
  func.func @transform_3(%arg0: i32, %arg1: i32) -> (i32, i32, i32) {
    %c0_i32 = arith.constant 0 : i32
    %c0_i32_0 = arith.constant 0 : i32
    return %arg0, %arg1, %c0_i32 : i32, i32, i32
  }
}

module attributes {stable_mosaic.version = 11 : i64} {
  func.func @_matmul_bias_kernel(%arg0: i32, %arg1: memref<16x8xbf16, #tpu.memory_space<vmem>>, %arg2: memref<8x16xbf16, #tpu.memory_space<vmem>>, %arg3: memref<1x16xf32, #tpu.memory_space<vmem>>, %arg4: memref<16x16xbf16, #tpu.memory_space<vmem>>) attributes {dimension_semantics = [#tpu.dimension_semantics<parallel>], iteration_bounds = array<i64: 2>, scalar_prefetch = 0 : i64, scratch_operands = 0 : i64, tpu.core_type = #tpu.core_type<tc>, window_params = [{transform_indices = @transform_0, window_bounds = array<i64: 16, 8>}, {pipeline_mode = #tpu.pipeline_mode<synchronous>, transform_indices = @transform_1, window_bounds = array<i64: 8, 16>}, {pipeline_mode = #tpu.pipeline_mode<synchronous>, transform_indices = @transform_2, window_bounds = array<i64: 1, 16>}, {transform_indices = @transform_3, window_bounds = array<i64: 16, 16>}]} {
    %c0 = arith.constant 0 : index
    %c0_0 = arith.constant 0 : index
    %0 = vector.load %arg1[%c0, %c0_0] : memref<16x8xbf16, #tpu.memory_space<vmem>>, vector<16x8xbf16>
    %c0_1 = arith.constant 0 : index
    %c0_2 = arith.constant 0 : index
    %1 = vector.load %arg2[%c0_1, %c0_2] : memref<8x16xbf16, #tpu.memory_space<vmem>>, vector<8x16xbf16>
    %cst = arith.constant dense<0.000000e+00> : vector<16x16xf32>
    %2 = tpu.matmul %0, %1, %cst {dimension_numbers = #tpu.dot_dimension_numbers<[1], [0], [0], [1], [0, 0, 1, 1], [], []>} : vector<16x8xbf16>, vector<8x16xbf16>, vector<16x16xf32> -> vector<16x16xf32>
    %c0_3 = arith.constant 0 : index
    %c0_4 = arith.constant 0 : index
    %3 = vector.load %arg3[%c0_3, %c0_4] : memref<1x16xf32, #tpu.memory_space<vmem>>, vector<1x16xf32>
    %4 = vector.broadcast %3 : vector<1x16xf32> to vector<16x16xf32>
    %5 = arith.addf %2, %4 : vector<16x16xf32>
    %6 = arith.truncf %5 : vector<16x16xf32> to vector<16x16xbf16>
    %c0_5 = arith.constant 0 : index
    %c0_6 = arith.constant 0 : index
    %7 = vector.load %arg4[%c0_5, %c0_6] : memref<16x16xbf16, #tpu.memory_space<vmem>>, vector<16x16xbf16>
    tpu.vector_store %arg4[%c0_5, %c0_6], %6 {strides = array<i32>} : memref<16x16xbf16, #tpu.memory_space<vmem>>, vector<16x16xbf16>,
    return
  }
  func.func @transform_0(%arg0: i32) -> (i32, i32) {
    %c0_i32 = arith.constant 0 : i32
    %c0_i32_0 = arith.constant 0 : i32
    return %arg0, %c0_i32 : i32, i32
  }
  func.func @transform_1(%arg0: i32) -> (i32, i32) {
    %c0_i32 = arith.constant 0 : i32
    %c0_i32_0 = arith.constant 0 : i32
    %c0_i32_1 = arith.constant 0 : i32
    return %c0_i32, %c0_i32_0 : i32, i32
  }
  func.func @transform_2(%arg0: i32) -> (i32, i32) {
    %c0_i32 = arith.constant 0 : i32
    %c0_i32_0 = arith.constant 0 : i32
    %c0_i32_1 = arith.constant 0 : i32
    return %c0_i32, %c0_i32_0 : i32, i32
  }
  func.func @transform_3(%arg0: i32) -> (i32, i32) {
    %c0_i32 = arith.constant 0 : i32
    %c0_i32_0 = arith.constant 0 : i32
    return %arg0, %c0_i32 : i32, i32
  }
}

module attributes {stable_mosaic.version = 11 : i64} {
  func.func @_pool_kernel(%arg0: i32, %arg1: memref<9x16x16xbf16, #tpu.memory_space<vmem>>, %arg2: memref<16x1xf32, #tpu.memory_space<vmem>>, %arg3: memref<1x16xf32, #tpu.memory_space<vmem>>, %arg4: memref<1x16xf32, #tpu.memory_space<vmem>>, %arg5: memref<16x16xbf16, #tpu.memory_space<vmem>>) attributes {dimension_semantics = [#tpu.dimension_semantics<parallel>], iteration_bounds = array<i64: 1>, scalar_prefetch = 0 : i64, scratch_operands = 0 : i64, tpu.core_type = #tpu.core_type<tc>, window_params = [{transform_indices = @transform_0, window_bounds = array<i64: 9, 16, 16>}, {transform_indices = @transform_1, window_bounds = array<i64: 16, 1>}, {pipeline_mode = #tpu.pipeline_mode<synchronous>, transform_indices = @transform_2, window_bounds = array<i64: 1, 16>}, {pipeline_mode = #tpu.pipeline_mode<synchronous>, transform_indices = @transform_3, window_bounds = array<i64: 1, 16>}, {transform_indices = @transform_4, window_bounds = array<i64: 16, 16>}]} {
    %c0 = arith.constant 0 : index
    %c0_0 = arith.constant 0 : index
    %c0_1 = arith.constant 0 : index
    %0 = vector.load %arg1[%c0, %c0_0, %c0_1] : memref<9x16x16xbf16, #tpu.memory_space<vmem>>, vector<1x16x16xbf16>
    %1 = vector.shape_cast %0 : vector<1x16x16xbf16> to vector<16x16xbf16>
    %2 = arith.extf %1 : vector<16x16xbf16> to vector<16x16xf32>
    %c1 = arith.constant 1 : index
    %c0_2 = arith.constant 0 : index
    %c0_3 = arith.constant 0 : index
    %3 = vector.load %arg1[%c1, %c0_2, %c0_3] : memref<9x16x16xbf16, #tpu.memory_space<vmem>>, vector<1x16x16xbf16>
    %4 = vector.shape_cast %3 : vector<1x16x16xbf16> to vector<16x16xbf16>
    %5 = arith.extf %4 : vector<16x16xbf16> to vector<16x16xf32>
    %6 = arith.addf %2, %5 : vector<16x16xf32>
    %c2 = arith.constant 2 : index
    %c0_4 = arith.constant 0 : index
    %c0_5 = arith.constant 0 : index
    %7 = vector.load %arg1[%c2, %c0_4, %c0_5] : memref<9x16x16xbf16, #tpu.memory_space<vmem>>, vector<1x16x16xbf16>
    %8 = vector.shape_cast %7 : vector<1x16x16xbf16> to vector<16x16xbf16>
    %9 = arith.extf %8 : vector<16x16xbf16> to vector<16x16xf32>
    %10 = arith.addf %6, %9 : vector<16x16xf32>
    %c3 = arith.constant 3 : index
    %c0_6 = arith.constant 0 : index
    %c0_7 = arith.constant 0 : index
    %11 = vector.load %arg1[%c3, %c0_6, %c0_7] : memref<9x16x16xbf16, #tpu.memory_space<vmem>>, vector<1x16x16xbf16>
    %12 = vector.shape_cast %11 : vector<1x16x16xbf16> to vector<16x16xbf16>
    %13 = arith.extf %12 : vector<16x16xbf16> to vector<16x16xf32>
    %14 = arith.addf %10, %13 : vector<16x16xf32>
    %c4 = arith.constant 4 : index
    %c0_8 = arith.constant 0 : index
    %c0_9 = arith.constant 0 : index
    %15 = vector.load %arg1[%c4, %c0_8, %c0_9] : memref<9x16x16xbf16, #tpu.memory_space<vmem>>, vector<1x16x16xbf16>
    %16 = vector.shape_cast %15 : vector<1x16x16xbf16> to vector<16x16xbf16>
    %17 = arith.extf %16 : vector<16x16xbf16> to vector<16x16xf32>
    %18 = arith.addf %14, %17 : vector<16x16xf32>
    %c5 = arith.constant 5 : index
    %c0_10 = arith.constant 0 : index
    %c0_11 = arith.constant 0 : index
    %19 = vector.load %arg1[%c5, %c0_10, %c0_11] : memref<9x16x16xbf16, #tpu.memory_space<vmem>>, vector<1x16x16xbf16>
    %20 = vector.shape_cast %19 : vector<1x16x16xbf16> to vector<16x16xbf16>
    %21 = arith.extf %20 : vector<16x16xbf16> to vector<16x16xf32>
    %22 = arith.addf %18, %21 : vector<16x16xf32>
    %c6 = arith.constant 6 : index
    %c0_12 = arith.constant 0 : index
    %c0_13 = arith.constant 0 : index
    %23 = vector.load %arg1[%c6, %c0_12, %c0_13] : memref<9x16x16xbf16, #tpu.memory_space<vmem>>, vector<1x16x16xbf16>
    %24 = vector.shape_cast %23 : vector<1x16x16xbf16> to vector<16x16xbf16>
    %25 = arith.extf %24 : vector<16x16xbf16> to vector<16x16xf32>
    %26 = arith.addf %22, %25 : vector<16x16xf32>
    %c7 = arith.constant 7 : index
    %c0_14 = arith.constant 0 : index
    %c0_15 = arith.constant 0 : index
    %27 = vector.load %arg1[%c7, %c0_14, %c0_15] : memref<9x16x16xbf16, #tpu.memory_space<vmem>>, vector<1x16x16xbf16>
    %28 = vector.shape_cast %27 : vector<1x16x16xbf16> to vector<16x16xbf16>
    %29 = arith.extf %28 : vector<16x16xbf16> to vector<16x16xf32>
    %30 = arith.addf %26, %29 : vector<16x16xf32>
    %c8 = arith.constant 8 : index
    %c0_16 = arith.constant 0 : index
    %c0_17 = arith.constant 0 : index
    %31 = vector.load %arg1[%c8, %c0_16, %c0_17] : memref<9x16x16xbf16, #tpu.memory_space<vmem>>, vector<1x16x16xbf16>
    %32 = vector.shape_cast %31 : vector<1x16x16xbf16> to vector<16x16xbf16>
    %33 = arith.extf %32 : vector<16x16xbf16> to vector<16x16xf32>
    %34 = arith.addf %30, %33 : vector<16x16xf32>
    %c0_18 = arith.constant 0 : index
    %c0_19 = arith.constant 0 : index
    %35 = vector.load %arg2[%c0_18, %c0_19] : memref<16x1xf32, #tpu.memory_space<vmem>>, vector<16x1xf32>
    %36 = vector.broadcast %35 : vector<16x1xf32> to vector<16x16xf32>
    %37 = arith.mulf %34, %36 : vector<16x16xf32>
    %c0_20 = arith.constant 0 : index
    %c0_21 = arith.constant 0 : index
    %38 = vector.load %arg3[%c0_20, %c0_21] : memref<1x16xf32, #tpu.memory_space<vmem>>, vector<1x16xf32>
    %39 = vector.broadcast %38 : vector<1x16xf32> to vector<16x16xf32>
    %40 = arith.mulf %37, %39 : vector<16x16xf32>
    %c0_22 = arith.constant 0 : index
    %c0_23 = arith.constant 0 : index
    %41 = vector.load %arg4[%c0_22, %c0_23] : memref<1x16xf32, #tpu.memory_space<vmem>>, vector<1x16xf32>
    %42 = vector.broadcast %41 : vector<1x16xf32> to vector<16x16xf32>
    %43 = arith.addf %40, %42 : vector<16x16xf32>
    %44 = arith.truncf %43 : vector<16x16xf32> to vector<16x16xbf16>
    %c0_24 = arith.constant 0 : index
    %c0_25 = arith.constant 0 : index
    %45 = vector.load %arg5[%c0_24, %c0_25] : memref<16x16xbf16, #tpu.memory_space<vmem>>, vector<16x16xbf16>
    tpu.vector_store %arg5[%c0_24, %c0_25], %44 {strides = array<i32>} : memref<16x16xbf16, #tpu.memory_space<vmem>>, vector<16x16xbf16>,
    return
  }
  func.func @transform_0(%arg0: i32) -> (i32, i32, i32) {
    %c0_i32 = arith.constant 0 : i32
    %c0_i32_0 = arith.constant 0 : i32
    %c0_i32_1 = arith.constant 0 : i32
    return %c0_i32, %arg0, %c0_i32_0 : i32, i32, i32
  }
  func.func @transform_1(%arg0: i32) -> (i32, i32) {
    %c0_i32 = arith.constant 0 : i32
    %c0_i32_0 = arith.constant 0 : i32
    return %arg0, %c0_i32 : i32, i32
  }
  func.func @transform_2(%arg0: i32) -> (i32, i32) {
    %c0_i32 = arith.constant 0 : i32
    %c0_i32_0 = arith.constant 0 : i32
    %c0_i32_1 = arith.constant 0 : i32
    return %c0_i32, %c0_i32_0 : i32, i32
  }
  func.func @transform_3(%arg0: i32) -> (i32, i32) {
    %c0_i32 = arith.constant 0 : i32
    %c0_i32_0 = arith.constant 0 : i32
    %c0_i32_1 = arith.constant 0 : i32
    return %c0_i32, %c0_i32_0 : i32, i32
  }
  func.func @transform_4(%arg0: i32) -> (i32, i32) {
    %c0_i32 = arith.constant 0 : i32
    %c0_i32_0 = arith.constant 0 : i32
    return %arg0, %c0_i32 : i32, i32
  }
}

module attributes {stable_mosaic.version = 11 : i64} {
  func.func @_pool_kernel(%arg0: i32, %arg1: memref<9x16x16xbf16, #tpu.memory_space<vmem>>, %arg2: memref<1x16xf32, #tpu.memory_space<vmem>>, %arg3: memref<1x16xf32, #tpu.memory_space<vmem>>, %arg4: memref<16x16xbf16, #tpu.memory_space<vmem>>) attributes {dimension_semantics = [#tpu.dimension_semantics<parallel>], iteration_bounds = array<i64: 1>, scalar_prefetch = 0 : i64, scratch_operands = 0 : i64, tpu.core_type = #tpu.core_type<tc>, window_params = [{transform_indices = @transform_0, window_bounds = array<i64: 9, 16, 16>}, {pipeline_mode = #tpu.pipeline_mode<synchronous>, transform_indices = @transform_1, window_bounds = array<i64: 1, 16>}, {pipeline_mode = #tpu.pipeline_mode<synchronous>, transform_indices = @transform_2, window_bounds = array<i64: 1, 16>}, {transform_indices = @transform_3, window_bounds = array<i64: 16, 16>}]} {
    %c0 = arith.constant 0 : index
    %c0_0 = arith.constant 0 : index
    %c0_1 = arith.constant 0 : index
    %0 = vector.load %arg1[%c0, %c0_0, %c0_1] : memref<9x16x16xbf16, #tpu.memory_space<vmem>>, vector<1x16x16xbf16>
    %1 = vector.shape_cast %0 : vector<1x16x16xbf16> to vector<16x16xbf16>
    %c1 = arith.constant 1 : index
    %c0_2 = arith.constant 0 : index
    %c0_3 = arith.constant 0 : index
    %2 = vector.load %arg1[%c1, %c0_2, %c0_3] : memref<9x16x16xbf16, #tpu.memory_space<vmem>>, vector<1x16x16xbf16>
    %3 = vector.shape_cast %2 : vector<1x16x16xbf16> to vector<16x16xbf16>
    %4 = arith.maximumf %1, %3 : vector<16x16xbf16>
    %c2 = arith.constant 2 : index
    %c0_4 = arith.constant 0 : index
    %c0_5 = arith.constant 0 : index
    %5 = vector.load %arg1[%c2, %c0_4, %c0_5] : memref<9x16x16xbf16, #tpu.memory_space<vmem>>, vector<1x16x16xbf16>
    %6 = vector.shape_cast %5 : vector<1x16x16xbf16> to vector<16x16xbf16>
    %7 = arith.maximumf %4, %6 : vector<16x16xbf16>
    %c3 = arith.constant 3 : index
    %c0_6 = arith.constant 0 : index
    %c0_7 = arith.constant 0 : index
    %8 = vector.load %arg1[%c3, %c0_6, %c0_7] : memref<9x16x16xbf16, #tpu.memory_space<vmem>>, vector<1x16x16xbf16>
    %9 = vector.shape_cast %8 : vector<1x16x16xbf16> to vector<16x16xbf16>
    %10 = arith.maximumf %7, %9 : vector<16x16xbf16>
    %c4 = arith.constant 4 : index
    %c0_8 = arith.constant 0 : index
    %c0_9 = arith.constant 0 : index
    %11 = vector.load %arg1[%c4, %c0_8, %c0_9] : memref<9x16x16xbf16, #tpu.memory_space<vmem>>, vector<1x16x16xbf16>
    %12 = vector.shape_cast %11 : vector<1x16x16xbf16> to vector<16x16xbf16>
    %13 = arith.maximumf %10, %12 : vector<16x16xbf16>
    %c5 = arith.constant 5 : index
    %c0_10 = arith.constant 0 : index
    %c0_11 = arith.constant 0 : index
    %14 = vector.load %arg1[%c5, %c0_10, %c0_11] : memref<9x16x16xbf16, #tpu.memory_space<vmem>>, vector<1x16x16xbf16>
    %15 = vector.shape_cast %14 : vector<1x16x16xbf16> to vector<16x16xbf16>
    %16 = arith.maximumf %13, %15 : vector<16x16xbf16>
    %c6 = arith.constant 6 : index
    %c0_12 = arith.constant 0 : index
    %c0_13 = arith.constant 0 : index
    %17 = vector.load %arg1[%c6, %c0_12, %c0_13] : memref<9x16x16xbf16, #tpu.memory_space<vmem>>, vector<1x16x16xbf16>
    %18 = vector.shape_cast %17 : vector<1x16x16xbf16> to vector<16x16xbf16>
    %19 = arith.maximumf %16, %18 : vector<16x16xbf16>
    %c7 = arith.constant 7 : index
    %c0_14 = arith.constant 0 : index
    %c0_15 = arith.constant 0 : index
    %20 = vector.load %arg1[%c7, %c0_14, %c0_15] : memref<9x16x16xbf16, #tpu.memory_space<vmem>>, vector<1x16x16xbf16>
    %21 = vector.shape_cast %20 : vector<1x16x16xbf16> to vector<16x16xbf16>
    %22 = arith.maximumf %19, %21 : vector<16x16xbf16>
    %c8 = arith.constant 8 : index
    %c0_16 = arith.constant 0 : index
    %c0_17 = arith.constant 0 : index
    %23 = vector.load %arg1[%c8, %c0_16, %c0_17] : memref<9x16x16xbf16, #tpu.memory_space<vmem>>, vector<1x16x16xbf16>
    %24 = vector.shape_cast %23 : vector<1x16x16xbf16> to vector<16x16xbf16>
    %25 = arith.maximumf %22, %24 : vector<16x16xbf16>
    %26 = arith.extf %25 : vector<16x16xbf16> to vector<16x16xf32>
    %c0_18 = arith.constant 0 : index
    %c0_19 = arith.constant 0 : index
    %27 = vector.load %arg2[%c0_18, %c0_19] : memref<1x16xf32, #tpu.memory_space<vmem>>, vector<1x16xf32>
    %28 = vector.broadcast %27 : vector<1x16xf32> to vector<16x16xf32>
    %29 = arith.mulf %26, %28 : vector<16x16xf32>
    %c0_20 = arith.constant 0 : index
    %c0_21 = arith.constant 0 : index
    %30 = vector.load %arg3[%c0_20, %c0_21] : memref<1x16xf32, #tpu.memory_space<vmem>>, vector<1x16xf32>
    %31 = vector.broadcast %30 : vector<1x16xf32> to vector<16x16xf32>
    %32 = arith.addf %29, %31 : vector<16x16xf32>
    %33 = arith.truncf %32 : vector<16x16xf32> to vector<16x16xbf16>
    %c0_22 = arith.constant 0 : index
    %c0_23 = arith.constant 0 : index
    %34 = vector.load %arg4[%c0_22, %c0_23] : memref<16x16xbf16, #tpu.memory_space<vmem>>, vector<16x16xbf16>
    tpu.vector_store %arg4[%c0_22, %c0_23], %33 {strides = array<i32>} : memref<16x16xbf16, #tpu.memory_space<vmem>>, vector<16x16xbf16>,
    return
  }
  func.func @transform_0(%arg0: i32) -> (i32, i32, i32) {
    %c0_i32 = arith.constant 0 : i32
    %c0_i32_0 = arith.constant 0 : i32
    %c0_i32_1 = arith.constant 0 : i32
    return %c0_i32, %arg0, %c0_i32_0 : i32, i32, i32
  }
  func.func @transform_1(%arg0: i32) -> (i32, i32) {
    %c0_i32 = arith.constant 0 : i32
    %c0_i32_0 = arith.constant 0 : i32
    %c0_i32_1 = arith.constant 0 : i32
    return %c0_i32, %c0_i32_0 : i32, i32
  }
  func.func @transform_2(%arg0: i32) -> (i32, i32) {
    %c0_i32 = arith.constant 0 : i32
    %c0_i32_0 = arith.constant 0 : i32
    %c0_i32_1 = arith.constant 0 : i32
    return %c0_i32, %c0_i32_0 : i32, i32
  }
  func.func @transform_3(%arg0: i32) -> (i32, i32) {
    %c0_i32 = arith.constant 0 : i32
    %c0_i32_0 = arith.constant 0 : i32
    return %arg0, %c0_i32 : i32, i32
  }
}

module attributes {stable_mosaic.version = 11 : i64} {
  func.func @_matmul_bias_kernel(%arg0: i32, %arg1: memref<16x144xbf16, #tpu.memory_space<vmem>>, %arg2: memref<144x16xbf16, #tpu.memory_space<vmem>>, %arg3: memref<1x16xf32, #tpu.memory_space<vmem>>, %arg4: memref<16x16xbf16, #tpu.memory_space<vmem>>) attributes {dimension_semantics = [#tpu.dimension_semantics<parallel>], iteration_bounds = array<i64: 1>, scalar_prefetch = 0 : i64, scratch_operands = 0 : i64, tpu.core_type = #tpu.core_type<tc>, window_params = [{transform_indices = @transform_0, window_bounds = array<i64: 16, 144>}, {pipeline_mode = #tpu.pipeline_mode<synchronous>, transform_indices = @transform_1, window_bounds = array<i64: 144, 16>}, {pipeline_mode = #tpu.pipeline_mode<synchronous>, transform_indices = @transform_2, window_bounds = array<i64: 1, 16>}, {transform_indices = @transform_3, window_bounds = array<i64: 16, 16>}]} {
    %c0 = arith.constant 0 : index
    %c0_0 = arith.constant 0 : index
    %0 = vector.load %arg1[%c0, %c0_0] : memref<16x144xbf16, #tpu.memory_space<vmem>>, vector<16x144xbf16>
    %c0_1 = arith.constant 0 : index
    %c0_2 = arith.constant 0 : index
    %1 = vector.load %arg2[%c0_1, %c0_2] : memref<144x16xbf16, #tpu.memory_space<vmem>>, vector<144x16xbf16>
    %cst = arith.constant dense<0.000000e+00> : vector<16x16xf32>
    %2 = tpu.matmul %0, %1, %cst {dimension_numbers = #tpu.dot_dimension_numbers<[1], [0], [0], [1], [0, 0, 1, 1], [], []>} : vector<16x144xbf16>, vector<144x16xbf16>, vector<16x16xf32> -> vector<16x16xf32>
    %c0_3 = arith.constant 0 : index
    %c0_4 = arith.constant 0 : index
    %3 = vector.load %arg3[%c0_3, %c0_4] : memref<1x16xf32, #tpu.memory_space<vmem>>, vector<1x16xf32>
    %4 = vector.broadcast %3 : vector<1x16xf32> to vector<16x16xf32>
    %5 = arith.addf %2, %4 : vector<16x16xf32>
    %6 = arith.truncf %5 : vector<16x16xf32> to vector<16x16xbf16>
    %c0_5 = arith.constant 0 : index
    %c0_6 = arith.constant 0 : index
    %7 = vector.load %arg4[%c0_5, %c0_6] : memref<16x16xbf16, #tpu.memory_space<vmem>>, vector<16x16xbf16>
    tpu.vector_store %arg4[%c0_5, %c0_6], %6 {strides = array<i32>} : memref<16x16xbf16, #tpu.memory_space<vmem>>, vector<16x16xbf16>,
    return
  }
  func.func @transform_0(%arg0: i32) -> (i32, i32) {
    %c0_i32 = arith.constant 0 : i32
    %c0_i32_0 = arith.constant 0 : i32
    return %arg0, %c0_i32 : i32, i32
  }
  func.func @transform_1(%arg0: i32) -> (i32, i32) {
    %c0_i32 = arith.constant 0 : i32
    %c0_i32_0 = arith.constant 0 : i32
    %c0_i32_1 = arith.constant 0 : i32
    return %c0_i32, %c0_i32_0 : i32, i32
  }
  func.func @transform_2(%arg0: i32) -> (i32, i32) {
    %c0_i32 = arith.constant 0 : i32
    %c0_i32_0 = arith.constant 0 : i32
    %c0_i32_1 = arith.constant 0 : i32
    return %c0_i32, %c0_i32_0 : i32, i32
  }
  func.func @transform_3(%arg0: i32) -> (i32, i32) {
    %c0_i32 = arith.constant 0 : i32
    %c0_i32_0 = arith.constant 0 : i32
    return %arg0, %c0_i32 : i32, i32
  }
}

module attributes {stable_mosaic.version = 11 : i64} {
  func.func @_fr_kernel(%arg0: i32, %arg1: i32, %arg2: memref<1x16x32xbf16, #tpu.memory_space<vmem>>, %arg3: memref<1x32x16xbf16, #tpu.memory_space<vmem>>, %arg4: memref<1x1x16xf32, #tpu.memory_space<vmem>>, %arg5: memref<1x16x16xbf16, #tpu.memory_space<vmem>>) attributes {dimension_semantics = [#tpu.dimension_semantics<parallel>, #tpu.dimension_semantics<parallel>], iteration_bounds = array<i64: 2, 1>, scalar_prefetch = 0 : i64, scratch_operands = 0 : i64, tpu.core_type = #tpu.core_type<tc>, window_params = [{transform_indices = @transform_0, window_bounds = array<i64: 1, 16, 32>}, {transform_indices = @transform_1, window_bounds = array<i64: 1, 32, 16>}, {transform_indices = @transform_2, window_bounds = array<i64: 1, 1, 16>}, {transform_indices = @transform_3, window_bounds = array<i64: 1, 16, 16>}]} {
    %c0 = arith.constant 0 : index
    %c0_0 = arith.constant 0 : index
    %c0_1 = arith.constant 0 : index
    %0 = vector.load %arg2[%c0, %c0_0, %c0_1] : memref<1x16x32xbf16, #tpu.memory_space<vmem>>, vector<1x16x32xbf16>
    %1 = vector.shape_cast %0 : vector<1x16x32xbf16> to vector<16x32xbf16>
    %c0_2 = arith.constant 0 : index
    %c0_3 = arith.constant 0 : index
    %c0_4 = arith.constant 0 : index
    %2 = vector.load %arg3[%c0_2, %c0_3, %c0_4] : memref<1x32x16xbf16, #tpu.memory_space<vmem>>, vector<1x32x16xbf16>
    %3 = vector.shape_cast %2 : vector<1x32x16xbf16> to vector<32x16xbf16>
    %cst = arith.constant dense<0.000000e+00> : vector<16x16xf32>
    %4 = tpu.matmul %1, %3, %cst {dimension_numbers = #tpu.dot_dimension_numbers<[1], [0], [0], [1], [0, 0, 1, 1], [], []>} : vector<16x32xbf16>, vector<32x16xbf16>, vector<16x16xf32> -> vector<16x16xf32>
    %c0_5 = arith.constant 0 : index
    %c0_6 = arith.constant 0 : index
    %c0_7 = arith.constant 0 : index
    %5 = vector.load %arg4[%c0_5, %c0_6, %c0_7] : memref<1x1x16xf32, #tpu.memory_space<vmem>>, vector<1x1x16xf32>
    %6 = vector.shape_cast %5 : vector<1x1x16xf32> to vector<1x16xf32>
    %7 = vector.broadcast %6 : vector<1x16xf32> to vector<16x16xf32>
    %8 = arith.addf %4, %7 : vector<16x16xf32>
    %9 = arith.truncf %8 : vector<16x16xf32> to vector<16x16xbf16>
    %c0_8 = arith.constant 0 : index
    %c0_9 = arith.constant 0 : index
    %c0_10 = arith.constant 0 : index
    %10 = vector.load %arg5[%c0_8, %c0_9, %c0_10] : memref<1x16x16xbf16, #tpu.memory_space<vmem>>, vector<1x16x16xbf16>
    %11 = vector.shape_cast %10 : vector<1x16x16xbf16> to vector<16x16xbf16>
    %12 = vector.shape_cast %9 : vector<16x16xbf16> to vector<1x16x16xbf16>
    tpu.vector_store %arg5[%c0_8, %c0_9, %c0_10], %12 {strides = array<i32>} : memref<1x16x16xbf16, #tpu.memory_space<vmem>>, vector<1x16x16xbf16>,
    return
  }
  func.func @transform_0(%arg0: i32, %arg1: i32) -> (i32, i32, i32) {
    %c0_i32 = arith.constant 0 : i32
    %c0_i32_0 = arith.constant 0 : i32
    return %arg0, %arg1, %c0_i32 : i32, i32, i32
  }
  func.func @transform_1(%arg0: i32, %arg1: i32) -> (i32, i32, i32) {
    %c0_i32 = arith.constant 0 : i32
    %c0_i32_0 = arith.constant 0 : i32
    %c0_i32_1 = arith.constant 0 : i32
    return %arg0, %c0_i32, %c0_i32_0 : i32, i32, i32
  }
  func.func @transform_2(%arg0: i32, %arg1: i32) -> (i32, i32, i32) {
    %c0_i32 = arith.constant 0 : i32
    %c0_i32_0 = arith.constant 0 : i32
    %c0_i32_1 = arith.constant 0 : i32
    return %arg0, %c0_i32, %c0_i32_0 : i32, i32, i32
  }
  func.func @transform_3(%arg0: i32, %arg1: i32) -> (i32, i32, i32) {
    %c0_i32 = arith.constant 0 : i32
    %c0_i32_0 = arith.constant 0 : i32
    return %arg0, %arg1, %c0_i32 : i32, i32, i32
  }
}

module attributes {stable_mosaic.version = 11 : i64} {
  func.func @_matmul_bias_kernel(%arg0: i32, %arg1: memref<16x32xbf16, #tpu.memory_space<vmem>>, %arg2: memref<32x32xbf16, #tpu.memory_space<vmem>>, %arg3: memref<1x32xf32, #tpu.memory_space<vmem>>, %arg4: memref<16x32xbf16, #tpu.memory_space<vmem>>) attributes {dimension_semantics = [#tpu.dimension_semantics<parallel>], iteration_bounds = array<i64: 1>, scalar_prefetch = 0 : i64, scratch_operands = 0 : i64, tpu.core_type = #tpu.core_type<tc>, window_params = [{transform_indices = @transform_0, window_bounds = array<i64: 16, 32>}, {pipeline_mode = #tpu.pipeline_mode<synchronous>, transform_indices = @transform_1, window_bounds = array<i64: 32, 32>}, {pipeline_mode = #tpu.pipeline_mode<synchronous>, transform_indices = @transform_2, window_bounds = array<i64: 1, 32>}, {transform_indices = @transform_3, window_bounds = array<i64: 16, 32>}]} {
    %c0 = arith.constant 0 : index
    %c0_0 = arith.constant 0 : index
    %0 = vector.load %arg1[%c0, %c0_0] : memref<16x32xbf16, #tpu.memory_space<vmem>>, vector<16x32xbf16>
    %c0_1 = arith.constant 0 : index
    %c0_2 = arith.constant 0 : index
    %1 = vector.load %arg2[%c0_1, %c0_2] : memref<32x32xbf16, #tpu.memory_space<vmem>>, vector<32x32xbf16>
    %cst = arith.constant dense<0.000000e+00> : vector<16x32xf32>
    %2 = tpu.matmul %0, %1, %cst {dimension_numbers = #tpu.dot_dimension_numbers<[1], [0], [0], [1], [0, 0, 1, 1], [], []>} : vector<16x32xbf16>, vector<32x32xbf16>, vector<16x32xf32> -> vector<16x32xf32>
    %c0_3 = arith.constant 0 : index
    %c0_4 = arith.constant 0 : index
    %3 = vector.load %arg3[%c0_3, %c0_4] : memref<1x32xf32, #tpu.memory_space<vmem>>, vector<1x32xf32>
    %4 = vector.broadcast %3 : vector<1x32xf32> to vector<16x32xf32>
    %5 = arith.addf %2, %4 : vector<16x32xf32>
    %6 = arith.truncf %5 : vector<16x32xf32> to vector<16x32xbf16>
    %c0_5 = arith.constant 0 : index
    %c0_6 = arith.constant 0 : index
    %7 = vector.load %arg4[%c0_5, %c0_6] : memref<16x32xbf16, #tpu.memory_space<vmem>>, vector<16x32xbf16>
    tpu.vector_store %arg4[%c0_5, %c0_6], %6 {strides = array<i32>} : memref<16x32xbf16, #tpu.memory_space<vmem>>, vector<16x32xbf16>,
    return
  }
  func.func @transform_0(%arg0: i32) -> (i32, i32) {
    %c0_i32 = arith.constant 0 : i32
    %c0_i32_0 = arith.constant 0 : i32
    return %arg0, %c0_i32 : i32, i32
  }
  func.func @transform_1(%arg0: i32) -> (i32, i32) {
    %c0_i32 = arith.constant 0 : i32
    %c0_i32_0 = arith.constant 0 : i32
    %c0_i32_1 = arith.constant 0 : i32
    return %c0_i32, %c0_i32_0 : i32, i32
  }
  func.func @transform_2(%arg0: i32) -> (i32, i32) {
    %c0_i32 = arith.constant 0 : i32
    %c0_i32_0 = arith.constant 0 : i32
    %c0_i32_1 = arith.constant 0 : i32
    return %c0_i32, %c0_i32_0 : i32, i32
  }
  func.func @transform_3(%arg0: i32) -> (i32, i32) {
    %c0_i32 = arith.constant 0 : i32
    %c0_i32_0 = arith.constant 0 : i32
    return %arg0, %c0_i32 : i32, i32
  }
}

module attributes {stable_mosaic.version = 11 : i64} {
  func.func @_fr_kernel(%arg0: i32, %arg1: i32, %arg2: memref<1x16x16xbf16, #tpu.memory_space<vmem>>, %arg3: memref<1x16x16xbf16, #tpu.memory_space<vmem>>, %arg4: memref<1x1x16xf32, #tpu.memory_space<vmem>>, %arg5: memref<1x16x16xbf16, #tpu.memory_space<vmem>>) attributes {dimension_semantics = [#tpu.dimension_semantics<parallel>, #tpu.dimension_semantics<parallel>], iteration_bounds = array<i64: 2, 1>, scalar_prefetch = 0 : i64, scratch_operands = 0 : i64, tpu.core_type = #tpu.core_type<tc>, window_params = [{transform_indices = @transform_0, window_bounds = array<i64: 1, 16, 16>}, {transform_indices = @transform_1, window_bounds = array<i64: 1, 16, 16>}, {transform_indices = @transform_2, window_bounds = array<i64: 1, 1, 16>}, {transform_indices = @transform_3, window_bounds = array<i64: 1, 16, 16>}]} {
    %c0 = arith.constant 0 : index
    %c0_0 = arith.constant 0 : index
    %c0_1 = arith.constant 0 : index
    %0 = vector.load %arg2[%c0, %c0_0, %c0_1] : memref<1x16x16xbf16, #tpu.memory_space<vmem>>, vector<1x16x16xbf16>
    %1 = vector.shape_cast %0 : vector<1x16x16xbf16> to vector<16x16xbf16>
    %c0_2 = arith.constant 0 : index
    %c0_3 = arith.constant 0 : index
    %c0_4 = arith.constant 0 : index
    %2 = vector.load %arg3[%c0_2, %c0_3, %c0_4] : memref<1x16x16xbf16, #tpu.memory_space<vmem>>, vector<1x16x16xbf16>
    %3 = vector.shape_cast %2 : vector<1x16x16xbf16> to vector<16x16xbf16>
    %cst = arith.constant dense<0.000000e+00> : vector<16x16xf32>
    %4 = tpu.matmul %1, %3, %cst {dimension_numbers = #tpu.dot_dimension_numbers<[1], [0], [0], [1], [0, 0, 1, 1], [], []>} : vector<16x16xbf16>, vector<16x16xbf16>, vector<16x16xf32> -> vector<16x16xf32>
    %c0_5 = arith.constant 0 : index
    %c0_6 = arith.constant 0 : index
    %c0_7 = arith.constant 0 : index
    %5 = vector.load %arg4[%c0_5, %c0_6, %c0_7] : memref<1x1x16xf32, #tpu.memory_space<vmem>>, vector<1x1x16xf32>
    %6 = vector.shape_cast %5 : vector<1x1x16xf32> to vector<1x16xf32>
    %7 = vector.broadcast %6 : vector<1x16xf32> to vector<16x16xf32>
    %8 = arith.addf %4, %7 : vector<16x16xf32>
    %9 = arith.truncf %8 : vector<16x16xf32> to vector<16x16xbf16>
    %c0_8 = arith.constant 0 : index
    %c0_9 = arith.constant 0 : index
    %c0_10 = arith.constant 0 : index
    %10 = vector.load %arg5[%c0_8, %c0_9, %c0_10] : memref<1x16x16xbf16, #tpu.memory_space<vmem>>, vector<1x16x16xbf16>
    %11 = vector.shape_cast %10 : vector<1x16x16xbf16> to vector<16x16xbf16>
    %12 = vector.shape_cast %9 : vector<16x16xbf16> to vector<1x16x16xbf16>
    tpu.vector_store %arg5[%c0_8, %c0_9, %c0_10], %12 {strides = array<i32>} : memref<1x16x16xbf16, #tpu.memory_space<vmem>>, vector<1x16x16xbf16>,
    return
  }
  func.func @transform_0(%arg0: i32, %arg1: i32) -> (i32, i32, i32) {
    %c0_i32 = arith.constant 0 : i32
    %c0_i32_0 = arith.constant 0 : i32
    return %arg0, %arg1, %c0_i32 : i32, i32, i32
  }
  func.func @transform_1(%arg0: i32, %arg1: i32) -> (i32, i32, i32) {
    %c0_i32 = arith.constant 0 : i32
    %c0_i32_0 = arith.constant 0 : i32
    %c0_i32_1 = arith.constant 0 : i32
    return %arg0, %c0_i32, %c0_i32_0 : i32, i32, i32
  }
  func.func @transform_2(%arg0: i32, %arg1: i32) -> (i32, i32, i32) {
    %c0_i32 = arith.constant 0 : i32
    %c0_i32_0 = arith.constant 0 : i32
    %c0_i32_1 = arith.constant 0 : i32
    return %arg0, %c0_i32, %c0_i32_0 : i32, i32, i32
  }
  func.func @transform_3(%arg0: i32, %arg1: i32) -> (i32, i32, i32) {
    %c0_i32 = arith.constant 0 : i32
    %c0_i32_0 = arith.constant 0 : i32
    return %arg0, %arg1, %c0_i32 : i32, i32, i32
  }
}

module attributes {stable_mosaic.version = 11 : i64} {
  func.func @_pool_kernel(%arg0: i32, %arg1: memref<9x16x32xbf16, #tpu.memory_space<vmem>>, %arg2: memref<1x32xf32, #tpu.memory_space<vmem>>, %arg3: memref<1x32xf32, #tpu.memory_space<vmem>>, %arg4: memref<16x32xbf16, #tpu.memory_space<vmem>>) attributes {dimension_semantics = [#tpu.dimension_semantics<parallel>], iteration_bounds = array<i64: 1>, scalar_prefetch = 0 : i64, scratch_operands = 0 : i64, tpu.core_type = #tpu.core_type<tc>, window_params = [{transform_indices = @transform_0, window_bounds = array<i64: 9, 16, 32>}, {pipeline_mode = #tpu.pipeline_mode<synchronous>, transform_indices = @transform_1, window_bounds = array<i64: 1, 32>}, {pipeline_mode = #tpu.pipeline_mode<synchronous>, transform_indices = @transform_2, window_bounds = array<i64: 1, 32>}, {transform_indices = @transform_3, window_bounds = array<i64: 16, 32>}]} {
    %c0 = arith.constant 0 : index
    %c0_0 = arith.constant 0 : index
    %c0_1 = arith.constant 0 : index
    %0 = vector.load %arg1[%c0, %c0_0, %c0_1] : memref<9x16x32xbf16, #tpu.memory_space<vmem>>, vector<1x16x32xbf16>
    %1 = vector.shape_cast %0 : vector<1x16x32xbf16> to vector<16x32xbf16>
    %c1 = arith.constant 1 : index
    %c0_2 = arith.constant 0 : index
    %c0_3 = arith.constant 0 : index
    %2 = vector.load %arg1[%c1, %c0_2, %c0_3] : memref<9x16x32xbf16, #tpu.memory_space<vmem>>, vector<1x16x32xbf16>
    %3 = vector.shape_cast %2 : vector<1x16x32xbf16> to vector<16x32xbf16>
    %4 = arith.maximumf %1, %3 : vector<16x32xbf16>
    %c2 = arith.constant 2 : index
    %c0_4 = arith.constant 0 : index
    %c0_5 = arith.constant 0 : index
    %5 = vector.load %arg1[%c2, %c0_4, %c0_5] : memref<9x16x32xbf16, #tpu.memory_space<vmem>>, vector<1x16x32xbf16>
    %6 = vector.shape_cast %5 : vector<1x16x32xbf16> to vector<16x32xbf16>
    %7 = arith.maximumf %4, %6 : vector<16x32xbf16>
    %c3 = arith.constant 3 : index
    %c0_6 = arith.constant 0 : index
    %c0_7 = arith.constant 0 : index
    %8 = vector.load %arg1[%c3, %c0_6, %c0_7] : memref<9x16x32xbf16, #tpu.memory_space<vmem>>, vector<1x16x32xbf16>
    %9 = vector.shape_cast %8 : vector<1x16x32xbf16> to vector<16x32xbf16>
    %10 = arith.maximumf %7, %9 : vector<16x32xbf16>
    %c4 = arith.constant 4 : index
    %c0_8 = arith.constant 0 : index
    %c0_9 = arith.constant 0 : index
    %11 = vector.load %arg1[%c4, %c0_8, %c0_9] : memref<9x16x32xbf16, #tpu.memory_space<vmem>>, vector<1x16x32xbf16>
    %12 = vector.shape_cast %11 : vector<1x16x32xbf16> to vector<16x32xbf16>
    %13 = arith.maximumf %10, %12 : vector<16x32xbf16>
    %c5 = arith.constant 5 : index
    %c0_10 = arith.constant 0 : index
    %c0_11 = arith.constant 0 : index
    %14 = vector.load %arg1[%c5, %c0_10, %c0_11] : memref<9x16x32xbf16, #tpu.memory_space<vmem>>, vector<1x16x32xbf16>
    %15 = vector.shape_cast %14 : vector<1x16x32xbf16> to vector<16x32xbf16>
    %16 = arith.maximumf %13, %15 : vector<16x32xbf16>
    %c6 = arith.constant 6 : index
    %c0_12 = arith.constant 0 : index
    %c0_13 = arith.constant 0 : index
    %17 = vector.load %arg1[%c6, %c0_12, %c0_13] : memref<9x16x32xbf16, #tpu.memory_space<vmem>>, vector<1x16x32xbf16>
    %18 = vector.shape_cast %17 : vector<1x16x32xbf16> to vector<16x32xbf16>
    %19 = arith.maximumf %16, %18 : vector<16x32xbf16>
    %c7 = arith.constant 7 : index
    %c0_14 = arith.constant 0 : index
    %c0_15 = arith.constant 0 : index
    %20 = vector.load %arg1[%c7, %c0_14, %c0_15] : memref<9x16x32xbf16, #tpu.memory_space<vmem>>, vector<1x16x32xbf16>
    %21 = vector.shape_cast %20 : vector<1x16x32xbf16> to vector<16x32xbf16>
    %22 = arith.maximumf %19, %21 : vector<16x32xbf16>
    %c8 = arith.constant 8 : index
    %c0_16 = arith.constant 0 : index
    %c0_17 = arith.constant 0 : index
    %23 = vector.load %arg1[%c8, %c0_16, %c0_17] : memref<9x16x32xbf16, #tpu.memory_space<vmem>>, vector<1x16x32xbf16>
    %24 = vector.shape_cast %23 : vector<1x16x32xbf16> to vector<16x32xbf16>
    %25 = arith.maximumf %22, %24 : vector<16x32xbf16>
    %26 = arith.extf %25 : vector<16x32xbf16> to vector<16x32xf32>
    %c0_18 = arith.constant 0 : index
    %c0_19 = arith.constant 0 : index
    %27 = vector.load %arg2[%c0_18, %c0_19] : memref<1x32xf32, #tpu.memory_space<vmem>>, vector<1x32xf32>
    %28 = vector.broadcast %27 : vector<1x32xf32> to vector<16x32xf32>
    %29 = arith.mulf %26, %28 : vector<16x32xf32>
    %c0_20 = arith.constant 0 : index
    %c0_21 = arith.constant 0 : index
    %30 = vector.load %arg3[%c0_20, %c0_21] : memref<1x32xf32, #tpu.memory_space<vmem>>, vector<1x32xf32>
    %31 = vector.broadcast %30 : vector<1x32xf32> to vector<16x32xf32>
    %32 = arith.addf %29, %31 : vector<16x32xf32>
    %33 = arith.truncf %32 : vector<16x32xf32> to vector<16x32xbf16>
    %c0_22 = arith.constant 0 : index
    %c0_23 = arith.constant 0 : index
    %34 = vector.load %arg4[%c0_22, %c0_23] : memref<16x32xbf16, #tpu.memory_space<vmem>>, vector<16x32xbf16>
    tpu.vector_store %arg4[%c0_22, %c0_23], %33 {strides = array<i32>} : memref<16x32xbf16, #tpu.memory_space<vmem>>, vector<16x32xbf16>,
    return
  }
  func.func @transform_0(%arg0: i32) -> (i32, i32, i32) {
    %c0_i32 = arith.constant 0 : i32
    %c0_i32_0 = arith.constant 0 : i32
    %c0_i32_1 = arith.constant 0 : i32
    return %c0_i32, %arg0, %c0_i32_0 : i32, i32, i32
  }
  func.func @transform_1(%arg0: i32) -> (i32, i32) {
    %c0_i32 = arith.constant 0 : i32
    %c0_i32_0 = arith.constant 0 : i32
    %c0_i32_1 = arith.constant 0 : i32
    return %c0_i32, %c0_i32_0 : i32, i32
  }
  func.func @transform_2(%arg0: i32) -> (i32, i32) {
    %c0_i32 = arith.constant 0 : i32
    %c0_i32_0 = arith.constant 0 : i32
    %c0_i32_1 = arith.constant 0 : i32
    return %c0_i32, %c0_i32_0 : i32, i32
  }
  func.func @transform_3(%arg0: i32) -> (i32, i32) {
    %c0_i32 = arith.constant 0 : i32
    %c0_i32_0 = arith.constant 0 : i32
    return %arg0, %c0_i32 : i32, i32
  }
}

module attributes {stable_mosaic.version = 11 : i64} {
  func.func @_pool_kernel(%arg0: i32, %arg1: memref<9x16x32xbf16, #tpu.memory_space<vmem>>, %arg2: memref<16x1xf32, #tpu.memory_space<vmem>>, %arg3: memref<1x32xf32, #tpu.memory_space<vmem>>, %arg4: memref<1x32xf32, #tpu.memory_space<vmem>>, %arg5: memref<16x32xbf16, #tpu.memory_space<vmem>>) attributes {dimension_semantics = [#tpu.dimension_semantics<parallel>], iteration_bounds = array<i64: 1>, scalar_prefetch = 0 : i64, scratch_operands = 0 : i64, tpu.core_type = #tpu.core_type<tc>, window_params = [{transform_indices = @transform_0, window_bounds = array<i64: 9, 16, 32>}, {transform_indices = @transform_1, window_bounds = array<i64: 16, 1>}, {pipeline_mode = #tpu.pipeline_mode<synchronous>, transform_indices = @transform_2, window_bounds = array<i64: 1, 32>}, {pipeline_mode = #tpu.pipeline_mode<synchronous>, transform_indices = @transform_3, window_bounds = array<i64: 1, 32>}, {transform_indices = @transform_4, window_bounds = array<i64: 16, 32>}]} {
    %c0 = arith.constant 0 : index
    %c0_0 = arith.constant 0 : index
    %c0_1 = arith.constant 0 : index
    %0 = vector.load %arg1[%c0, %c0_0, %c0_1] : memref<9x16x32xbf16, #tpu.memory_space<vmem>>, vector<1x16x32xbf16>
    %1 = vector.shape_cast %0 : vector<1x16x32xbf16> to vector<16x32xbf16>
    %2 = arith.extf %1 : vector<16x32xbf16> to vector<16x32xf32>
    %c1 = arith.constant 1 : index
    %c0_2 = arith.constant 0 : index
    %c0_3 = arith.constant 0 : index
    %3 = vector.load %arg1[%c1, %c0_2, %c0_3] : memref<9x16x32xbf16, #tpu.memory_space<vmem>>, vector<1x16x32xbf16>
    %4 = vector.shape_cast %3 : vector<1x16x32xbf16> to vector<16x32xbf16>
    %5 = arith.extf %4 : vector<16x32xbf16> to vector<16x32xf32>
    %6 = arith.addf %2, %5 : vector<16x32xf32>
    %c2 = arith.constant 2 : index
    %c0_4 = arith.constant 0 : index
    %c0_5 = arith.constant 0 : index
    %7 = vector.load %arg1[%c2, %c0_4, %c0_5] : memref<9x16x32xbf16, #tpu.memory_space<vmem>>, vector<1x16x32xbf16>
    %8 = vector.shape_cast %7 : vector<1x16x32xbf16> to vector<16x32xbf16>
    %9 = arith.extf %8 : vector<16x32xbf16> to vector<16x32xf32>
    %10 = arith.addf %6, %9 : vector<16x32xf32>
    %c3 = arith.constant 3 : index
    %c0_6 = arith.constant 0 : index
    %c0_7 = arith.constant 0 : index
    %11 = vector.load %arg1[%c3, %c0_6, %c0_7] : memref<9x16x32xbf16, #tpu.memory_space<vmem>>, vector<1x16x32xbf16>
    %12 = vector.shape_cast %11 : vector<1x16x32xbf16> to vector<16x32xbf16>
    %13 = arith.extf %12 : vector<16x32xbf16> to vector<16x32xf32>
    %14 = arith.addf %10, %13 : vector<16x32xf32>
    %c4 = arith.constant 4 : index
    %c0_8 = arith.constant 0 : index
    %c0_9 = arith.constant 0 : index
    %15 = vector.load %arg1[%c4, %c0_8, %c0_9] : memref<9x16x32xbf16, #tpu.memory_space<vmem>>, vector<1x16x32xbf16>
    %16 = vector.shape_cast %15 : vector<1x16x32xbf16> to vector<16x32xbf16>
    %17 = arith.extf %16 : vector<16x32xbf16> to vector<16x32xf32>
    %18 = arith.addf %14, %17 : vector<16x32xf32>
    %c5 = arith.constant 5 : index
    %c0_10 = arith.constant 0 : index
    %c0_11 = arith.constant 0 : index
    %19 = vector.load %arg1[%c5, %c0_10, %c0_11] : memref<9x16x32xbf16, #tpu.memory_space<vmem>>, vector<1x16x32xbf16>
    %20 = vector.shape_cast %19 : vector<1x16x32xbf16> to vector<16x32xbf16>
    %21 = arith.extf %20 : vector<16x32xbf16> to vector<16x32xf32>
    %22 = arith.addf %18, %21 : vector<16x32xf32>
    %c6 = arith.constant 6 : index
    %c0_12 = arith.constant 0 : index
    %c0_13 = arith.constant 0 : index
    %23 = vector.load %arg1[%c6, %c0_12, %c0_13] : memref<9x16x32xbf16, #tpu.memory_space<vmem>>, vector<1x16x32xbf16>
    %24 = vector.shape_cast %23 : vector<1x16x32xbf16> to vector<16x32xbf16>
    %25 = arith.extf %24 : vector<16x32xbf16> to vector<16x32xf32>
    %26 = arith.addf %22, %25 : vector<16x32xf32>
    %c7 = arith.constant 7 : index
    %c0_14 = arith.constant 0 : index
    %c0_15 = arith.constant 0 : index
    %27 = vector.load %arg1[%c7, %c0_14, %c0_15] : memref<9x16x32xbf16, #tpu.memory_space<vmem>>, vector<1x16x32xbf16>
    %28 = vector.shape_cast %27 : vector<1x16x32xbf16> to vector<16x32xbf16>
    %29 = arith.extf %28 : vector<16x32xbf16> to vector<16x32xf32>
    %30 = arith.addf %26, %29 : vector<16x32xf32>
    %c8 = arith.constant 8 : index
    %c0_16 = arith.constant 0 : index
    %c0_17 = arith.constant 0 : index
    %31 = vector.load %arg1[%c8, %c0_16, %c0_17] : memref<9x16x32xbf16, #tpu.memory_space<vmem>>, vector<1x16x32xbf16>
    %32 = vector.shape_cast %31 : vector<1x16x32xbf16> to vector<16x32xbf16>
    %33 = arith.extf %32 : vector<16x32xbf16> to vector<16x32xf32>
    %34 = arith.addf %30, %33 : vector<16x32xf32>
    %c0_18 = arith.constant 0 : index
    %c0_19 = arith.constant 0 : index
    %35 = vector.load %arg2[%c0_18, %c0_19] : memref<16x1xf32, #tpu.memory_space<vmem>>, vector<16x1xf32>
    %36 = vector.broadcast %35 : vector<16x1xf32> to vector<16x32xf32>
    %37 = arith.mulf %34, %36 : vector<16x32xf32>
    %c0_20 = arith.constant 0 : index
    %c0_21 = arith.constant 0 : index
    %38 = vector.load %arg3[%c0_20, %c0_21] : memref<1x32xf32, #tpu.memory_space<vmem>>, vector<1x32xf32>
    %39 = vector.broadcast %38 : vector<1x32xf32> to vector<16x32xf32>
    %40 = arith.mulf %37, %39 : vector<16x32xf32>
    %c0_22 = arith.constant 0 : index
    %c0_23 = arith.constant 0 : index
    %41 = vector.load %arg4[%c0_22, %c0_23] : memref<1x32xf32, #tpu.memory_space<vmem>>, vector<1x32xf32>
    %42 = vector.broadcast %41 : vector<1x32xf32> to vector<16x32xf32>
    %43 = arith.addf %40, %42 : vector<16x32xf32>
    %44 = arith.truncf %43 : vector<16x32xf32> to vector<16x32xbf16>
    %c0_24 = arith.constant 0 : index
    %c0_25 = arith.constant 0 : index
    %45 = vector.load %arg5[%c0_24, %c0_25] : memref<16x32xbf16, #tpu.memory_space<vmem>>, vector<16x32xbf16>
    tpu.vector_store %arg5[%c0_24, %c0_25], %44 {strides = array<i32>} : memref<16x32xbf16, #tpu.memory_space<vmem>>, vector<16x32xbf16>,
    return
  }
  func.func @transform_0(%arg0: i32) -> (i32, i32, i32) {
    %c0_i32 = arith.constant 0 : i32
    %c0_i32_0 = arith.constant 0 : i32
    %c0_i32_1 = arith.constant 0 : i32
    return %c0_i32, %arg0, %c0_i32_0 : i32, i32, i32
  }
  func.func @transform_1(%arg0: i32) -> (i32, i32) {
    %c0_i32 = arith.constant 0 : i32
    %c0_i32_0 = arith.constant 0 : i32
    return %arg0, %c0_i32 : i32, i32
  }
  func.func @transform_2(%arg0: i32) -> (i32, i32) {
    %c0_i32 = arith.constant 0 : i32
    %c0_i32_0 = arith.constant 0 : i32
    %c0_i32_1 = arith.constant 0 : i32
    return %c0_i32, %c0_i32_0 : i32, i32
  }
  func.func @transform_3(%arg0: i32) -> (i32, i32) {
    %c0_i32 = arith.constant 0 : i32
    %c0_i32_0 = arith.constant 0 : i32
    %c0_i32_1 = arith.constant 0 : i32
    return %c0_i32, %c0_i32_0 : i32, i32
  }
  func.func @transform_4(%arg0: i32) -> (i32, i32) {
    %c0_i32 = arith.constant 0 : i32
    %c0_i32_0 = arith.constant 0 : i32
    return %arg0, %c0_i32 : i32, i32
  }
}

module attributes {stable_mosaic.version = 11 : i64} {
  func.func @_matmul_bias_kernel(%arg0: i32, %arg1: memref<16x288xbf16, #tpu.memory_space<vmem>>, %arg2: memref<288x32xbf16, #tpu.memory_space<vmem>>, %arg3: memref<1x32xf32, #tpu.memory_space<vmem>>, %arg4: memref<16x32xbf16, #tpu.memory_space<vmem>>) attributes {dimension_semantics = [#tpu.dimension_semantics<parallel>], iteration_bounds = array<i64: 1>, scalar_prefetch = 0 : i64, scratch_operands = 0 : i64, tpu.core_type = #tpu.core_type<tc>, window_params = [{transform_indices = @transform_0, window_bounds = array<i64: 16, 288>}, {pipeline_mode = #tpu.pipeline_mode<synchronous>, transform_indices = @transform_1, window_bounds = array<i64: 288, 32>}, {pipeline_mode = #tpu.pipeline_mode<synchronous>, transform_indices = @transform_2, window_bounds = array<i64: 1, 32>}, {transform_indices = @transform_3, window_bounds = array<i64: 16, 32>}]} {
    %c0 = arith.constant 0 : index
    %c0_0 = arith.constant 0 : index
    %0 = vector.load %arg1[%c0, %c0_0] : memref<16x288xbf16, #tpu.memory_space<vmem>>, vector<16x288xbf16>
    %c0_1 = arith.constant 0 : index
    %c0_2 = arith.constant 0 : index
    %1 = vector.load %arg2[%c0_1, %c0_2] : memref<288x32xbf16, #tpu.memory_space<vmem>>, vector<288x32xbf16>
    %cst = arith.constant dense<0.000000e+00> : vector<16x32xf32>
    %2 = tpu.matmul %0, %1, %cst {dimension_numbers = #tpu.dot_dimension_numbers<[1], [0], [0], [1], [0, 0, 1, 1], [], []>} : vector<16x288xbf16>, vector<288x32xbf16>, vector<16x32xf32> -> vector<16x32xf32>
    %c0_3 = arith.constant 0 : index
    %c0_4 = arith.constant 0 : index
    %3 = vector.load %arg3[%c0_3, %c0_4] : memref<1x32xf32, #tpu.memory_space<vmem>>, vector<1x32xf32>
    %4 = vector.broadcast %3 : vector<1x32xf32> to vector<16x32xf32>
    %5 = arith.addf %2, %4 : vector<16x32xf32>
    %6 = arith.truncf %5 : vector<16x32xf32> to vector<16x32xbf16>
    %c0_5 = arith.constant 0 : index
    %c0_6 = arith.constant 0 : index
    %7 = vector.load %arg4[%c0_5, %c0_6] : memref<16x32xbf16, #tpu.memory_space<vmem>>, vector<16x32xbf16>
    tpu.vector_store %arg4[%c0_5, %c0_6], %6 {strides = array<i32>} : memref<16x32xbf16, #tpu.memory_space<vmem>>, vector<16x32xbf16>,
    return
  }
  func.func @transform_0(%arg0: i32) -> (i32, i32) {
    %c0_i32 = arith.constant 0 : i32
    %c0_i32_0 = arith.constant 0 : i32
    return %arg0, %c0_i32 : i32, i32
  }
  func.func @transform_1(%arg0: i32) -> (i32, i32) {
    %c0_i32 = arith.constant 0 : i32
    %c0_i32_0 = arith.constant 0 : i32
    %c0_i32_1 = arith.constant 0 : i32
    return %c0_i32, %c0_i32_0 : i32, i32
  }
  func.func @transform_2(%arg0: i32) -> (i32, i32) {
    %c0_i32 = arith.constant 0 : i32
    %c0_i32_0 = arith.constant 0 : i32
    %c0_i32_1 = arith.constant 0 : i32
    return %c0_i32, %c0_i32_0 : i32, i32
  }
  func.func @transform_3(%arg0: i32) -> (i32, i32) {
    %c0_i32 = arith.constant 0 : i32
    %c0_i32_0 = arith.constant 0 : i32
    return %arg0, %c0_i32 : i32, i32
  }
}

</mosaic_0001>

<llo_original>
// kernel: _lambda_.23
$region0: #{_lambda_.23}
  #allocation0 [shape = 'u32[]', space=smem, size = 0x4, offset = 0x4, fixed_abs, tag = 'smem constant byte address 0x4 - core index']
  #allocation1 [shape = 'u32[144,128]{1,0:T(1,128)}', space=vmem, size = 0x12000, scoped, tag = 'internal scratch']
  %s0 = inlined_call_operand.vmem [shape: bf16[512,27], index: 0, kind: input, shape index: {}]
  %s1 = inlined_call_operand.vmem [shape: bf16[27,4], index: 1, kind: input, shape index: {}]
  %s2 = inlined_call_operand.vmem [shape: f32[1,4], index: 2, kind: input, shape index: {}]
  %s3 = inlined_call_operand.vmem [shape: bf16[512,4], index: 3, kind: output, shape index: {}]
  %s4 = sld [smem:[#allocation0]]
  $region45: #{_lambda_.23} parent=0
    _
  %s6 = ssub.s32 1, %s4
  %s7 = scalar_select 0, %s6, %s4
  loop: start=0, step=1, limit=4
  $region2: #{_lambda_.23} parent=0 // loop_pre_header
    _
  $region3: #{_lambda_.23} parent=0 // loop_header
    %s9 = sphi 0, %s13
    %p10 = scmp.ge.s32.totalorder %s9, 4
    %s19 = sphi 0, %s21
    %s22 = sphi 0, %s19
    %s23 = sphi 0, %s22
    %s39 = sphi 0, %s23
    %s43 = sphi 0, %s43
    %s45 = sphi 0, %s43
    %s46 = sphi 0, %s45
    %s60 = sphi 0, %s46
    %s64 = sphi 0, %s64
    %s66 = sphi 0, %s64
    %s67 = sphi 0, %s66
    %s81 = sphi 0, %s67
    %s87 = sphi 0, %s89
    %s90 = sphi 0, %s87
    %s91 = sphi 0, %s90
    %s107 = sphi 0, %s91
  $region4: #{_lambda_.23} parent=0 // loop_header_branch
    %12 = sbr.rel (%p10) target = $region8
  $region5: #{_lambda_.23} parent=0 // loop_body
    %s14 = ssub.s32 %s9, 1
    %s15 = ssub.s32 %s9, 2
    %s16 = sadd.s32 %s9, 1
    %s17 = ssub.s32 %s9, %s16
    %p18 = scmp.eq.s32.totalorder %s17, 0
    %s20 = sadd.s32 %s19, 1
    %s21 = scalar_select %p18, %s19, %s20
    %p24 = pneg %p18
    %p25 = scmp.eq.s32.totalorder %s9, 1
    %p26 = por %p24, %p25
    %p27 = scmp.ne.s32.totalorder %s19, %s22
    %p28 = scmp.eq.s32.totalorder %s9, 0
    %p29 = por %p27, %p28
    %p30 = scmp.ne.s32.totalorder %s19, %s22
    %p31 = scmp.eq.s32.totalorder %s14, 1
    %p32 = por %p30, %p31
    %p33 = scmp.ne.s32.totalorder %s22, %s23
    %p34 = scmp.eq.s32.totalorder %s14, 0
    %p35 = por %p33, %p34
    %p36 = scmp.ne.s32.totalorder %s22, %s23
    %p37 = scmp.eq.s32.totalorder %s15, 1
    %p38 = por %p36, %p37
    %p40 = scmp.ne.s32.totalorder %s23, %s39
    %p41 = scmp.eq.s32.totalorder %s15, 0
    %p42 = por %p40, %p41
    %s44 = sadd.s32 %s43, 1
    %p47 = scmp.eq.s32.totalorder %s9, 1
    %p48 = scmp.ne.s32.totalorder %s43, %s45
    %p49 = scmp.eq.s32.totalorder %s9, 0
    %p50 = por %p48, %p49
    %p51 = scmp.ne.s32.totalorder %s43, %s45
    %p52 = scmp.eq.s32.totalorder %s14, 1
    %p53 = por %p51, %p52
    %p54 = scmp.ne.s32.totalorder %s45, %s46
    %p55 = scmp.eq.s32.totalorder %s14, 0
    %p56 = por %p54, %p55
    %p57 = scmp.ne.s32.totalorder %s45, %s46
    %p58 = scmp.eq.s32.totalorder %s15, 1
    %p59 = por %p57, %p58
    %p61 = scmp.ne.s32.totalorder %s46, %s60
    %p62 = scmp.eq.s32.totalorder %s15, 0
    %p63 = por %p61, %p62
    %s65 = sadd.s32 %s64, 1
    %p68 = scmp.eq.s32.totalorder %s9, 1
    %p69 = scmp.ne.s32.totalorder %s64, %s66
    %p70 = scmp.eq.s32.totalorder %s9, 0
    %p71 = por %p69, %p70
    %p72 = scmp.ne.s32.totalorder %s64, %s66
    %p73 = scmp.eq.s32.totalorder %s14, 1
    %p74 = por %p72, %p73
    %p75 = scmp.ne.s32.totalorder %s66, %s67
    %p76 = scmp.eq.s32.totalorder %s14, 0
    %p77 = por %p75, %p76
    %p78 = scmp.ne.s32.totalorder %s66, %s67
    %p79 = scmp.eq.s32.totalorder %s15, 1
    %p80 = por %p78, %p79
    %p82 = scmp.ne.s32.totalorder %s67, %s81
    %p83 = scmp.eq.s32.totalorder %s15, 0
    %p84 = por %p82, %p83
    %s85 = ssub.s32 %s9, %s16
    %p86 = scmp.eq.s32.totalorder %s85, 0
    %s88 = sadd.s32 %s87, 1
    %s89 = scalar_select %p86, %s87, %s88
    %p92 = pneg %p86
    %p93 = scmp.eq.s32.totalorder %s9, 1
    %p94 = por %p92, %p93
    %p95 = scmp.ne.s32.totalorder %s87, %s90
    %p96 = scmp.eq.s32.totalorder %s9, 0
    %p97 = por %p95, %p96
    %p98 = scmp.ne.s32.totalorder %s87, %s90
    %p99 = scmp.eq.s32.totalorder %s14, 1
    %p100 = por %p98, %p99
    %p101 = scmp.ne.s32.totalorder %s90, %s91
    %p102 = scmp.eq.s32.totalorder %s14, 0
    %p103 = por %p101, %p102
    %p104 = scmp.ne.s32.totalorder %s90, %s91
    %p105 = scmp.eq.s32.totalorder %s15, 1
    %p106 = por %p104, %p105
    %p108 = scmp.ne.s32.totalorder %s91, %s107
    %p109 = scmp.eq.s32.totalorder %s15, 0
    %p110 = por %p108, %p109
    %p111 = scmp.le.s32.totalorder 1, %s9
    %p112 = scmp.lt.s32.totalorder %s9, 3
    %p113 = pnand %p111, %p112
    %p114 = pneg %p113
    // Predicated region
    $region9: #{_lambda_.23} parent=5 // pred_check
      _
    $region10: #{_lambda_.23} parent=5 // pred_check_branch
      %116 = sbr.rel (%p113) target = $region12
    $region11: #{_lambda_.23} parent=5 // pred_region
      %s117 = ssub.s32 %s9, 1
      // Predicated region
      $region13: #{_lambda_.23} parent=11 // pred_check
        %p118 = pneg %p56
      $region14: #{_lambda_.23} parent=11 // pred_check_branch
        %120 = sbr.rel (%p118) target = $region16
      $region15: #{_lambda_.23} parent=11 // pred_region
        _
      $region16: #{_lambda_.23} parent=11 // pred_fallthru
        _
      // Predicated region
      $region17: #{_lambda_.23} parent=11 // pred_check
        %p121 = pneg %p77
      $region18: #{_lambda_.23} parent=11 // pred_check_branch
        %123 = sbr.rel (%p121) target = $region20
      $region19: #{_lambda_.23} parent=11 // pred_region
        _
      $region20: #{_lambda_.23} parent=11 // pred_fallthru
        _
    $region12: #{_lambda_.23} parent=5 // pred_fallthru
      _
    %p124 = scmp.lt.s32.totalorder %s9, 2
    // Predicated region
    $region21: #{_lambda_.23} parent=5 // pred_check
      %p125 = pneg %p124
    $region22: #{_lambda_.23} parent=5 // pred_check_branch
      %127 = sbr.rel (%p125) target = $region24
    $region23: #{_lambda_.23} parent=5 // pred_region
      // Predicated region
      $region25: #{_lambda_.23} parent=23 // pred_check
        %p128 = pneg %p29
      $region26: #{_lambda_.23} parent=23 // pred_check_branch
        %130 = sbr.rel (%p128) target = $region28
      $region27: #{_lambda_.23} parent=23 // pred_region
        %s131 = smul.u32 32, %s9
        %p132 = scmp.lt.s32.totalorder %s131, 63
        %s133 = scalar_select %p132, %s131, 63
        %s134 = smul.addr %s133, 4
        %s135 = scalar_lea.vmem %s0, %s134
        %s136 = smul.u32 32, %s9
      $region28: #{_lambda_.23} parent=23 // pred_fallthru
        _
    $region24: #{_lambda_.23} parent=5 // pred_fallthru
      _
    %p137 = scmp.le.s32.totalorder 1, %s9
    %p138 = scmp.lt.s32.totalorder %s9, 3
    %p139 = pnand %p137, %p138
    %p140 = pneg %p139
    // Predicated region
    $region29: #{_lambda_.23} parent=5 // pred_check
      _
    $region30: #{_lambda_.23} parent=5 // pred_check_branch
      %142 = sbr.rel (%p139) target = $region32
    $region31: #{_lambda_.23} parent=5 // pred_region
      %s143 = ssub.s32 %s9, 1
      %s144 = smul.u32 32, %s14
      %p145 = scmp.lt.s32.totalorder %s144, 63
      %s146 = scalar_select %p145, %s144, 63
      %s147 = smul.addr %s146, 4
      %s148 = scalar_lea.vmem %s0, %s147
      %p149 = pneg %p35
      %p150 = pneg %p32
      %p151 = pneg %p56
      %p152 = pneg %p53
      %p153 = pneg %p77
      %p154 = pneg %p74
      %p155 = pneg %p103
      %p156 = pneg %p100
      %s157 = smul.u32 32, %s14
      %p158 = scmp.lt.s32.totalorder %s157, 63
      %s159 = scalar_select %p158, %s157, 63
      %s160 = smul.addr %s159, 4
      %s161 = scalar_lea.vmem %s3, %s160
      %s162 = smul.u32 32, %s14
      %p163 = scmp.lt.s32.totalorder %s162, 63
      %s164 = scalar_select %p163, %s162, 63
      %s165 = smul.addr %s164, 4
      %s166 = scalar_lea.vmem %s0, %s165
      %s167 = smul.u32 32, %s14
      %s168 = smul.u32 32, %s14
      %p169 = scmp.lt.s32.totalorder %s168, 63
      %s170 = scalar_select %p169, %s168, 63
      %s171 = smul.addr %s170, 4
      %s172 = scalar_lea.vmem %s3, %s171
      %s173 = smul.u32 32, %s14
      %v175 = vld [vmem:[%s166] sm:$0xf]
      %v176 = vld [vmem:[%s166 + $0x4] sm:$0xf]
      %v177 = vld [vmem:[%s166 + $0x8] sm:$0xf]
      %v178 = vld [vmem:[%s166 + $0xc] sm:$0xf]
      %v179 = vld [vmem:[%s166 + $0x10] sm:$0xf]
      %v180 = vld [vmem:[%s166 + $0x14] sm:$0xf]
      %v181 = vld [vmem:[%s166 + $0x18] sm:$0xf]
      %v182 = vld [vmem:[%s166 + $0x1c] sm:$0xf]
      %v183 = vld [vmem:[%s166 + $0x20] sm:$0xf]
      %v184 = vld [vmem:[%s166 + $0x24] sm:$0xf]
      %v185 = vld [vmem:[%s166 + $0x28] sm:$0xf]
      %v186 = vld [vmem:[%s166 + $0x2c] sm:$0xf]
      %v187 = vld [vmem:[%s166 + $0x30] sm:$0xf]
      %v188 = vld [vmem:[%s166 + $0x34] sm:$0xf]
      %v189 = vld [vmem:[%s166 + $0x38] sm:$0xf]
      %v190 = vld [vmem:[%s166 + $0x3c] sm:$0xf]
      %v191 = vld [vmem:[%s166 + $0x40] sm:$0xf]
      %v192 = vld [vmem:[%s166 + $0x44] sm:$0xf]
      %v193 = vld [vmem:[%s166 + $0x48] sm:$0xf]
      %v194 = vld [vmem:[%s166 + $0x4c] sm:$0xf]
      %v195 = vld [vmem:[%s166 + $0x50] sm:$0xf]
      %v196 = vld [vmem:[%s166 + $0x54] sm:$0xf]
      %v197 = vld [vmem:[%s166 + $0x58] sm:$0xf]
      %v198 = vld [vmem:[%s166 + $0x5c] sm:$0xf]
      %v199 = vld [vmem:[%s166 + $0x60] sm:$0xf]
      %v200 = vld [vmem:[%s166 + $0x64] sm:$0xf]
      %v201 = vld [vmem:[%s166 + $0x68] sm:$0xf]
      %v202 = vld [vmem:[%s166 + $0x6c] sm:$0xf]
      %v203 = vld [vmem:[%s166 + $0x70] sm:$0xf]
      %v204 = vld [vmem:[%s166 + $0x74] sm:$0xf]
      %v205 = vld [vmem:[%s166 + $0x78] sm:$0xf]
      %v206 = vld [vmem:[%s166 + $0x7c] sm:$0xf]
      %v207 = vld [vmem:[%s1] sm:$0xf]
      %v208 = vld [vmem:[%s1 + $0x4] sm:$0xf]
      %v209 = vld [vmem:[%s1 + $0x8] sm:$0xf]
      %v210 = vld [vmem:[%s1 + $0xc] sm:$0x3]
      %v211 = vld [vmem:[%s2] sm:$0x1]
      %v213 = vlaneseq
      %v214 = vshrl.u32 %v213, 7
      %v215 = vsub.s32 0, %v214
      %v216 = vrot.slane %v211, %v215
      %v250 = vunpack.c.l.b16 %v175
      %v251 = vunpack.c.l.b16 %v176
      %v252 = vunpack.c.l.b16 %v177
      %v253 = vunpack.c.l.b16 %v178
      %v254 = vunpack.c.l.b16 %v179
      %v255 = vunpack.c.l.b16 %v180
      %v256 = vunpack.c.l.b16 %v181
      %v257 = vunpack.c.l.b16 %v182
      %v258 = vunpack.c.l.b16 %v183
      %v259 = vunpack.c.l.b16 %v184
      %v260 = vunpack.c.l.b16 %v185
      %v261 = vunpack.c.l.b16 %v186
      %v262 = vunpack.c.l.b16 %v187
      %v263 = vunpack.c.l.b16 %v188
      %v264 = vunpack.c.l.b16 %v189
      %v265 = vunpack.c.l.b16 %v190
      %v266 = vunpack.c.l.b16 %v191
      %v267 = vunpack.c.l.b16 %v192
      %v268 = vunpack.c.l.b16 %v193
      %v269 = vunpack.c.l.b16 %v194
      %v270 = vunpack.c.l.b16 %v195
      %v271 = vunpack.c.l.b16 %v196
      %v272 = vunpack.c.l.b16 %v197
      %v273 = vunpack.c.l.b16 %v198
      %v274 = vunpack.c.l.b16 %v199
      %v275 = vunpack.c.l.b16 %v200
      %v276 = vunpack.c.l.b16 %v201
      %v277 = vunpack.c.l.b16 %v202
      %v278 = vunpack.c.l.b16 %v203
      %v279 = vunpack.c.l.b16 %v204
      %v280 = vunpack.c.l.b16 %v205
      %v281 = vunpack.c.l.b16 %v206
      %v282 = vpack.c.b16 %v251, %v250
      %v283 = vpack.c.b16 %v253, %v252
      %v284 = vpack.c.b16 %v255, %v254
      %v285 = vpack.c.b16 %v257, %v256
      %v286 = vpack.c.b16 %v259, %v258
      %v287 = vpack.c.b16 %v261, %v260
      %v288 = vpack.c.b16 %v263, %v262
      %v289 = vpack.c.b16 %v265, %v264
      %v290 = vpack.c.b16 %v267, %v266
      %v291 = vpack.c.b16 %v269, %v268
      %v292 = vpack.c.b16 %v271, %v270
      %v293 = vpack.c.b16 %v273, %v272
      %v294 = vpack.c.b16 %v275, %v274
      %v295 = vpack.c.b16 %v277, %v276
      %v296 = vpack.c.b16 %v279, %v278
      %v297 = vpack.c.b16 %v281, %v280
      %v302 = vunpack.c.l.b16 %v207
      %v303 = vunpack.c.l.b16 %v208
      %v304 = vunpack.c.l.b16 %v209
      %v305 = vunpack.c.l.b16 %v210
      %v306 = vpack.c.b16 %v303, %v302
      %v307 = vpack.c.b16 %v305, %v304
      %vm309 = vcmask 220160
      %v311 = vsel %vm309, %v282, 0
      %v314 = vsel %vm309, %v283, 0
      %v317 = vsel %vm309, %v284, 0
      %v320 = vsel %vm309, %v285, 0
      %v323 = vsel %vm309, %v286, 0
      %v326 = vsel %vm309, %v287, 0
      %v329 = vsel %vm309, %v288, 0
      %v332 = vsel %vm309, %v289, 0
      %v335 = vsel %vm309, %v290, 0
      %v338 = vsel %vm309, %v291, 0
      %v341 = vsel %vm309, %v292, 0
      %v344 = vsel %vm309, %v293, 0
      %v347 = vsel %vm309, %v294, 0
      %v350 = vsel %vm309, %v295, 0
      %v353 = vsel %vm309, %v296, 0
      %v356 = vsel %vm309, %v297, 0
      %vm358 = vcmask 1044480
      %vm359 = vcmask 1045504
      %v360 = vsel %vm358, 4294967295, 65535
      %v361 = vsel %vm359, %v360, 0
      %v363 = vand.u32 %v307, %v361
      %365 = vmatprep.subr.bf16.mxu0 0
      %366 = vmatpush1.bf16.msra.mxu0 %v306
      %367 = vmatprep.subr.bf16.mxu0 0
      %368 = vmatpush1.bf16.msra.mxu0 %v363
      %369 = vmatprep.subr.bf16.mxu0 0
      %370 = vmatpush1.bf16.msra.mxu0 0
      %371 = vmatprep.subr.bf16.mxu0 0
      %372 = vmatpush1.bf16.msra.mxu0 0
      %373 = vmatprep.subr.bf16.mxu0 0
      %374 = vmatpush1.bf16.msra.mxu0 0
      %375 = vmatprep.subr.bf16.mxu0 0
      %376 = vmatpush1.bf16.msra.mxu0 0
      %377 = vmatprep.subr.bf16.mxu0 0
      %378 = vmatpush1.bf16.msra.mxu0 0
      %379 = vmatprep.subr.bf16.mxu0 0
      %380 = vmatpush1.bf16.msra.mxu0 0
      %381 = vmatprep.subr.bf16.mxu0 0
      %382 = vmatpush1.bf16.msra.mxu0 0
      %383 = vmatprep.subr.bf16.mxu0 0
      %384 = vmatpush1.bf16.msra.mxu0 0
      %385 = vmatprep.subr.bf16.mxu0 0
      %386 = vmatpush1.bf16.msra.mxu0 0
      %387 = vmatprep.subr.bf16.mxu0 0
      %388 = vmatpush1.bf16.msra.mxu0 0
      %389 = vmatprep.subr.bf16.mxu0 0
      %390 = vmatpush1.bf16.msra.mxu0 0
      %391 = vmatprep.subr.bf16.mxu0 0
      %392 = vmatpush1.bf16.msra.mxu0 0
      %393 = vmatprep.subr.bf16.mxu0 0
      %394 = vmatpush1.bf16.msra.mxu0 0
      %395 = vmatprep.subr.bf16.mxu0 0
      %396 = vmatpush1.bf16.msra.mxu0 0
      %397 = vmatprep.mubr.bf16.mxu0 0
      %398 = vmatmul.mubr.bf16.gmra.mrb[0].mxu0 %v311
      %v399 = vpop.f32.mrb[0].mxu0
      %v400 = vadd.f32 %v216, %v399
      %v401 = vpop.f32.mrb[0].mxu0
      %v402 = vpop.f32.mrb[0].mxu0
      %v403 = vadd.f32 %v216, %v402
      %v404 = vpop.f32.mrb[0].mxu0
      %405 = vmatprep.mubr.bf16.mxu0 0
      %406 = vmatmul.mubr.bf16.gmra.mrb[0].mxu0 %v314
      %v407 = vpop.f32.mrb[0].mxu0
      %v408 = vadd.f32 %v216, %v407
      %v409 = vpop.f32.mrb[0].mxu0
      %v410 = vpop.f32.mrb[0].mxu0
      %v411 = vadd.f32 %v216, %v410
      %v412 = vpop.f32.mrb[0].mxu0
      %413 = vmatprep.mubr.bf16.mxu0 0
      %414 = vmatmul.mubr.bf16.gmra.mrb[0].mxu0 %v317
      %v415 = vpop.f32.mrb[0].mxu0
      %v416 = vadd.f32 %v216, %v415
      %v417 = vpop.f32.mrb[0].mxu0
      %v418 = vpop.f32.mrb[0].mxu0
      %v419 = vadd.f32 %v216, %v418
      %v420 = vpop.f32.mrb[0].mxu0
      %421 = vmatprep.mubr.bf16.mxu0 0
      %422 = vmatmul.mubr.bf16.gmra.mrb[0].mxu0 %v320
      %v423 = vpop.f32.mrb[0].mxu0
      %v424 = vadd.f32 %v216, %v423
      %v425 = vpop.f32.mrb[0].mxu0
      %v426 = vpop.f32.mrb[0].mxu0
      %v427 = vadd.f32 %v216, %v426
      %v428 = vpop.f32.mrb[0].mxu0
      %429 = vmatprep.mubr.bf16.mxu0 0
      %430 = vmatmul.mubr.bf16.gmra.mrb[0].mxu0 %v323
      %v431 = vpop.f32.mrb[0].mxu0
      %v432 = vadd.f32 %v216, %v431
      %v433 = vpop.f32.mrb[0].mxu0
      %v434 = vpop.f32.mrb[0].mxu0
      %v435 = vadd.f32 %v216, %v434
      %v436 = vpop.f32.mrb[0].mxu0
      %437 = vmatprep.mubr.bf16.mxu0 0
      %438 = vmatmul.mubr.bf16.gmra.mrb[0].mxu0 %v326
      %v439 = vpop.f32.mrb[0].mxu0
      %v440 = vadd.f32 %v216, %v439
      %v441 = vpop.f32.mrb[0].mxu0
      %v442 = vpop.f32.mrb[0].mxu0
      %v443 = vadd.f32 %v216, %v442
      %v444 = vpop.f32.mrb[0].mxu0
      %445 = vmatprep.mubr.bf16.mxu0 0
      %446 = vmatmul.mubr.bf16.gmra.mrb[0].mxu0 %v329
      %v447 = vpop.f32.mrb[0].mxu0
      %v448 = vadd.f32 %v216, %v447
      %v449 = vpop.f32.mrb[0].mxu0
      %v450 = vpop.f32.mrb[0].mxu0
      %v451 = vadd.f32 %v216, %v450
      %v452 = vpop.f32.mrb[0].mxu0
      %453 = vmatprep.mubr.bf16.mxu0 0
      %454 = vmatmul.mubr.bf16.gmra.mrb[0].mxu0 %v332
      %v455 = vpop.f32.mrb[0].mxu0
      %v456 = vadd.f32 %v216, %v455
      %v457 = vpop.f32.mrb[0].mxu0
      %v458 = vpop.f32.mrb[0].mxu0
      %v459 = vadd.f32 %v216, %v458
      %v460 = vpop.f32.mrb[0].mxu0
      %461 = vmatprep.mubr.bf16.mxu0 0
      %462 = vmatmul.mubr.bf16.gmra.mrb[0].mxu0 %v335
      %v463 = vpop.f32.mrb[0].mxu0
      %v464 = vadd.f32 %v216, %v463
      %v465 = vpop.f32.mrb[0].mxu0
      %v466 = vpop.f32.mrb[0].mxu0
      %v467 = vadd.f32 %v216, %v466
      %v468 = vpop.f32.mrb[0].mxu0
      %469 = vmatprep.mubr.bf16.mxu0 0
      %470 = vmatmul.mubr.bf16.gmra.mrb[0].mxu0 %v338
      %v471 = vpop.f32.mrb[0].mxu0
      %v472 = vadd.f32 %v216, %v471
      %v473 = vpop.f32.mrb[0].mxu0
      %v474 = vpop.f32.mrb[0].mxu0
      %v475 = vadd.f32 %v216, %v474
      %v476 = vpop.f32.mrb[0].mxu0
      %477 = vmatprep.mubr.bf16.mxu0 0
      %478 = vmatmul.mubr.bf16.gmra.mrb[0].mxu0 %v341
      %v479 = vpop.f32.mrb[0].mxu0
      %v480 = vadd.f32 %v216, %v479
      %v481 = vpop.f32.mrb[0].mxu0
      %v482 = vpop.f32.mrb[0].mxu0
      %v483 = vadd.f32 %v216, %v482
      %v484 = vpop.f32.mrb[0].mxu0
      %485 = vmatprep.mubr.bf16.mxu0 0
      %486 = vmatmul.mubr.bf16.gmra.mrb[0].mxu0 %v344
      %v487 = vpop.f32.mrb[0].mxu0
      %v488 = vadd.f32 %v216, %v487
      %v489 = vpop.f32.mrb[0].mxu0
      %v490 = vpop.f32.mrb[0].mxu0
      %v491 = vadd.f32 %v216, %v490
      %v492 = vpop.f32.mrb[0].mxu0
      %493 = vmatprep.mubr.bf16.mxu0 0
      %494 = vmatmul.mubr.bf16.gmra.mrb[0].mxu0 %v347
      %v495 = vpop.f32.mrb[0].mxu0
      %v496 = vadd.f32 %v216, %v495
      %v497 = vpop.f32.mrb[0].mxu0
      %v498 = vpop.f32.mrb[0].mxu0
      %v499 = vadd.f32 %v216, %v498
      %v500 = vpop.f32.mrb[0].mxu0
      %501 = vmatprep.mubr.bf16.mxu0 0
      %502 = vmatmul.mubr.bf16.gmra.mrb[0].mxu0 %v350
      %v503 = vpop.f32.mrb[0].mxu0
      %v504 = vadd.f32 %v216, %v503
      %v505 = vpop.f32.mrb[0].mxu0
      %v506 = vpop.f32.mrb[0].mxu0
      %v507 = vadd.f32 %v216, %v506
      %v508 = vpop.f32.mrb[0].mxu0
      %509 = vmatprep.mubr.bf16.mxu0 0
      %510 = vmatmul.mubr.bf16.gmra.mrb[0].mxu0 %v353
      %v511 = vpop.f32.mrb[0].mxu0
      %v512 = vadd.f32 %v216, %v511
      %v513 = vpop.f32.mrb[0].mxu0
      %v514 = vpop.f32.mrb[0].mxu0
      %v515 = vadd.f32 %v216, %v514
      %v516 = vpop.f32.mrb[0].mxu0
      %517 = vmatprep.mubr.bf16.mxu0 0
      %518 = vmatmul.mubr.bf16.gmra.mrb[0].mxu0 %v356
      %v519 = vpop.f32.mrb[0].mxu0
      %v520 = vadd.f32 %v216, %v519
      %v521 = vpop.f32.mrb[0].mxu0
      %v522 = vpop.f32.mrb[0].mxu0
      %v523 = vadd.f32 %v216, %v522
      %v524 = vpop.f32.mrb[0].mxu0
      %525 = vdwg.mxu0
      %v526 = vpack.c.bf16 %v403, %v400
      %v527 = vpack.c.bf16 %v411, %v408
      %v528 = vpack.c.bf16 %v419, %v416
      %v529 = vpack.c.bf16 %v427, %v424
      %v530 = vpack.c.bf16 %v435, %v432
      %v531 = vpack.c.bf16 %v443, %v440
      %v532 = vpack.c.bf16 %v451, %v448
      %v533 = vpack.c.bf16 %v459, %v456
      %v534 = vpack.c.bf16 %v467, %v464
      %v535 = vpack.c.bf16 %v475, %v472
      %v536 = vpack.c.bf16 %v483, %v480
      %v537 = vpack.c.bf16 %v491, %v488
      %v538 = vpack.c.bf16 %v499, %v496
      %v539 = vpack.c.bf16 %v507, %v504
      %v540 = vpack.c.bf16 %v515, %v512
      %v541 = vpack.c.bf16 %v523, %v520
      %v558 = vunpack.c.l.b16 %v526
      %v559 = vunpack.c.h.b16 %v526
      %v560 = vunpack.c.l.b16 %v527
      %v561 = vunpack.c.h.b16 %v527
      %v562 = vunpack.c.l.b16 %v528
      %v563 = vunpack.c.h.b16 %v528
      %v564 = vunpack.c.l.b16 %v529
      %v565 = vunpack.c.h.b16 %v529
      %v566 = vunpack.c.l.b16 %v530
      %v567 = vunpack.c.h.b16 %v530
      %v568 = vunpack.c.l.b16 %v531
      %v569 = vunpack.c.h.b16 %v531
      %v570 = vunpack.c.l.b16 %v532
      %v571 = vunpack.c.h.b16 %v532
      %v572 = vunpack.c.l.b16 %v533
      %v573 = vunpack.c.h.b16 %v533
      %v574 = vunpack.c.l.b16 %v534
      %v575 = vunpack.c.h.b16 %v534
      %v576 = vunpack.c.l.b16 %v535
      %v577 = vunpack.c.h.b16 %v535
      %v578 = vunpack.c.l.b16 %v536
      %v579 = vunpack.c.h.b16 %v536
      %v580 = vunpack.c.l.b16 %v537
      %v581 = vunpack.c.h.b16 %v537
      %v582 = vunpack.c.l.b16 %v538
      %v583 = vunpack.c.h.b16 %v538
      %v584 = vunpack.c.l.b16 %v539
      %v585 = vunpack.c.h.b16 %v539
      %v586 = vunpack.c.l.b16 %v540
      %v587 = vunpack.c.h.b16 %v540
      %v588 = vunpack.c.l.b16 %v541
      %v589 = vunpack.c.h.b16 %v541
      %v590 = vpack.c.b16 %v558, %v558
      %v591 = vpack.c.b16 %v559, %v559
      %v592 = vpack.c.b16 %v560, %v560
      %v593 = vpack.c.b16 %v561, %v561
      %v594 = vpack.c.b16 %v562, %v562
      %v595 = vpack.c.b16 %v563, %v563
      %v596 = vpack.c.b16 %v564, %v564
      %v597 = vpack.c.b16 %v565, %v565
      %v598 = vpack.c.b16 %v566, %v566
      %v599 = vpack.c.b16 %v567, %v567
      %v600 = vpack.c.b16 %v568, %v568
      %v601 = vpack.c.b16 %v569, %v569
      %v602 = vpack.c.b16 %v570, %v570
      %v603 = vpack.c.b16 %v571, %v571
      %v604 = vpack.c.b16 %v572, %v572
      %v605 = vpack.c.b16 %v573, %v573
      %v606 = vpack.c.b16 %v574, %v574
      %v607 = vpack.c.b16 %v575, %v575
      %v608 = vpack.c.b16 %v576, %v576
      %v609 = vpack.c.b16 %v577, %v577
      %v610 = vpack.c.b16 %v578, %v578
      %v611 = vpack.c.b16 %v579, %v579
      %v612 = vpack.c.b16 %v580, %v580
      %v613 = vpack.c.b16 %v581, %v581
      %v614 = vpack.c.b16 %v582, %v582
      %v615 = vpack.c.b16 %v583, %v583
      %v616 = vpack.c.b16 %v584, %v584
      %v617 = vpack.c.b16 %v585, %v585
      %v618 = vpack.c.b16 %v586, %v586
      %v619 = vpack.c.b16 %v587, %v587
      %v620 = vpack.c.b16 %v588, %v588
      %v621 = vpack.c.b16 %v589, %v589
      %vm654 = vcmask 27648
      %655 = vst.msk [vmem:[%s172] sm:$0xf] %vm654, %v590
      %656 = vst.msk [vmem:[%s172 + $0x4] sm:$0xf] %vm654, %v591
      %657 = vst.msk [vmem:[%s172 + $0x8] sm:$0xf] %vm654, %v592
      %658 = vst.msk [vmem:[%s172 + $0xc] sm:$0xf] %vm654, %v593
      %659 = vst.msk [vmem:[%s172 + $0x10] sm:$0xf] %vm654, %v594
      %660 = vst.msk [vmem:[%s172 + $0x14] sm:$0xf] %vm654, %v595
      %661 = vst.msk [vmem:[%s172 + $0x18] sm:$0xf] %vm654, %v596
      %662 = vst.msk [vmem:[%s172 + $0x1c] sm:$0xf] %vm654, %v597
      %663 = vst.msk [vmem:[%s172 + $0x20] sm:$0xf] %vm654, %v598
      %664 = vst.msk [vmem:[%s172 + $0x24] sm:$0xf] %vm654, %v599
      %665 = vst.msk [vmem:[%s172 + $0x28] sm:$0xf] %vm654, %v600
      %666 = vst.msk [vmem:[%s172 + $0x2c] sm:$0xf] %vm654, %v601
      %667 = vst.msk [vmem:[%s172 + $0x30] sm:$0xf] %vm654, %v602
      %668 = vst.msk [vmem:[%s172 + $0x34] sm:$0xf] %vm654, %v603
      %669 = vst.msk [vmem:[%s172 + $0x38] sm:$0xf] %vm654, %v604
      %670 = vst.msk [vmem:[%s172 + $0x3c] sm:$0xf] %vm654, %v605
      %671 = vst.msk [vmem:[%s172 + $0x40] sm:$0xf] %vm654, %v606
      %672 = vst.msk [vmem:[%s172 + $0x44] sm:$0xf] %vm654, %v607
      %673 = vst.msk [vmem:[%s172 + $0x48] sm:$0xf] %vm654, %v608
      %674 = vst.msk [vmem:[%s172 + $0x4c] sm:$0xf] %vm654, %v609
      %675 = vst.msk [vmem:[%s172 + $0x50] sm:$0xf] %vm654, %v610
      %676 = vst.msk [vmem:[%s172 + $0x54] sm:$0xf] %vm654, %v611
      %677 = vst.msk [vmem:[%s172 + $0x58] sm:$0xf] %vm654, %v612
      %678 = vst.msk [vmem:[%s172 + $0x5c] sm:$0xf] %vm654, %v613
      %679 = vst.msk [vmem:[%s172 + $0x60] sm:$0xf] %vm654, %v614
      %680 = vst.msk [vmem:[%s172 + $0x64] sm:$0xf] %vm654, %v615
      %681 = vst.msk [vmem:[%s172 + $0x68] sm:$0xf] %vm654, %v616
      %682 = vst.msk [vmem:[%s172 + $0x6c] sm:$0xf] %vm654, %v617
      %683 = vst.msk [vmem:[%s172 + $0x70] sm:$0xf] %vm654, %v618
      %684 = vst.msk [vmem:[%s172 + $0x74] sm:$0xf] %vm654, %v619
      %685 = vst.msk [vmem:[%s172 + $0x78] sm:$0xf] %vm654, %v620
      %686 = vst.msk [vmem:[%s172 + $0x7c] sm:$0xf] %vm654, %v621
      %s687 = smul.u32 32, %s14
      %p688 = scmp.lt.s32.totalorder %s687, 63
      %s689 = scalar_select %p688, %s687, 63
      %s690 = smul.addr %s689, 4
      %s691 = scalar_lea.vmem %s3, %s690
      // Predicated region
      $region33: #{_lambda_.23} parent=31 // pred_check
        %p692 = pneg %p100
      $region34: #{_lambda_.23} parent=31 // pred_check_branch
        %694 = sbr.rel (%p692) target = $region36
      $region35: #{_lambda_.23} parent=31 // pred_region
        %s695 = smul.u32 32, %s14
      $region36: #{_lambda_.23} parent=31 // pred_fallthru
        _
    $region32: #{_lambda_.23} parent=5 // pred_fallthru
      _
    %p696 = scmp.le.s32.totalorder 2, %s9
    // Predicated region
    $region37: #{_lambda_.23} parent=5 // pred_check
      %p697 = pneg %p696
    $region38: #{_lambda_.23} parent=5 // pred_check_branch
      %699 = sbr.rel (%p697) target = $region40
    $region39: #{_lambda_.23} parent=5 // pred_region
      %s700 = ssub.s32 %s9, 2
      // Predicated region
      $region41: #{_lambda_.23} parent=39 // pred_check
        %p701 = pneg %p106
      $region42: #{_lambda_.23} parent=39 // pred_check_branch
        %703 = sbr.rel (%p701) target = $region44
      $region43: #{_lambda_.23} parent=39 // pred_region
        %s704 = smul.u32 32, %s15
        %p705 = scmp.lt.s32.totalorder %s704, 63
        %s706 = scalar_select %p705, %s704, 63
        %s707 = smul.addr %s706, 4
        %s708 = scalar_lea.vmem %s3, %s707
      $region44: #{_lambda_.23} parent=39 // pred_fallthru
        _
    $region40: #{_lambda_.23} parent=5 // pred_fallthru
      _
  $region6: #{_lambda_.23} parent=0 // loop_footer
    %s13 = sadd.s32 1, %s9
  $region7: #{_lambda_.23} parent=0 // loop_footer_branch
    %8 = sbr.rel target = $region3
  $region8: #{_lambda_.23} parent=0 // loop_exit
    _

// kernel: _lambda_.24
$region0: #{_lambda_.24}
  #allocation0 [shape = 'u32[]', space=smem, size = 0x4, offset = 0x4, fixed_abs, tag = 'smem constant byte address 0x4 - core index']
  #allocation1 [shape = 'u32[144,128]{1,0:T(1,128)}', space=vmem, size = 0x12000, scoped, tag = 'internal scratch']
  %s0 = inlined_call_operand.vmem [shape: bf16[128,36], index: 0, kind: input, shape index: {}]
  %s1 = inlined_call_operand.vmem [shape: bf16[36,8], index: 1, kind: input, shape index: {}]
  %s2 = inlined_call_operand.vmem [shape: f32[1,8], index: 2, kind: input, shape index: {}]
  %s3 = inlined_call_operand.vmem [shape: bf16[128,8], index: 3, kind: output, shape index: {}]
  %s4 = sld [smem:[#allocation0]]
  $region45: #{_lambda_.24} parent=0
    _
  %s6 = ssub.s32 1, %s4
  %s7 = scalar_select 0, %s6, %s4
  loop: start=0, step=1, limit=4
  $region2: #{_lambda_.24} parent=0 // loop_pre_header
    _
  $region3: #{_lambda_.24} parent=0 // loop_header
    %s9 = sphi 0, %s13
    %p10 = scmp.ge.s32.totalorder %s9, 4
    %s19 = sphi 0, %s21
    %s22 = sphi 0, %s19
    %s23 = sphi 0, %s22
    %s39 = sphi 0, %s23
    %s43 = sphi 0, %s43
    %s45 = sphi 0, %s43
    %s46 = sphi 0, %s45
    %s60 = sphi 0, %s46
    %s64 = sphi 0, %s64
    %s66 = sphi 0, %s64
    %s67 = sphi 0, %s66
    %s81 = sphi 0, %s67
    %s87 = sphi 0, %s89
    %s90 = sphi 0, %s87
    %s91 = sphi 0, %s90
    %s107 = sphi 0, %s91
  $region4: #{_lambda_.24} parent=0 // loop_header_branch
    %12 = sbr.rel (%p10) target = $region8
  $region5: #{_lambda_.24} parent=0 // loop_body
    %s14 = ssub.s32 %s9, 1
    %s15 = ssub.s32 %s9, 2
    %s16 = sadd.s32 %s9, 1
    %s17 = ssub.s32 %s9, %s16
    %p18 = scmp.eq.s32.totalorder %s17, 0
    %s20 = sadd.s32 %s19, 1
    %s21 = scalar_select %p18, %s19, %s20
    %p24 = pneg %p18
    %p25 = scmp.eq.s32.totalorder %s9, 1
    %p26 = por %p24, %p25
    %p27 = scmp.ne.s32.totalorder %s19, %s22
    %p28 = scmp.eq.s32.totalorder %s9, 0
    %p29 = por %p27, %p28
    %p30 = scmp.ne.s32.totalorder %s19, %s22
    %p31 = scmp.eq.s32.totalorder %s14, 1
    %p32 = por %p30, %p31
    %p33 = scmp.ne.s32.totalorder %s22, %s23
    %p34 = scmp.eq.s32.totalorder %s14, 0
    %p35 = por %p33, %p34
    %p36 = scmp.ne.s32.totalorder %s22, %s23
    %p37 = scmp.eq.s32.totalorder %s15, 1
    %p38 = por %p36, %p37
    %p40 = scmp.ne.s32.totalorder %s23, %s39
    %p41 = scmp.eq.s32.totalorder %s15, 0
    %p42 = por %p40, %p41
    %s44 = sadd.s32 %s43, 1
    %p47 = scmp.eq.s32.totalorder %s9, 1
    %p48 = scmp.ne.s32.totalorder %s43, %s45
    %p49 = scmp.eq.s32.totalorder %s9, 0
    %p50 = por %p48, %p49
    %p51 = scmp.ne.s32.totalorder %s43, %s45
    %p52 = scmp.eq.s32.totalorder %s14, 1
    %p53 = por %p51, %p52
    %p54 = scmp.ne.s32.totalorder %s45, %s46
    %p55 = scmp.eq.s32.totalorder %s14, 0
    %p56 = por %p54, %p55
    %p57 = scmp.ne.s32.totalorder %s45, %s46
    %p58 = scmp.eq.s32.totalorder %s15, 1
    %p59 = por %p57, %p58
    %p61 = scmp.ne.s32.totalorder %s46, %s60
    %p62 = scmp.eq.s32.totalorder %s15, 0
    %p63 = por %p61, %p62
    %s65 = sadd.s32 %s64, 1
    %p68 = scmp.eq.s32.totalorder %s9, 1
    %p69 = scmp.ne.s32.totalorder %s64, %s66
    %p70 = scmp.eq.s32.totalorder %s9, 0
    %p71 = por %p69, %p70
    %p72 = scmp.ne.s32.totalorder %s64, %s66
    %p73 = scmp.eq.s32.totalorder %s14, 1
    %p74 = por %p72, %p73
    %p75 = scmp.ne.s32.totalorder %s66, %s67
    %p76 = scmp.eq.s32.totalorder %s14, 0
    %p77 = por %p75, %p76
    %p78 = scmp.ne.s32.totalorder %s66, %s67
    %p79 = scmp.eq.s32.totalorder %s15, 1
    %p80 = por %p78, %p79
    %p82 = scmp.ne.s32.totalorder %s67, %s81
    %p83 = scmp.eq.s32.totalorder %s15, 0
    %p84 = por %p82, %p83
    %s85 = ssub.s32 %s9, %s16
    %p86 = scmp.eq.s32.totalorder %s85, 0
    %s88 = sadd.s32 %s87, 1
    %s89 = scalar_select %p86, %s87, %s88
    %p92 = pneg %p86
    %p93 = scmp.eq.s32.totalorder %s9, 1
    %p94 = por %p92, %p93
    %p95 = scmp.ne.s32.totalorder %s87, %s90
    %p96 = scmp.eq.s32.totalorder %s9, 0
    %p97 = por %p95, %p96
    %p98 = scmp.ne.s32.totalorder %s87, %s90
    %p99 = scmp.eq.s32.totalorder %s14, 1
    %p100 = por %p98, %p99
    %p101 = scmp.ne.s32.totalorder %s90, %s91
    %p102 = scmp.eq.s32.totalorder %s14, 0
    %p103 = por %p101, %p102
    %p104 = scmp.ne.s32.totalorder %s90, %s91
    %p105 = scmp.eq.s32.totalorder %s15, 1
    %p106 = por %p104, %p105
    %p108 = scmp.ne.s32.totalorder %s91, %s107
    %p109 = scmp.eq.s32.totalorder %s15, 0
    %p110 = por %p108, %p109
    %p111 = scmp.le.s32.totalorder 1, %s9
    %p112 = scmp.lt.s32.totalorder %s9, 3
    %p113 = pnand %p111, %p112
    %p114 = pneg %p113
    // Predicated region
    $region9: #{_lambda_.24} parent=5 // pred_check
      _
    $region10: #{_lambda_.24} parent=5 // pred_check_branch
      %116 = sbr.rel (%p113) target = $region12
    $region11: #{_lambda_.24} parent=5 // pred_region
      %s117 = ssub.s32 %s9, 1
      // Predicated region
      $region13: #{_lambda_.24} parent=11 // pred_check
        %p118 = pneg %p56
      $region14: #{_lambda_.24} parent=11 // pred_check_branch
        %120 = sbr.rel (%p118) target = $region16
      $region15: #{_lambda_.24} parent=11 // pred_region
        _
      $region16: #{_lambda_.24} parent=11 // pred_fallthru
        _
      // Predicated region
      $region17: #{_lambda_.24} parent=11 // pred_check
        %p121 = pneg %p77
      $region18: #{_lambda_.24} parent=11 // pred_check_branch
        %123 = sbr.rel (%p121) target = $region20
      $region19: #{_lambda_.24} parent=11 // pred_region
        _
      $region20: #{_lambda_.24} parent=11 // pred_fallthru
        _
    $region12: #{_lambda_.24} parent=5 // pred_fallthru
      _
    %p124 = scmp.lt.s32.totalorder %s9, 2
    // Predicated region
    $region21: #{_lambda_.24} parent=5 // pred_check
      %p125 = pneg %p124
    $region22: #{_lambda_.24} parent=5 // pred_check_branch
      %127 = sbr.rel (%p125) target = $region24
    $region23: #{_lambda_.24} parent=5 // pred_region
      // Predicated region
      $region25: #{_lambda_.24} parent=23 // pred_check
        %p128 = pneg %p29
      $region26: #{_lambda_.24} parent=23 // pred_check_branch
        %130 = sbr.rel (%p128) target = $region28
      $region27: #{_lambda_.24} parent=23 // pred_region
        %s131 = smul.u32 8, %s9
        %p132 = scmp.lt.s32.totalorder %s131, 15
        %s133 = scalar_select %p132, %s131, 15
        %s134 = smul.addr %s133, 4
        %s135 = scalar_lea.vmem %s0, %s134
        %s136 = smul.u32 8, %s9
      $region28: #{_lambda_.24} parent=23 // pred_fallthru
        _
    $region24: #{_lambda_.24} parent=5 // pred_fallthru
      _
    %p137 = scmp.le.s32.totalorder 1, %s9
    %p138 = scmp.lt.s32.totalorder %s9, 3
    %p139 = pnand %p137, %p138
    %p140 = pneg %p139
    // Predicated region
    $region29: #{_lambda_.24} parent=5 // pred_check
      _
    $region30: #{_lambda_.24} parent=5 // pred_check_branch
      %142 = sbr.rel (%p139) target = $region32
    $region31: #{_lambda_.24} parent=5 // pred_region
      %s143 = ssub.s32 %s9, 1
      %s144 = smul.u32 8, %s14
      %p145 = scmp.lt.s32.totalorder %s144, 15
      %s146 = scalar_select %p145, %s144, 15
      %s147 = smul.addr %s146, 4
      %s148 = scalar_lea.vmem %s0, %s147
      %p149 = pneg %p35
      %p150 = pneg %p32
      %p151 = pneg %p56
      %p152 = pneg %p53
      %p153 = pneg %p77
      %p154 = pneg %p74
      %p155 = pneg %p103
      %p156 = pneg %p100
      %s157 = smul.u32 8, %s14
      %p158 = scmp.lt.s32.totalorder %s157, 15
      %s159 = scalar_select %p158, %s157, 15
      %s160 = smul.addr %s159, 4
      %s161 = scalar_lea.vmem %s3, %s160
      %s162 = smul.u32 8, %s14
      %p163 = scmp.lt.s32.totalorder %s162, 15
      %s164 = scalar_select %p163, %s162, 15
      %s165 = smul.addr %s164, 4
      %s166 = scalar_lea.vmem %s0, %s165
      %s167 = smul.u32 8, %s14
      %s168 = smul.u32 8, %s14
      %p169 = scmp.lt.s32.totalorder %s168, 15
      %s170 = scalar_select %p169, %s168, 15
      %s171 = smul.addr %s170, 4
      %s172 = scalar_lea.vmem %s3, %s171
      %s173 = smul.u32 8, %s14
      %v175 = vld [vmem:[%s166] sm:$0xf]
      %v176 = vld [vmem:[%s166 + $0x4] sm:$0xf]
      %v177 = vld [vmem:[%s166 + $0x8] sm:$0xf]
      %v178 = vld [vmem:[%s166 + $0xc] sm:$0xf]
      %v179 = vld [vmem:[%s166 + $0x10] sm:$0xf]
      %v180 = vld [vmem:[%s166 + $0x14] sm:$0xf]
      %v181 = vld [vmem:[%s166 + $0x18] sm:$0xf]
      %v182 = vld [vmem:[%s166 + $0x1c] sm:$0xf]
      %v183 = vld [vmem:[%s1] sm:$0xf]
      %v184 = vld [vmem:[%s1 + $0x4] sm:$0xf]
      %v185 = vld [vmem:[%s1 + $0x8] sm:$0xf]
      %v186 = vld [vmem:[%s1 + $0xc] sm:$0xf]
      %v187 = vld [vmem:[%s1 + $0x10] sm:$0x3]
      %v188 = vld [vmem:[%s2] sm:$0x1]
      %v190 = vlaneseq
      %v191 = vshrl.u32 %v190, 7
      %v192 = vsub.s32 0, %v191
      %v193 = vrot.slane %v188, %v192
      %v203 = vunpack.c.l.b16 %v175
      %v204 = vunpack.c.l.b16 %v176
      %v205 = vunpack.c.l.b16 %v177
      %v206 = vunpack.c.l.b16 %v178
      %v207 = vunpack.c.l.b16 %v179
      %v208 = vunpack.c.l.b16 %v180
      %v209 = vunpack.c.l.b16 %v181
      %v210 = vunpack.c.l.b16 %v182
      %v211 = vpack.c.b16 %v204, %v203
      %v212 = vpack.c.b16 %v206, %v205
      %v213 = vpack.c.b16 %v208, %v207
      %v214 = vpack.c.b16 %v210, %v209
      %v220 = vunpack.c.l.b16 %v183
      %v221 = vunpack.c.l.b16 %v184
      %v222 = vunpack.c.l.b16 %v185
      %v223 = vunpack.c.l.b16 %v186
      %v224 = vunpack.c.l.b16 %v187
      %v225 = vpack.c.b16 %v221, %v220
      %v226 = vpack.c.b16 %v223, %v222
      %v227 = vpack.c.b16 %v224, %v224
      %vm230 = vcmask 293888
      %v232 = vsel %vm230, %v211, 0
      %v235 = vsel %vm230, %v212, 0
      %v238 = vsel %vm230, %v213, 0
      %v241 = vsel %vm230, %v214, 0
      %vm243 = vcmask 1041408
      %v245 = vsel %vm243, %v227, 0
      %247 = vmatprep.subr.bf16.mxu0 0
      %248 = vmatpush1.bf16.msra.mxu0 %v225
      %249 = vmatprep.subr.bf16.mxu0 0
      %250 = vmatpush1.bf16.msra.mxu0 %v226
      %251 = vmatprep.subr.bf16.mxu0 0
      %252 = vmatpush1.bf16.msra.mxu0 %v245
      %253 = vmatprep.subr.bf16.mxu0 0
      %254 = vmatpush1.bf16.msra.mxu0 0
      %255 = vmatprep.subr.bf16.mxu0 0
      %256 = vmatpush1.bf16.msra.mxu0 0
      %257 = vmatprep.subr.bf16.mxu0 0
      %258 = vmatpush1.bf16.msra.mxu0 0
      %259 = vmatprep.subr.bf16.mxu0 0
      %260 = vmatpush1.bf16.msra.mxu0 0
      %261 = vmatprep.subr.bf16.mxu0 0
      %262 = vmatpush1.bf16.msra.mxu0 0
      %263 = vmatprep.subr.bf16.mxu0 0
      %264 = vmatpush1.bf16.msra.mxu0 0
      %265 = vmatprep.subr.bf16.mxu0 0
      %266 = vmatpush1.bf16.msra.mxu0 0
      %267 = vmatprep.subr.bf16.mxu0 0
      %268 = vmatpush1.bf16.msra.mxu0 0
      %269 = vmatprep.subr.bf16.mxu0 0
      %270 = vmatpush1.bf16.msra.mxu0 0
      %271 = vmatprep.subr.bf16.mxu0 0
      %272 = vmatpush1.bf16.msra.mxu0 0
      %273 = vmatprep.subr.bf16.mxu0 0
      %274 = vmatpush1.bf16.msra.mxu0 0
      %275 = vmatprep.subr.bf16.mxu0 0
      %276 = vmatpush1.bf16.msra.mxu0 0
      %277 = vmatprep.subr.bf16.mxu0 0
      %278 = vmatpush1.bf16.msra.mxu0 0
      %279 = vmatprep.mubr.bf16.mxu0 0
      %280 = vmatmul.mubr.bf16.gmra.mrb[0].mxu0 %v232
      %v281 = vpop.f32.mrb[0].mxu0
      %v282 = vadd.f32 %v193, %v281
      %v283 = vpop.f32.mrb[0].mxu0
      %v284 = vpop.f32.mrb[0].mxu0
      %v285 = vadd.f32 %v193, %v284
      %v286 = vpop.f32.mrb[0].mxu0
      %287 = vmatprep.mubr.bf16.mxu0 0
      %288 = vmatmul.mubr.bf16.gmra.mrb[0].mxu0 %v235
      %v289 = vpop.f32.mrb[0].mxu0
      %v290 = vadd.f32 %v193, %v289
      %v291 = vpop.f32.mrb[0].mxu0
      %v292 = vpop.f32.mrb[0].mxu0
      %v293 = vadd.f32 %v193, %v292
      %v294 = vpop.f32.mrb[0].mxu0
      %295 = vmatprep.mubr.bf16.mxu0 0
      %296 = vmatmul.mubr.bf16.gmra.mrb[0].mxu0 %v238
      %v297 = vpop.f32.mrb[0].mxu0
      %v298 = vadd.f32 %v193, %v297
      %v299 = vpop.f32.mrb[0].mxu0
      %v300 = vpop.f32.mrb[0].mxu0
      %v301 = vadd.f32 %v193, %v300
      %v302 = vpop.f32.mrb[0].mxu0
      %303 = vmatprep.mubr.bf16.mxu0 0
      %304 = vmatmul.mubr.bf16.gmra.mrb[0].mxu0 %v241
      %v305 = vpop.f32.mrb[0].mxu0
      %v306 = vadd.f32 %v193, %v305
      %v307 = vpop.f32.mrb[0].mxu0
      %v308 = vpop.f32.mrb[0].mxu0
      %v309 = vadd.f32 %v193, %v308
      %v310 = vpop.f32.mrb[0].mxu0
      %311 = vdwg.mxu0
      %v312 = vpack.c.bf16 %v285, %v282
      %v313 = vpack.c.bf16 %v293, %v290
      %v314 = vpack.c.bf16 %v301, %v298
      %v315 = vpack.c.bf16 %v309, %v306
      %v320 = vunpack.c.l.b16 %v312
      %v321 = vunpack.c.h.b16 %v312
      %v322 = vunpack.c.l.b16 %v313
      %v323 = vunpack.c.h.b16 %v313
      %v324 = vunpack.c.l.b16 %v314
      %v325 = vunpack.c.h.b16 %v314
      %v326 = vunpack.c.l.b16 %v315
      %v327 = vunpack.c.h.b16 %v315
      %v328 = vpack.c.b16 %v320, %v320
      %v329 = vpack.c.b16 %v321, %v321
      %v330 = vpack.c.b16 %v322, %v322
      %v331 = vpack.c.b16 %v323, %v323
      %v332 = vpack.c.b16 %v324, %v324
      %v333 = vpack.c.b16 %v325, %v325
      %v334 = vpack.c.b16 %v326, %v326
      %v335 = vpack.c.b16 %v327, %v327
      %vm344 = vcmask 60416
      %345 = vst.msk [vmem:[%s172] sm:$0xf] %vm344, %v328
      %346 = vst.msk [vmem:[%s172 + $0x4] sm:$0xf] %vm344, %v329
      %347 = vst.msk [vmem:[%s172 + $0x8] sm:$0xf] %vm344, %v330
      %348 = vst.msk [vmem:[%s172 + $0xc] sm:$0xf] %vm344, %v331
      %349 = vst.msk [vmem:[%s172 + $0x10] sm:$0xf] %vm344, %v332
      %350 = vst.msk [vmem:[%s172 + $0x14] sm:$0xf] %vm344, %v333
      %351 = vst.msk [vmem:[%s172 + $0x18] sm:$0xf] %vm344, %v334
      %352 = vst.msk [vmem:[%s172 + $0x1c] sm:$0xf] %vm344, %v335
      %s353 = smul.u32 8, %s14
      %p354 = scmp.lt.s32.totalorder %s353, 15
      %s355 = scalar_select %p354, %s353, 15
      %s356 = smul.addr %s355, 4
      %s357 = scalar_lea.vmem %s3, %s356
      // Predicated region
      $region33: #{_lambda_.24} parent=31 // pred_check
        %p358 = pneg %p100
      $region34: #{_lambda_.24} parent=31 // pred_check_branch
        %360 = sbr.rel (%p358) target = $region36
      $region35: #{_lambda_.24} parent=31 // pred_region
        %s361 = smul.u32 8, %s14
      $region36: #{_lambda_.24} parent=31 // pred_fallthru
        _
    $region32: #{_lambda_.24} parent=5 // pred_fallthru
      _
    %p362 = scmp.le.s32.totalorder 2, %s9
    // Predicated region
    $region37: #{_lambda_.24} parent=5 // pred_check
      %p363 = pneg %p362
    $region38: #{_lambda_.24} parent=5 // pred_check_branch
      %365 = sbr.rel (%p363) target = $region40
    $region39: #{_lambda_.24} parent=5 // pred_region
      %s366 = ssub.s32 %s9, 2
      // Predicated region
      $region41: #{_lambda_.24} parent=39 // pred_check
        %p367 = pneg %p106
      $region42: #{_lambda_.24} parent=39 // pred_check_branch
        %369 = sbr.rel (%p367) target = $region44
      $region43: #{_lambda_.24} parent=39 // pred_region
        %s370 = smul.u32 8, %s15
        %p371 = scmp.lt.s32.totalorder %s370, 15
        %s372 = scalar_select %p371, %s370, 15
        %s373 = smul.addr %s372, 4
        %s374 = scalar_lea.vmem %s3, %s373
      $region44: #{_lambda_.24} parent=39 // pred_fallthru
        _
    $region40: #{_lambda_.24} parent=5 // pred_fallthru
      _
  $region6: #{_lambda_.24} parent=0 // loop_footer
    %s13 = sadd.s32 1, %s9
  $region7: #{_lambda_.24} parent=0 // loop_footer_branch
    %8 = sbr.rel target = $region3
  $region8: #{_lambda_.24} parent=0 // loop_exit
    _

// kernel: _lambda_.25
$region0: #{_lambda_.25}
  #allocation0 [shape = 'u32[]', space=smem, size = 0x4, offset = 0x4, fixed_abs, tag = 'smem constant byte address 0x4 - core index']
  #allocation1 [shape = 'u32[144,128]{1,0:T(1,128)}', space=vmem, size = 0x12000, scoped, tag = 'internal scratch']
  %s0 = inlined_call_operand.vmem [shape: bf16[32,72], index: 0, kind: input, shape index: {}]
  %s1 = inlined_call_operand.vmem [shape: bf16[72,8], index: 1, kind: input, shape index: {}]
  %s2 = inlined_call_operand.vmem [shape: f32[1,8], index: 2, kind: input, shape index: {}]
  %s3 = inlined_call_operand.vmem [shape: bf16[32,8], index: 3, kind: output, shape index: {}]
  %s4 = sld [smem:[#allocation0]]
  $region45: #{_lambda_.25} parent=0
    _
  %s6 = ssub.s32 1, %s4
  %s7 = scalar_select 0, %s6, %s4
  loop: start=0, step=1, limit=4
  $region2: #{_lambda_.25} parent=0 // loop_pre_header
    _
  $region3: #{_lambda_.25} parent=0 // loop_header
    %s9 = sphi 0, %s13
    %p10 = scmp.ge.s32.totalorder %s9, 4
    %s19 = sphi 0, %s21
    %s22 = sphi 0, %s19
    %s23 = sphi 0, %s22
    %s39 = sphi 0, %s23
    %s43 = sphi 0, %s43
    %s45 = sphi 0, %s43
    %s46 = sphi 0, %s45
    %s60 = sphi 0, %s46
    %s64 = sphi 0, %s64
    %s66 = sphi 0, %s64
    %s67 = sphi 0, %s66
    %s81 = sphi 0, %s67
    %s87 = sphi 0, %s89
    %s90 = sphi 0, %s87
    %s91 = sphi 0, %s90
    %s107 = sphi 0, %s91
  $region4: #{_lambda_.25} parent=0 // loop_header_branch
    %12 = sbr.rel (%p10) target = $region8
  $region5: #{_lambda_.25} parent=0 // loop_body
    %s14 = ssub.s32 %s9, 1
    %s15 = ssub.s32 %s9, 2
    %s16 = sadd.s32 %s9, 1
    %s17 = ssub.s32 %s9, %s16
    %p18 = scmp.eq.s32.totalorder %s17, 0
    %s20 = sadd.s32 %s19, 1
    %s21 = scalar_select %p18, %s19, %s20
    %p24 = pneg %p18
    %p25 = scmp.eq.s32.totalorder %s9, 1
    %p26 = por %p24, %p25
    %p27 = scmp.ne.s32.totalorder %s19, %s22
    %p28 = scmp.eq.s32.totalorder %s9, 0
    %p29 = por %p27, %p28
    %p30 = scmp.ne.s32.totalorder %s19, %s22
    %p31 = scmp.eq.s32.totalorder %s14, 1
    %p32 = por %p30, %p31
    %p33 = scmp.ne.s32.totalorder %s22, %s23
    %p34 = scmp.eq.s32.totalorder %s14, 0
    %p35 = por %p33, %p34
    %p36 = scmp.ne.s32.totalorder %s22, %s23
    %p37 = scmp.eq.s32.totalorder %s15, 1
    %p38 = por %p36, %p37
    %p40 = scmp.ne.s32.totalorder %s23, %s39
    %p41 = scmp.eq.s32.totalorder %s15, 0
    %p42 = por %p40, %p41
    %s44 = sadd.s32 %s43, 1
    %p47 = scmp.eq.s32.totalorder %s9, 1
    %p48 = scmp.ne.s32.totalorder %s43, %s45
    %p49 = scmp.eq.s32.totalorder %s9, 0
    %p50 = por %p48, %p49
    %p51 = scmp.ne.s32.totalorder %s43, %s45
    %p52 = scmp.eq.s32.totalorder %s14, 1
    %p53 = por %p51, %p52
    %p54 = scmp.ne.s32.totalorder %s45, %s46
    %p55 = scmp.eq.s32.totalorder %s14, 0
    %p56 = por %p54, %p55
    %p57 = scmp.ne.s32.totalorder %s45, %s46
    %p58 = scmp.eq.s32.totalorder %s15, 1
    %p59 = por %p57, %p58
    %p61 = scmp.ne.s32.totalorder %s46, %s60
    %p62 = scmp.eq.s32.totalorder %s15, 0
    %p63 = por %p61, %p62
    %s65 = sadd.s32 %s64, 1
    %p68 = scmp.eq.s32.totalorder %s9, 1
    %p69 = scmp.ne.s32.totalorder %s64, %s66
    %p70 = scmp.eq.s32.totalorder %s9, 0
    %p71 = por %p69, %p70
    %p72 = scmp.ne.s32.totalorder %s64, %s66
    %p73 = scmp.eq.s32.totalorder %s14, 1
    %p74 = por %p72, %p73
    %p75 = scmp.ne.s32.totalorder %s66, %s67
    %p76 = scmp.eq.s32.totalorder %s14, 0
    %p77 = por %p75, %p76
    %p78 = scmp.ne.s32.totalorder %s66, %s67
    %p79 = scmp.eq.s32.totalorder %s15, 1
    %p80 = por %p78, %p79
    %p82 = scmp.ne.s32.totalorder %s67, %s81
    %p83 = scmp.eq.s32.totalorder %s15, 0
    %p84 = por %p82, %p83
    %s85 = ssub.s32 %s9, %s16
    %p86 = scmp.eq.s32.totalorder %s85, 0
    %s88 = sadd.s32 %s87, 1
    %s89 = scalar_select %p86, %s87, %s88
    %p92 = pneg %p86
    %p93 = scmp.eq.s32.totalorder %s9, 1
    %p94 = por %p92, %p93
    %p95 = scmp.ne.s32.totalorder %s87, %s90
    %p96 = scmp.eq.s32.totalorder %s9, 0
    %p97 = por %p95, %p96
    %p98 = scmp.ne.s32.totalorder %s87, %s90
    %p99 = scmp.eq.s32.totalorder %s14, 1
    %p100 = por %p98, %p99
    %p101 = scmp.ne.s32.totalorder %s90, %s91
    %p102 = scmp.eq.s32.totalorder %s14, 0
    %p103 = por %p101, %p102
    %p104 = scmp.ne.s32.totalorder %s90, %s91
    %p105 = scmp.eq.s32.totalorder %s15, 1
    %p106 = por %p104, %p105
    %p108 = scmp.ne.s32.totalorder %s91, %s107
    %p109 = scmp.eq.s32.totalorder %s15, 0
    %p110 = por %p108, %p109
    %p111 = scmp.le.s32.totalorder 1, %s9
    %p112 = scmp.lt.s32.totalorder %s9, 3
    %p113 = pnand %p111, %p112
    %p114 = pneg %p113
    // Predicated region
    $region9: #{_lambda_.25} parent=5 // pred_check
      _
    $region10: #{_lambda_.25} parent=5 // pred_check_branch
      %116 = sbr.rel (%p113) target = $region12
    $region11: #{_lambda_.25} parent=5 // pred_region
      %s117 = ssub.s32 %s9, 1
      // Predicated region
      $region13: #{_lambda_.25} parent=11 // pred_check
        %p118 = pneg %p56
      $region14: #{_lambda_.25} parent=11 // pred_check_branch
        %120 = sbr.rel (%p118) target = $region16
      $region15: #{_lambda_.25} parent=11 // pred_region
        _
      $region16: #{_lambda_.25} parent=11 // pred_fallthru
        _
      // Predicated region
      $region17: #{_lambda_.25} parent=11 // pred_check
        %p121 = pneg %p77
      $region18: #{_lambda_.25} parent=11 // pred_check_branch
        %123 = sbr.rel (%p121) target = $region20
      $region19: #{_lambda_.25} parent=11 // pred_region
        _
      $region20: #{_lambda_.25} parent=11 // pred_fallthru
        _
    $region12: #{_lambda_.25} parent=5 // pred_fallthru
      _
    %p124 = scmp.lt.s32.totalorder %s9, 2
    // Predicated region
    $region21: #{_lambda_.25} parent=5 // pred_check
      %p125 = pneg %p124
    $region22: #{_lambda_.25} parent=5 // pred_check_branch
      %127 = sbr.rel (%p125) target = $region24
    $region23: #{_lambda_.25} parent=5 // pred_region
      // Predicated region
      $region25: #{_lambda_.25} parent=23 // pred_check
        %p128 = pneg %p29
      $region26: #{_lambda_.25} parent=23 // pred_check_branch
        %130 = sbr.rel (%p128) target = $region28
      $region27: #{_lambda_.25} parent=23 // pred_region
        %s131 = smul.u32 2, %s9
        %p132 = scmp.lt.s32.totalorder %s131, 3
        %s133 = scalar_select %p132, %s131, 3
        %s134 = smul.addr %s133, 4
        %s135 = scalar_lea.vmem %s0, %s134
        %s136 = smul.u32 2, %s9
      $region28: #{_lambda_.25} parent=23 // pred_fallthru
        _
    $region24: #{_lambda_.25} parent=5 // pred_fallthru
      _
    %p137 = scmp.le.s32.totalorder 1, %s9
    %p138 = scmp.lt.s32.totalorder %s9, 3
    %p139 = pnand %p137, %p138
    %p140 = pneg %p139
    // Predicated region
    $region29: #{_lambda_.25} parent=5 // pred_check
      _
    $region30: #{_lambda_.25} parent=5 // pred_check_branch
      %142 = sbr.rel (%p139) target = $region32
    $region31: #{_lambda_.25} parent=5 // pred_region
      %s143 = ssub.s32 %s9, 1
      %s144 = smul.u32 2, %s14
      %p145 = scmp.lt.s32.totalorder %s144, 3
      %s146 = scalar_select %p145, %s144, 3
      %s147 = smul.addr %s146, 4
      %s148 = scalar_lea.vmem %s0, %s147
      %p149 = pneg %p35
      %p150 = pneg %p32
      %p151 = pneg %p56
      %p152 = pneg %p53
      %p153 = pneg %p77
      %p154 = pneg %p74
      %p155 = pneg %p103
      %p156 = pneg %p100
      %s157 = smul.u32 2, %s14
      %p158 = scmp.lt.s32.totalorder %s157, 3
      %s159 = scalar_select %p158, %s157, 3
      %s160 = smul.addr %s159, 4
      %s161 = scalar_lea.vmem %s3, %s160
      %s162 = smul.u32 2, %s14
      %p163 = scmp.lt.s32.totalorder %s162, 3
      %s164 = scalar_select %p163, %s162, 3
      %s165 = smul.addr %s164, 4
      %s166 = scalar_lea.vmem %s0, %s165
      %s167 = smul.u32 2, %s14
      %s168 = smul.u32 2, %s14
      %p169 = scmp.lt.s32.totalorder %s168, 3
      %s170 = scalar_select %p169, %s168, 3
      %s171 = smul.addr %s170, 4
      %s172 = scalar_lea.vmem %s3, %s171
      %s173 = smul.u32 2, %s14
      %v175 = vld [vmem:[%s166] sm:$0xf]
      %v176 = vld [vmem:[%s166 + $0x4] sm:$0xf]
      %v177 = vld [vmem:[%s1] sm:$0xf]
      %v178 = vld [vmem:[%s1 + $0x4] sm:$0xf]
      %v179 = vld [vmem:[%s1 + $0x8] sm:$0xf]
      %v180 = vld [vmem:[%s1 + $0xc] sm:$0xf]
      %v181 = vld [vmem:[%s1 + $0x10] sm:$0xf]
      %v182 = vld [vmem:[%s1 + $0x14] sm:$0xf]
      %v183 = vld [vmem:[%s1 + $0x18] sm:$0xf]
      %v184 = vld [vmem:[%s1 + $0x1c] sm:$0xf]
      %v185 = vld [vmem:[%s1 + $0x20] sm:$0xf]
      %v186 = vld [vmem:[%s2] sm:$0x1]
      %v188 = vlaneseq
      %v189 = vshrl.u32 %v188, 7
      %v190 = vsub.s32 0, %v189
      %v191 = vrot.slane %v186, %v190
      %v195 = vunpack.c.l.b16 %v175
      %v196 = vunpack.c.l.b16 %v176
      %v197 = vpack.c.b16 %v196, %v195
      %v207 = vunpack.c.l.b16 %v177
      %v208 = vunpack.c.l.b16 %v178
      %v209 = vunpack.c.l.b16 %v179
      %v210 = vunpack.c.l.b16 %v180
      %v211 = vunpack.c.l.b16 %v181
      %v212 = vunpack.c.l.b16 %v182
      %v213 = vunpack.c.l.b16 %v183
      %v214 = vunpack.c.l.b16 %v184
      %v215 = vunpack.c.l.b16 %v185
      %v216 = vpack.c.b16 %v208, %v207
      %v217 = vpack.c.b16 %v210, %v209
      %v218 = vpack.c.b16 %v212, %v211
      %v219 = vpack.c.b16 %v214, %v213
      %v220 = vpack.c.b16 %v215, %v215
      %vm225 = vcmask 588800
      %v227 = vsel %vm225, %v197, 0
      %vm229 = vcmask 1043456
      %v231 = vsel %vm229, %v220, 0
      %233 = vmatprep.subr.bf16.mxu0 0
      %234 = vmatpush1.bf16.msra.mxu0 %v216
      %235 = vmatprep.subr.bf16.mxu0 0
      %236 = vmatpush1.bf16.msra.mxu0 %v217
      %237 = vmatprep.subr.bf16.mxu0 0
      %238 = vmatpush1.bf16.msra.mxu0 %v218
      %239 = vmatprep.subr.bf16.mxu0 0
      %240 = vmatpush1.bf16.msra.mxu0 %v219
      %241 = vmatprep.subr.bf16.mxu0 0
      %242 = vmatpush1.bf16.msra.mxu0 %v231
      %243 = vmatprep.subr.bf16.mxu0 0
      %244 = vmatpush1.bf16.msra.mxu0 0
      %245 = vmatprep.subr.bf16.mxu0 0
      %246 = vmatpush1.bf16.msra.mxu0 0
      %247 = vmatprep.subr.bf16.mxu0 0
      %248 = vmatpush1.bf16.msra.mxu0 0
      %249 = vmatprep.subr.bf16.mxu0 0
      %250 = vmatpush1.bf16.msra.mxu0 0
      %251 = vmatprep.subr.bf16.mxu0 0
      %252 = vmatpush1.bf16.msra.mxu0 0
      %253 = vmatprep.subr.bf16.mxu0 0
      %254 = vmatpush1.bf16.msra.mxu0 0
      %255 = vmatprep.subr.bf16.mxu0 0
      %256 = vmatpush1.bf16.msra.mxu0 0
      %257 = vmatprep.subr.bf16.mxu0 0
      %258 = vmatpush1.bf16.msra.mxu0 0
      %259 = vmatprep.subr.bf16.mxu0 0
      %260 = vmatpush1.bf16.msra.mxu0 0
      %261 = vmatprep.subr.bf16.mxu0 0
      %262 = vmatpush1.bf16.msra.mxu0 0
      %263 = vmatprep.subr.bf16.mxu0 0
      %264 = vmatpush1.bf16.msra.mxu0 0
      %265 = vmatprep.mubr.bf16.mxu0 0
      %266 = vmatmul.mubr.bf16.gmra.mrb[0].mxu0 %v227
      %v267 = vpop.f32.mrb[0].mxu0
      %v268 = vadd.f32 %v191, %v267
      %v269 = vpop.f32.mrb[0].mxu0
      %v270 = vpop.f32.mrb[0].mxu0
      %v271 = vadd.f32 %v191, %v270
      %v272 = vpop.f32.mrb[0].mxu0
      %273 = vdwg.mxu0
      %v274 = vpack.c.bf16 %v271, %v268
      %v276 = vunpack.c.l.b16 %v274
      %v277 = vunpack.c.h.b16 %v274
      %v278 = vpack.c.b16 %v276, %v276
      %v279 = vpack.c.b16 %v277, %v277
      %vm282 = vcmask 60416
      %283 = vst.msk [vmem:[%s172] sm:$0xf] %vm282, %v278
      %284 = vst.msk [vmem:[%s172 + $0x4] sm:$0xf] %vm282, %v279
      %s285 = smul.u32 2, %s14
      %p286 = scmp.lt.s32.totalorder %s285, 3
      %s287 = scalar_select %p286, %s285, 3
      %s288 = smul.addr %s287, 4
      %s289 = scalar_lea.vmem %s3, %s288
      // Predicated region
      $region33: #{_lambda_.25} parent=31 // pred_check
        %p290 = pneg %p100
      $region34: #{_lambda_.25} parent=31 // pred_check_branch
        %292 = sbr.rel (%p290) target = $region36
      $region35: #{_lambda_.25} parent=31 // pred_region
        %s293 = smul.u32 2, %s14
      $region36: #{_lambda_.25} parent=31 // pred_fallthru
        _
    $region32: #{_lambda_.25} parent=5 // pred_fallthru
      _
    %p294 = scmp.le.s32.totalorder 2, %s9
    // Predicated region
    $region37: #{_lambda_.25} parent=5 // pred_check
      %p295 = pneg %p294
    $region38: #{_lambda_.25} parent=5 // pred_check_branch
      %297 = sbr.rel (%p295) target = $region40
    $region39: #{_lambda_.25} parent=5 // pred_region
      %s298 = ssub.s32 %s9, 2
      // Predicated region
      $region41: #{_lambda_.25} parent=39 // pred_check
        %p299 = pneg %p106
      $region42: #{_lambda_.25} parent=39 // pred_check_branch
        %301 = sbr.rel (%p299) target = $region44
      $region43: #{_lambda_.25} parent=39 // pred_region
        %s302 = smul.u32 2, %s15
        %p303 = scmp.lt.s32.totalorder %s302, 3
        %s304 = scalar_select %p303, %s302, 3
        %s305 = smul.addr %s304, 4
        %s306 = scalar_lea.vmem %s3, %s305
      $region44: #{_lambda_.25} parent=39 // pred_fallthru
        _
    $region40: #{_lambda_.25} parent=5 // pred_fallthru
      _
  $region6: #{_lambda_.25} parent=0 // loop_footer
    %s13 = sadd.s32 1, %s9
  $region7: #{_lambda_.25} parent=0 // loop_footer_branch
    %8 = sbr.rel target = $region3
  $region8: #{_lambda_.25} parent=0 // loop_exit
    _

// kernel: _lambda_.27
$region0: #{_lambda_.27}
  #allocation0 [shape = 'u32[]', space=smem, size = 0x4, offset = 0x4, fixed_abs, tag = 'smem constant byte address 0x4 - core index']
  #allocation1 [shape = 'u32[144,128]{1,0:T(1,128)}', space=vmem, size = 0x12000, scoped, tag = 'internal scratch']
  %s0 = inlined_call_operand.vmem [shape: bf16[32,8], index: 0, kind: input, shape index: {}]
  %s1 = inlined_call_operand.vmem [shape: bf16[8,8], index: 1, kind: input, shape index: {}]
  %s2 = inlined_call_operand.vmem [shape: f32[1,8], index: 2, kind: input, shape index: {}]
  %s3 = inlined_call_operand.vmem [shape: bf16[32,8], index: 3, kind: output, shape index: {}]
  %s4 = sld [smem:[#allocation0]]
  $region45: #{_lambda_.27} parent=0
    _
  %s6 = ssub.s32 1, %s4
  %s7 = scalar_select 0, %s6, %s4
  loop: start=0, step=1, limit=4
  $region2: #{_lambda_.27} parent=0 // loop_pre_header
    _
  $region3: #{_lambda_.27} parent=0 // loop_header
    %s9 = sphi 0, %s13
    %p10 = scmp.ge.s32.totalorder %s9, 4
    %s19 = sphi 0, %s21
    %s22 = sphi 0, %s19
    %s23 = sphi 0, %s22
    %s39 = sphi 0, %s23
    %s43 = sphi 0, %s43
    %s45 = sphi 0, %s43
    %s46 = sphi 0, %s45
    %s60 = sphi 0, %s46
    %s64 = sphi 0, %s64
    %s66 = sphi 0, %s64
    %s67 = sphi 0, %s66
    %s81 = sphi 0, %s67
    %s87 = sphi 0, %s89
    %s90 = sphi 0, %s87
    %s91 = sphi 0, %s90
    %s107 = sphi 0, %s91
  $region4: #{_lambda_.27} parent=0 // loop_header_branch
    %12 = sbr.rel (%p10) target = $region8
  $region5: #{_lambda_.27} parent=0 // loop_body
    %s14 = ssub.s32 %s9, 1
    %s15 = ssub.s32 %s9, 2
    %s16 = sadd.s32 %s9, 1
    %s17 = ssub.s32 %s9, %s16
    %p18 = scmp.eq.s32.totalorder %s17, 0
    %s20 = sadd.s32 %s19, 1
    %s21 = scalar_select %p18, %s19, %s20
    %p24 = pneg %p18
    %p25 = scmp.eq.s32.totalorder %s9, 1
    %p26 = por %p24, %p25
    %p27 = scmp.ne.s32.totalorder %s19, %s22
    %p28 = scmp.eq.s32.totalorder %s9, 0
    %p29 = por %p27, %p28
    %p30 = scmp.ne.s32.totalorder %s19, %s22
    %p31 = scmp.eq.s32.totalorder %s14, 1
    %p32 = por %p30, %p31
    %p33 = scmp.ne.s32.totalorder %s22, %s23
    %p34 = scmp.eq.s32.totalorder %s14, 0
    %p35 = por %p33, %p34
    %p36 = scmp.ne.s32.totalorder %s22, %s23
    %p37 = scmp.eq.s32.totalorder %s15, 1
    %p38 = por %p36, %p37
    %p40 = scmp.ne.s32.totalorder %s23, %s39
    %p41 = scmp.eq.s32.totalorder %s15, 0
    %p42 = por %p40, %p41
    %s44 = sadd.s32 %s43, 1
    %p47 = scmp.eq.s32.totalorder %s9, 1
    %p48 = scmp.ne.s32.totalorder %s43, %s45
    %p49 = scmp.eq.s32.totalorder %s9, 0
    %p50 = por %p48, %p49
    %p51 = scmp.ne.s32.totalorder %s43, %s45
    %p52 = scmp.eq.s32.totalorder %s14, 1
    %p53 = por %p51, %p52
    %p54 = scmp.ne.s32.totalorder %s45, %s46
    %p55 = scmp.eq.s32.totalorder %s14, 0
    %p56 = por %p54, %p55
    %p57 = scmp.ne.s32.totalorder %s45, %s46
    %p58 = scmp.eq.s32.totalorder %s15, 1
    %p59 = por %p57, %p58
    %p61 = scmp.ne.s32.totalorder %s46, %s60
    %p62 = scmp.eq.s32.totalorder %s15, 0
    %p63 = por %p61, %p62
    %s65 = sadd.s32 %s64, 1
    %p68 = scmp.eq.s32.totalorder %s9, 1
    %p69 = scmp.ne.s32.totalorder %s64, %s66
    %p70 = scmp.eq.s32.totalorder %s9, 0
    %p71 = por %p69, %p70
    %p72 = scmp.ne.s32.totalorder %s64, %s66
    %p73 = scmp.eq.s32.totalorder %s14, 1
    %p74 = por %p72, %p73
    %p75 = scmp.ne.s32.totalorder %s66, %s67
    %p76 = scmp.eq.s32.totalorder %s14, 0
    %p77 = por %p75, %p76
    %p78 = scmp.ne.s32.totalorder %s66, %s67
    %p79 = scmp.eq.s32.totalorder %s15, 1
    %p80 = por %p78, %p79
    %p82 = scmp.ne.s32.totalorder %s67, %s81
    %p83 = scmp.eq.s32.totalorder %s15, 0
    %p84 = por %p82, %p83
    %s85 = ssub.s32 %s9, %s16
    %p86 = scmp.eq.s32.totalorder %s85, 0
    %s88 = sadd.s32 %s87, 1
    %s89 = scalar_select %p86, %s87, %s88
    %p92 = pneg %p86
    %p93 = scmp.eq.s32.totalorder %s9, 1
    %p94 = por %p92, %p93
    %p95 = scmp.ne.s32.totalorder %s87, %s90
    %p96 = scmp.eq.s32.totalorder %s9, 0
    %p97 = por %p95, %p96
    %p98 = scmp.ne.s32.totalorder %s87, %s90
    %p99 = scmp.eq.s32.totalorder %s14, 1
    %p100 = por %p98, %p99
    %p101 = scmp.ne.s32.totalorder %s90, %s91
    %p102 = scmp.eq.s32.totalorder %s14, 0
    %p103 = por %p101, %p102
    %p104 = scmp.ne.s32.totalorder %s90, %s91
    %p105 = scmp.eq.s32.totalorder %s15, 1
    %p106 = por %p104, %p105
    %p108 = scmp.ne.s32.totalorder %s91, %s107
    %p109 = scmp.eq.s32.totalorder %s15, 0
    %p110 = por %p108, %p109
    %p111 = scmp.le.s32.totalorder 1, %s9
    %p112 = scmp.lt.s32.totalorder %s9, 3
    %p113 = pnand %p111, %p112
    %p114 = pneg %p113
    // Predicated region
    $region9: #{_lambda_.27} parent=5 // pred_check
      _
    $region10: #{_lambda_.27} parent=5 // pred_check_branch
      %116 = sbr.rel (%p113) target = $region12
    $region11: #{_lambda_.27} parent=5 // pred_region
      %s117 = ssub.s32 %s9, 1
      // Predicated region
      $region13: #{_lambda_.27} parent=11 // pred_check
        %p118 = pneg %p56
      $region14: #{_lambda_.27} parent=11 // pred_check_branch
        %120 = sbr.rel (%p118) target = $region16
      $region15: #{_lambda_.27} parent=11 // pred_region
        _
      $region16: #{_lambda_.27} parent=11 // pred_fallthru
        _
      // Predicated region
      $region17: #{_lambda_.27} parent=11 // pred_check
        %p121 = pneg %p77
      $region18: #{_lambda_.27} parent=11 // pred_check_branch
        %123 = sbr.rel (%p121) target = $region20
      $region19: #{_lambda_.27} parent=11 // pred_region
        _
      $region20: #{_lambda_.27} parent=11 // pred_fallthru
        _
    $region12: #{_lambda_.27} parent=5 // pred_fallthru
      _
    %p124 = scmp.lt.s32.totalorder %s9, 2
    // Predicated region
    $region21: #{_lambda_.27} parent=5 // pred_check
      %p125 = pneg %p124
    $region22: #{_lambda_.27} parent=5 // pred_check_branch
      %127 = sbr.rel (%p125) target = $region24
    $region23: #{_lambda_.27} parent=5 // pred_region
      // Predicated region
      $region25: #{_lambda_.27} parent=23 // pred_check
        %p128 = pneg %p29
      $region26: #{_lambda_.27} parent=23 // pred_check_branch
        %130 = sbr.rel (%p128) target = $region28
      $region27: #{_lambda_.27} parent=23 // pred_region
        %s131 = smul.u32 2, %s9
        %p132 = scmp.lt.s32.totalorder %s131, 3
        %s133 = scalar_select %p132, %s131, 3
        %s134 = smul.addr %s133, 4
        %s135 = scalar_lea.vmem %s0, %s134
        %s136 = smul.u32 2, %s9
      $region28: #{_lambda_.27} parent=23 // pred_fallthru
        _
    $region24: #{_lambda_.27} parent=5 // pred_fallthru
      _
    %p137 = scmp.le.s32.totalorder 1, %s9
    %p138 = scmp.lt.s32.totalorder %s9, 3
    %p139 = pnand %p137, %p138
    %p140 = pneg %p139
    // Predicated region
    $region29: #{_lambda_.27} parent=5 // pred_check
      _
    $region30: #{_lambda_.27} parent=5 // pred_check_branch
      %142 = sbr.rel (%p139) target = $region32
    $region31: #{_lambda_.27} parent=5 // pred_region
      %s143 = ssub.s32 %s9, 1
      %s144 = smul.u32 2, %s14
      %p145 = scmp.lt.s32.totalorder %s144, 3
      %s146 = scalar_select %p145, %s144, 3
      %s147 = smul.addr %s146, 4
      %s148 = scalar_lea.vmem %s0, %s147
      %p149 = pneg %p35
      %p150 = pneg %p32
      %p151 = pneg %p56
      %p152 = pneg %p53
      %p153 = pneg %p77
      %p154 = pneg %p74
      %p155 = pneg %p103
      %p156 = pneg %p100
      %s157 = smul.u32 2, %s14
      %p158 = scmp.lt.s32.totalorder %s157, 3
      %s159 = scalar_select %p158, %s157, 3
      %s160 = smul.addr %s159, 4
      %s161 = scalar_lea.vmem %s3, %s160
      %s162 = smul.u32 2, %s14
      %p163 = scmp.lt.s32.totalorder %s162, 3
      %s164 = scalar_select %p163, %s162, 3
      %s165 = smul.addr %s164, 4
      %s166 = scalar_lea.vmem %s0, %s165
      %s167 = smul.u32 2, %s14
      %s168 = smul.u32 2, %s14
      %p169 = scmp.lt.s32.totalorder %s168, 3
      %s170 = scalar_select %p169, %s168, 3
      %s171 = smul.addr %s170, 4
      %s172 = scalar_lea.vmem %s3, %s171
      %s173 = smul.u32 2, %s14
      %v175 = vld [vmem:[%s166] sm:$0xf]
      %v176 = vld [vmem:[%s166 + $0x4] sm:$0xf]
      %v177 = vld [vmem:[%s1] sm:$0xf]
      %v178 = vld [vmem:[%s2] sm:$0x1]
      %v180 = vlaneseq
      %v181 = vshrl.u32 %v180, 7
      %v182 = vsub.s32 0, %v181
      %v183 = vrot.slane %v178, %v182
      %v187 = vunpack.c.l.b16 %v175
      %v188 = vunpack.c.l.b16 %v176
      %v189 = vpack.c.b16 %v188, %v187
      %vm190 = vcmask 64512
      %v192 = vsel %vm190, %v189, 0
      %vm194 = vcmask 1043456
      %v196 = vsel %vm194, %v177, 0
      %198 = vmatprep.subr.bf16.mxu0 0
      %199 = vmatpush1.bf16.msra.mxu0 %v196
      %200 = vmatprep.subr.bf16.mxu0 0
      %201 = vmatpush1.bf16.msra.mxu0 0
      %202 = vmatprep.subr.bf16.mxu0 0
      %203 = vmatpush1.bf16.msra.mxu0 0
      %204 = vmatprep.subr.bf16.mxu0 0
      %205 = vmatpush1.bf16.msra.mxu0 0
      %206 = vmatprep.subr.bf16.mxu0 0
      %207 = vmatpush1.bf16.msra.mxu0 0
      %208 = vmatprep.subr.bf16.mxu0 0
      %209 = vmatpush1.bf16.msra.mxu0 0
      %210 = vmatprep.subr.bf16.mxu0 0
      %211 = vmatpush1.bf16.msra.mxu0 0
      %212 = vmatprep.subr.bf16.mxu0 0
      %213 = vmatpush1.bf16.msra.mxu0 0
      %214 = vmatprep.subr.bf16.mxu0 0
      %215 = vmatpush1.bf16.msra.mxu0 0
      %216 = vmatprep.subr.bf16.mxu0 0
      %217 = vmatpush1.bf16.msra.mxu0 0
      %218 = vmatprep.subr.bf16.mxu0 0
      %219 = vmatpush1.bf16.msra.mxu0 0
      %220 = vmatprep.subr.bf16.mxu0 0
      %221 = vmatpush1.bf16.msra.mxu0 0
      %222 = vmatprep.subr.bf16.mxu0 0
      %223 = vmatpush1.bf16.msra.mxu0 0
      %224 = vmatprep.subr.bf16.mxu0 0
      %225 = vmatpush1.bf16.msra.mxu0 0
      %226 = vmatprep.subr.bf16.mxu0 0
      %227 = vmatpush1.bf16.msra.mxu0 0
      %228 = vmatprep.subr.bf16.mxu0 0
      %229 = vmatpush1.bf16.msra.mxu0 0
      %230 = vmatprep.mubr.bf16.mxu0 0
      %231 = vmatmul.mubr.bf16.gmra.mrb[0].mxu0 %v192
      %v232 = vpop.f32.mrb[0].mxu0
      %v233 = vadd.f32 %v183, %v232
      %v234 = vpop.f32.mrb[0].mxu0
      %v235 = vpop.f32.mrb[0].mxu0
      %v236 = vadd.f32 %v183, %v235
      %v237 = vpop.f32.mrb[0].mxu0
      %238 = vdwg.mxu0
      %v239 = vpack.c.bf16 %v236, %v233
      %v241 = vunpack.c.l.b16 %v239
      %v242 = vunpack.c.h.b16 %v239
      %v243 = vpack.c.b16 %v241, %v241
      %v244 = vpack.c.b16 %v242, %v242
      %vm247 = vcmask 60416
      %248 = vst.msk [vmem:[%s172] sm:$0xf] %vm247, %v243
      %249 = vst.msk [vmem:[%s172 + $0x4] sm:$0xf] %vm247, %v244
      %s250 = smul.u32 2, %s14
      %p251 = scmp.lt.s32.totalorder %s250, 3
      %s252 = scalar_select %p251, %s250, 3
      %s253 = smul.addr %s252, 4
      %s254 = scalar_lea.vmem %s3, %s253
      // Predicated region
      $region33: #{_lambda_.27} parent=31 // pred_check
        %p255 = pneg %p100
      $region34: #{_lambda_.27} parent=31 // pred_check_branch
        %257 = sbr.rel (%p255) target = $region36
      $region35: #{_lambda_.27} parent=31 // pred_region
        %s258 = smul.u32 2, %s14
      $region36: #{_lambda_.27} parent=31 // pred_fallthru
        _
    $region32: #{_lambda_.27} parent=5 // pred_fallthru
      _
    %p259 = scmp.le.s32.totalorder 2, %s9
    // Predicated region
    $region37: #{_lambda_.27} parent=5 // pred_check
      %p260 = pneg %p259
    $region38: #{_lambda_.27} parent=5 // pred_check_branch
      %262 = sbr.rel (%p260) target = $region40
    $region39: #{_lambda_.27} parent=5 // pred_region
      %s263 = ssub.s32 %s9, 2
      // Predicated region
      $region41: #{_lambda_.27} parent=39 // pred_check
        %p264 = pneg %p106
      $region42: #{_lambda_.27} parent=39 // pred_check_branch
        %266 = sbr.rel (%p264) target = $region44
      $region43: #{_lambda_.27} parent=39 // pred_region
        %s267 = smul.u32 2, %s15
        %p268 = scmp.lt.s32.totalorder %s267, 3
        %s269 = scalar_select %p268, %s267, 3
        %s270 = smul.addr %s269, 4
        %s271 = scalar_lea.vmem %s3, %s270
      $region44: #{_lambda_.27} parent=39 // pred_fallthru
        _
    $region40: #{_lambda_.27} parent=5 // pred_fallthru
      _
  $region6: #{_lambda_.27} parent=0 // loop_footer
    %s13 = sadd.s32 1, %s9
  $region7: #{_lambda_.27} parent=0 // loop_footer_branch
    %8 = sbr.rel target = $region3
  $region8: #{_lambda_.27} parent=0 // loop_exit
    _

// kernel: _lambda_.26
$region0: #{_lambda_.26}
  #allocation0 [shape = 'u32[]', space=smem, size = 0x4, offset = 0x4, fixed_abs, tag = 'smem constant byte address 0x4 - core index']
  #allocation1 [shape = 'u32[144,128]{1,0:T(1,128)}', space=vmem, size = 0x12000, scoped, tag = 'internal scratch']
  %s0 = inlined_call_operand.vmem [shape: bf16[2,32,8], index: 0, kind: input, shape index: {}]
  %s1 = inlined_call_operand.vmem [shape: bf16[2,8,4], index: 1, kind: input, shape index: {}]
  %s2 = inlined_call_operand.vmem [shape: f32[2,1,4], index: 2, kind: input, shape index: {}]
  %s3 = inlined_call_operand.vmem [shape: bf16[2,32,4], index: 3, kind: output, shape index: {}]
  %s4 = sld [smem:[#allocation0]]
  $region45: #{_lambda_.26} parent=0
    _
  %s6 = ssub.s32 1, %s4
  %s7 = scalar_select 0, %s6, %s4
  loop: start=0, step=1, limit=6
  $region2: #{_lambda_.26} parent=0 // loop_pre_header
    _
  $region3: #{_lambda_.26} parent=0 // loop_header
    %s9 = sphi 0, %s13
    %p10 = scmp.ge.s32.totalorder %s9, 6
    %s16 = sphi 0, %s28
    %s17 = sphi 0, %s24
    %s18 = sphi 0, %s16
    %s19 = sphi 0, %s17
    %s20 = sphi 0, %s18
    %s21 = sphi 0, %s19
    %s33 = sphi 0, %s35
    %s36 = sphi 0, %s33
    %s37 = sphi 0, %s36
    %s53 = sphi 0, %s37
    %s59 = sphi 0, %s61
    %s62 = sphi 0, %s59
    %s63 = sphi 0, %s62
    %s79 = sphi 0, %s63
    %s85 = sphi 0, %s87
    %s88 = sphi 0, %s85
    %s89 = sphi 0, %s88
    %s105 = sphi 0, %s89
    %s113 = sphi 0, %s115
    %s116 = sphi 0, %s113
    %s117 = sphi 0, %s116
    %s133 = sphi 0, %s117
  $region4: #{_lambda_.26} parent=0 // loop_header_branch
    %12 = sbr.rel (%p10) target = $region8
  $region5: #{_lambda_.26} parent=0 // loop_body
    %s14 = ssub.s32 %s9, 1
    %s15 = ssub.s32 %s9, 2
    %s22 = sadd.s32 1, %s17
    %p23 = scmp.ge.s32.totalorder %s22, 2
    %s24 = scalar_select %p23, 0, %s22
    %s25 = sadd.s32 1, %s16
    %s26 = scalar_select %p23, %s25, %s16
    %p27 = scmp.ge.s32.totalorder %s26, 2
    %s28 = scalar_select %p27, 0, %s26
    %s29 = ssub.s32 %s16, %s28
    %s30 = ssub.s32 %s17, %s24
    %s31 = sor.u32 %s29, %s30
    %p32 = scmp.eq.s32.totalorder %s31, 0
    %s34 = sadd.s32 %s33, 1
    %s35 = scalar_select %p32, %s33, %s34
    %p38 = pneg %p32
    %p39 = scmp.eq.s32.totalorder %s9, 3
    %p40 = por %p38, %p39
    %p41 = scmp.ne.s32.totalorder %s33, %s36
    %p42 = scmp.eq.s32.totalorder %s9, 0
    %p43 = por %p41, %p42
    %p44 = scmp.ne.s32.totalorder %s33, %s36
    %p45 = scmp.eq.s32.totalorder %s14, 3
    %p46 = por %p44, %p45
    %p47 = scmp.ne.s32.totalorder %s36, %s37
    %p48 = scmp.eq.s32.totalorder %s14, 0
    %p49 = por %p47, %p48
    %p50 = scmp.ne.s32.totalorder %s36, %s37
    %p51 = scmp.eq.s32.totalorder %s15, 3
    %p52 = por %p50, %p51
    %p54 = scmp.ne.s32.totalorder %s37, %s53
    %p55 = scmp.eq.s32.totalorder %s15, 0
    %p56 = por %p54, %p55
    %s57 = ssub.s32 %s16, %s28
    %p58 = scmp.eq.s32.totalorder %s57, 0
    %s60 = sadd.s32 %s59, 1
    %s61 = scalar_select %p58, %s59, %s60
    %p64 = pneg %p58
    %p65 = scmp.eq.s32.totalorder %s9, 3
    %p66 = por %p64, %p65
    %p67 = scmp.ne.s32.totalorder %s59, %s62
    %p68 = scmp.eq.s32.totalorder %s9, 0
    %p69 = por %p67, %p68
    %p70 = scmp.ne.s32.totalorder %s59, %s62
    %p71 = scmp.eq.s32.totalorder %s14, 3
    %p72 = por %p70, %p71
    %p73 = scmp.ne.s32.totalorder %s62, %s63
    %p74 = scmp.eq.s32.totalorder %s14, 0
    %p75 = por %p73, %p74
    %p76 = scmp.ne.s32.totalorder %s62, %s63
    %p77 = scmp.eq.s32.totalorder %s15, 3
    %p78 = por %p76, %p77
    %p80 = scmp.ne.s32.totalorder %s63, %s79
    %p81 = scmp.eq.s32.totalorder %s15, 0
    %p82 = por %p80, %p81
    %s83 = ssub.s32 %s16, %s28
    %p84 = scmp.eq.s32.totalorder %s83, 0
    %s86 = sadd.s32 %s85, 1
    %s87 = scalar_select %p84, %s85, %s86
    %p90 = pneg %p84
    %p91 = scmp.eq.s32.totalorder %s9, 3
    %p92 = por %p90, %p91
    %p93 = scmp.ne.s32.totalorder %s85, %s88
    %p94 = scmp.eq.s32.totalorder %s9, 0
    %p95 = por %p93, %p94
    %p96 = scmp.ne.s32.totalorder %s85, %s88
    %p97 = scmp.eq.s32.totalorder %s14, 3
    %p98 = por %p96, %p97
    %p99 = scmp.ne.s32.totalorder %s88, %s89
    %p100 = scmp.eq.s32.totalorder %s14, 0
    %p101 = por %p99, %p100
    %p102 = scmp.ne.s32.totalorder %s88, %s89
    %p103 = scmp.eq.s32.totalorder %s15, 3
    %p104 = por %p102, %p103
    %p106 = scmp.ne.s32.totalorder %s89, %s105
    %p107 = scmp.eq.s32.totalorder %s15, 0
    %p108 = por %p106, %p107
    %s109 = ssub.s32 %s16, %s28
    %s110 = ssub.s32 %s17, %s24
    %s111 = sor.u32 %s109, %s110
    %p112 = scmp.eq.s32.totalorder %s111, 0
    %s114 = sadd.s32 %s113, 1
    %s115 = scalar_select %p112, %s113, %s114
    %p118 = pneg %p112
    %p119 = scmp.eq.s32.totalorder %s9, 3
    %p120 = por %p118, %p119
    %p121 = scmp.ne.s32.totalorder %s113, %s116
    %p122 = scmp.eq.s32.totalorder %s9, 0
    %p123 = por %p121, %p122
    %p124 = scmp.ne.s32.totalorder %s113, %s116
    %p125 = scmp.eq.s32.totalorder %s14, 3
    %p126 = por %p124, %p125
    %p127 = scmp.ne.s32.totalorder %s116, %s117
    %p128 = scmp.eq.s32.totalorder %s14, 0
    %p129 = por %p127, %p128
    %p130 = scmp.ne.s32.totalorder %s116, %s117
    %p131 = scmp.eq.s32.totalorder %s15, 3
    %p132 = por %p130, %p131
    %p134 = scmp.ne.s32.totalorder %s117, %s133
    %p135 = scmp.eq.s32.totalorder %s15, 0
    %p136 = por %p134, %p135
    %p137 = scmp.le.s32.totalorder 1, %s9
    %p138 = scmp.lt.s32.totalorder %s9, 5
    %p139 = pnand %p137, %p138
    %p140 = pneg %p139
    // Predicated region
    $region9: #{_lambda_.26} parent=5 // pred_check
      _
    $region10: #{_lambda_.26} parent=5 // pred_check_branch
      %142 = sbr.rel (%p139) target = $region12
    $region11: #{_lambda_.26} parent=5 // pred_region
      %s143 = ssub.s32 %s9, 1
    $region12: #{_lambda_.26} parent=5 // pred_fallthru
      _
    %p144 = scmp.lt.s32.totalorder %s9, 4
    // Predicated region
    $region13: #{_lambda_.26} parent=5 // pred_check
      %p145 = pneg %p144
    $region14: #{_lambda_.26} parent=5 // pred_check_branch
      %147 = sbr.rel (%p145) target = $region16
    $region15: #{_lambda_.26} parent=5 // pred_region
      // Predicated region
      $region17: #{_lambda_.26} parent=15 // pred_check
        %p148 = pneg %p43
      $region18: #{_lambda_.26} parent=15 // pred_check_branch
        %150 = sbr.rel (%p148) target = $region20
      $region19: #{_lambda_.26} parent=15 // pred_region
        %s151 = smul.u32 2, %s17
        %p152 = scmp.lt.s32.totalorder %s16, 1
        %s153 = scalar_select %p152, %s16, 1
        %p154 = scmp.lt.s32.totalorder %s151, 3
        %s155 = scalar_select %p154, %s151, 3
        %s156 = smul.addr %s153, 4
        %s157 = sadd.s32 %s155, %s156
        %s158 = smul.addr %s157, 4
        %s159 = scalar_lea.vmem %s0, %s158
        %s160 = smul.u32 2, %s17
      $region20: #{_lambda_.26} parent=15 // pred_fallthru
        _
      // Predicated region
      $region21: #{_lambda_.26} parent=15 // pred_check
        %p161 = pneg %p69
      $region22: #{_lambda_.26} parent=15 // pred_check_branch
        %163 = sbr.rel (%p161) target = $region24
      $region23: #{_lambda_.26} parent=15 // pred_region
        %p164 = scmp.lt.s32.totalorder %s16, 1
        %s165 = scalar_select %p164, %s16, 1
        %s166 = smul.addr %s165, 4
        %s167 = scalar_lea.vmem %s1, %s166
      $region24: #{_lambda_.26} parent=15 // pred_fallthru
        _
      // Predicated region
      $region25: #{_lambda_.26} parent=15 // pred_check
        %p168 = pneg %p95
      $region26: #{_lambda_.26} parent=15 // pred_check_branch
        %170 = sbr.rel (%p168) target = $region28
      $region27: #{_lambda_.26} parent=15 // pred_region
        %p171 = scmp.lt.s32.totalorder %s16, 1
        %s172 = scalar_select %p171, %s16, 1
        %s173 = scalar_lea.vmem %s2, %s172
      $region28: #{_lambda_.26} parent=15 // pred_fallthru
        _
    $region16: #{_lambda_.26} parent=5 // pred_fallthru
      _
    %p174 = scmp.le.s32.totalorder 1, %s9
    %p175 = scmp.lt.s32.totalorder %s9, 5
    %p176 = pnand %p174, %p175
    %p177 = pneg %p176
    // Predicated region
    $region29: #{_lambda_.26} parent=5 // pred_check
      _
    $region30: #{_lambda_.26} parent=5 // pred_check_branch
      %179 = sbr.rel (%p176) target = $region32
    $region31: #{_lambda_.26} parent=5 // pred_region
      %s180 = ssub.s32 %s9, 1
      %s181 = smul.u32 2, %s19
      %p182 = scmp.lt.s32.totalorder %s18, 1
      %s183 = scalar_select %p182, %s18, 1
      %p184 = scmp.lt.s32.totalorder %s181, 3
      %s185 = scalar_select %p184, %s181, 3
      %s186 = smul.addr %s183, 4
      %s187 = sadd.s32 %s185, %s186
      %s188 = smul.addr %s187, 4
      %s189 = scalar_lea.vmem %s0, %s188
      %p190 = pneg %p49
      %p191 = pneg %p46
      %p192 = scmp.lt.s32.totalorder %s18, 1
      %s193 = scalar_select %p192, %s18, 1
      %s194 = smul.addr %s193, 4
      %s195 = scalar_lea.vmem %s1, %s194
      %p196 = pneg %p75
      %p197 = pneg %p72
      %p198 = scmp.lt.s32.totalorder %s18, 1
      %s199 = scalar_select %p198, %s18, 1
      %s200 = scalar_lea.vmem %s2, %s199
      %p201 = pneg %p101
      %p202 = pneg %p98
      %p203 = pneg %p129
      %p204 = pneg %p126
      %s205 = smul.u32 2, %s19
      %p206 = scmp.lt.s32.totalorder %s18, 1
      %s207 = scalar_select %p206, %s18, 1
      %p208 = scmp.lt.s32.totalorder %s205, 3
      %s209 = scalar_select %p208, %s205, 3
      %s210 = smul.addr %s207, 4
      %s211 = sadd.s32 %s209, %s210
      %s212 = smul.addr %s211, 4
      %s213 = scalar_lea.vmem %s3, %s212
      %s214 = smul.u32 2, %s19
      %p215 = scmp.lt.s32.totalorder %s18, 1
      %s216 = scalar_select %p215, %s18, 1
      %p217 = scmp.lt.s32.totalorder %s214, 3
      %s218 = scalar_select %p217, %s214, 3
      %s219 = smul.addr %s216, 4
      %s220 = sadd.s32 %s218, %s219
      %s221 = smul.addr %s220, 4
      %s222 = scalar_lea.vmem %s0, %s221
      %s223 = smul.u32 2, %s19
      %p224 = scmp.lt.s32.totalorder %s18, 1
      %s225 = scalar_select %p224, %s18, 1
      %s226 = smul.addr %s225, 4
      %s227 = scalar_lea.vmem %s1, %s226
      %p228 = scmp.lt.s32.totalorder %s18, 1
      %s229 = scalar_select %p228, %s18, 1
      %s230 = scalar_lea.vmem %s2, %s229
      %s231 = smul.u32 2, %s19
      %p232 = scmp.lt.s32.totalorder %s18, 1
      %s233 = scalar_select %p232, %s18, 1
      %p234 = scmp.lt.s32.totalorder %s231, 3
      %s235 = scalar_select %p234, %s231, 3
      %s236 = smul.addr %s233, 4
      %s237 = sadd.s32 %s235, %s236
      %s238 = smul.addr %s237, 4
      %s239 = scalar_lea.vmem %s3, %s238
      %s240 = smul.u32 2, %s19
      %v242 = vld [vmem:[%s222] sm:$0xf]
      %v243 = vld [vmem:[%s222 + $0x4] sm:$0xf]
      %v244 = vld [vmem:[%s227] sm:$0xf]
      %v245 = vld [vmem:[%s230] sm:$0x1]
      %v247 = vlaneseq
      %v248 = vshrl.u32 %v247, 7
      %v249 = vsub.s32 0, %v248
      %v250 = vrot.slane %v245, %v249
      %v254 = vunpack.c.l.b16 %v242
      %v255 = vunpack.c.l.b16 %v243
      %v256 = vpack.c.b16 %v255, %v254
      %vm257 = vcmask 64512
      %v259 = vsel %vm257, %v256, 0
      %vm261 = vcmask 1043456
      %v263 = vsel %vm261, %v244, 0
      %265 = vmatprep.subr.bf16.mxu0 0
      %266 = vmatpush1.bf16.msra.mxu0 %v263
      %267 = vmatprep.subr.bf16.mxu0 0
      %268 = vmatpush1.bf16.msra.mxu0 0
      %269 = vmatprep.subr.bf16.mxu0 0
      %270 = vmatpush1.bf16.msra.mxu0 0
      %271 = vmatprep.subr.bf16.mxu0 0
      %272 = vmatpush1.bf16.msra.mxu0 0
      %273 = vmatprep.subr.bf16.mxu0 0
      %274 = vmatpush1.bf16.msra.mxu0 0
      %275 = vmatprep.subr.bf16.mxu0 0
      %276 = vmatpush1.bf16.msra.mxu0 0
      %277 = vmatprep.subr.bf16.mxu0 0
      %278 = vmatpush1.bf16.msra.mxu0 0
      %279 = vmatprep.subr.bf16.mxu0 0
      %280 = vmatpush1.bf16.msra.mxu0 0
      %281 = vmatprep.subr.bf16.mxu0 0
      %282 = vmatpush1.bf16.msra.mxu0 0
      %283 = vmatprep.subr.bf16.mxu0 0
      %284 = vmatpush1.bf16.msra.mxu0 0
      %285 = vmatprep.subr.bf16.mxu0 0
      %286 = vmatpush1.bf16.msra.mxu0 0
      %287 = vmatprep.subr.bf16.mxu0 0
      %288 = vmatpush1.bf16.msra.mxu0 0
      %289 = vmatprep.subr.bf16.mxu0 0
      %290 = vmatpush1.bf16.msra.mxu0 0
      %291 = vmatprep.subr.bf16.mxu0 0
      %292 = vmatpush1.bf16.msra.mxu0 0
      %293 = vmatprep.subr.bf16.mxu0 0
      %294 = vmatpush1.bf16.msra.mxu0 0
      %295 = vmatprep.subr.bf16.mxu0 0
      %296 = vmatpush1.bf16.msra.mxu0 0
      %297 = vmatprep.mubr.bf16.mxu0 0
      %298 = vmatmul.mubr.bf16.gmra.mrb[0].mxu0 %v259
      %v299 = vpop.f32.mrb[0].mxu0
      %v300 = vadd.f32 %v250, %v299
      %v301 = vpop.f32.mrb[0].mxu0
      %v302 = vpop.f32.mrb[0].mxu0
      %v303 = vadd.f32 %v250, %v302
      %v304 = vpop.f32.mrb[0].mxu0
      %305 = vdwg.mxu0
      %v306 = vpack.c.bf16 %v303, %v300
      %v308 = vunpack.c.l.b16 %v306
      %v309 = vunpack.c.h.b16 %v306
      %v310 = vpack.c.b16 %v308, %v308
      %v311 = vpack.c.b16 %v309, %v309
      %vm314 = vcmask 27648
      %315 = vst.msk [vmem:[%s239] sm:$0xf] %vm314, %v310
      %316 = vst.msk [vmem:[%s239 + $0x4] sm:$0xf] %vm314, %v311
      %s317 = smul.u32 2, %s19
      %p318 = scmp.lt.s32.totalorder %s18, 1
      %s319 = scalar_select %p318, %s18, 1
      %p320 = scmp.lt.s32.totalorder %s317, 3
      %s321 = scalar_select %p320, %s317, 3
      %s322 = smul.addr %s319, 4
      %s323 = sadd.s32 %s321, %s322
      %s324 = smul.addr %s323, 4
      %s325 = scalar_lea.vmem %s3, %s324
      // Predicated region
      $region33: #{_lambda_.26} parent=31 // pred_check
        %p326 = pneg %p126
      $region34: #{_lambda_.26} parent=31 // pred_check_branch
        %328 = sbr.rel (%p326) target = $region36
      $region35: #{_lambda_.26} parent=31 // pred_region
        %s329 = smul.u32 2, %s19
      $region36: #{_lambda_.26} parent=31 // pred_fallthru
        _
    $region32: #{_lambda_.26} parent=5 // pred_fallthru
      _
    %p330 = scmp.le.s32.totalorder 2, %s9
    // Predicated region
    $region37: #{_lambda_.26} parent=5 // pred_check
      %p331 = pneg %p330
    $region38: #{_lambda_.26} parent=5 // pred_check_branch
      %333 = sbr.rel (%p331) target = $region40
    $region39: #{_lambda_.26} parent=5 // pred_region
      %s334 = ssub.s32 %s9, 2
      // Predicated region
      $region41: #{_lambda_.26} parent=39 // pred_check
        %p335 = pneg %p132
      $region42: #{_lambda_.26} parent=39 // pred_check_branch
        %337 = sbr.rel (%p335) target = $region44
      $region43: #{_lambda_.26} parent=39 // pred_region
        %s338 = smul.u32 2, %s21
        %p339 = scmp.lt.s32.totalorder %s20, 1
        %s340 = scalar_select %p339, %s20, 1
        %p341 = scmp.lt.s32.totalorder %s338, 3
        %s342 = scalar_select %p341, %s338, 3
        %s343 = smul.addr %s340, 4
        %s344 = sadd.s32 %s342, %s343
        %s345 = smul.addr %s344, 4
        %s346 = scalar_lea.vmem %s3, %s345
      $region44: #{_lambda_.26} parent=39 // pred_fallthru
        _
    $region40: #{_lambda_.26} parent=5 // pred_fallthru
      _
  $region6: #{_lambda_.26} parent=0 // loop_footer
    %s13 = sadd.s32 1, %s9
  $region7: #{_lambda_.26} parent=0 // loop_footer_branch
    %8 = sbr.rel target = $region3
  $region8: #{_lambda_.26} parent=0 // loop_exit
    _

// kernel: _lambda_.31
$region0: #{_lambda_.31}
  #allocation0 [shape = 'u32[]', space=smem, size = 0x4, offset = 0x4, fixed_abs, tag = 'smem constant byte address 0x4 - core index']
  #allocation1 [shape = 'u32[144,128]{1,0:T(1,128)}', space=vmem, size = 0x12000, scoped, tag = 'internal scratch']
  %s0 = inlined_call_operand.vmem [shape: bf16[9,32,8], index: 0, kind: input, shape index: {}]
  %s1 = inlined_call_operand.vmem [shape: f32[1,8], index: 1, kind: input, shape index: {}]
  %s2 = inlined_call_operand.vmem [shape: f32[1,8], index: 2, kind: input, shape index: {}]
  %s3 = inlined_call_operand.vmem [shape: bf16[32,8], index: 3, kind: output, shape index: {}]
  %s4 = sld [smem:[#allocation0]]
  $region86: #{_lambda_.31} parent=0
    _
  %s6 = ssub.s32 1, %s4
  %s7 = scalar_select 0, %s6, %s4
  $region1: #{_lambda_.31} parent=0
    #allocation2 [shape = 'u8[73728]{0}', space=vmem, size = 0x12000, scoped, tag = 'input window, operand 0']
    loop: start=0, step=1, limit=4
    $region2: #{_lambda_.31} parent=1 // loop_pre_header
      _
    $region3: #{_lambda_.31} parent=1 // loop_header
      %s9 = sphi 0, %s13
      %p10 = scmp.ge.s32.totalorder %s9, 4
      %s19 = sphi 0, %s21
      %s22 = sphi 0, %s19
      %s23 = sphi 0, %s22
      %s39 = sphi 0, %s23
      %s43 = sphi 0, %s43
      %s45 = sphi 0, %s43
      %s46 = sphi 0, %s45
      %s60 = sphi 0, %s46
      %s64 = sphi 0, %s64
      %s66 = sphi 0, %s64
      %s67 = sphi 0, %s66
      %s81 = sphi 0, %s67
      %s87 = sphi 0, %s89
      %s90 = sphi 0, %s87
      %s91 = sphi 0, %s90
      %s107 = sphi 0, %s91
    $region4: #{_lambda_.31} parent=1 // loop_header_branch
      %12 = sbr.rel (%p10) target = $region8
    $region5: #{_lambda_.31} parent=1 // loop_body
      %s14 = ssub.s32 %s9, 1
      %s15 = ssub.s32 %s9, 2
      %s16 = sadd.s32 %s9, 1
      %s17 = ssub.s32 %s9, %s16
      %p18 = scmp.eq.s32.totalorder %s17, 0
      %s20 = sadd.s32 %s19, 1
      %s21 = scalar_select %p18, %s19, %s20
      %p24 = pneg %p18
      %p25 = scmp.eq.s32.totalorder %s9, 1
      %p26 = por %p24, %p25
      %p27 = scmp.ne.s32.totalorder %s19, %s22
      %p28 = scmp.eq.s32.totalorder %s9, 0
      %p29 = por %p27, %p28
      %p30 = scmp.ne.s32.totalorder %s19, %s22
      %p31 = scmp.eq.s32.totalorder %s14, 1
      %p32 = por %p30, %p31
      %p33 = scmp.ne.s32.totalorder %s22, %s23
      %p34 = scmp.eq.s32.totalorder %s14, 0
      %p35 = por %p33, %p34
      %p36 = scmp.ne.s32.totalorder %s22, %s23
      %p37 = scmp.eq.s32.totalorder %s15, 1
      %p38 = por %p36, %p37
      %p40 = scmp.ne.s32.totalorder %s23, %s39
      %p41 = scmp.eq.s32.totalorder %s15, 0
      %p42 = por %p40, %p41
      %s44 = sadd.s32 %s43, 1
      %p47 = scmp.eq.s32.totalorder %s9, 1
      %p48 = scmp.ne.s32.totalorder %s43, %s45
      %p49 = scmp.eq.s32.totalorder %s9, 0
      %p50 = por %p48, %p49
      %p51 = scmp.ne.s32.totalorder %s43, %s45
      %p52 = scmp.eq.s32.totalorder %s14, 1
      %p53 = por %p51, %p52
      %p54 = scmp.ne.s32.totalorder %s45, %s46
      %p55 = scmp.eq.s32.totalorder %s14, 0
      %p56 = por %p54, %p55
      %p57 = scmp.ne.s32.totalorder %s45, %s46
      %p58 = scmp.eq.s32.totalorder %s15, 1
      %p59 = por %p57, %p58
      %p61 = scmp.ne.s32.totalorder %s46, %s60
      %p62 = scmp.eq.s32.totalorder %s15, 0
      %p63 = por %p61, %p62
      %s65 = sadd.s32 %s64, 1
      %p68 = scmp.eq.s32.totalorder %s9, 1
      %p69 = scmp.ne.s32.totalorder %s64, %s66
      %p70 = scmp.eq.s32.totalorder %s9, 0
      %p71 = por %p69, %p70
      %p72 = scmp.ne.s32.totalorder %s64, %s66
      %p73 = scmp.eq.s32.totalorder %s14, 1
      %p74 = por %p72, %p73
      %p75 = scmp.ne.s32.totalorder %s66, %s67
      %p76 = scmp.eq.s32.totalorder %s14, 0
      %p77 = por %p75, %p76
      %p78 = scmp.ne.s32.totalorder %s66, %s67
      %p79 = scmp.eq.s32.totalorder %s15, 1
      %p80 = por %p78, %p79
      %p82 = scmp.ne.s32.totalorder %s67, %s81
      %p83 = scmp.eq.s32.totalorder %s15, 0
      %p84 = por %p82, %p83
      %s85 = ssub.s32 %s9, %s16
      %p86 = scmp.eq.s32.totalorder %s85, 0
      %s88 = sadd.s32 %s87, 1
      %s89 = scalar_select %p86, %s87, %s88
      %p92 = pneg %p86
      %p93 = scmp.eq.s32.totalorder %s9, 1
      %p94 = por %p92, %p93
      %p95 = scmp.ne.s32.totalorder %s87, %s90
      %p96 = scmp.eq.s32.totalorder %s9, 0
      %p97 = por %p95, %p96
      %p98 = scmp.ne.s32.totalorder %s87, %s90
      %p99 = scmp.eq.s32.totalorder %s14, 1
      %p100 = por %p98, %p99
      %p101 = scmp.ne.s32.totalorder %s90, %s91
      %p102 = scmp.eq.s32.totalorder %s14, 0
      %p103 = por %p101, %p102
      %p104 = scmp.ne.s32.totalorder %s90, %s91
      %p105 = scmp.eq.s32.totalorder %s15, 1
      %p106 = por %p104, %p105
      %p108 = scmp.ne.s32.totalorder %s91, %s107
      %p109 = scmp.eq.s32.totalorder %s15, 0
      %p110 = por %p108, %p109
      %p111 = scmp.le.s32.totalorder 1, %s9
      %p112 = scmp.lt.s32.totalorder %s9, 3
      %p113 = pnand %p111, %p112
      %p114 = pneg %p113
      // Predicated region
      $region9: #{_lambda_.31} parent=5 // pred_check
        _
      $region10: #{_lambda_.31} parent=5 // pred_check_branch
        %116 = sbr.rel (%p113) target = $region12
      $region11: #{_lambda_.31} parent=5 // pred_region
        %s117 = ssub.s32 %s9, 1
        // Predicated region
        $region13: #{_lambda_.31} parent=11 // pred_check
          %p118 = pneg %p56
        $region14: #{_lambda_.31} parent=11 // pred_check_branch
          %120 = sbr.rel (%p118) target = $region16
        $region15: #{_lambda_.31} parent=11 // pred_region
          _
        $region16: #{_lambda_.31} parent=11 // pred_fallthru
          _
        // Predicated region
        $region17: #{_lambda_.31} parent=11 // pred_check
          %p121 = pneg %p77
        $region18: #{_lambda_.31} parent=11 // pred_check_branch
          %123 = sbr.rel (%p121) target = $region20
        $region19: #{_lambda_.31} parent=11 // pred_region
          _
        $region20: #{_lambda_.31} parent=11 // pred_fallthru
          _
      $region12: #{_lambda_.31} parent=5 // pred_fallthru
        _
      %p124 = scmp.lt.s32.totalorder %s9, 2
      // Predicated region
      $region21: #{_lambda_.31} parent=5 // pred_check
        %p125 = pneg %p124
      $region22: #{_lambda_.31} parent=5 // pred_check_branch
        %127 = sbr.rel (%p125) target = $region24
      $region23: #{_lambda_.31} parent=5 // pred_region
        // Predicated region
        $region25: #{_lambda_.31} parent=23 // pred_check
          %p128 = pneg %p29
        $region26: #{_lambda_.31} parent=23 // pred_check_branch
          %130 = sbr.rel (%p128) target = $region28
        $region27: #{_lambda_.31} parent=23 // pred_region
          %s131 = sand.u32 %s19, 1
          %s132 = sand.u32 %s19, 1
          %s133 = smul.addr %s132, 72
          %s134 = scalar_lea.vmem [#allocation2], %s133
          %s135 = smul.u32 2, %s9
          %s136 = smul.addr %s135, 4
          %s137 = scalar_lea.vmem %s0, %s136
          // Predicated region
          $region29: #{_lambda_.31} parent=27 // pred_check
            _
          $region30: #{_lambda_.31} parent=27 // pred_check_branch
            %139 = sbr.rel (0) target = $region32
          $region31: #{_lambda_.31} parent=27 // pred_region
            // Predicated region
            $region33: #{_lambda_.31} parent=31 // pred_check
              _
            $region34: #{_lambda_.31} parent=31 // pred_check_branch
              %141 = sbr.rel target = $region36
            $region35: #{_lambda_.31} parent=31 // pred_region
              // Predicated region
              $region48: #{_lambda_.31} parent=35 // pred_check
                _
              $region49: #{_lambda_.31} parent=35 // pred_check_branch
                %190 = sbr.rel (0) target = $region51
              $region50: #{_lambda_.31} parent=35 // pred_region
                loop: start=0, step=1, limit=1
                $region52: #{_lambda_.31} parent=50 // loop_pre_header
                  _
                $region53: #{_lambda_.31} parent=50 // loop_header
                  %s192 = sphi 0, %s196
                  %p193 = scmp.ge.s32.totalorder %s192, 1
                  %s197 = sphi %s137, %s137
                  %s198 = sphi %s134, %s134
                $region54: #{_lambda_.31} parent=50 // loop_header_branch
                  %195 = sbr.rel (%p193) target = $region58
                $region55: #{_lambda_.31} parent=50 // loop_body
                  _
                $region56: #{_lambda_.31} parent=50 // loop_footer
                  %s196 = sadd.s32 1, %s192
                $region57: #{_lambda_.31} parent=50 // loop_footer_branch
                  %191 = sbr.rel target = $region53
                $region58: #{_lambda_.31} parent=50 // loop_exit
                  _
                loop: start=0, step=1, limit=1
                $region59: #{_lambda_.31} parent=50 // loop_pre_header
                  _
                $region60: #{_lambda_.31} parent=50 // loop_header
                  %s201 = sphi 0, %s205
                  %p202 = scmp.ge.s32.totalorder %s201, 1
                  %s206 = sphi %s137, %s137
                  %s207 = sphi %s134, %s134
                $region61: #{_lambda_.31} parent=50 // loop_header_branch
                  %204 = sbr.rel (%p202) target = $region65
                $region62: #{_lambda_.31} parent=50 // loop_body
                  %v208 = vld [vmem:[%s206] sm:$0xf]
                  %209 = vst [vmem:[%s207] sm:$0xf] %v208
                  %v210 = vld [vmem:[%s206 + $0x4] sm:$0xf]
                  %211 = vst [vmem:[%s207 + $0x4] sm:$0xf] %v210
                  %v212 = vld [vmem:[%s206 + $0x10] sm:$0xf]
                  %213 = vst [vmem:[%s207 + $0x8] sm:$0xf] %v212
                  %v214 = vld [vmem:[%s206 + $0x14] sm:$0xf]
                  %215 = vst [vmem:[%s207 + $0xc] sm:$0xf] %v214
                  %v216 = vld [vmem:[%s206 + $0x20] sm:$0xf]
                  %217 = vst [vmem:[%s207 + $0x10] sm:$0xf] %v216
                  %v218 = vld [vmem:[%s206 + $0x24] sm:$0xf]
                  %219 = vst [vmem:[%s207 + $0x14] sm:$0xf] %v218
                  %v220 = vld [vmem:[%s206 + $0x30] sm:$0xf]
                  %221 = vst [vmem:[%s207 + $0x18] sm:$0xf] %v220
                  %v222 = vld [vmem:[%s206 + $0x34] sm:$0xf]
                  %223 = vst [vmem:[%s207 + $0x1c] sm:$0xf] %v222
                  %v224 = vld [vmem:[%s206 + $0x40] sm:$0xf]
                  %225 = vst [vmem:[%s207 + $0x20] sm:$0xf] %v224
                  %v226 = vld [vmem:[%s206 + $0x44] sm:$0xf]
                  %227 = vst [vmem:[%s207 + $0x24] sm:$0xf] %v226
                  %v228 = vld [vmem:[%s206 + $0x50] sm:$0xf]
                  %229 = vst [vmem:[%s207 + $0x28] sm:$0xf] %v228
                  %v230 = vld [vmem:[%s206 + $0x54] sm:$0xf]
                  %231 = vst [vmem:[%s207 + $0x2c] sm:$0xf] %v230
                  %v232 = vld [vmem:[%s206 + $0x60] sm:$0xf]
                  %233 = vst [vmem:[%s207 + $0x30] sm:$0xf] %v232
                  %v234 = vld [vmem:[%s206 + $0x64] sm:$0xf]
                  %235 = vst [vmem:[%s207 + $0x34] sm:$0xf] %v234
                  %v236 = vld [vmem:[%s206 + $0x70] sm:$0xf]
                  %237 = vst [vmem:[%s207 + $0x38] sm:$0xf] %v236
                  %v238 = vld [vmem:[%s206 + $0x74] sm:$0xf]
                  %239 = vst [vmem:[%s207 + $0x3c] sm:$0xf] %v238
                  %v240 = vld [vmem:[%s206 + $0x80] sm:$0xf]
                  %241 = vst [vmem:[%s207 + $0x40] sm:$0xf] %v240
                  %v242 = vld [vmem:[%s206 + $0x84] sm:$0xf]
                  %243 = vst [vmem:[%s207 + $0x44] sm:$0xf] %v242
                $region63: #{_lambda_.31} parent=50 // loop_footer
                  %s205 = sadd.s32 1, %s201
                $region64: #{_lambda_.31} parent=50 // loop_footer_branch
                  %200 = sbr.rel target = $region60
                $region65: #{_lambda_.31} parent=50 // loop_exit
                  _
              $region51: #{_lambda_.31} parent=35 // pred_fallthru
                _
            $region36: #{_lambda_.31} parent=31 // pred_fallthru
              _
            // Predicated region
            $region37: #{_lambda_.31} parent=31 // pred_check
              _
            $region38: #{_lambda_.31} parent=31 // pred_check_branch
              %143 = sbr.rel (0) target = $region40
            $region39: #{_lambda_.31} parent=31 // pred_region
              loop: start=0, step=1, limit=1
              $region41: #{_lambda_.31} parent=39 // loop_pre_header
                _
              $region42: #{_lambda_.31} parent=39 // loop_header
                %s146 = sphi 0, %s150
                %p147 = scmp.ge.s32.totalorder %s146, 1
                %s151 = sphi %s137, %s137
                %s152 = sphi %s134, %s134
              $region43: #{_lambda_.31} parent=39 // loop_header_branch
                %149 = sbr.rel (%p147) target = $region47
              $region44: #{_lambda_.31} parent=39 // loop_body
                %v153 = vld [vmem:[%s151] sm:$0xf]
                %154 = vst [vmem:[%s152] sm:$0xf] %v153
                %v155 = vld [vmem:[%s151 + $0x4] sm:$0xf]
                %156 = vst [vmem:[%s152 + $0x4] sm:$0xf] %v155
                %v157 = vld [vmem:[%s151 + $0x10] sm:$0xf]
                %158 = vst [vmem:[%s152 + $0x8] sm:$0xf] %v157
                %v159 = vld [vmem:[%s151 + $0x14] sm:$0xf]
                %160 = vst [vmem:[%s152 + $0xc] sm:$0xf] %v159
                %v161 = vld [vmem:[%s151 + $0x20] sm:$0xf]
                %162 = vst [vmem:[%s152 + $0x10] sm:$0xf] %v161
                %v163 = vld [vmem:[%s151 + $0x24] sm:$0xf]
                %164 = vst [vmem:[%s152 + $0x14] sm:$0xf] %v163
                %v165 = vld [vmem:[%s151 + $0x30] sm:$0xf]
                %166 = vst [vmem:[%s152 + $0x18] sm:$0xf] %v165
                %v167 = vld [vmem:[%s151 + $0x34] sm:$0xf]
                %168 = vst [vmem:[%s152 + $0x1c] sm:$0xf] %v167
                %v169 = vld [vmem:[%s151 + $0x40] sm:$0xf]
                %170 = vst [vmem:[%s152 + $0x20] sm:$0xf] %v169
                %v171 = vld [vmem:[%s151 + $0x44] sm:$0xf]
                %172 = vst [vmem:[%s152 + $0x24] sm:$0xf] %v171
                %v173 = vld [vmem:[%s151 + $0x50] sm:$0xf]
                %174 = vst [vmem:[%s152 + $0x28] sm:$0xf] %v173
                %v175 = vld [vmem:[%s151 + $0x54] sm:$0xf]
                %176 = vst [vmem:[%s152 + $0x2c] sm:$0xf] %v175
                %v177 = vld [vmem:[%s151 + $0x60] sm:$0xf]
                %178 = vst [vmem:[%s152 + $0x30] sm:$0xf] %v177
                %v179 = vld [vmem:[%s151 + $0x64] sm:$0xf]
                %180 = vst [vmem:[%s152 + $0x34] sm:$0xf] %v179
                %v181 = vld [vmem:[%s151 + $0x70] sm:$0xf]
                %182 = vst [vmem:[%s152 + $0x38] sm:$0xf] %v181
                %v183 = vld [vmem:[%s151 + $0x74] sm:$0xf]
                %184 = vst [vmem:[%s152 + $0x3c] sm:$0xf] %v183
                %v185 = vld [vmem:[%s151 + $0x80] sm:$0xf]
                %186 = vst [vmem:[%s152 + $0x40] sm:$0xf] %v185
                %v187 = vld [vmem:[%s151 + $0x84] sm:$0xf]
                %188 = vst [vmem:[%s152 + $0x44] sm:$0xf] %v187
              $region45: #{_lambda_.31} parent=39 // loop_footer
                %s150 = sadd.s32 1, %s146
              $region46: #{_lambda_.31} parent=39 // loop_footer_branch
                %145 = sbr.rel target = $region42
              $region47: #{_lambda_.31} parent=39 // loop_exit
                _
            $region40: #{_lambda_.31} parent=31 // pred_fallthru
              _
          $region32: #{_lambda_.31} parent=27 // pred_fallthru
            _
          %244 = vnop
        $region28: #{_lambda_.31} parent=23 // pred_fallthru
          _
      $region24: #{_lambda_.31} parent=5 // pred_fallthru
        _
      %p245 = scmp.le.s32.totalorder 1, %s9
      %p246 = scmp.lt.s32.totalorder %s9, 3
      %p247 = pnand %p245, %p246
      %p248 = pneg %p247
      // Predicated region
      $region66: #{_lambda_.31} parent=5 // pred_check
        _
      $region67: #{_lambda_.31} parent=5 // pred_check_branch
        %250 = sbr.rel (%p247) target = $region69
      $region68: #{_lambda_.31} parent=5 // pred_region
        %s251 = ssub.s32 %s9, 1
        %s252 = sand.u32 %s22, 1
        %s253 = sand.u32 %s22, 1
        %s254 = smul.addr %s253, 72
        %s255 = scalar_lea.vmem [#allocation2], %s254
        // Predicated region
        $region70: #{_lambda_.31} parent=68 // pred_check
          %p256 = pneg %p35
        $region71: #{_lambda_.31} parent=68 // pred_check_branch
          %258 = sbr.rel (%p256) target = $region73
        $region72: #{_lambda_.31} parent=68 // pred_region
          _
        $region73: #{_lambda_.31} parent=68 // pred_fallthru
          _
        %s259 = sand.u32 %s22, 1
        %s260 = sand.u32 %s22, 1
        %s261 = smul.addr %s260, 72
        %s262 = scalar_lea.vmem [#allocation2], %s261
        %p263 = pneg %p35
        %p264 = pneg %p32
        %p265 = pneg %p56
        %p266 = pneg %p53
        %p267 = pneg %p77
        %p268 = pneg %p74
        %p269 = pneg %p103
        %p270 = pneg %p100
        %s271 = smul.u32 2, %s14
        %p272 = scmp.lt.s32.totalorder %s271, 3
        %s273 = scalar_select %p272, %s271, 3
        %s274 = smul.addr %s273, 4
        %s275 = scalar_lea.vmem %s3, %s274
        %s276 = smul.u32 2, %s14
        %s277 = smul.u32 2, %s14
        %p278 = scmp.lt.s32.totalorder %s277, 3
        %s279 = scalar_select %p278, %s277, 3
        %s280 = smul.addr %s279, 4
        %s281 = scalar_lea.vmem %s3, %s280
        %s282 = smul.u32 2, %s14
        %v283 = vld [vmem:[%s255] sm:$0xf]
        %v284 = vld [vmem:[%s255 + $0x4] sm:$0xf]
        %s285 = scalar_lea.vmem %s255, 8 [#allocation2]
        %v286 = vld [vmem:[%s285] sm:$0xf]
        %v287 = vld [vmem:[%s285 + $0x4] sm:$0xf]
        %v288 = vmax.bf16 %v283, %v286
        %v289 = vmax.bf16 %v284, %v287
        %s290 = scalar_lea.vmem %s255, 16 [#allocation2]
        %v291 = vld [vmem:[%s290] sm:$0xf]
        %v292 = vld [vmem:[%s290 + $0x4] sm:$0xf]
        %v293 = vmax.bf16 %v288, %v291
        %v294 = vmax.bf16 %v289, %v292
        %s295 = scalar_lea.vmem %s255, 24 [#allocation2]
        %v296 = vld [vmem:[%s295] sm:$0xf]
        %v297 = vld [vmem:[%s295 + $0x4] sm:$0xf]
        %v298 = vmax.bf16 %v293, %v296
        %v299 = vmax.bf16 %v294, %v297
        %s300 = scalar_lea.vmem %s255, 32 [#allocation2]
        %v301 = vld [vmem:[%s300] sm:$0xf]
        %v302 = vld [vmem:[%s300 + $0x4] sm:$0xf]
        %v303 = vmax.bf16 %v298, %v301
        %v304 = vmax.bf16 %v299, %v302
        %s305 = scalar_lea.vmem %s255, 40 [#allocation2]
        %v306 = vld [vmem:[%s305] sm:$0xf]
        %v307 = vld [vmem:[%s305 + $0x4] sm:$0xf]
        %v308 = vmax.bf16 %v303, %v306
        %v309 = vmax.bf16 %v304, %v307
        %s310 = scalar_lea.vmem %s255, 48 [#allocation2]
        %v311 = vld [vmem:[%s310] sm:$0xf]
        %v312 = vld [vmem:[%s310 + $0x4] sm:$0xf]
        %v313 = vmax.bf16 %v308, %v311
        %v314 = vmax.bf16 %v309, %v312
        %s315 = scalar_lea.vmem %s255, 56 [#allocation2]
        %v316 = vld [vmem:[%s315] sm:$0xf]
        %v317 = vld [vmem:[%s315 + $0x4] sm:$0xf]
        %v318 = vmax.bf16 %v313, %v316
        %v319 = vmax.bf16 %v314, %v317
        %s320 = scalar_lea.vmem %s255, 64 [#allocation2]
        %v321 = vld [vmem:[%s320] sm:$0xf]
        %v322 = vld [vmem:[%s320 + $0x4] sm:$0xf]
        %v323 = vmax.bf16 %v318, %v321
        %v324 = vmax.bf16 %v319, %v322
        %v325 = vunpack.c.l.bf16 %v323
        %v326 = vunpack.c.l.bf16 %v324
        %v327 = vld [vmem:[%s1] sm:$0x1]
        %v329 = vlaneseq
        %v330 = vshrl.u32 %v329, 7
        %v331 = vsub.s32 0, %v330
        %v332 = vrot.slane %v327, %v331
        %v334 = vmul.f32 %v325, %v332
        %v335 = vmul.f32 %v326, %v332
        %v336 = vld [vmem:[%s2] sm:$0x1]
        %v338 = vlaneseq
        %v339 = vshrl.u32 %v338, 7
        %v340 = vsub.s32 0, %v339
        %v341 = vrot.slane %v336, %v340
        %v343 = vadd.f32 %v334, %v341
        %v344 = vadd.f32 %v335, %v341
        %v345 = vpack.c.bf16 %v344, %v343
        %v347 = vunpack.c.l.b16 %v345
        %v348 = vunpack.c.h.b16 %v345
        %v349 = vpack.c.b16 %v347, %v347
        %v350 = vpack.c.b16 %v348, %v348
        %vm353 = vcmask 60416
        %354 = vst.msk [vmem:[%s281] sm:$0xf] %vm353, %v349
        %355 = vst.msk [vmem:[%s281 + $0x4] sm:$0xf] %vm353, %v350
        %s356 = smul.u32 2, %s14
        %p357 = scmp.lt.s32.totalorder %s356, 3
        %s358 = scalar_select %p357, %s356, 3
        %s359 = smul.addr %s358, 4
        %s360 = scalar_lea.vmem %s3, %s359
        // Predicated region
        $region74: #{_lambda_.31} parent=68 // pred_check
          %p361 = pneg %p100
        $region75: #{_lambda_.31} parent=68 // pred_check_branch
          %363 = sbr.rel (%p361) target = $region77
        $region76: #{_lambda_.31} parent=68 // pred_region
          %s364 = smul.u32 2, %s14
        $region77: #{_lambda_.31} parent=68 // pred_fallthru
          _
      $region69: #{_lambda_.31} parent=5 // pred_fallthru
        _
      %p365 = scmp.le.s32.totalorder 2, %s9
      // Predicated region
      $region78: #{_lambda_.31} parent=5 // pred_check
        %p366 = pneg %p365
      $region79: #{_lambda_.31} parent=5 // pred_check_branch
        %368 = sbr.rel (%p366) target = $region81
      $region80: #{_lambda_.31} parent=5 // pred_region
        %s369 = ssub.s32 %s9, 2
        // Predicated region
        $region82: #{_lambda_.31} parent=80 // pred_check
          %p370 = pneg %p106
        $region83: #{_lambda_.31} parent=80 // pred_check_branch
          %372 = sbr.rel (%p370) target = $region85
        $region84: #{_lambda_.31} parent=80 // pred_region
          %s373 = smul.u32 2, %s15
          %p374 = scmp.lt.s32.totalorder %s373, 3
          %s375 = scalar_select %p374, %s373, 3
          %s376 = smul.addr %s375, 4
          %s377 = scalar_lea.vmem %s3, %s376
        $region85: #{_lambda_.31} parent=80 // pred_fallthru
          _
      $region81: #{_lambda_.31} parent=5 // pred_fallthru
        _
    $region6: #{_lambda_.31} parent=1 // loop_footer
      %s13 = sadd.s32 1, %s9
    $region7: #{_lambda_.31} parent=1 // loop_footer_branch
      %8 = sbr.rel target = $region3
    $region8: #{_lambda_.31} parent=1 // loop_exit
      _

// kernel: _lambda_.33
$region0: #{_lambda_.33}
  #allocation0 [shape = 'u32[]', space=smem, size = 0x4, offset = 0x4, fixed_abs, tag = 'smem constant byte address 0x4 - core index']
  #allocation1 [shape = 'u32[144,128]{1,0:T(1,128)}', space=vmem, size = 0x12000, scoped, tag = 'internal scratch']
  %s0 = inlined_call_operand.vmem [shape: bf16[32,16], index: 0, kind: input, shape index: {}]
  %s1 = inlined_call_operand.vmem [shape: bf16[16,16], index: 1, kind: input, shape index: {}]
  %s2 = inlined_call_operand.vmem [shape: f32[1,16], index: 2, kind: input, shape index: {}]
  %s3 = inlined_call_operand.vmem [shape: bf16[32,16], index: 3, kind: output, shape index: {}]
  %s4 = sld [smem:[#allocation0]]
  $region45: #{_lambda_.33} parent=0
    _
  %s6 = ssub.s32 1, %s4
  %s7 = scalar_select 0, %s6, %s4
  loop: start=0, step=1, limit=4
  $region2: #{_lambda_.33} parent=0 // loop_pre_header
    _
  $region3: #{_lambda_.33} parent=0 // loop_header
    %s9 = sphi 0, %s13
    %p10 = scmp.ge.s32.totalorder %s9, 4
    %s19 = sphi 0, %s21
    %s22 = sphi 0, %s19
    %s23 = sphi 0, %s22
    %s39 = sphi 0, %s23
    %s43 = sphi 0, %s43
    %s45 = sphi 0, %s43
    %s46 = sphi 0, %s45
    %s60 = sphi 0, %s46
    %s64 = sphi 0, %s64
    %s66 = sphi 0, %s64
    %s67 = sphi 0, %s66
    %s81 = sphi 0, %s67
    %s87 = sphi 0, %s89
    %s90 = sphi 0, %s87
    %s91 = sphi 0, %s90
    %s107 = sphi 0, %s91
  $region4: #{_lambda_.33} parent=0 // loop_header_branch
    %12 = sbr.rel (%p10) target = $region8
  $region5: #{_lambda_.33} parent=0 // loop_body
    %s14 = ssub.s32 %s9, 1
    %s15 = ssub.s32 %s9, 2
    %s16 = sadd.s32 %s9, 1
    %s17 = ssub.s32 %s9, %s16
    %p18 = scmp.eq.s32.totalorder %s17, 0
    %s20 = sadd.s32 %s19, 1
    %s21 = scalar_select %p18, %s19, %s20
    %p24 = pneg %p18
    %p25 = scmp.eq.s32.totalorder %s9, 1
    %p26 = por %p24, %p25
    %p27 = scmp.ne.s32.totalorder %s19, %s22
    %p28 = scmp.eq.s32.totalorder %s9, 0
    %p29 = por %p27, %p28
    %p30 = scmp.ne.s32.totalorder %s19, %s22
    %p31 = scmp.eq.s32.totalorder %s14, 1
    %p32 = por %p30, %p31
    %p33 = scmp.ne.s32.totalorder %s22, %s23
    %p34 = scmp.eq.s32.totalorder %s14, 0
    %p35 = por %p33, %p34
    %p36 = scmp.ne.s32.totalorder %s22, %s23
    %p37 = scmp.eq.s32.totalorder %s15, 1
    %p38 = por %p36, %p37
    %p40 = scmp.ne.s32.totalorder %s23, %s39
    %p41 = scmp.eq.s32.totalorder %s15, 0
    %p42 = por %p40, %p41
    %s44 = sadd.s32 %s43, 1
    %p47 = scmp.eq.s32.totalorder %s9, 1
    %p48 = scmp.ne.s32.totalorder %s43, %s45
    %p49 = scmp.eq.s32.totalorder %s9, 0
    %p50 = por %p48, %p49
    %p51 = scmp.ne.s32.totalorder %s43, %s45
    %p52 = scmp.eq.s32.totalorder %s14, 1
    %p53 = por %p51, %p52
    %p54 = scmp.ne.s32.totalorder %s45, %s46
    %p55 = scmp.eq.s32.totalorder %s14, 0
    %p56 = por %p54, %p55
    %p57 = scmp.ne.s32.totalorder %s45, %s46
    %p58 = scmp.eq.s32.totalorder %s15, 1
    %p59 = por %p57, %p58
    %p61 = scmp.ne.s32.totalorder %s46, %s60
    %p62 = scmp.eq.s32.totalorder %s15, 0
    %p63 = por %p61, %p62
    %s65 = sadd.s32 %s64, 1
    %p68 = scmp.eq.s32.totalorder %s9, 1
    %p69 = scmp.ne.s32.totalorder %s64, %s66
    %p70 = scmp.eq.s32.totalorder %s9, 0
    %p71 = por %p69, %p70
    %p72 = scmp.ne.s32.totalorder %s64, %s66
    %p73 = scmp.eq.s32.totalorder %s14, 1
    %p74 = por %p72, %p73
    %p75 = scmp.ne.s32.totalorder %s66, %s67
    %p76 = scmp.eq.s32.totalorder %s14, 0
    %p77 = por %p75, %p76
    %p78 = scmp.ne.s32.totalorder %s66, %s67
    %p79 = scmp.eq.s32.totalorder %s15, 1
    %p80 = por %p78, %p79
    %p82 = scmp.ne.s32.totalorder %s67, %s81
    %p83 = scmp.eq.s32.totalorder %s15, 0
    %p84 = por %p82, %p83
    %s85 = ssub.s32 %s9, %s16
    %p86 = scmp.eq.s32.totalorder %s85, 0
    %s88 = sadd.s32 %s87, 1
    %s89 = scalar_select %p86, %s87, %s88
    %p92 = pneg %p86
    %p93 = scmp.eq.s32.totalorder %s9, 1
    %p94 = por %p92, %p93
    %p95 = scmp.ne.s32.totalorder %s87, %s90
    %p96 = scmp.eq.s32.totalorder %s9, 0
    %p97 = por %p95, %p96
    %p98 = scmp.ne.s32.totalorder %s87, %s90
    %p99 = scmp.eq.s32.totalorder %s14, 1
    %p100 = por %p98, %p99
    %p101 = scmp.ne.s32.totalorder %s90, %s91
    %p102 = scmp.eq.s32.totalorder %s14, 0
    %p103 = por %p101, %p102
    %p104 = scmp.ne.s32.totalorder %s90, %s91
    %p105 = scmp.eq.s32.totalorder %s15, 1
    %p106 = por %p104, %p105
    %p108 = scmp.ne.s32.totalorder %s91, %s107
    %p109 = scmp.eq.s32.totalorder %s15, 0
    %p110 = por %p108, %p109
    %p111 = scmp.le.s32.totalorder 1, %s9
    %p112 = scmp.lt.s32.totalorder %s9, 3
    %p113 = pnand %p111, %p112
    %p114 = pneg %p113
    // Predicated region
    $region9: #{_lambda_.33} parent=5 // pred_check
      _
    $region10: #{_lambda_.33} parent=5 // pred_check_branch
      %116 = sbr.rel (%p113) target = $region12
    $region11: #{_lambda_.33} parent=5 // pred_region
      %s117 = ssub.s32 %s9, 1
      // Predicated region
      $region13: #{_lambda_.33} parent=11 // pred_check
        %p118 = pneg %p56
      $region14: #{_lambda_.33} parent=11 // pred_check_branch
        %120 = sbr.rel (%p118) target = $region16
      $region15: #{_lambda_.33} parent=11 // pred_region
        _
      $region16: #{_lambda_.33} parent=11 // pred_fallthru
        _
      // Predicated region
      $region17: #{_lambda_.33} parent=11 // pred_check
        %p121 = pneg %p77
      $region18: #{_lambda_.33} parent=11 // pred_check_branch
        %123 = sbr.rel (%p121) target = $region20
      $region19: #{_lambda_.33} parent=11 // pred_region
        _
      $region20: #{_lambda_.33} parent=11 // pred_fallthru
        _
    $region12: #{_lambda_.33} parent=5 // pred_fallthru
      _
    %p124 = scmp.lt.s32.totalorder %s9, 2
    // Predicated region
    $region21: #{_lambda_.33} parent=5 // pred_check
      %p125 = pneg %p124
    $region22: #{_lambda_.33} parent=5 // pred_check_branch
      %127 = sbr.rel (%p125) target = $region24
    $region23: #{_lambda_.33} parent=5 // pred_region
      // Predicated region
      $region25: #{_lambda_.33} parent=23 // pred_check
        %p128 = pneg %p29
      $region26: #{_lambda_.33} parent=23 // pred_check_branch
        %130 = sbr.rel (%p128) target = $region28
      $region27: #{_lambda_.33} parent=23 // pred_region
        %s131 = smul.u32 2, %s9
        %p132 = scmp.lt.s32.totalorder %s131, 3
        %s133 = scalar_select %p132, %s131, 3
        %s134 = smul.addr %s133, 4
        %s135 = scalar_lea.vmem %s0, %s134
        %s136 = smul.u32 2, %s9
      $region28: #{_lambda_.33} parent=23 // pred_fallthru
        _
    $region24: #{_lambda_.33} parent=5 // pred_fallthru
      _
    %p137 = scmp.le.s32.totalorder 1, %s9
    %p138 = scmp.lt.s32.totalorder %s9, 3
    %p139 = pnand %p137, %p138
    %p140 = pneg %p139
    // Predicated region
    $region29: #{_lambda_.33} parent=5 // pred_check
      _
    $region30: #{_lambda_.33} parent=5 // pred_check_branch
      %142 = sbr.rel (%p139) target = $region32
    $region31: #{_lambda_.33} parent=5 // pred_region
      %s143 = ssub.s32 %s9, 1
      %s144 = smul.u32 2, %s14
      %p145 = scmp.lt.s32.totalorder %s144, 3
      %s146 = scalar_select %p145, %s144, 3
      %s147 = smul.addr %s146, 4
      %s148 = scalar_lea.vmem %s0, %s147
      %p149 = pneg %p35
      %p150 = pneg %p32
      %p151 = pneg %p56
      %p152 = pneg %p53
      %p153 = pneg %p77
      %p154 = pneg %p74
      %p155 = pneg %p103
      %p156 = pneg %p100
      %s157 = smul.u32 2, %s14
      %p158 = scmp.lt.s32.totalorder %s157, 3
      %s159 = scalar_select %p158, %s157, 3
      %s160 = smul.addr %s159, 4
      %s161 = scalar_lea.vmem %s3, %s160
      %s162 = smul.u32 2, %s14
      %p163 = scmp.lt.s32.totalorder %s162, 3
      %s164 = scalar_select %p163, %s162, 3
      %s165 = smul.addr %s164, 4
      %s166 = scalar_lea.vmem %s0, %s165
      %s167 = smul.u32 2, %s14
      %s168 = smul.u32 2, %s14
      %p169 = scmp.lt.s32.totalorder %s168, 3
      %s170 = scalar_select %p169, %s168, 3
      %s171 = smul.addr %s170, 4
      %s172 = scalar_lea.vmem %s3, %s171
      %s173 = smul.u32 2, %s14
      %v175 = vld [vmem:[%s166] sm:$0xf]
      %v176 = vld [vmem:[%s166 + $0x4] sm:$0xf]
      %v177 = vld [vmem:[%s1] sm:$0xf]
      %v178 = vld [vmem:[%s1 + $0x4] sm:$0xf]
      %v179 = vld [vmem:[%s2] sm:$0x1]
      %v181 = vlaneseq
      %v182 = vshrl.u32 %v181, 7
      %v183 = vsub.s32 0, %v182
      %v184 = vrot.slane %v179, %v183
      %v188 = vunpack.c.l.b16 %v175
      %v189 = vunpack.c.l.b16 %v176
      %v190 = vpack.c.b16 %v189, %v188
      %v193 = vunpack.c.l.b16 %v177
      %v194 = vunpack.c.l.b16 %v178
      %v195 = vpack.c.b16 %v194, %v193
      %vm197 = vcmask 130048
      %v199 = vsel %vm197, %v190, 0
      %201 = vmatprep.subr.bf16.mxu0 0
      %202 = vmatpush1.bf16.msra.mxu0 %v195
      %203 = vmatprep.subr.bf16.mxu0 0
      %204 = vmatpush1.bf16.msra.mxu0 0
      %205 = vmatprep.subr.bf16.mxu0 0
      %206 = vmatpush1.bf16.msra.mxu0 0
      %207 = vmatprep.subr.bf16.mxu0 0
      %208 = vmatpush1.bf16.msra.mxu0 0
      %209 = vmatprep.subr.bf16.mxu0 0
      %210 = vmatpush1.bf16.msra.mxu0 0
      %211 = vmatprep.subr.bf16.mxu0 0
      %212 = vmatpush1.bf16.msra.mxu0 0
      %213 = vmatprep.subr.bf16.mxu0 0
      %214 = vmatpush1.bf16.msra.mxu0 0
      %215 = vmatprep.subr.bf16.mxu0 0
      %216 = vmatpush1.bf16.msra.mxu0 0
      %217 = vmatprep.subr.bf16.mxu0 0
      %218 = vmatpush1.bf16.msra.mxu0 0
      %219 = vmatprep.subr.bf16.mxu0 0
      %220 = vmatpush1.bf16.msra.mxu0 0
      %221 = vmatprep.subr.bf16.mxu0 0
      %222 = vmatpush1.bf16.msra.mxu0 0
      %223 = vmatprep.subr.bf16.mxu0 0
      %224 = vmatpush1.bf16.msra.mxu0 0
      %225 = vmatprep.subr.bf16.mxu0 0
      %226 = vmatpush1.bf16.msra.mxu0 0
      %227 = vmatprep.subr.bf16.mxu0 0
      %228 = vmatpush1.bf16.msra.mxu0 0
      %229 = vmatprep.subr.bf16.mxu0 0
      %230 = vmatpush1.bf16.msra.mxu0 0
      %231 = vmatprep.subr.bf16.mxu0 0
      %232 = vmatpush1.bf16.msra.mxu0 0
      %233 = vmatprep.mubr.bf16.mxu0 0
      %234 = vmatmul.mubr.bf16.gmra.mrb[0].mxu0 %v199
      %v235 = vpop.f32.mrb[0].mxu0
      %v236 = vadd.f32 %v184, %v235
      %v237 = vpop.f32.mrb[0].mxu0
      %v238 = vpop.f32.mrb[0].mxu0
      %v239 = vadd.f32 %v184, %v238
      %v240 = vpop.f32.mrb[0].mxu0
      %241 = vdwg.mxu0
      %v242 = vpack.c.bf16 %v239, %v236
      %v244 = vunpack.c.l.b16 %v242
      %v245 = vunpack.c.h.b16 %v242
      %v246 = vpack.c.b16 %v244, %v244
      %v247 = vpack.c.b16 %v245, %v245
      %vm250 = vcmask 125952
      %251 = vst.msk [vmem:[%s172] sm:$0xf] %vm250, %v246
      %252 = vst.msk [vmem:[%s172 + $0x4] sm:$0xf] %vm250, %v247
      %s253 = smul.u32 2, %s14
      %p254 = scmp.lt.s32.totalorder %s253, 3
      %s255 = scalar_select %p254, %s253, 3
      %s256 = smul.addr %s255, 4
      %s257 = scalar_lea.vmem %s3, %s256
      // Predicated region
      $region33: #{_lambda_.33} parent=31 // pred_check
        %p258 = pneg %p100
      $region34: #{_lambda_.33} parent=31 // pred_check_branch
        %260 = sbr.rel (%p258) target = $region36
      $region35: #{_lambda_.33} parent=31 // pred_region
        %s261 = smul.u32 2, %s14
      $region36: #{_lambda_.33} parent=31 // pred_fallthru
        _
    $region32: #{_lambda_.33} parent=5 // pred_fallthru
      _
    %p262 = scmp.le.s32.totalorder 2, %s9
    // Predicated region
    $region37: #{_lambda_.33} parent=5 // pred_check
      %p263 = pneg %p262
    $region38: #{_lambda_.33} parent=5 // pred_check_branch
      %265 = sbr.rel (%p263) target = $region40
    $region39: #{_lambda_.33} parent=5 // pred_region
      %s266 = ssub.s32 %s9, 2
      // Predicated region
      $region41: #{_lambda_.33} parent=39 // pred_check
        %p267 = pneg %p106
      $region42: #{_lambda_.33} parent=39 // pred_check_branch
        %269 = sbr.rel (%p267) target = $region44
      $region43: #{_lambda_.33} parent=39 // pred_region
        %s270 = smul.u32 2, %s15
        %p271 = scmp.lt.s32.totalorder %s270, 3
        %s272 = scalar_select %p271, %s270, 3
        %s273 = smul.addr %s272, 4
        %s274 = scalar_lea.vmem %s3, %s273
      $region44: #{_lambda_.33} parent=39 // pred_fallthru
        _
    $region40: #{_lambda_.33} parent=5 // pred_fallthru
      _
  $region6: #{_lambda_.33} parent=0 // loop_footer
    %s13 = sadd.s32 1, %s9
  $region7: #{_lambda_.33} parent=0 // loop_footer_branch
    %8 = sbr.rel target = $region3
  $region8: #{_lambda_.33} parent=0 // loop_exit
    _

// kernel: _lambda_.35
$region0: #{_lambda_.35}
  #allocation0 [shape = 'u32[]', space=smem, size = 0x4, offset = 0x4, fixed_abs, tag = 'smem constant byte address 0x4 - core index']
  #allocation1 [shape = 'u32[144,128]{1,0:T(1,128)}', space=vmem, size = 0x12000, scoped, tag = 'internal scratch']
  %s0 = inlined_call_operand.vmem [shape: bf16[2,16,16], index: 0, kind: input, shape index: {}]
  %s1 = inlined_call_operand.vmem [shape: bf16[2,16,8], index: 1, kind: input, shape index: {}]
  %s2 = inlined_call_operand.vmem [shape: f32[2,1,8], index: 2, kind: input, shape index: {}]
  %s3 = inlined_call_operand.vmem [shape: bf16[2,16,8], index: 3, kind: output, shape index: {}]
  %s4 = sld [smem:[#allocation0]]
  $region45: #{_lambda_.35} parent=0
    _
  %s6 = ssub.s32 1, %s4
  %s7 = scalar_select 0, %s6, %s4
  loop: start=0, step=1, limit=4
  $region2: #{_lambda_.35} parent=0 // loop_pre_header
    _
  $region3: #{_lambda_.35} parent=0 // loop_header
    %s9 = sphi 0, %s13
    %p10 = scmp.ge.s32.totalorder %s9, 4
    %s16 = sphi 0, %s28
    %s17 = sphi 0, %s24
    %s18 = sphi 0, %s16
    %s19 = sphi 0, %s17
    %s20 = sphi 0, %s18
    %s21 = sphi 0, %s19
    %s33 = sphi 0, %s35
    %s36 = sphi 0, %s33
    %s37 = sphi 0, %s36
    %s53 = sphi 0, %s37
    %s59 = sphi 0, %s61
    %s62 = sphi 0, %s59
    %s63 = sphi 0, %s62
    %s79 = sphi 0, %s63
    %s85 = sphi 0, %s87
    %s88 = sphi 0, %s85
    %s89 = sphi 0, %s88
    %s105 = sphi 0, %s89
    %s113 = sphi 0, %s115
    %s116 = sphi 0, %s113
    %s117 = sphi 0, %s116
    %s133 = sphi 0, %s117
  $region4: #{_lambda_.35} parent=0 // loop_header_branch
    %12 = sbr.rel (%p10) target = $region8
  $region5: #{_lambda_.35} parent=0 // loop_body
    %s14 = ssub.s32 %s9, 1
    %s15 = ssub.s32 %s9, 2
    %s22 = sadd.s32 1, %s17
    %p23 = scmp.ge.s32.totalorder %s22, 1
    %s24 = scalar_select %p23, 0, %s22
    %s25 = sadd.s32 1, %s16
    %s26 = scalar_select %p23, %s25, %s16
    %p27 = scmp.ge.s32.totalorder %s26, 2
    %s28 = scalar_select %p27, 0, %s26
    %s29 = ssub.s32 %s16, %s28
    %s30 = ssub.s32 %s17, %s24
    %s31 = sor.u32 %s29, %s30
    %p32 = scmp.eq.s32.totalorder %s31, 0
    %s34 = sadd.s32 %s33, 1
    %s35 = scalar_select %p32, %s33, %s34
    %p38 = pneg %p32
    %p39 = scmp.eq.s32.totalorder %s9, 1
    %p40 = por %p38, %p39
    %p41 = scmp.ne.s32.totalorder %s33, %s36
    %p42 = scmp.eq.s32.totalorder %s9, 0
    %p43 = por %p41, %p42
    %p44 = scmp.ne.s32.totalorder %s33, %s36
    %p45 = scmp.eq.s32.totalorder %s14, 1
    %p46 = por %p44, %p45
    %p47 = scmp.ne.s32.totalorder %s36, %s37
    %p48 = scmp.eq.s32.totalorder %s14, 0
    %p49 = por %p47, %p48
    %p50 = scmp.ne.s32.totalorder %s36, %s37
    %p51 = scmp.eq.s32.totalorder %s15, 1
    %p52 = por %p50, %p51
    %p54 = scmp.ne.s32.totalorder %s37, %s53
    %p55 = scmp.eq.s32.totalorder %s15, 0
    %p56 = por %p54, %p55
    %s57 = ssub.s32 %s16, %s28
    %p58 = scmp.eq.s32.totalorder %s57, 0
    %s60 = sadd.s32 %s59, 1
    %s61 = scalar_select %p58, %s59, %s60
    %p64 = pneg %p58
    %p65 = scmp.eq.s32.totalorder %s9, 1
    %p66 = por %p64, %p65
    %p67 = scmp.ne.s32.totalorder %s59, %s62
    %p68 = scmp.eq.s32.totalorder %s9, 0
    %p69 = por %p67, %p68
    %p70 = scmp.ne.s32.totalorder %s59, %s62
    %p71 = scmp.eq.s32.totalorder %s14, 1
    %p72 = por %p70, %p71
    %p73 = scmp.ne.s32.totalorder %s62, %s63
    %p74 = scmp.eq.s32.totalorder %s14, 0
    %p75 = por %p73, %p74
    %p76 = scmp.ne.s32.totalorder %s62, %s63
    %p77 = scmp.eq.s32.totalorder %s15, 1
    %p78 = por %p76, %p77
    %p80 = scmp.ne.s32.totalorder %s63, %s79
    %p81 = scmp.eq.s32.totalorder %s15, 0
    %p82 = por %p80, %p81
    %s83 = ssub.s32 %s16, %s28
    %p84 = scmp.eq.s32.totalorder %s83, 0
    %s86 = sadd.s32 %s85, 1
    %s87 = scalar_select %p84, %s85, %s86
    %p90 = pneg %p84
    %p91 = scmp.eq.s32.totalorder %s9, 1
    %p92 = por %p90, %p91
    %p93 = scmp.ne.s32.totalorder %s85, %s88
    %p94 = scmp.eq.s32.totalorder %s9, 0
    %p95 = por %p93, %p94
    %p96 = scmp.ne.s32.totalorder %s85, %s88
    %p97 = scmp.eq.s32.totalorder %s14, 1
    %p98 = por %p96, %p97
    %p99 = scmp.ne.s32.totalorder %s88, %s89
    %p100 = scmp.eq.s32.totalorder %s14, 0
    %p101 = por %p99, %p100
    %p102 = scmp.ne.s32.totalorder %s88, %s89
    %p103 = scmp.eq.s32.totalorder %s15, 1
    %p104 = por %p102, %p103
    %p106 = scmp.ne.s32.totalorder %s89, %s105
    %p107 = scmp.eq.s32.totalorder %s15, 0
    %p108 = por %p106, %p107
    %s109 = ssub.s32 %s16, %s28
    %s110 = ssub.s32 %s17, %s24
    %s111 = sor.u32 %s109, %s110
    %p112 = scmp.eq.s32.totalorder %s111, 0
    %s114 = sadd.s32 %s113, 1
    %s115 = scalar_select %p112, %s113, %s114
    %p118 = pneg %p112
    %p119 = scmp.eq.s32.totalorder %s9, 1
    %p120 = por %p118, %p119
    %p121 = scmp.ne.s32.totalorder %s113, %s116
    %p122 = scmp.eq.s32.totalorder %s9, 0
    %p123 = por %p121, %p122
    %p124 = scmp.ne.s32.totalorder %s113, %s116
    %p125 = scmp.eq.s32.totalorder %s14, 1
    %p126 = por %p124, %p125
    %p127 = scmp.ne.s32.totalorder %s116, %s117
    %p128 = scmp.eq.s32.totalorder %s14, 0
    %p129 = por %p127, %p128
    %p130 = scmp.ne.s32.totalorder %s116, %s117
    %p131 = scmp.eq.s32.totalorder %s15, 1
    %p132 = por %p130, %p131
    %p134 = scmp.ne.s32.totalorder %s117, %s133
    %p135 = scmp.eq.s32.totalorder %s15, 0
    %p136 = por %p134, %p135
    %p137 = scmp.le.s32.totalorder 1, %s9
    %p138 = scmp.lt.s32.totalorder %s9, 3
    %p139 = pnand %p137, %p138
    %p140 = pneg %p139
    // Predicated region
    $region9: #{_lambda_.35} parent=5 // pred_check
      _
    $region10: #{_lambda_.35} parent=5 // pred_check_branch
      %142 = sbr.rel (%p139) target = $region12
    $region11: #{_lambda_.35} parent=5 // pred_region
      %s143 = ssub.s32 %s9, 1
    $region12: #{_lambda_.35} parent=5 // pred_fallthru
      _
    %p144 = scmp.lt.s32.totalorder %s9, 2
    // Predicated region
    $region13: #{_lambda_.35} parent=5 // pred_check
      %p145 = pneg %p144
    $region14: #{_lambda_.35} parent=5 // pred_check_branch
      %147 = sbr.rel (%p145) target = $region16
    $region15: #{_lambda_.35} parent=5 // pred_region
      // Predicated region
      $region17: #{_lambda_.35} parent=15 // pred_check
        %p148 = pneg %p43
      $region18: #{_lambda_.35} parent=15 // pred_check_branch
        %150 = sbr.rel (%p148) target = $region20
      $region19: #{_lambda_.35} parent=15 // pred_region
        %s151 = smul.u32 2, %s17
        %p152 = scmp.lt.s32.totalorder %s16, 1
        %s153 = scalar_select %p152, %s16, 1
        %p154 = scmp.lt.s32.totalorder %s151, 1
        %s155 = scalar_select %p154, %s151, 1
        %s156 = smul.addr %s153, 2
        %s157 = sadd.s32 %s155, %s156
        %s158 = smul.addr %s157, 4
        %s159 = scalar_lea.vmem %s0, %s158
        %s160 = smul.u32 2, %s17
      $region20: #{_lambda_.35} parent=15 // pred_fallthru
        _
      // Predicated region
      $region21: #{_lambda_.35} parent=15 // pred_check
        %p161 = pneg %p69
      $region22: #{_lambda_.35} parent=15 // pred_check_branch
        %163 = sbr.rel (%p161) target = $region24
      $region23: #{_lambda_.35} parent=15 // pred_region
        %p164 = scmp.lt.s32.totalorder %s16, 1
        %s165 = scalar_select %p164, %s16, 1
        %s166 = smul.addr %s165, 2
        %s167 = smul.addr %s166, 4
        %s168 = scalar_lea.vmem %s1, %s167
      $region24: #{_lambda_.35} parent=15 // pred_fallthru
        _
      // Predicated region
      $region25: #{_lambda_.35} parent=15 // pred_check
        %p169 = pneg %p95
      $region26: #{_lambda_.35} parent=15 // pred_check_branch
        %171 = sbr.rel (%p169) target = $region28
      $region27: #{_lambda_.35} parent=15 // pred_region
        %p172 = scmp.lt.s32.totalorder %s16, 1
        %s173 = scalar_select %p172, %s16, 1
        %s174 = scalar_lea.vmem %s2, %s173
      $region28: #{_lambda_.35} parent=15 // pred_fallthru
        _
    $region16: #{_lambda_.35} parent=5 // pred_fallthru
      _
    %p175 = scmp.le.s32.totalorder 1, %s9
    %p176 = scmp.lt.s32.totalorder %s9, 3
    %p177 = pnand %p175, %p176
    %p178 = pneg %p177
    // Predicated region
    $region29: #{_lambda_.35} parent=5 // pred_check
      _
    $region30: #{_lambda_.35} parent=5 // pred_check_branch
      %180 = sbr.rel (%p177) target = $region32
    $region31: #{_lambda_.35} parent=5 // pred_region
      %s181 = ssub.s32 %s9, 1
      %s182 = smul.u32 2, %s19
      %p183 = scmp.lt.s32.totalorder %s18, 1
      %s184 = scalar_select %p183, %s18, 1
      %p185 = scmp.lt.s32.totalorder %s182, 1
      %s186 = scalar_select %p185, %s182, 1
      %s187 = smul.addr %s184, 2
      %s188 = sadd.s32 %s186, %s187
      %s189 = smul.addr %s188, 4
      %s190 = scalar_lea.vmem %s0, %s189
      %p191 = pneg %p49
      %p192 = pneg %p46
      %p193 = scmp.lt.s32.totalorder %s18, 1
      %s194 = scalar_select %p193, %s18, 1
      %s195 = smul.addr %s194, 2
      %s196 = smul.addr %s195, 4
      %s197 = scalar_lea.vmem %s1, %s196
      %p198 = pneg %p75
      %p199 = pneg %p72
      %p200 = scmp.lt.s32.totalorder %s18, 1
      %s201 = scalar_select %p200, %s18, 1
      %s202 = scalar_lea.vmem %s2, %s201
      %p203 = pneg %p101
      %p204 = pneg %p98
      %p205 = pneg %p129
      %p206 = pneg %p126
      %s207 = smul.u32 2, %s19
      %p208 = scmp.lt.s32.totalorder %s18, 1
      %s209 = scalar_select %p208, %s18, 1
      %p210 = scmp.lt.s32.totalorder %s207, 1
      %s211 = scalar_select %p210, %s207, 1
      %s212 = smul.addr %s209, 2
      %s213 = sadd.s32 %s211, %s212
      %s214 = smul.addr %s213, 4
      %s215 = scalar_lea.vmem %s3, %s214
      %s216 = smul.u32 2, %s19
      %p217 = scmp.lt.s32.totalorder %s18, 1
      %s218 = scalar_select %p217, %s18, 1
      %p219 = scmp.lt.s32.totalorder %s216, 1
      %s220 = scalar_select %p219, %s216, 1
      %s221 = smul.addr %s218, 2
      %s222 = sadd.s32 %s220, %s221
      %s223 = smul.addr %s222, 4
      %s224 = scalar_lea.vmem %s0, %s223
      %s225 = smul.u32 2, %s19
      %p226 = scmp.lt.s32.totalorder %s18, 1
      %s227 = scalar_select %p226, %s18, 1
      %s228 = smul.addr %s227, 2
      %s229 = smul.addr %s228, 4
      %s230 = scalar_lea.vmem %s1, %s229
      %p231 = scmp.lt.s32.totalorder %s18, 1
      %s232 = scalar_select %p231, %s18, 1
      %s233 = scalar_lea.vmem %s2, %s232
      %s234 = smul.u32 2, %s19
      %p235 = scmp.lt.s32.totalorder %s18, 1
      %s236 = scalar_select %p235, %s18, 1
      %p237 = scmp.lt.s32.totalorder %s234, 1
      %s238 = scalar_select %p237, %s234, 1
      %s239 = smul.addr %s236, 2
      %s240 = sadd.s32 %s238, %s239
      %s241 = smul.addr %s240, 4
      %s242 = scalar_lea.vmem %s3, %s241
      %s243 = smul.u32 2, %s19
      %v245 = vld [vmem:[%s224] sm:$0xf]
      %v246 = vld [vmem:[%s224 + $0x4] sm:$0xf]
      %v247 = vld [vmem:[%s230] sm:$0xf]
      %v248 = vld [vmem:[%s230 + $0x4] sm:$0xf]
      %v249 = vld [vmem:[%s233] sm:$0x1]
      %v251 = vlaneseq
      %v252 = vshrl.u32 %v251, 7
      %v253 = vsub.s32 0, %v252
      %v254 = vrot.slane %v249, %v253
      %v258 = vunpack.c.l.b16 %v245
      %v259 = vunpack.c.l.b16 %v246
      %v260 = vpack.c.b16 %v259, %v258
      %v263 = vunpack.c.l.b16 %v247
      %v264 = vunpack.c.l.b16 %v248
      %v265 = vpack.c.b16 %v264, %v263
      %vm267 = vcmask 130048
      %v269 = vsel %vm267, %v260, 0
      %271 = vmatprep.subr.bf16.mxu0 0
      %272 = vmatpush1.bf16.msra.mxu0 %v265
      %273 = vmatprep.subr.bf16.mxu0 0
      %274 = vmatpush1.bf16.msra.mxu0 0
      %275 = vmatprep.subr.bf16.mxu0 0
      %276 = vmatpush1.bf16.msra.mxu0 0
      %277 = vmatprep.subr.bf16.mxu0 0
      %278 = vmatpush1.bf16.msra.mxu0 0
      %279 = vmatprep.subr.bf16.mxu0 0
      %280 = vmatpush1.bf16.msra.mxu0 0
      %281 = vmatprep.subr.bf16.mxu0 0
      %282 = vmatpush1.bf16.msra.mxu0 0
      %283 = vmatprep.subr.bf16.mxu0 0
      %284 = vmatpush1.bf16.msra.mxu0 0
      %285 = vmatprep.subr.bf16.mxu0 0
      %286 = vmatpush1.bf16.msra.mxu0 0
      %287 = vmatprep.subr.bf16.mxu0 0
      %288 = vmatpush1.bf16.msra.mxu0 0
      %289 = vmatprep.subr.bf16.mxu0 0
      %290 = vmatpush1.bf16.msra.mxu0 0
      %291 = vmatprep.subr.bf16.mxu0 0
      %292 = vmatpush1.bf16.msra.mxu0 0
      %293 = vmatprep.subr.bf16.mxu0 0
      %294 = vmatpush1.bf16.msra.mxu0 0
      %295 = vmatprep.subr.bf16.mxu0 0
      %296 = vmatpush1.bf16.msra.mxu0 0
      %297 = vmatprep.subr.bf16.mxu0 0
      %298 = vmatpush1.bf16.msra.mxu0 0
      %299 = vmatprep.subr.bf16.mxu0 0
      %300 = vmatpush1.bf16.msra.mxu0 0
      %301 = vmatprep.subr.bf16.mxu0 0
      %302 = vmatpush1.bf16.msra.mxu0 0
      %303 = vmatprep.mubr.bf16.mxu0 0
      %304 = vmatmul.mubr.bf16.gmra.mrb[0].mxu0 %v269
      %v305 = vpop.f32.mrb[0].mxu0
      %v306 = vadd.f32 %v254, %v305
      %v307 = vpop.f32.mrb[0].mxu0
      %v308 = vpop.f32.mrb[0].mxu0
      %v309 = vadd.f32 %v254, %v308
      %v310 = vpop.f32.mrb[0].mxu0
      %311 = vdwg.mxu0
      %v312 = vpack.c.bf16 %v309, %v306
      %v314 = vunpack.c.l.b16 %v312
      %v315 = vunpack.c.h.b16 %v312
      %v316 = vpack.c.b16 %v314, %v314
      %v317 = vpack.c.b16 %v315, %v315
      %vm320 = vcmask 60416
      %321 = vst.msk [vmem:[%s242] sm:$0xf] %vm320, %v316
      %322 = vst.msk [vmem:[%s242 + $0x4] sm:$0xf] %vm320, %v317
      %s323 = smul.u32 2, %s19
      %p324 = scmp.lt.s32.totalorder %s18, 1
      %s325 = scalar_select %p324, %s18, 1
      %p326 = scmp.lt.s32.totalorder %s323, 1
      %s327 = scalar_select %p326, %s323, 1
      %s328 = smul.addr %s325, 2
      %s329 = sadd.s32 %s327, %s328
      %s330 = smul.addr %s329, 4
      %s331 = scalar_lea.vmem %s3, %s330
      // Predicated region
      $region33: #{_lambda_.35} parent=31 // pred_check
        %p332 = pneg %p126
      $region34: #{_lambda_.35} parent=31 // pred_check_branch
        %334 = sbr.rel (%p332) target = $region36
      $region35: #{_lambda_.35} parent=31 // pred_region
        %s335 = smul.u32 2, %s19
      $region36: #{_lambda_.35} parent=31 // pred_fallthru
        _
    $region32: #{_lambda_.35} parent=5 // pred_fallthru
      _
    %p336 = scmp.le.s32.totalorder 2, %s9
    // Predicated region
    $region37: #{_lambda_.35} parent=5 // pred_check
      %p337 = pneg %p336
    $region38: #{_lambda_.35} parent=5 // pred_check_branch
      %339 = sbr.rel (%p337) target = $region40
    $region39: #{_lambda_.35} parent=5 // pred_region
      %s340 = ssub.s32 %s9, 2
      // Predicated region
      $region41: #{_lambda_.35} parent=39 // pred_check
        %p341 = pneg %p132
      $region42: #{_lambda_.35} parent=39 // pred_check_branch
        %343 = sbr.rel (%p341) target = $region44
      $region43: #{_lambda_.35} parent=39 // pred_region
        %s344 = smul.u32 2, %s21
        %p345 = scmp.lt.s32.totalorder %s20, 1
        %s346 = scalar_select %p345, %s20, 1
        %p347 = scmp.lt.s32.totalorder %s344, 1
        %s348 = scalar_select %p347, %s344, 1
        %s349 = smul.addr %s346, 2
        %s350 = sadd.s32 %s348, %s349
        %s351 = smul.addr %s350, 4
        %s352 = scalar_lea.vmem %s3, %s351
      $region44: #{_lambda_.35} parent=39 // pred_fallthru
        _
    $region40: #{_lambda_.35} parent=5 // pred_fallthru
      _
  $region6: #{_lambda_.35} parent=0 // loop_footer
    %s13 = sadd.s32 1, %s9
  $region7: #{_lambda_.35} parent=0 // loop_footer_branch
    %8 = sbr.rel target = $region3
  $region8: #{_lambda_.35} parent=0 // loop_exit
    _

// kernel: _lambda_.32
$region0: #{_lambda_.32}
  #allocation0 [shape = 'u32[]', space=smem, size = 0x4, offset = 0x4, fixed_abs, tag = 'smem constant byte address 0x4 - core index']
  #allocation1 [shape = 'u32[144,128]{1,0:T(1,128)}', space=vmem, size = 0x12000, scoped, tag = 'internal scratch']
  %s0 = inlined_call_operand.vmem [shape: bf16[32,8], index: 0, kind: input, shape index: {}]
  %s1 = inlined_call_operand.vmem [shape: bf16[8,16], index: 1, kind: input, shape index: {}]
  %s2 = inlined_call_operand.vmem [shape: f32[1,16], index: 2, kind: input, shape index: {}]
  %s3 = inlined_call_operand.vmem [shape: bf16[32,16], index: 3, kind: output, shape index: {}]
  %s4 = sld [smem:[#allocation0]]
  $region45: #{_lambda_.32} parent=0
    _
  %s6 = ssub.s32 1, %s4
  %s7 = scalar_select 0, %s6, %s4
  loop: start=0, step=1, limit=4
  $region2: #{_lambda_.32} parent=0 // loop_pre_header
    _
  $region3: #{_lambda_.32} parent=0 // loop_header
    %s9 = sphi 0, %s13
    %p10 = scmp.ge.s32.totalorder %s9, 4
    %s19 = sphi 0, %s21
    %s22 = sphi 0, %s19
    %s23 = sphi 0, %s22
    %s39 = sphi 0, %s23
    %s43 = sphi 0, %s43
    %s45 = sphi 0, %s43
    %s46 = sphi 0, %s45
    %s60 = sphi 0, %s46
    %s64 = sphi 0, %s64
    %s66 = sphi 0, %s64
    %s67 = sphi 0, %s66
    %s81 = sphi 0, %s67
    %s87 = sphi 0, %s89
    %s90 = sphi 0, %s87
    %s91 = sphi 0, %s90
    %s107 = sphi 0, %s91
  $region4: #{_lambda_.32} parent=0 // loop_header_branch
    %12 = sbr.rel (%p10) target = $region8
  $region5: #{_lambda_.32} parent=0 // loop_body
    %s14 = ssub.s32 %s9, 1
    %s15 = ssub.s32 %s9, 2
    %s16 = sadd.s32 %s9, 1
    %s17 = ssub.s32 %s9, %s16
    %p18 = scmp.eq.s32.totalorder %s17, 0
    %s20 = sadd.s32 %s19, 1
    %s21 = scalar_select %p18, %s19, %s20
    %p24 = pneg %p18
    %p25 = scmp.eq.s32.totalorder %s9, 1
    %p26 = por %p24, %p25
    %p27 = scmp.ne.s32.totalorder %s19, %s22
    %p28 = scmp.eq.s32.totalorder %s9, 0
    %p29 = por %p27, %p28
    %p30 = scmp.ne.s32.totalorder %s19, %s22
    %p31 = scmp.eq.s32.totalorder %s14, 1
    %p32 = por %p30, %p31
    %p33 = scmp.ne.s32.totalorder %s22, %s23
    %p34 = scmp.eq.s32.totalorder %s14, 0
    %p35 = por %p33, %p34
    %p36 = scmp.ne.s32.totalorder %s22, %s23
    %p37 = scmp.eq.s32.totalorder %s15, 1
    %p38 = por %p36, %p37
    %p40 = scmp.ne.s32.totalorder %s23, %s39
    %p41 = scmp.eq.s32.totalorder %s15, 0
    %p42 = por %p40, %p41
    %s44 = sadd.s32 %s43, 1
    %p47 = scmp.eq.s32.totalorder %s9, 1
    %p48 = scmp.ne.s32.totalorder %s43, %s45
    %p49 = scmp.eq.s32.totalorder %s9, 0
    %p50 = por %p48, %p49
    %p51 = scmp.ne.s32.totalorder %s43, %s45
    %p52 = scmp.eq.s32.totalorder %s14, 1
    %p53 = por %p51, %p52
    %p54 = scmp.ne.s32.totalorder %s45, %s46
    %p55 = scmp.eq.s32.totalorder %s14, 0
    %p56 = por %p54, %p55
    %p57 = scmp.ne.s32.totalorder %s45, %s46
    %p58 = scmp.eq.s32.totalorder %s15, 1
    %p59 = por %p57, %p58
    %p61 = scmp.ne.s32.totalorder %s46, %s60
    %p62 = scmp.eq.s32.totalorder %s15, 0
    %p63 = por %p61, %p62
    %s65 = sadd.s32 %s64, 1
    %p68 = scmp.eq.s32.totalorder %s9, 1
    %p69 = scmp.ne.s32.totalorder %s64, %s66
    %p70 = scmp.eq.s32.totalorder %s9, 0
    %p71 = por %p69, %p70
    %p72 = scmp.ne.s32.totalorder %s64, %s66
    %p73 = scmp.eq.s32.totalorder %s14, 1
    %p74 = por %p72, %p73
    %p75 = scmp.ne.s32.totalorder %s66, %s67
    %p76 = scmp.eq.s32.totalorder %s14, 0
    %p77 = por %p75, %p76
    %p78 = scmp.ne.s32.totalorder %s66, %s67
    %p79 = scmp.eq.s32.totalorder %s15, 1
    %p80 = por %p78, %p79
    %p82 = scmp.ne.s32.totalorder %s67, %s81
    %p83 = scmp.eq.s32.totalorder %s15, 0
    %p84 = por %p82, %p83
    %s85 = ssub.s32 %s9, %s16
    %p86 = scmp.eq.s32.totalorder %s85, 0
    %s88 = sadd.s32 %s87, 1
    %s89 = scalar_select %p86, %s87, %s88
    %p92 = pneg %p86
    %p93 = scmp.eq.s32.totalorder %s9, 1
    %p94 = por %p92, %p93
    %p95 = scmp.ne.s32.totalorder %s87, %s90
    %p96 = scmp.eq.s32.totalorder %s9, 0
    %p97 = por %p95, %p96
    %p98 = scmp.ne.s32.totalorder %s87, %s90
    %p99 = scmp.eq.s32.totalorder %s14, 1
    %p100 = por %p98, %p99
    %p101 = scmp.ne.s32.totalorder %s90, %s91
    %p102 = scmp.eq.s32.totalorder %s14, 0
    %p103 = por %p101, %p102
    %p104 = scmp.ne.s32.totalorder %s90, %s91
    %p105 = scmp.eq.s32.totalorder %s15, 1
    %p106 = por %p104, %p105
    %p108 = scmp.ne.s32.totalorder %s91, %s107
    %p109 = scmp.eq.s32.totalorder %s15, 0
    %p110 = por %p108, %p109
    %p111 = scmp.le.s32.totalorder 1, %s9
    %p112 = scmp.lt.s32.totalorder %s9, 3
    %p113 = pnand %p111, %p112
    %p114 = pneg %p113
    // Predicated region
    $region9: #{_lambda_.32} parent=5 // pred_check
      _
    $region10: #{_lambda_.32} parent=5 // pred_check_branch
      %116 = sbr.rel (%p113) target = $region12
    $region11: #{_lambda_.32} parent=5 // pred_region
      %s117 = ssub.s32 %s9, 1
      // Predicated region
      $region13: #{_lambda_.32} parent=11 // pred_check
        %p118 = pneg %p56
      $region14: #{_lambda_.32} parent=11 // pred_check_branch
        %120 = sbr.rel (%p118) target = $region16
      $region15: #{_lambda_.32} parent=11 // pred_region
        _
      $region16: #{_lambda_.32} parent=11 // pred_fallthru
        _
      // Predicated region
      $region17: #{_lambda_.32} parent=11 // pred_check
        %p121 = pneg %p77
      $region18: #{_lambda_.32} parent=11 // pred_check_branch
        %123 = sbr.rel (%p121) target = $region20
      $region19: #{_lambda_.32} parent=11 // pred_region
        _
      $region20: #{_lambda_.32} parent=11 // pred_fallthru
        _
    $region12: #{_lambda_.32} parent=5 // pred_fallthru
      _
    %p124 = scmp.lt.s32.totalorder %s9, 2
    // Predicated region
    $region21: #{_lambda_.32} parent=5 // pred_check
      %p125 = pneg %p124
    $region22: #{_lambda_.32} parent=5 // pred_check_branch
      %127 = sbr.rel (%p125) target = $region24
    $region23: #{_lambda_.32} parent=5 // pred_region
      // Predicated region
      $region25: #{_lambda_.32} parent=23 // pred_check
        %p128 = pneg %p29
      $region26: #{_lambda_.32} parent=23 // pred_check_branch
        %130 = sbr.rel (%p128) target = $region28
      $region27: #{_lambda_.32} parent=23 // pred_region
        %s131 = smul.u32 2, %s9
        %p132 = scmp.lt.s32.totalorder %s131, 3
        %s133 = scalar_select %p132, %s131, 3
        %s134 = smul.addr %s133, 4
        %s135 = scalar_lea.vmem %s0, %s134
        %s136 = smul.u32 2, %s9
      $region28: #{_lambda_.32} parent=23 // pred_fallthru
        _
    $region24: #{_lambda_.32} parent=5 // pred_fallthru
      _
    %p137 = scmp.le.s32.totalorder 1, %s9
    %p138 = scmp.lt.s32.totalorder %s9, 3
    %p139 = pnand %p137, %p138
    %p140 = pneg %p139
    // Predicated region
    $region29: #{_lambda_.32} parent=5 // pred_check
      _
    $region30: #{_lambda_.32} parent=5 // pred_check_branch
      %142 = sbr.rel (%p139) target = $region32
    $region31: #{_lambda_.32} parent=5 // pred_region
      %s143 = ssub.s32 %s9, 1
      %s144 = smul.u32 2, %s14
      %p145 = scmp.lt.s32.totalorder %s144, 3
      %s146 = scalar_select %p145, %s144, 3
      %s147 = smul.addr %s146, 4
      %s148 = scalar_lea.vmem %s0, %s147
      %p149 = pneg %p35
      %p150 = pneg %p32
      %p151 = pneg %p56
      %p152 = pneg %p53
      %p153 = pneg %p77
      %p154 = pneg %p74
      %p155 = pneg %p103
      %p156 = pneg %p100
      %s157 = smul.u32 2, %s14
      %p158 = scmp.lt.s32.totalorder %s157, 3
      %s159 = scalar_select %p158, %s157, 3
      %s160 = smul.addr %s159, 4
      %s161 = scalar_lea.vmem %s3, %s160
      %s162 = smul.u32 2, %s14
      %p163 = scmp.lt.s32.totalorder %s162, 3
      %s164 = scalar_select %p163, %s162, 3
      %s165 = smul.addr %s164, 4
      %s166 = scalar_lea.vmem %s0, %s165
      %s167 = smul.u32 2, %s14
      %s168 = smul.u32 2, %s14
      %p169 = scmp.lt.s32.totalorder %s168, 3
      %s170 = scalar_select %p169, %s168, 3
      %s171 = smul.addr %s170, 4
      %s172 = scalar_lea.vmem %s3, %s171
      %s173 = smul.u32 2, %s14
      %v175 = vld [vmem:[%s166] sm:$0xf]
      %v176 = vld [vmem:[%s166 + $0x4] sm:$0xf]
      %v177 = vld [vmem:[%s1] sm:$0xf]
      %v178 = vld [vmem:[%s2] sm:$0x1]
      %v180 = vlaneseq
      %v181 = vshrl.u32 %v180, 7
      %v182 = vsub.s32 0, %v181
      %v183 = vrot.slane %v178, %v182
      %v187 = vunpack.c.l.b16 %v175
      %v188 = vunpack.c.l.b16 %v176
      %v189 = vpack.c.b16 %v188, %v187
      %vm190 = vcmask 64512
      %v192 = vsel %vm190, %v189, 0
      %vm194 = vcmask 1043456
      %v196 = vsel %vm194, %v177, 0
      %198 = vmatprep.subr.bf16.mxu0 0
      %199 = vmatpush1.bf16.msra.mxu0 %v196
      %200 = vmatprep.subr.bf16.mxu0 0
      %201 = vmatpush1.bf16.msra.mxu0 0
      %202 = vmatprep.subr.bf16.mxu0 0
      %203 = vmatpush1.bf16.msra.mxu0 0
      %204 = vmatprep.subr.bf16.mxu0 0
      %205 = vmatpush1.bf16.msra.mxu0 0
      %206 = vmatprep.subr.bf16.mxu0 0
      %207 = vmatpush1.bf16.msra.mxu0 0
      %208 = vmatprep.subr.bf16.mxu0 0
      %209 = vmatpush1.bf16.msra.mxu0 0
      %210 = vmatprep.subr.bf16.mxu0 0
      %211 = vmatpush1.bf16.msra.mxu0 0
      %212 = vmatprep.subr.bf16.mxu0 0
      %213 = vmatpush1.bf16.msra.mxu0 0
      %214 = vmatprep.subr.bf16.mxu0 0
      %215 = vmatpush1.bf16.msra.mxu0 0
      %216 = vmatprep.subr.bf16.mxu0 0
      %217 = vmatpush1.bf16.msra.mxu0 0
      %218 = vmatprep.subr.bf16.mxu0 0
      %219 = vmatpush1.bf16.msra.mxu0 0
      %220 = vmatprep.subr.bf16.mxu0 0
      %221 = vmatpush1.bf16.msra.mxu0 0
      %222 = vmatprep.subr.bf16.mxu0 0
      %223 = vmatpush1.bf16.msra.mxu0 0
      %224 = vmatprep.subr.bf16.mxu0 0
      %225 = vmatpush1.bf16.msra.mxu0 0
      %226 = vmatprep.subr.bf16.mxu0 0
      %227 = vmatpush1.bf16.msra.mxu0 0
      %228 = vmatprep.subr.bf16.mxu0 0
      %229 = vmatpush1.bf16.msra.mxu0 0
      %230 = vmatprep.mubr.bf16.mxu0 0
      %231 = vmatmul.mubr.bf16.gmra.mrb[0].mxu0 %v192
      %v232 = vpop.f32.mrb[0].mxu0
      %v233 = vadd.f32 %v183, %v232
      %v234 = vpop.f32.mrb[0].mxu0
      %v235 = vpop.f32.mrb[0].mxu0
      %v236 = vadd.f32 %v183, %v235
      %v237 = vpop.f32.mrb[0].mxu0
      %238 = vdwg.mxu0
      %v239 = vpack.c.bf16 %v236, %v233
      %v241 = vunpack.c.l.b16 %v239
      %v242 = vunpack.c.h.b16 %v239
      %v243 = vpack.c.b16 %v241, %v241
      %v244 = vpack.c.b16 %v242, %v242
      %vm247 = vcmask 125952
      %248 = vst.msk [vmem:[%s172] sm:$0xf] %vm247, %v243
      %249 = vst.msk [vmem:[%s172 + $0x4] sm:$0xf] %vm247, %v244
      %s250 = smul.u32 2, %s14
      %p251 = scmp.lt.s32.totalorder %s250, 3
      %s252 = scalar_select %p251, %s250, 3
      %s253 = smul.addr %s252, 4
      %s254 = scalar_lea.vmem %s3, %s253
      // Predicated region
      $region33: #{_lambda_.32} parent=31 // pred_check
        %p255 = pneg %p100
      $region34: #{_lambda_.32} parent=31 // pred_check_branch
        %257 = sbr.rel (%p255) target = $region36
      $region35: #{_lambda_.32} parent=31 // pred_region
        %s258 = smul.u32 2, %s14
      $region36: #{_lambda_.32} parent=31 // pred_fallthru
        _
    $region32: #{_lambda_.32} parent=5 // pred_fallthru
      _
    %p259 = scmp.le.s32.totalorder 2, %s9
    // Predicated region
    $region37: #{_lambda_.32} parent=5 // pred_check
      %p260 = pneg %p259
    $region38: #{_lambda_.32} parent=5 // pred_check_branch
      %262 = sbr.rel (%p260) target = $region40
    $region39: #{_lambda_.32} parent=5 // pred_region
      %s263 = ssub.s32 %s9, 2
      // Predicated region
      $region41: #{_lambda_.32} parent=39 // pred_check
        %p264 = pneg %p106
      $region42: #{_lambda_.32} parent=39 // pred_check_branch
        %266 = sbr.rel (%p264) target = $region44
      $region43: #{_lambda_.32} parent=39 // pred_region
        %s267 = smul.u32 2, %s15
        %p268 = scmp.lt.s32.totalorder %s267, 3
        %s269 = scalar_select %p268, %s267, 3
        %s270 = smul.addr %s269, 4
        %s271 = scalar_lea.vmem %s3, %s270
      $region44: #{_lambda_.32} parent=39 // pred_fallthru
        _
    $region40: #{_lambda_.32} parent=5 // pred_fallthru
      _
  $region6: #{_lambda_.32} parent=0 // loop_footer
    %s13 = sadd.s32 1, %s9
  $region7: #{_lambda_.32} parent=0 // loop_footer_branch
    %8 = sbr.rel target = $region3
  $region8: #{_lambda_.32} parent=0 // loop_exit
    _

// kernel: _lambda_.36
$region0: #{_lambda_.36}
  #allocation0 [shape = 'u32[]', space=smem, size = 0x4, offset = 0x4, fixed_abs, tag = 'smem constant byte address 0x4 - core index']
  #allocation1 [shape = 'u32[144,128]{1,0:T(1,128)}', space=vmem, size = 0x12000, scoped, tag = 'internal scratch']
  %s0 = inlined_call_operand.vmem [shape: bf16[9,16,16], index: 0, kind: input, shape index: {}]
  %s1 = inlined_call_operand.vmem [shape: f32[16,1], index: 1, kind: input, shape index: {}]
  %s2 = inlined_call_operand.vmem [shape: f32[1,16], index: 2, kind: input, shape index: {}]
  %s3 = inlined_call_operand.vmem [shape: f32[1,16], index: 3, kind: input, shape index: {}]
  %s4 = inlined_call_operand.vmem [shape: bf16[16,16], index: 4, kind: output, shape index: {}]
  %s5 = sld [smem:[#allocation0]]
  $region26: #{_lambda_.36} parent=0
    _
  %s7 = ssub.s32 1, %s5
  %s8 = scalar_select 0, %s7, %s5
  // Predicated region
  $region2: #{_lambda_.36} parent=0 // pred_check
    _
  $region3: #{_lambda_.36} parent=0 // pred_check_branch
    %10 = sbr.rel (0) target = $region5
  $region4: #{_lambda_.36} parent=0 // pred_region
    _
  $region5: #{_lambda_.36} parent=0 // pred_fallthru
    _
  // Predicated region
  $region6: #{_lambda_.36} parent=0 // pred_check
    _
  $region7: #{_lambda_.36} parent=0 // pred_check_branch
    %12 = sbr.rel (0) target = $region9
  $region8: #{_lambda_.36} parent=0 // pred_region
    _
  $region9: #{_lambda_.36} parent=0 // pred_fallthru
    _
  // Predicated region
  $region10: #{_lambda_.36} parent=0 // pred_check
    _
  $region11: #{_lambda_.36} parent=0 // pred_check_branch
    %14 = sbr.rel (0) target = $region13
  $region12: #{_lambda_.36} parent=0 // pred_region
    _
  $region13: #{_lambda_.36} parent=0 // pred_fallthru
    _
  // Predicated region
  $region14: #{_lambda_.36} parent=0 // pred_check
    _
  $region15: #{_lambda_.36} parent=0 // pred_check_branch
    %16 = sbr.rel (0) target = $region17
  $region16: #{_lambda_.36} parent=0 // pred_region
    _
  $region17: #{_lambda_.36} parent=0 // pred_fallthru
    _
  %v17 = vld [vmem:[%s0] sm:$0xf]
  %v18 = vld [vmem:[%s0 + $0x4] sm:$0xf]
  %v19 = vunpack.c.l.bf16 %v17
  %v20 = vunpack.c.l.bf16 %v18
  %s21 = scalar_lea.vmem %s0, 8
  %v22 = vld [vmem:[%s21] sm:$0xf]
  %v23 = vld [vmem:[%s21 + $0x4] sm:$0xf]
  %v24 = vunpack.c.l.bf16 %v22
  %v25 = vunpack.c.l.bf16 %v23
  %v26 = vadd.f32 %v19, %v24
  %v27 = vadd.f32 %v20, %v25
  %s28 = scalar_lea.vmem %s0, 16
  %v29 = vld [vmem:[%s28] sm:$0xf]
  %v30 = vld [vmem:[%s28 + $0x4] sm:$0xf]
  %v31 = vunpack.c.l.bf16 %v29
  %v32 = vunpack.c.l.bf16 %v30
  %v33 = vadd.f32 %v26, %v31
  %v34 = vadd.f32 %v27, %v32
  %s35 = scalar_lea.vmem %s0, 24
  %v36 = vld [vmem:[%s35] sm:$0xf]
  %v37 = vld [vmem:[%s35 + $0x4] sm:$0xf]
  %v38 = vunpack.c.l.bf16 %v36
  %v39 = vunpack.c.l.bf16 %v37
  %v40 = vadd.f32 %v33, %v38
  %v41 = vadd.f32 %v34, %v39
  %s42 = scalar_lea.vmem %s0, 32
  %v43 = vld [vmem:[%s42] sm:$0xf]
  %v44 = vld [vmem:[%s42 + $0x4] sm:$0xf]
  %v45 = vunpack.c.l.bf16 %v43
  %v46 = vunpack.c.l.bf16 %v44
  %v47 = vadd.f32 %v40, %v45
  %v48 = vadd.f32 %v41, %v46
  %s49 = scalar_lea.vmem %s0, 40
  %v50 = vld [vmem:[%s49] sm:$0xf]
  %v51 = vld [vmem:[%s49 + $0x4] sm:$0xf]
  %v52 = vunpack.c.l.bf16 %v50
  %v53 = vunpack.c.l.bf16 %v51
  %v54 = vadd.f32 %v47, %v52
  %v55 = vadd.f32 %v48, %v53
  %s56 = scalar_lea.vmem %s0, 48
  %v57 = vld [vmem:[%s56] sm:$0xf]
  %v58 = vld [vmem:[%s56 + $0x4] sm:$0xf]
  %v59 = vunpack.c.l.bf16 %v57
  %v60 = vunpack.c.l.bf16 %v58
  %v61 = vadd.f32 %v54, %v59
  %v62 = vadd.f32 %v55, %v60
  %s63 = scalar_lea.vmem %s0, 56
  %v64 = vld [vmem:[%s63] sm:$0xf]
  %v65 = vld [vmem:[%s63 + $0x4] sm:$0xf]
  %v66 = vunpack.c.l.bf16 %v64
  %v67 = vunpack.c.l.bf16 %v65
  %v68 = vadd.f32 %v61, %v66
  %v69 = vadd.f32 %v62, %v67
  %s70 = scalar_lea.vmem %s0, 64
  %v71 = vld [vmem:[%s70] sm:$0xf]
  %v72 = vld [vmem:[%s70 + $0x4] sm:$0xf]
  %v73 = vunpack.c.l.bf16 %v71
  %v74 = vunpack.c.l.bf16 %v72
  %v75 = vadd.f32 %v68, %v73
  %v76 = vadd.f32 %v69, %v74
  %v77 = vld [vmem:[%s1] sm:$0xff]
  %v78 = vld [vmem:[%s1 + $0x8] sm:$0xff]
  %80 = vset.pattern.permute.xlu0 0
  %81 = vperm.xlu0 %80, %v77
  %v82 = vpop.permute.xlu0 %81
  %85 = vset.pattern.permute.xlu0 0
  %86 = vperm.xlu0 %85, %v78
  %v87 = vpop.permute.xlu0 %86
  %v89 = vmul.f32 %v75, %v82
  %v90 = vmul.f32 %v76, %v87
  %v91 = vld [vmem:[%s2] sm:$0x1]
  %v93 = vlaneseq
  %v94 = vshrl.u32 %v93, 7
  %v95 = vsub.s32 0, %v94
  %v96 = vrot.slane %v91, %v95
  %v98 = vmul.f32 %v89, %v96
  %v99 = vmul.f32 %v90, %v96
  %v100 = vld [vmem:[%s3] sm:$0x1]
  %v102 = vlaneseq
  %v103 = vshrl.u32 %v102, 7
  %v104 = vsub.s32 0, %v103
  %v105 = vrot.slane %v100, %v104
  %v107 = vadd.f32 %v98, %v105
  %v108 = vadd.f32 %v99, %v105
  %v109 = vpack.c.bf16 %v108, %v107
  %v111 = vunpack.c.l.b16 %v109
  %v112 = vunpack.c.h.b16 %v109
  %v113 = vpack.c.b16 %v111, %v111
  %v114 = vpack.c.b16 %v112, %v112
  %vm117 = vcmask 125952
  %118 = vst.msk [vmem:[%s4] sm:$0xf] %vm117, %v113
  %119 = vst.msk [vmem:[%s4 + $0x4] sm:$0xf] %vm117, %v114
  // Predicated region
  $region18: #{_lambda_.36} parent=0 // pred_check
    _
  $region19: #{_lambda_.36} parent=0 // pred_check_branch
    %121 = sbr.rel (0) target = $region21
  $region20: #{_lambda_.36} parent=0 // pred_region
    _
  $region21: #{_lambda_.36} parent=0 // pred_fallthru
    _
  // Predicated region
  $region22: #{_lambda_.36} parent=0 // pred_check
    _
  $region23: #{_lambda_.36} parent=0 // pred_check_branch
    %123 = sbr.rel (0) target = $region25
  $region24: #{_lambda_.36} parent=0 // pred_region
    _
  $region25: #{_lambda_.36} parent=0 // pred_fallthru
    _

// kernel: _lambda_.34
$region0: #{_lambda_.34}
  #allocation0 [shape = 'u32[]', space=smem, size = 0x4, offset = 0x4, fixed_abs, tag = 'smem constant byte address 0x4 - core index']
  #allocation1 [shape = 'u32[144,128]{1,0:T(1,128)}', space=vmem, size = 0x12000, scoped, tag = 'internal scratch']
  %s0 = inlined_call_operand.vmem [shape: bf16[9,16,16], index: 0, kind: input, shape index: {}]
  %s1 = inlined_call_operand.vmem [shape: f32[1,16], index: 1, kind: input, shape index: {}]
  %s2 = inlined_call_operand.vmem [shape: f32[1,16], index: 2, kind: input, shape index: {}]
  %s3 = inlined_call_operand.vmem [shape: bf16[16,16], index: 3, kind: output, shape index: {}]
  %s4 = sld [smem:[#allocation0]]
  $region22: #{_lambda_.34} parent=0
    _
  %s6 = ssub.s32 1, %s4
  %s7 = scalar_select 0, %s6, %s4
  // Predicated region
  $region2: #{_lambda_.34} parent=0 // pred_check
    _
  $region3: #{_lambda_.34} parent=0 // pred_check_branch
    %9 = sbr.rel (0) target = $region5
  $region4: #{_lambda_.34} parent=0 // pred_region
    _
  $region5: #{_lambda_.34} parent=0 // pred_fallthru
    _
  // Predicated region
  $region6: #{_lambda_.34} parent=0 // pred_check
    _
  $region7: #{_lambda_.34} parent=0 // pred_check_branch
    %11 = sbr.rel (0) target = $region9
  $region8: #{_lambda_.34} parent=0 // pred_region
    _
  $region9: #{_lambda_.34} parent=0 // pred_fallthru
    _
  // Predicated region
  $region10: #{_lambda_.34} parent=0 // pred_check
    _
  $region11: #{_lambda_.34} parent=0 // pred_check_branch
    %13 = sbr.rel (0) target = $region13
  $region12: #{_lambda_.34} parent=0 // pred_region
    _
  $region13: #{_lambda_.34} parent=0 // pred_fallthru
    _
  %v14 = vld [vmem:[%s0] sm:$0xf]
  %v15 = vld [vmem:[%s0 + $0x4] sm:$0xf]
  %s16 = scalar_lea.vmem %s0, 8
  %v17 = vld [vmem:[%s16] sm:$0xf]
  %v18 = vld [vmem:[%s16 + $0x4] sm:$0xf]
  %v19 = vmax.bf16 %v14, %v17
  %v20 = vmax.bf16 %v15, %v18
  %s21 = scalar_lea.vmem %s0, 16
  %v22 = vld [vmem:[%s21] sm:$0xf]
  %v23 = vld [vmem:[%s21 + $0x4] sm:$0xf]
  %v24 = vmax.bf16 %v19, %v22
  %v25 = vmax.bf16 %v20, %v23
  %s26 = scalar_lea.vmem %s0, 24
  %v27 = vld [vmem:[%s26] sm:$0xf]
  %v28 = vld [vmem:[%s26 + $0x4] sm:$0xf]
  %v29 = vmax.bf16 %v24, %v27
  %v30 = vmax.bf16 %v25, %v28
  %s31 = scalar_lea.vmem %s0, 32
  %v32 = vld [vmem:[%s31] sm:$0xf]
  %v33 = vld [vmem:[%s31 + $0x4] sm:$0xf]
  %v34 = vmax.bf16 %v29, %v32
  %v35 = vmax.bf16 %v30, %v33
  %s36 = scalar_lea.vmem %s0, 40
  %v37 = vld [vmem:[%s36] sm:$0xf]
  %v38 = vld [vmem:[%s36 + $0x4] sm:$0xf]
  %v39 = vmax.bf16 %v34, %v37
  %v40 = vmax.bf16 %v35, %v38
  %s41 = scalar_lea.vmem %s0, 48
  %v42 = vld [vmem:[%s41] sm:$0xf]
  %v43 = vld [vmem:[%s41 + $0x4] sm:$0xf]
  %v44 = vmax.bf16 %v39, %v42
  %v45 = vmax.bf16 %v40, %v43
  %s46 = scalar_lea.vmem %s0, 56
  %v47 = vld [vmem:[%s46] sm:$0xf]
  %v48 = vld [vmem:[%s46 + $0x4] sm:$0xf]
  %v49 = vmax.bf16 %v44, %v47
  %v50 = vmax.bf16 %v45, %v48
  %s51 = scalar_lea.vmem %s0, 64
  %v52 = vld [vmem:[%s51] sm:$0xf]
  %v53 = vld [vmem:[%s51 + $0x4] sm:$0xf]
  %v54 = vmax.bf16 %v49, %v52
  %v55 = vmax.bf16 %v50, %v53
  %v56 = vunpack.c.l.bf16 %v54
  %v57 = vunpack.c.l.bf16 %v55
  %v58 = vld [vmem:[%s1] sm:$0x1]
  %v60 = vlaneseq
  %v61 = vshrl.u32 %v60, 7
  %v62 = vsub.s32 0, %v61
  %v63 = vrot.slane %v58, %v62
  %v65 = vmul.f32 %v56, %v63
  %v66 = vmul.f32 %v57, %v63
  %v67 = vld [vmem:[%s2] sm:$0x1]
  %v69 = vlaneseq
  %v70 = vshrl.u32 %v69, 7
  %v71 = vsub.s32 0, %v70
  %v72 = vrot.slane %v67, %v71
  %v74 = vadd.f32 %v65, %v72
  %v75 = vadd.f32 %v66, %v72
  %v76 = vpack.c.bf16 %v75, %v74
  %v78 = vunpack.c.l.b16 %v76
  %v79 = vunpack.c.h.b16 %v76
  %v80 = vpack.c.b16 %v78, %v78
  %v81 = vpack.c.b16 %v79, %v79
  %vm84 = vcmask 125952
  %85 = vst.msk [vmem:[%s3] sm:$0xf] %vm84, %v80
  %86 = vst.msk [vmem:[%s3 + $0x4] sm:$0xf] %vm84, %v81
  // Predicated region
  $region14: #{_lambda_.34} parent=0 // pred_check
    _
  $region15: #{_lambda_.34} parent=0 // pred_check_branch
    %88 = sbr.rel (0) target = $region17
  $region16: #{_lambda_.34} parent=0 // pred_region
    _
  $region17: #{_lambda_.34} parent=0 // pred_fallthru
    _
  // Predicated region
  $region18: #{_lambda_.34} parent=0 // pred_check
    _
  $region19: #{_lambda_.34} parent=0 // pred_check_branch
    %90 = sbr.rel (0) target = $region21
  $region20: #{_lambda_.34} parent=0 // pred_region
    _
  $region21: #{_lambda_.34} parent=0 // pred_fallthru
    _

// kernel: _lambda_.37
$region0: #{_lambda_.37}
  #allocation0 [shape = 'u32[]', space=smem, size = 0x4, offset = 0x4, fixed_abs, tag = 'smem constant byte address 0x4 - core index']
  #allocation1 [shape = 'u32[144,128]{1,0:T(1,128)}', space=vmem, size = 0x12000, scoped, tag = 'internal scratch']
  %s0 = inlined_call_operand.vmem [shape: bf16[16,144], index: 0, kind: input, shape index: {}]
  %s1 = inlined_call_operand.vmem [shape: bf16[144,16], index: 1, kind: input, shape index: {}]
  %s2 = inlined_call_operand.vmem [shape: f32[1,16], index: 2, kind: input, shape index: {}]
  %s3 = inlined_call_operand.vmem [shape: bf16[16,16], index: 3, kind: output, shape index: {}]
  %s4 = sld [smem:[#allocation0]]
  $region22: #{_lambda_.37} parent=0
    _
  %s6 = ssub.s32 1, %s4
  %s7 = scalar_select 0, %s6, %s4
  // Predicated region
  $region2: #{_lambda_.37} parent=0 // pred_check
    _
  $region3: #{_lambda_.37} parent=0 // pred_check_branch
    %9 = sbr.rel (0) target = $region5
  $region4: #{_lambda_.37} parent=0 // pred_region
    _
  $region5: #{_lambda_.37} parent=0 // pred_fallthru
    _
  // Predicated region
  $region6: #{_lambda_.37} parent=0 // pred_check
    _
  $region7: #{_lambda_.37} parent=0 // pred_check_branch
    %11 = sbr.rel (0) target = $region9
  $region8: #{_lambda_.37} parent=0 // pred_region
    _
  $region9: #{_lambda_.37} parent=0 // pred_fallthru
    _
  // Predicated region
  $region10: #{_lambda_.37} parent=0 // pred_check
    _
  $region11: #{_lambda_.37} parent=0 // pred_check_branch
    %13 = sbr.rel (0) target = $region13
  $region12: #{_lambda_.37} parent=0 // pred_region
    _
  $region13: #{_lambda_.37} parent=0 // pred_fallthru
    _
  %v15 = vld [vmem:[%s0] sm:$0xff]
  %v16 = vld [vmem:[%s0 + $0x8] sm:$0xff]
  %v17 = vld [vmem:[%s1] sm:$0xf]
  %v18 = vld [vmem:[%s1 + $0x4] sm:$0xf]
  %v19 = vld [vmem:[%s1 + $0x8] sm:$0xf]
  %v20 = vld [vmem:[%s1 + $0xc] sm:$0xf]
  %v21 = vld [vmem:[%s1 + $0x10] sm:$0xf]
  %v22 = vld [vmem:[%s1 + $0x14] sm:$0xf]
  %v23 = vld [vmem:[%s1 + $0x18] sm:$0xf]
  %v24 = vld [vmem:[%s1 + $0x1c] sm:$0xf]
  %v25 = vld [vmem:[%s1 + $0x20] sm:$0xf]
  %v26 = vld [vmem:[%s1 + $0x24] sm:$0xf]
  %v27 = vld [vmem:[%s1 + $0x28] sm:$0xf]
  %v28 = vld [vmem:[%s1 + $0x2c] sm:$0xf]
  %v29 = vld [vmem:[%s1 + $0x30] sm:$0xf]
  %v30 = vld [vmem:[%s1 + $0x34] sm:$0xf]
  %v31 = vld [vmem:[%s1 + $0x38] sm:$0xf]
  %v32 = vld [vmem:[%s1 + $0x3c] sm:$0xf]
  %v33 = vld [vmem:[%s1 + $0x40] sm:$0xf]
  %v34 = vld [vmem:[%s1 + $0x44] sm:$0xf]
  %v35 = vld [vmem:[%s2] sm:$0x1]
  %v37 = vlaneseq
  %v38 = vshrl.u32 %v37, 7
  %v39 = vsub.s32 0, %v38
  %v40 = vrot.slane %v35, %v39
  %v44 = vunpack.c.l.b16 %v15
  %v45 = vunpack.c.h.b16 %v15
  %v46 = vunpack.c.l.b16 %v16
  %v47 = vunpack.c.h.b16 %v16
  %v48 = vpack.c.b16 %v46, %v44
  %v49 = vpack.c.b16 %v47, %v45
  %v69 = vunpack.c.l.b16 %v17
  %v70 = vunpack.c.l.b16 %v18
  %v71 = vunpack.c.l.b16 %v19
  %v72 = vunpack.c.l.b16 %v20
  %v73 = vunpack.c.l.b16 %v21
  %v74 = vunpack.c.l.b16 %v22
  %v75 = vunpack.c.l.b16 %v23
  %v76 = vunpack.c.l.b16 %v24
  %v77 = vunpack.c.l.b16 %v25
  %v78 = vunpack.c.l.b16 %v26
  %v79 = vunpack.c.l.b16 %v27
  %v80 = vunpack.c.l.b16 %v28
  %v81 = vunpack.c.l.b16 %v29
  %v82 = vunpack.c.l.b16 %v30
  %v83 = vunpack.c.l.b16 %v31
  %v84 = vunpack.c.l.b16 %v32
  %v85 = vunpack.c.l.b16 %v33
  %v86 = vunpack.c.l.b16 %v34
  %v87 = vpack.c.b16 %v70, %v69
  %v88 = vpack.c.b16 %v72, %v71
  %v89 = vpack.c.b16 %v74, %v73
  %v90 = vpack.c.b16 %v76, %v75
  %v91 = vpack.c.b16 %v78, %v77
  %v92 = vpack.c.b16 %v80, %v79
  %v93 = vpack.c.b16 %v82, %v81
  %v94 = vpack.c.b16 %v84, %v83
  %v95 = vpack.c.b16 %v86, %v85
  %vm105 = vcmask 130048
  %v107 = vsel %vm105, %v49, 0
  %109 = vmatprep.subr.bf16.mxu0 0
  %110 = vmatpush1.bf16.msra.mxu0 %v87
  %111 = vmatprep.subr.bf16.mxu0 0
  %112 = vmatpush1.bf16.msra.mxu0 %v88
  %113 = vmatprep.subr.bf16.mxu0 0
  %114 = vmatpush1.bf16.msra.mxu0 %v89
  %115 = vmatprep.subr.bf16.mxu0 0
  %116 = vmatpush1.bf16.msra.mxu0 %v90
  %117 = vmatprep.subr.bf16.mxu0 0
  %118 = vmatpush1.bf16.msra.mxu0 %v91
  %119 = vmatprep.subr.bf16.mxu0 0
  %120 = vmatpush1.bf16.msra.mxu0 %v92
  %121 = vmatprep.subr.bf16.mxu0 0
  %122 = vmatpush1.bf16.msra.mxu0 %v93
  %123 = vmatprep.subr.bf16.mxu0 0
  %124 = vmatpush1.bf16.msra.mxu0 %v94
  %125 = vmatprep.subr.bf16.mxu0 0
  %126 = vmatpush1.bf16.msra.mxu0 %v95
  %127 = vmatprep.subr.bf16.mxu0 0
  %128 = vmatpush1.bf16.msra.mxu0 0
  %129 = vmatprep.subr.bf16.mxu0 0
  %130 = vmatpush1.bf16.msra.mxu0 0
  %131 = vmatprep.subr.bf16.mxu0 0
  %132 = vmatpush1.bf16.msra.mxu0 0
  %133 = vmatprep.subr.bf16.mxu0 0
  %134 = vmatpush1.bf16.msra.mxu0 0
  %135 = vmatprep.subr.bf16.mxu0 0
  %136 = vmatpush1.bf16.msra.mxu0 0
  %137 = vmatprep.subr.bf16.mxu0 0
  %138 = vmatpush1.bf16.msra.mxu0 0
  %139 = vmatprep.subr.bf16.mxu0 0
  %140 = vmatpush1.bf16.msra.mxu0 0
  %141 = vmatprep.mubr.bf16.mxu0 %v107
  %142 = vmatmul.mubr.bf16.gmra.mrb[0].mxu0 %v48
  %v143 = vpop.f32.mrb[0].mxu0
  %v144 = vadd.f32 %v40, %v143
  %v145 = vpop.f32.mrb[0].mxu0
  %v146 = vpop.f32.mrb[0].mxu0
  %v147 = vadd.f32 %v40, %v146
  %v148 = vpop.f32.mrb[0].mxu0
  %149 = vdwg.mxu0
  %v150 = vpack.c.bf16 %v147, %v144
  %v152 = vunpack.c.l.b16 %v150
  %v153 = vunpack.c.h.b16 %v150
  %v154 = vpack.c.b16 %v152, %v152
  %v155 = vpack.c.b16 %v153, %v153
  %vm158 = vcmask 125952
  %159 = vst.msk [vmem:[%s3] sm:$0xf] %vm158, %v154
  %160 = vst.msk [vmem:[%s3 + $0x4] sm:$0xf] %vm158, %v155
  // Predicated region
  $region14: #{_lambda_.37} parent=0 // pred_check
    _
  $region15: #{_lambda_.37} parent=0 // pred_check_branch
    %162 = sbr.rel (0) target = $region17
  $region16: #{_lambda_.37} parent=0 // pred_region
    _
  $region17: #{_lambda_.37} parent=0 // pred_fallthru
    _
  // Predicated region
  $region18: #{_lambda_.37} parent=0 // pred_check
    _
  $region19: #{_lambda_.37} parent=0 // pred_check_branch
    %164 = sbr.rel (0) target = $region21
  $region20: #{_lambda_.37} parent=0 // pred_region
    _
  $region21: #{_lambda_.37} parent=0 // pred_fallthru
    _

// kernel: _lambda_.42
$region0: #{_lambda_.42}
  #allocation0 [shape = 'u32[]', space=smem, size = 0x4, offset = 0x4, fixed_abs, tag = 'smem constant byte address 0x4 - core index']
  #allocation1 [shape = 'u32[144,128]{1,0:T(1,128)}', space=vmem, size = 0x12000, scoped, tag = 'internal scratch']
  %s0 = inlined_call_operand.vmem [shape: bf16[2,16,32], index: 0, kind: input, shape index: {}]
  %s1 = inlined_call_operand.vmem [shape: bf16[2,32,16], index: 1, kind: input, shape index: {}]
  %s2 = inlined_call_operand.vmem [shape: f32[2,1,16], index: 2, kind: input, shape index: {}]
  %s3 = inlined_call_operand.vmem [shape: bf16[2,16,16], index: 3, kind: output, shape index: {}]
  %s4 = sld [smem:[#allocation0]]
  $region45: #{_lambda_.42} parent=0
    _
  %s6 = ssub.s32 1, %s4
  %s7 = scalar_select 0, %s6, %s4
  loop: start=0, step=1, limit=4
  $region2: #{_lambda_.42} parent=0 // loop_pre_header
    _
  $region3: #{_lambda_.42} parent=0 // loop_header
    %s9 = sphi 0, %s13
    %p10 = scmp.ge.s32.totalorder %s9, 4
    %s16 = sphi 0, %s28
    %s17 = sphi 0, %s24
    %s18 = sphi 0, %s16
    %s19 = sphi 0, %s17
    %s20 = sphi 0, %s18
    %s21 = sphi 0, %s19
    %s33 = sphi 0, %s35
    %s36 = sphi 0, %s33
    %s37 = sphi 0, %s36
    %s53 = sphi 0, %s37
    %s59 = sphi 0, %s61
    %s62 = sphi 0, %s59
    %s63 = sphi 0, %s62
    %s79 = sphi 0, %s63
    %s85 = sphi 0, %s87
    %s88 = sphi 0, %s85
    %s89 = sphi 0, %s88
    %s105 = sphi 0, %s89
    %s113 = sphi 0, %s115
    %s116 = sphi 0, %s113
    %s117 = sphi 0, %s116
    %s133 = sphi 0, %s117
  $region4: #{_lambda_.42} parent=0 // loop_header_branch
    %12 = sbr.rel (%p10) target = $region8
  $region5: #{_lambda_.42} parent=0 // loop_body
    %s14 = ssub.s32 %s9, 1
    %s15 = ssub.s32 %s9, 2
    %s22 = sadd.s32 1, %s17
    %p23 = scmp.ge.s32.totalorder %s22, 1
    %s24 = scalar_select %p23, 0, %s22
    %s25 = sadd.s32 1, %s16
    %s26 = scalar_select %p23, %s25, %s16
    %p27 = scmp.ge.s32.totalorder %s26, 2
    %s28 = scalar_select %p27, 0, %s26
    %s29 = ssub.s32 %s16, %s28
    %s30 = ssub.s32 %s17, %s24
    %s31 = sor.u32 %s29, %s30
    %p32 = scmp.eq.s32.totalorder %s31, 0
    %s34 = sadd.s32 %s33, 1
    %s35 = scalar_select %p32, %s33, %s34
    %p38 = pneg %p32
    %p39 = scmp.eq.s32.totalorder %s9, 1
    %p40 = por %p38, %p39
    %p41 = scmp.ne.s32.totalorder %s33, %s36
    %p42 = scmp.eq.s32.totalorder %s9, 0
    %p43 = por %p41, %p42
    %p44 = scmp.ne.s32.totalorder %s33, %s36
    %p45 = scmp.eq.s32.totalorder %s14, 1
    %p46 = por %p44, %p45
    %p47 = scmp.ne.s32.totalorder %s36, %s37
    %p48 = scmp.eq.s32.totalorder %s14, 0
    %p49 = por %p47, %p48
    %p50 = scmp.ne.s32.totalorder %s36, %s37
    %p51 = scmp.eq.s32.totalorder %s15, 1
    %p52 = por %p50, %p51
    %p54 = scmp.ne.s32.totalorder %s37, %s53
    %p55 = scmp.eq.s32.totalorder %s15, 0
    %p56 = por %p54, %p55
    %s57 = ssub.s32 %s16, %s28
    %p58 = scmp.eq.s32.totalorder %s57, 0
    %s60 = sadd.s32 %s59, 1
    %s61 = scalar_select %p58, %s59, %s60
    %p64 = pneg %p58
    %p65 = scmp.eq.s32.totalorder %s9, 1
    %p66 = por %p64, %p65
    %p67 = scmp.ne.s32.totalorder %s59, %s62
    %p68 = scmp.eq.s32.totalorder %s9, 0
    %p69 = por %p67, %p68
    %p70 = scmp.ne.s32.totalorder %s59, %s62
    %p71 = scmp.eq.s32.totalorder %s14, 1
    %p72 = por %p70, %p71
    %p73 = scmp.ne.s32.totalorder %s62, %s63
    %p74 = scmp.eq.s32.totalorder %s14, 0
    %p75 = por %p73, %p74
    %p76 = scmp.ne.s32.totalorder %s62, %s63
    %p77 = scmp.eq.s32.totalorder %s15, 1
    %p78 = por %p76, %p77
    %p80 = scmp.ne.s32.totalorder %s63, %s79
    %p81 = scmp.eq.s32.totalorder %s15, 0
    %p82 = por %p80, %p81
    %s83 = ssub.s32 %s16, %s28
    %p84 = scmp.eq.s32.totalorder %s83, 0
    %s86 = sadd.s32 %s85, 1
    %s87 = scalar_select %p84, %s85, %s86
    %p90 = pneg %p84
    %p91 = scmp.eq.s32.totalorder %s9, 1
    %p92 = por %p90, %p91
    %p93 = scmp.ne.s32.totalorder %s85, %s88
    %p94 = scmp.eq.s32.totalorder %s9, 0
    %p95 = por %p93, %p94
    %p96 = scmp.ne.s32.totalorder %s85, %s88
    %p97 = scmp.eq.s32.totalorder %s14, 1
    %p98 = por %p96, %p97
    %p99 = scmp.ne.s32.totalorder %s88, %s89
    %p100 = scmp.eq.s32.totalorder %s14, 0
    %p101 = por %p99, %p100
    %p102 = scmp.ne.s32.totalorder %s88, %s89
    %p103 = scmp.eq.s32.totalorder %s15, 1
    %p104 = por %p102, %p103
    %p106 = scmp.ne.s32.totalorder %s89, %s105
    %p107 = scmp.eq.s32.totalorder %s15, 0
    %p108 = por %p106, %p107
    %s109 = ssub.s32 %s16, %s28
    %s110 = ssub.s32 %s17, %s24
    %s111 = sor.u32 %s109, %s110
    %p112 = scmp.eq.s32.totalorder %s111, 0
    %s114 = sadd.s32 %s113, 1
    %s115 = scalar_select %p112, %s113, %s114
    %p118 = pneg %p112
    %p119 = scmp.eq.s32.totalorder %s9, 1
    %p120 = por %p118, %p119
    %p121 = scmp.ne.s32.totalorder %s113, %s116
    %p122 = scmp.eq.s32.totalorder %s9, 0
    %p123 = por %p121, %p122
    %p124 = scmp.ne.s32.totalorder %s113, %s116
    %p125 = scmp.eq.s32.totalorder %s14, 1
    %p126 = por %p124, %p125
    %p127 = scmp.ne.s32.totalorder %s116, %s117
    %p128 = scmp.eq.s32.totalorder %s14, 0
    %p129 = por %p127, %p128
    %p130 = scmp.ne.s32.totalorder %s116, %s117
    %p131 = scmp.eq.s32.totalorder %s15, 1
    %p132 = por %p130, %p131
    %p134 = scmp.ne.s32.totalorder %s117, %s133
    %p135 = scmp.eq.s32.totalorder %s15, 0
    %p136 = por %p134, %p135
    %p137 = scmp.le.s32.totalorder 1, %s9
    %p138 = scmp.lt.s32.totalorder %s9, 3
    %p139 = pnand %p137, %p138
    %p140 = pneg %p139
    // Predicated region
    $region9: #{_lambda_.42} parent=5 // pred_check
      _
    $region10: #{_lambda_.42} parent=5 // pred_check_branch
      %142 = sbr.rel (%p139) target = $region12
    $region11: #{_lambda_.42} parent=5 // pred_region
      %s143 = ssub.s32 %s9, 1
    $region12: #{_lambda_.42} parent=5 // pred_fallthru
      _
    %p144 = scmp.lt.s32.totalorder %s9, 2
    // Predicated region
    $region13: #{_lambda_.42} parent=5 // pred_check
      %p145 = pneg %p144
    $region14: #{_lambda_.42} parent=5 // pred_check_branch
      %147 = sbr.rel (%p145) target = $region16
    $region15: #{_lambda_.42} parent=5 // pred_region
      // Predicated region
      $region17: #{_lambda_.42} parent=15 // pred_check
        %p148 = pneg %p43
      $region18: #{_lambda_.42} parent=15 // pred_check_branch
        %150 = sbr.rel (%p148) target = $region20
      $region19: #{_lambda_.42} parent=15 // pred_region
        %s151 = smul.u32 2, %s17
        %p152 = scmp.lt.s32.totalorder %s16, 1
        %s153 = scalar_select %p152, %s16, 1
        %p154 = scmp.lt.s32.totalorder %s151, 1
        %s155 = scalar_select %p154, %s151, 1
        %s156 = smul.addr %s153, 2
        %s157 = sadd.s32 %s155, %s156
        %s158 = smul.addr %s157, 4
        %s159 = scalar_lea.vmem %s0, %s158
        %s160 = smul.u32 2, %s17
      $region20: #{_lambda_.42} parent=15 // pred_fallthru
        _
      // Predicated region
      $region21: #{_lambda_.42} parent=15 // pred_check
        %p161 = pneg %p69
      $region22: #{_lambda_.42} parent=15 // pred_check_branch
        %163 = sbr.rel (%p161) target = $region24
      $region23: #{_lambda_.42} parent=15 // pred_region
        %p164 = scmp.lt.s32.totalorder %s16, 1
        %s165 = scalar_select %p164, %s16, 1
        %s166 = smul.addr %s165, 4
        %s167 = smul.addr %s166, 4
        %s168 = scalar_lea.vmem %s1, %s167
      $region24: #{_lambda_.42} parent=15 // pred_fallthru
        _
      // Predicated region
      $region25: #{_lambda_.42} parent=15 // pred_check
        %p169 = pneg %p95
      $region26: #{_lambda_.42} parent=15 // pred_check_branch
        %171 = sbr.rel (%p169) target = $region28
      $region27: #{_lambda_.42} parent=15 // pred_region
        %p172 = scmp.lt.s32.totalorder %s16, 1
        %s173 = scalar_select %p172, %s16, 1
        %s174 = scalar_lea.vmem %s2, %s173
      $region28: #{_lambda_.42} parent=15 // pred_fallthru
        _
    $region16: #{_lambda_.42} parent=5 // pred_fallthru
      _
    %p175 = scmp.le.s32.totalorder 1, %s9
    %p176 = scmp.lt.s32.totalorder %s9, 3
    %p177 = pnand %p175, %p176
    %p178 = pneg %p177
    // Predicated region
    $region29: #{_lambda_.42} parent=5 // pred_check
      _
    $region30: #{_lambda_.42} parent=5 // pred_check_branch
      %180 = sbr.rel (%p177) target = $region32
    $region31: #{_lambda_.42} parent=5 // pred_region
      %s181 = ssub.s32 %s9, 1
      %s182 = smul.u32 2, %s19
      %p183 = scmp.lt.s32.totalorder %s18, 1
      %s184 = scalar_select %p183, %s18, 1
      %p185 = scmp.lt.s32.totalorder %s182, 1
      %s186 = scalar_select %p185, %s182, 1
      %s187 = smul.addr %s184, 2
      %s188 = sadd.s32 %s186, %s187
      %s189 = smul.addr %s188, 4
      %s190 = scalar_lea.vmem %s0, %s189
      %p191 = pneg %p49
      %p192 = pneg %p46
      %p193 = scmp.lt.s32.totalorder %s18, 1
      %s194 = scalar_select %p193, %s18, 1
      %s195 = smul.addr %s194, 4
      %s196 = smul.addr %s195, 4
      %s197 = scalar_lea.vmem %s1, %s196
      %p198 = pneg %p75
      %p199 = pneg %p72
      %p200 = scmp.lt.s32.totalorder %s18, 1
      %s201 = scalar_select %p200, %s18, 1
      %s202 = scalar_lea.vmem %s2, %s201
      %p203 = pneg %p101
      %p204 = pneg %p98
      %p205 = pneg %p129
      %p206 = pneg %p126
      %s207 = smul.u32 2, %s19
      %p208 = scmp.lt.s32.totalorder %s18, 1
      %s209 = scalar_select %p208, %s18, 1
      %p210 = scmp.lt.s32.totalorder %s207, 1
      %s211 = scalar_select %p210, %s207, 1
      %s212 = smul.addr %s209, 2
      %s213 = sadd.s32 %s211, %s212
      %s214 = smul.addr %s213, 4
      %s215 = scalar_lea.vmem %s3, %s214
      %s216 = smul.u32 2, %s19
      %p217 = scmp.lt.s32.totalorder %s18, 1
      %s218 = scalar_select %p217, %s18, 1
      %p219 = scmp.lt.s32.totalorder %s216, 1
      %s220 = scalar_select %p219, %s216, 1
      %s221 = smul.addr %s218, 2
      %s222 = sadd.s32 %s220, %s221
      %s223 = smul.addr %s222, 4
      %s224 = scalar_lea.vmem %s0, %s223
      %s225 = smul.u32 2, %s19
      %p226 = scmp.lt.s32.totalorder %s18, 1
      %s227 = scalar_select %p226, %s18, 1
      %s228 = smul.addr %s227, 4
      %s229 = smul.addr %s228, 4
      %s230 = scalar_lea.vmem %s1, %s229
      %p231 = scmp.lt.s32.totalorder %s18, 1
      %s232 = scalar_select %p231, %s18, 1
      %s233 = scalar_lea.vmem %s2, %s232
      %s234 = smul.u32 2, %s19
      %p235 = scmp.lt.s32.totalorder %s18, 1
      %s236 = scalar_select %p235, %s18, 1
      %p237 = scmp.lt.s32.totalorder %s234, 1
      %s238 = scalar_select %p237, %s234, 1
      %s239 = smul.addr %s236, 2
      %s240 = sadd.s32 %s238, %s239
      %s241 = smul.addr %s240, 4
      %s242 = scalar_lea.vmem %s3, %s241
      %s243 = smul.u32 2, %s19
      %v245 = vld [vmem:[%s224] sm:$0xf]
      %v246 = vld [vmem:[%s224 + $0x4] sm:$0xf]
      %v247 = vld [vmem:[%s230] sm:$0xf]
      %v248 = vld [vmem:[%s230 + $0x4] sm:$0xf]
      %v249 = vld [vmem:[%s230 + $0x8] sm:$0xf]
      %v250 = vld [vmem:[%s230 + $0xc] sm:$0xf]
      %v251 = vld [vmem:[%s233] sm:$0x1]
      %v253 = vlaneseq
      %v254 = vshrl.u32 %v253, 7
      %v255 = vsub.s32 0, %v254
      %v256 = vrot.slane %v251, %v255
      %v260 = vunpack.c.l.b16 %v245
      %v261 = vunpack.c.l.b16 %v246
      %v262 = vpack.c.b16 %v261, %v260
      %v267 = vunpack.c.l.b16 %v247
      %v268 = vunpack.c.l.b16 %v248
      %v269 = vunpack.c.l.b16 %v249
      %v270 = vunpack.c.l.b16 %v250
      %v271 = vpack.c.b16 %v268, %v267
      %v272 = vpack.c.b16 %v270, %v269
      %vm275 = vcmask 261120
      %v277 = vsel %vm275, %v262, 0
      %279 = vmatprep.subr.bf16.mxu0 0
      %280 = vmatpush1.bf16.msra.mxu0 %v271
      %281 = vmatprep.subr.bf16.mxu0 0
      %282 = vmatpush1.bf16.msra.mxu0 %v272
      %283 = vmatprep.subr.bf16.mxu0 0
      %284 = vmatpush1.bf16.msra.mxu0 0
      %285 = vmatprep.subr.bf16.mxu0 0
      %286 = vmatpush1.bf16.msra.mxu0 0
      %287 = vmatprep.subr.bf16.mxu0 0
      %288 = vmatpush1.bf16.msra.mxu0 0
      %289 = vmatprep.subr.bf16.mxu0 0
      %290 = vmatpush1.bf16.msra.mxu0 0
      %291 = vmatprep.subr.bf16.mxu0 0
      %292 = vmatpush1.bf16.msra.mxu0 0
      %293 = vmatprep.subr.bf16.mxu0 0
      %294 = vmatpush1.bf16.msra.mxu0 0
      %295 = vmatprep.subr.bf16.mxu0 0
      %296 = vmatpush1.bf16.msra.mxu0 0
      %297 = vmatprep.subr.bf16.mxu0 0
      %298 = vmatpush1.bf16.msra.mxu0 0
      %299 = vmatprep.subr.bf16.mxu0 0
      %300 = vmatpush1.bf16.msra.mxu0 0
      %301 = vmatprep.subr.bf16.mxu0 0
      %302 = vmatpush1.bf16.msra.mxu0 0
      %303 = vmatprep.subr.bf16.mxu0 0
      %304 = vmatpush1.bf16.msra.mxu0 0
      %305 = vmatprep.subr.bf16.mxu0 0
      %306 = vmatpush1.bf16.msra.mxu0 0
      %307 = vmatprep.subr.bf16.mxu0 0
      %308 = vmatpush1.bf16.msra.mxu0 0
      %309 = vmatprep.subr.bf16.mxu0 0
      %310 = vmatpush1.bf16.msra.mxu0 0
      %311 = vmatprep.mubr.bf16.mxu0 0
      %312 = vmatmul.mubr.bf16.gmra.mrb[0].mxu0 %v277
      %v313 = vpop.f32.mrb[0].mxu0
      %v314 = vadd.f32 %v256, %v313
      %v315 = vpop.f32.mrb[0].mxu0
      %v316 = vpop.f32.mrb[0].mxu0
      %v317 = vadd.f32 %v256, %v316
      %v318 = vpop.f32.mrb[0].mxu0
      %319 = vdwg.mxu0
      %v320 = vpack.c.bf16 %v317, %v314
      %v322 = vunpack.c.l.b16 %v320
      %v323 = vunpack.c.h.b16 %v320
      %v324 = vpack.c.b16 %v322, %v322
      %v325 = vpack.c.b16 %v323, %v323
      %vm328 = vcmask 125952
      %329 = vst.msk [vmem:[%s242] sm:$0xf] %vm328, %v324
      %330 = vst.msk [vmem:[%s242 + $0x4] sm:$0xf] %vm328, %v325
      %s331 = smul.u32 2, %s19
      %p332 = scmp.lt.s32.totalorder %s18, 1
      %s333 = scalar_select %p332, %s18, 1
      %p334 = scmp.lt.s32.totalorder %s331, 1
      %s335 = scalar_select %p334, %s331, 1
      %s336 = smul.addr %s333, 2
      %s337 = sadd.s32 %s335, %s336
      %s338 = smul.addr %s337, 4
      %s339 = scalar_lea.vmem %s3, %s338
      // Predicated region
      $region33: #{_lambda_.42} parent=31 // pred_check
        %p340 = pneg %p126
      $region34: #{_lambda_.42} parent=31 // pred_check_branch
        %342 = sbr.rel (%p340) target = $region36
      $region35: #{_lambda_.42} parent=31 // pred_region
        %s343 = smul.u32 2, %s19
      $region36: #{_lambda_.42} parent=31 // pred_fallthru
        _
    $region32: #{_lambda_.42} parent=5 // pred_fallthru
      _
    %p344 = scmp.le.s32.totalorder 2, %s9
    // Predicated region
    $region37: #{_lambda_.42} parent=5 // pred_check
      %p345 = pneg %p344
    $region38: #{_lambda_.42} parent=5 // pred_check_branch
      %347 = sbr.rel (%p345) target = $region40
    $region39: #{_lambda_.42} parent=5 // pred_region
      %s348 = ssub.s32 %s9, 2
      // Predicated region
      $region41: #{_lambda_.42} parent=39 // pred_check
        %p349 = pneg %p132
      $region42: #{_lambda_.42} parent=39 // pred_check_branch
        %351 = sbr.rel (%p349) target = $region44
      $region43: #{_lambda_.42} parent=39 // pred_region
        %s352 = smul.u32 2, %s21
        %p353 = scmp.lt.s32.totalorder %s20, 1
        %s354 = scalar_select %p353, %s20, 1
        %p355 = scmp.lt.s32.totalorder %s352, 1
        %s356 = scalar_select %p355, %s352, 1
        %s357 = smul.addr %s354, 2
        %s358 = sadd.s32 %s356, %s357
        %s359 = smul.addr %s358, 4
        %s360 = scalar_lea.vmem %s3, %s359
      $region44: #{_lambda_.42} parent=39 // pred_fallthru
        _
    $region40: #{_lambda_.42} parent=5 // pred_fallthru
      _
  $region6: #{_lambda_.42} parent=0 // loop_footer
    %s13 = sadd.s32 1, %s9
  $region7: #{_lambda_.42} parent=0 // loop_footer_branch
    %8 = sbr.rel target = $region3
  $region8: #{_lambda_.42} parent=0 // loop_exit
    _

// kernel: _lambda_.40
$region0: #{_lambda_.40}
  #allocation0 [shape = 'u32[]', space=smem, size = 0x4, offset = 0x4, fixed_abs, tag = 'smem constant byte address 0x4 - core index']
  #allocation1 [shape = 'u32[144,128]{1,0:T(1,128)}', space=vmem, size = 0x12000, scoped, tag = 'internal scratch']
  %s0 = inlined_call_operand.vmem [shape: bf16[16,32], index: 0, kind: input, shape index: {}]
  %s1 = inlined_call_operand.vmem [shape: bf16[32,32], index: 1, kind: input, shape index: {}]
  %s2 = inlined_call_operand.vmem [shape: f32[1,32], index: 2, kind: input, shape index: {}]
  %s3 = inlined_call_operand.vmem [shape: bf16[16,32], index: 3, kind: output, shape index: {}]
  %s4 = sld [smem:[#allocation0]]
  $region22: #{_lambda_.40} parent=0
    _
  %s6 = ssub.s32 1, %s4
  %s7 = scalar_select 0, %s6, %s4
  // Predicated region
  $region2: #{_lambda_.40} parent=0 // pred_check
    _
  $region3: #{_lambda_.40} parent=0 // pred_check_branch
    %9 = sbr.rel (0) target = $region5
  $region4: #{_lambda_.40} parent=0 // pred_region
    _
  $region5: #{_lambda_.40} parent=0 // pred_fallthru
    _
  // Predicated region
  $region6: #{_lambda_.40} parent=0 // pred_check
    _
  $region7: #{_lambda_.40} parent=0 // pred_check_branch
    %11 = sbr.rel (0) target = $region9
  $region8: #{_lambda_.40} parent=0 // pred_region
    _
  $region9: #{_lambda_.40} parent=0 // pred_fallthru
    _
  // Predicated region
  $region10: #{_lambda_.40} parent=0 // pred_check
    _
  $region11: #{_lambda_.40} parent=0 // pred_check_branch
    %13 = sbr.rel (0) target = $region13
  $region12: #{_lambda_.40} parent=0 // pred_region
    _
  $region13: #{_lambda_.40} parent=0 // pred_fallthru
    _
  %v15 = vld [vmem:[%s0] sm:$0xf]
  %v16 = vld [vmem:[%s0 + $0x4] sm:$0xf]
  %v17 = vld [vmem:[%s1] sm:$0xf]
  %v18 = vld [vmem:[%s1 + $0x4] sm:$0xf]
  %v19 = vld [vmem:[%s1 + $0x8] sm:$0xf]
  %v20 = vld [vmem:[%s1 + $0xc] sm:$0xf]
  %v21 = vld [vmem:[%s2] sm:$0x1]
  %v23 = vlaneseq
  %v24 = vshrl.u32 %v23, 7
  %v25 = vsub.s32 0, %v24
  %v26 = vrot.slane %v21, %v25
  %v30 = vunpack.c.l.b16 %v15
  %v31 = vunpack.c.l.b16 %v16
  %v32 = vpack.c.b16 %v31, %v30
  %v37 = vunpack.c.l.b16 %v17
  %v38 = vunpack.c.l.b16 %v18
  %v39 = vunpack.c.l.b16 %v19
  %v40 = vunpack.c.l.b16 %v20
  %v41 = vpack.c.b16 %v38, %v37
  %v42 = vpack.c.b16 %v40, %v39
  %vm45 = vcmask 261120
  %v47 = vsel %vm45, %v32, 0
  %49 = vmatprep.subr.bf16.mxu0 0
  %50 = vmatpush1.bf16.msra.mxu0 %v41
  %51 = vmatprep.subr.bf16.mxu0 0
  %52 = vmatpush1.bf16.msra.mxu0 %v42
  %53 = vmatprep.subr.bf16.mxu0 0
  %54 = vmatpush1.bf16.msra.mxu0 0
  %55 = vmatprep.subr.bf16.mxu0 0
  %56 = vmatpush1.bf16.msra.mxu0 0
  %57 = vmatprep.subr.bf16.mxu0 0
  %58 = vmatpush1.bf16.msra.mxu0 0
  %59 = vmatprep.subr.bf16.mxu0 0
  %60 = vmatpush1.bf16.msra.mxu0 0
  %61 = vmatprep.subr.bf16.mxu0 0
  %62 = vmatpush1.bf16.msra.mxu0 0
  %63 = vmatprep.subr.bf16.mxu0 0
  %64 = vmatpush1.bf16.msra.mxu0 0
  %65 = vmatprep.subr.bf16.mxu0 0
  %66 = vmatpush1.bf16.msra.mxu0 0
  %67 = vmatprep.subr.bf16.mxu0 0
  %68 = vmatpush1.bf16.msra.mxu0 0
  %69 = vmatprep.subr.bf16.mxu0 0
  %70 = vmatpush1.bf16.msra.mxu0 0
  %71 = vmatprep.subr.bf16.mxu0 0
  %72 = vmatpush1.bf16.msra.mxu0 0
  %73 = vmatprep.subr.bf16.mxu0 0
  %74 = vmatpush1.bf16.msra.mxu0 0
  %75 = vmatprep.subr.bf16.mxu0 0
  %76 = vmatpush1.bf16.msra.mxu0 0
  %77 = vmatprep.subr.bf16.mxu0 0
  %78 = vmatpush1.bf16.msra.mxu0 0
  %79 = vmatprep.subr.bf16.mxu0 0
  %80 = vmatpush1.bf16.msra.mxu0 0
  %81 = vmatprep.mubr.bf16.mxu0 0
  %82 = vmatmul.mubr.bf16.gmra.mrb[0].mxu0 %v47
  %v83 = vpop.f32.mrb[0].mxu0
  %v84 = vadd.f32 %v26, %v83
  %v85 = vpop.f32.mrb[0].mxu0
  %v86 = vpop.f32.mrb[0].mxu0
  %v87 = vadd.f32 %v26, %v86
  %v88 = vpop.f32.mrb[0].mxu0
  %89 = vdwg.mxu0
  %v90 = vpack.c.bf16 %v87, %v84
  %v92 = vunpack.c.l.b16 %v90
  %v93 = vunpack.c.h.b16 %v90
  %v94 = vpack.c.b16 %v92, %v92
  %v95 = vpack.c.b16 %v93, %v93
  %vm98 = vcmask 257024
  %99 = vst.msk [vmem:[%s3] sm:$0xf] %vm98, %v94
  %100 = vst.msk [vmem:[%s3 + $0x4] sm:$0xf] %vm98, %v95
  // Predicated region
  $region14: #{_lambda_.40} parent=0 // pred_check
    _
  $region15: #{_lambda_.40} parent=0 // pred_check_branch
    %102 = sbr.rel (0) target = $region17
  $region16: #{_lambda_.40} parent=0 // pred_region
    _
  $region17: #{_lambda_.40} parent=0 // pred_fallthru
    _
  // Predicated region
  $region18: #{_lambda_.40} parent=0 // pred_check
    _
  $region19: #{_lambda_.40} parent=0 // pred_check_branch
    %104 = sbr.rel (0) target = $region21
  $region20: #{_lambda_.40} parent=0 // pred_region
    _
  $region21: #{_lambda_.40} parent=0 // pred_fallthru
    _

// kernel: _lambda_.39
$region0: #{_lambda_.39}
  #allocation0 [shape = 'u32[]', space=smem, size = 0x4, offset = 0x4, fixed_abs, tag = 'smem constant byte address 0x4 - core index']
  #allocation1 [shape = 'u32[144,128]{1,0:T(1,128)}', space=vmem, size = 0x12000, scoped, tag = 'internal scratch']
  %s0 = inlined_call_operand.vmem [shape: bf16[2,16,16], index: 0, kind: input, shape index: {}]
  %s1 = inlined_call_operand.vmem [shape: bf16[2,16,16], index: 1, kind: input, shape index: {}]
  %s2 = inlined_call_operand.vmem [shape: f32[2,1,16], index: 2, kind: input, shape index: {}]
  %s3 = inlined_call_operand.vmem [shape: bf16[2,16,16], index: 3, kind: output, shape index: {}]
  %s4 = sld [smem:[#allocation0]]
  $region45: #{_lambda_.39} parent=0
    _
  %s6 = ssub.s32 1, %s4
  %s7 = scalar_select 0, %s6, %s4
  loop: start=0, step=1, limit=4
  $region2: #{_lambda_.39} parent=0 // loop_pre_header
    _
  $region3: #{_lambda_.39} parent=0 // loop_header
    %s9 = sphi 0, %s13
    %p10 = scmp.ge.s32.totalorder %s9, 4
    %s16 = sphi 0, %s28
    %s17 = sphi 0, %s24
    %s18 = sphi 0, %s16
    %s19 = sphi 0, %s17
    %s20 = sphi 0, %s18
    %s21 = sphi 0, %s19
    %s33 = sphi 0, %s35
    %s36 = sphi 0, %s33
    %s37 = sphi 0, %s36
    %s53 = sphi 0, %s37
    %s59 = sphi 0, %s61
    %s62 = sphi 0, %s59
    %s63 = sphi 0, %s62
    %s79 = sphi 0, %s63
    %s85 = sphi 0, %s87
    %s88 = sphi 0, %s85
    %s89 = sphi 0, %s88
    %s105 = sphi 0, %s89
    %s113 = sphi 0, %s115
    %s116 = sphi 0, %s113
    %s117 = sphi 0, %s116
    %s133 = sphi 0, %s117
  $region4: #{_lambda_.39} parent=0 // loop_header_branch
    %12 = sbr.rel (%p10) target = $region8
  $region5: #{_lambda_.39} parent=0 // loop_body
    %s14 = ssub.s32 %s9, 1
    %s15 = ssub.s32 %s9, 2
    %s22 = sadd.s32 1, %s17
    %p23 = scmp.ge.s32.totalorder %s22, 1
    %s24 = scalar_select %p23, 0, %s22
    %s25 = sadd.s32 1, %s16
    %s26 = scalar_select %p23, %s25, %s16
    %p27 = scmp.ge.s32.totalorder %s26, 2
    %s28 = scalar_select %p27, 0, %s26
    %s29 = ssub.s32 %s16, %s28
    %s30 = ssub.s32 %s17, %s24
    %s31 = sor.u32 %s29, %s30
    %p32 = scmp.eq.s32.totalorder %s31, 0
    %s34 = sadd.s32 %s33, 1
    %s35 = scalar_select %p32, %s33, %s34
    %p38 = pneg %p32
    %p39 = scmp.eq.s32.totalorder %s9, 1
    %p40 = por %p38, %p39
    %p41 = scmp.ne.s32.totalorder %s33, %s36
    %p42 = scmp.eq.s32.totalorder %s9, 0
    %p43 = por %p41, %p42
    %p44 = scmp.ne.s32.totalorder %s33, %s36
    %p45 = scmp.eq.s32.totalorder %s14, 1
    %p46 = por %p44, %p45
    %p47 = scmp.ne.s32.totalorder %s36, %s37
    %p48 = scmp.eq.s32.totalorder %s14, 0
    %p49 = por %p47, %p48
    %p50 = scmp.ne.s32.totalorder %s36, %s37
    %p51 = scmp.eq.s32.totalorder %s15, 1
    %p52 = por %p50, %p51
    %p54 = scmp.ne.s32.totalorder %s37, %s53
    %p55 = scmp.eq.s32.totalorder %s15, 0
    %p56 = por %p54, %p55
    %s57 = ssub.s32 %s16, %s28
    %p58 = scmp.eq.s32.totalorder %s57, 0
    %s60 = sadd.s32 %s59, 1
    %s61 = scalar_select %p58, %s59, %s60
    %p64 = pneg %p58
    %p65 = scmp.eq.s32.totalorder %s9, 1
    %p66 = por %p64, %p65
    %p67 = scmp.ne.s32.totalorder %s59, %s62
    %p68 = scmp.eq.s32.totalorder %s9, 0
    %p69 = por %p67, %p68
    %p70 = scmp.ne.s32.totalorder %s59, %s62
    %p71 = scmp.eq.s32.totalorder %s14, 1
    %p72 = por %p70, %p71
    %p73 = scmp.ne.s32.totalorder %s62, %s63
    %p74 = scmp.eq.s32.totalorder %s14, 0
    %p75 = por %p73, %p74
    %p76 = scmp.ne.s32.totalorder %s62, %s63
    %p77 = scmp.eq.s32.totalorder %s15, 1
    %p78 = por %p76, %p77
    %p80 = scmp.ne.s32.totalorder %s63, %s79
    %p81 = scmp.eq.s32.totalorder %s15, 0
    %p82 = por %p80, %p81
    %s83 = ssub.s32 %s16, %s28
    %p84 = scmp.eq.s32.totalorder %s83, 0
    %s86 = sadd.s32 %s85, 1
    %s87 = scalar_select %p84, %s85, %s86
    %p90 = pneg %p84
    %p91 = scmp.eq.s32.totalorder %s9, 1
    %p92 = por %p90, %p91
    %p93 = scmp.ne.s32.totalorder %s85, %s88
    %p94 = scmp.eq.s32.totalorder %s9, 0
    %p95 = por %p93, %p94
    %p96 = scmp.ne.s32.totalorder %s85, %s88
    %p97 = scmp.eq.s32.totalorder %s14, 1
    %p98 = por %p96, %p97
    %p99 = scmp.ne.s32.totalorder %s88, %s89
    %p100 = scmp.eq.s32.totalorder %s14, 0
    %p101 = por %p99, %p100
    %p102 = scmp.ne.s32.totalorder %s88, %s89
    %p103 = scmp.eq.s32.totalorder %s15, 1
    %p104 = por %p102, %p103
    %p106 = scmp.ne.s32.totalorder %s89, %s105
    %p107 = scmp.eq.s32.totalorder %s15, 0
    %p108 = por %p106, %p107
    %s109 = ssub.s32 %s16, %s28
    %s110 = ssub.s32 %s17, %s24
    %s111 = sor.u32 %s109, %s110
    %p112 = scmp.eq.s32.totalorder %s111, 0
    %s114 = sadd.s32 %s113, 1
    %s115 = scalar_select %p112, %s113, %s114
    %p118 = pneg %p112
    %p119 = scmp.eq.s32.totalorder %s9, 1
    %p120 = por %p118, %p119
    %p121 = scmp.ne.s32.totalorder %s113, %s116
    %p122 = scmp.eq.s32.totalorder %s9, 0
    %p123 = por %p121, %p122
    %p124 = scmp.ne.s32.totalorder %s113, %s116
    %p125 = scmp.eq.s32.totalorder %s14, 1
    %p126 = por %p124, %p125
    %p127 = scmp.ne.s32.totalorder %s116, %s117
    %p128 = scmp.eq.s32.totalorder %s14, 0
    %p129 = por %p127, %p128
    %p130 = scmp.ne.s32.totalorder %s116, %s117
    %p131 = scmp.eq.s32.totalorder %s15, 1
    %p132 = por %p130, %p131
    %p134 = scmp.ne.s32.totalorder %s117, %s133
    %p135 = scmp.eq.s32.totalorder %s15, 0
    %p136 = por %p134, %p135
    %p137 = scmp.le.s32.totalorder 1, %s9
    %p138 = scmp.lt.s32.totalorder %s9, 3
    %p139 = pnand %p137, %p138
    %p140 = pneg %p139
    // Predicated region
    $region9: #{_lambda_.39} parent=5 // pred_check
      _
    $region10: #{_lambda_.39} parent=5 // pred_check_branch
      %142 = sbr.rel (%p139) target = $region12
    $region11: #{_lambda_.39} parent=5 // pred_region
      %s143 = ssub.s32 %s9, 1
    $region12: #{_lambda_.39} parent=5 // pred_fallthru
      _
    %p144 = scmp.lt.s32.totalorder %s9, 2
    // Predicated region
    $region13: #{_lambda_.39} parent=5 // pred_check
      %p145 = pneg %p144
    $region14: #{_lambda_.39} parent=5 // pred_check_branch
      %147 = sbr.rel (%p145) target = $region16
    $region15: #{_lambda_.39} parent=5 // pred_region
      // Predicated region
      $region17: #{_lambda_.39} parent=15 // pred_check
        %p148 = pneg %p43
      $region18: #{_lambda_.39} parent=15 // pred_check_branch
        %150 = sbr.rel (%p148) target = $region20
      $region19: #{_lambda_.39} parent=15 // pred_region
        %s151 = smul.u32 2, %s17
        %p152 = scmp.lt.s32.totalorder %s16, 1
        %s153 = scalar_select %p152, %s16, 1
        %p154 = scmp.lt.s32.totalorder %s151, 1
        %s155 = scalar_select %p154, %s151, 1
        %s156 = smul.addr %s153, 2
        %s157 = sadd.s32 %s155, %s156
        %s158 = smul.addr %s157, 4
        %s159 = scalar_lea.vmem %s0, %s158
        %s160 = smul.u32 2, %s17
      $region20: #{_lambda_.39} parent=15 // pred_fallthru
        _
      // Predicated region
      $region21: #{_lambda_.39} parent=15 // pred_check
        %p161 = pneg %p69
      $region22: #{_lambda_.39} parent=15 // pred_check_branch
        %163 = sbr.rel (%p161) target = $region24
      $region23: #{_lambda_.39} parent=15 // pred_region
        %p164 = scmp.lt.s32.totalorder %s16, 1
        %s165 = scalar_select %p164, %s16, 1
        %s166 = smul.addr %s165, 2
        %s167 = smul.addr %s166, 4
        %s168 = scalar_lea.vmem %s1, %s167
      $region24: #{_lambda_.39} parent=15 // pred_fallthru
        _
      // Predicated region
      $region25: #{_lambda_.39} parent=15 // pred_check
        %p169 = pneg %p95
      $region26: #{_lambda_.39} parent=15 // pred_check_branch
        %171 = sbr.rel (%p169) target = $region28
      $region27: #{_lambda_.39} parent=15 // pred_region
        %p172 = scmp.lt.s32.totalorder %s16, 1
        %s173 = scalar_select %p172, %s16, 1
        %s174 = scalar_lea.vmem %s2, %s173
      $region28: #{_lambda_.39} parent=15 // pred_fallthru
        _
    $region16: #{_lambda_.39} parent=5 // pred_fallthru
      _
    %p175 = scmp.le.s32.totalorder 1, %s9
    %p176 = scmp.lt.s32.totalorder %s9, 3
    %p177 = pnand %p175, %p176
    %p178 = pneg %p177
    // Predicated region
    $region29: #{_lambda_.39} parent=5 // pred_check
      _
    $region30: #{_lambda_.39} parent=5 // pred_check_branch
      %180 = sbr.rel (%p177) target = $region32
    $region31: #{_lambda_.39} parent=5 // pred_region
      %s181 = ssub.s32 %s9, 1
      %s182 = smul.u32 2, %s19
      %p183 = scmp.lt.s32.totalorder %s18, 1
      %s184 = scalar_select %p183, %s18, 1
      %p185 = scmp.lt.s32.totalorder %s182, 1
      %s186 = scalar_select %p185, %s182, 1
      %s187 = smul.addr %s184, 2
      %s188 = sadd.s32 %s186, %s187
      %s189 = smul.addr %s188, 4
      %s190 = scalar_lea.vmem %s0, %s189
      %p191 = pneg %p49
      %p192 = pneg %p46
      %p193 = scmp.lt.s32.totalorder %s18, 1
      %s194 = scalar_select %p193, %s18, 1
      %s195 = smul.addr %s194, 2
      %s196 = smul.addr %s195, 4
      %s197 = scalar_lea.vmem %s1, %s196
      %p198 = pneg %p75
      %p199 = pneg %p72
      %p200 = scmp.lt.s32.totalorder %s18, 1
      %s201 = scalar_select %p200, %s18, 1
      %s202 = scalar_lea.vmem %s2, %s201
      %p203 = pneg %p101
      %p204 = pneg %p98
      %p205 = pneg %p129
      %p206 = pneg %p126
      %s207 = smul.u32 2, %s19
      %p208 = scmp.lt.s32.totalorder %s18, 1
      %s209 = scalar_select %p208, %s18, 1
      %p210 = scmp.lt.s32.totalorder %s207, 1
      %s211 = scalar_select %p210, %s207, 1
      %s212 = smul.addr %s209, 2
      %s213 = sadd.s32 %s211, %s212
      %s214 = smul.addr %s213, 4
      %s215 = scalar_lea.vmem %s3, %s214
      %s216 = smul.u32 2, %s19
      %p217 = scmp.lt.s32.totalorder %s18, 1
      %s218 = scalar_select %p217, %s18, 1
      %p219 = scmp.lt.s32.totalorder %s216, 1
      %s220 = scalar_select %p219, %s216, 1
      %s221 = smul.addr %s218, 2
      %s222 = sadd.s32 %s220, %s221
      %s223 = smul.addr %s222, 4
      %s224 = scalar_lea.vmem %s0, %s223
      %s225 = smul.u32 2, %s19
      %p226 = scmp.lt.s32.totalorder %s18, 1
      %s227 = scalar_select %p226, %s18, 1
      %s228 = smul.addr %s227, 2
      %s229 = smul.addr %s228, 4
      %s230 = scalar_lea.vmem %s1, %s229
      %p231 = scmp.lt.s32.totalorder %s18, 1
      %s232 = scalar_select %p231, %s18, 1
      %s233 = scalar_lea.vmem %s2, %s232
      %s234 = smul.u32 2, %s19
      %p235 = scmp.lt.s32.totalorder %s18, 1
      %s236 = scalar_select %p235, %s18, 1
      %p237 = scmp.lt.s32.totalorder %s234, 1
      %s238 = scalar_select %p237, %s234, 1
      %s239 = smul.addr %s236, 2
      %s240 = sadd.s32 %s238, %s239
      %s241 = smul.addr %s240, 4
      %s242 = scalar_lea.vmem %s3, %s241
      %s243 = smul.u32 2, %s19
      %v245 = vld [vmem:[%s224] sm:$0xf]
      %v246 = vld [vmem:[%s224 + $0x4] sm:$0xf]
      %v247 = vld [vmem:[%s230] sm:$0xf]
      %v248 = vld [vmem:[%s230 + $0x4] sm:$0xf]
      %v249 = vld [vmem:[%s233] sm:$0x1]
      %v251 = vlaneseq
      %v252 = vshrl.u32 %v251, 7
      %v253 = vsub.s32 0, %v252
      %v254 = vrot.slane %v249, %v253
      %v258 = vunpack.c.l.b16 %v245
      %v259 = vunpack.c.l.b16 %v246
      %v260 = vpack.c.b16 %v259, %v258
      %v263 = vunpack.c.l.b16 %v247
      %v264 = vunpack.c.l.b16 %v248
      %v265 = vpack.c.b16 %v264, %v263
      %vm267 = vcmask 130048
      %v269 = vsel %vm267, %v260, 0
      %271 = vmatprep.subr.bf16.mxu0 0
      %272 = vmatpush1.bf16.msra.mxu0 %v265
      %273 = vmatprep.subr.bf16.mxu0 0
      %274 = vmatpush1.bf16.msra.mxu0 0
      %275 = vmatprep.subr.bf16.mxu0 0
      %276 = vmatpush1.bf16.msra.mxu0 0
      %277 = vmatprep.subr.bf16.mxu0 0
      %278 = vmatpush1.bf16.msra.mxu0 0
      %279 = vmatprep.subr.bf16.mxu0 0
      %280 = vmatpush1.bf16.msra.mxu0 0
      %281 = vmatprep.subr.bf16.mxu0 0
      %282 = vmatpush1.bf16.msra.mxu0 0
      %283 = vmatprep.subr.bf16.mxu0 0
      %284 = vmatpush1.bf16.msra.mxu0 0
      %285 = vmatprep.subr.bf16.mxu0 0
      %286 = vmatpush1.bf16.msra.mxu0 0
      %287 = vmatprep.subr.bf16.mxu0 0
      %288 = vmatpush1.bf16.msra.mxu0 0
      %289 = vmatprep.subr.bf16.mxu0 0
      %290 = vmatpush1.bf16.msra.mxu0 0
      %291 = vmatprep.subr.bf16.mxu0 0
      %292 = vmatpush1.bf16.msra.mxu0 0
      %293 = vmatprep.subr.bf16.mxu0 0
      %294 = vmatpush1.bf16.msra.mxu0 0
      %295 = vmatprep.subr.bf16.mxu0 0
      %296 = vmatpush1.bf16.msra.mxu0 0
      %297 = vmatprep.subr.bf16.mxu0 0
      %298 = vmatpush1.bf16.msra.mxu0 0
      %299 = vmatprep.subr.bf16.mxu0 0
      %300 = vmatpush1.bf16.msra.mxu0 0
      %301 = vmatprep.subr.bf16.mxu0 0
      %302 = vmatpush1.bf16.msra.mxu0 0
      %303 = vmatprep.mubr.bf16.mxu0 0
      %304 = vmatmul.mubr.bf16.gmra.mrb[0].mxu0 %v269
      %v305 = vpop.f32.mrb[0].mxu0
      %v306 = vadd.f32 %v254, %v305
      %v307 = vpop.f32.mrb[0].mxu0
      %v308 = vpop.f32.mrb[0].mxu0
      %v309 = vadd.f32 %v254, %v308
      %v310 = vpop.f32.mrb[0].mxu0
      %311 = vdwg.mxu0
      %v312 = vpack.c.bf16 %v309, %v306
      %v314 = vunpack.c.l.b16 %v312
      %v315 = vunpack.c.h.b16 %v312
      %v316 = vpack.c.b16 %v314, %v314
      %v317 = vpack.c.b16 %v315, %v315
      %vm320 = vcmask 125952
      %321 = vst.msk [vmem:[%s242] sm:$0xf] %vm320, %v316
      %322 = vst.msk [vmem:[%s242 + $0x4] sm:$0xf] %vm320, %v317
      %s323 = smul.u32 2, %s19
      %p324 = scmp.lt.s32.totalorder %s18, 1
      %s325 = scalar_select %p324, %s18, 1
      %p326 = scmp.lt.s32.totalorder %s323, 1
      %s327 = scalar_select %p326, %s323, 1
      %s328 = smul.addr %s325, 2
      %s329 = sadd.s32 %s327, %s328
      %s330 = smul.addr %s329, 4
      %s331 = scalar_lea.vmem %s3, %s330
      // Predicated region
      $region33: #{_lambda_.39} parent=31 // pred_check
        %p332 = pneg %p126
      $region34: #{_lambda_.39} parent=31 // pred_check_branch
        %334 = sbr.rel (%p332) target = $region36
      $region35: #{_lambda_.39} parent=31 // pred_region
        %s335 = smul.u32 2, %s19
      $region36: #{_lambda_.39} parent=31 // pred_fallthru
        _
    $region32: #{_lambda_.39} parent=5 // pred_fallthru
      _
    %p336 = scmp.le.s32.totalorder 2, %s9
    // Predicated region
    $region37: #{_lambda_.39} parent=5 // pred_check
      %p337 = pneg %p336
    $region38: #{_lambda_.39} parent=5 // pred_check_branch
      %339 = sbr.rel (%p337) target = $region40
    $region39: #{_lambda_.39} parent=5 // pred_region
      %s340 = ssub.s32 %s9, 2
      // Predicated region
      $region41: #{_lambda_.39} parent=39 // pred_check
        %p341 = pneg %p132
      $region42: #{_lambda_.39} parent=39 // pred_check_branch
        %343 = sbr.rel (%p341) target = $region44
      $region43: #{_lambda_.39} parent=39 // pred_region
        %s344 = smul.u32 2, %s21
        %p345 = scmp.lt.s32.totalorder %s20, 1
        %s346 = scalar_select %p345, %s20, 1
        %p347 = scmp.lt.s32.totalorder %s344, 1
        %s348 = scalar_select %p347, %s344, 1
        %s349 = smul.addr %s346, 2
        %s350 = sadd.s32 %s348, %s349
        %s351 = smul.addr %s350, 4
        %s352 = scalar_lea.vmem %s3, %s351
      $region44: #{_lambda_.39} parent=39 // pred_fallthru
        _
    $region40: #{_lambda_.39} parent=5 // pred_fallthru
      _
  $region6: #{_lambda_.39} parent=0 // loop_footer
    %s13 = sadd.s32 1, %s9
  $region7: #{_lambda_.39} parent=0 // loop_footer_branch
    %8 = sbr.rel target = $region3
  $region8: #{_lambda_.39} parent=0 // loop_exit
    _

// kernel: _lambda_.41
$region0: #{_lambda_.41}
  #allocation0 [shape = 'u32[]', space=smem, size = 0x4, offset = 0x4, fixed_abs, tag = 'smem constant byte address 0x4 - core index']
  #allocation1 [shape = 'u32[144,128]{1,0:T(1,128)}', space=vmem, size = 0x12000, scoped, tag = 'internal scratch']
  %s0 = inlined_call_operand.vmem [shape: bf16[9,16,32], index: 0, kind: input, shape index: {}]
  %s1 = inlined_call_operand.vmem [shape: f32[1,32], index: 1, kind: input, shape index: {}]
  %s2 = inlined_call_operand.vmem [shape: f32[1,32], index: 2, kind: input, shape index: {}]
  %s3 = inlined_call_operand.vmem [shape: bf16[16,32], index: 3, kind: output, shape index: {}]
  %s4 = sld [smem:[#allocation0]]
  $region22: #{_lambda_.41} parent=0
    _
  %s6 = ssub.s32 1, %s4
  %s7 = scalar_select 0, %s6, %s4
  // Predicated region
  $region2: #{_lambda_.41} parent=0 // pred_check
    _
  $region3: #{_lambda_.41} parent=0 // pred_check_branch
    %9 = sbr.rel (0) target = $region5
  $region4: #{_lambda_.41} parent=0 // pred_region
    _
  $region5: #{_lambda_.41} parent=0 // pred_fallthru
    _
  // Predicated region
  $region6: #{_lambda_.41} parent=0 // pred_check
    _
  $region7: #{_lambda_.41} parent=0 // pred_check_branch
    %11 = sbr.rel (0) target = $region9
  $region8: #{_lambda_.41} parent=0 // pred_region
    _
  $region9: #{_lambda_.41} parent=0 // pred_fallthru
    _
  // Predicated region
  $region10: #{_lambda_.41} parent=0 // pred_check
    _
  $region11: #{_lambda_.41} parent=0 // pred_check_branch
    %13 = sbr.rel (0) target = $region13
  $region12: #{_lambda_.41} parent=0 // pred_region
    _
  $region13: #{_lambda_.41} parent=0 // pred_fallthru
    _
  %v14 = vld [vmem:[%s0] sm:$0xf]
  %v15 = vld [vmem:[%s0 + $0x4] sm:$0xf]
  %s16 = scalar_lea.vmem %s0, 8
  %v17 = vld [vmem:[%s16] sm:$0xf]
  %v18 = vld [vmem:[%s16 + $0x4] sm:$0xf]
  %v19 = vmax.bf16 %v14, %v17
  %v20 = vmax.bf16 %v15, %v18
  %s21 = scalar_lea.vmem %s0, 16
  %v22 = vld [vmem:[%s21] sm:$0xf]
  %v23 = vld [vmem:[%s21 + $0x4] sm:$0xf]
  %v24 = vmax.bf16 %v19, %v22
  %v25 = vmax.bf16 %v20, %v23
  %s26 = scalar_lea.vmem %s0, 24
  %v27 = vld [vmem:[%s26] sm:$0xf]
  %v28 = vld [vmem:[%s26 + $0x4] sm:$0xf]
  %v29 = vmax.bf16 %v24, %v27
  %v30 = vmax.bf16 %v25, %v28
  %s31 = scalar_lea.vmem %s0, 32
  %v32 = vld [vmem:[%s31] sm:$0xf]
  %v33 = vld [vmem:[%s31 + $0x4] sm:$0xf]
  %v34 = vmax.bf16 %v29, %v32
  %v35 = vmax.bf16 %v30, %v33
  %s36 = scalar_lea.vmem %s0, 40
  %v37 = vld [vmem:[%s36] sm:$0xf]
  %v38 = vld [vmem:[%s36 + $0x4] sm:$0xf]
  %v39 = vmax.bf16 %v34, %v37
  %v40 = vmax.bf16 %v35, %v38
  %s41 = scalar_lea.vmem %s0, 48
  %v42 = vld [vmem:[%s41] sm:$0xf]
  %v43 = vld [vmem:[%s41 + $0x4] sm:$0xf]
  %v44 = vmax.bf16 %v39, %v42
  %v45 = vmax.bf16 %v40, %v43
  %s46 = scalar_lea.vmem %s0, 56
  %v47 = vld [vmem:[%s46] sm:$0xf]
  %v48 = vld [vmem:[%s46 + $0x4] sm:$0xf]
  %v49 = vmax.bf16 %v44, %v47
  %v50 = vmax.bf16 %v45, %v48
  %s51 = scalar_lea.vmem %s0, 64
  %v52 = vld [vmem:[%s51] sm:$0xf]
  %v53 = vld [vmem:[%s51 + $0x4] sm:$0xf]
  %v54 = vmax.bf16 %v49, %v52
  %v55 = vmax.bf16 %v50, %v53
  %v56 = vunpack.c.l.bf16 %v54
  %v57 = vunpack.c.l.bf16 %v55
  %v58 = vld [vmem:[%s1] sm:$0x1]
  %v60 = vlaneseq
  %v61 = vshrl.u32 %v60, 7
  %v62 = vsub.s32 0, %v61
  %v63 = vrot.slane %v58, %v62
  %v65 = vmul.f32 %v56, %v63
  %v66 = vmul.f32 %v57, %v63
  %v67 = vld [vmem:[%s2] sm:$0x1]
  %v69 = vlaneseq
  %v70 = vshrl.u32 %v69, 7
  %v71 = vsub.s32 0, %v70
  %v72 = vrot.slane %v67, %v71
  %v74 = vadd.f32 %v65, %v72
  %v75 = vadd.f32 %v66, %v72
  %v76 = vpack.c.bf16 %v75, %v74
  %v78 = vunpack.c.l.b16 %v76
  %v79 = vunpack.c.h.b16 %v76
  %v80 = vpack.c.b16 %v78, %v78
  %v81 = vpack.c.b16 %v79, %v79
  %vm84 = vcmask 257024
  %85 = vst.msk [vmem:[%s3] sm:$0xf] %vm84, %v80
  %86 = vst.msk [vmem:[%s3 + $0x4] sm:$0xf] %vm84, %v81
  // Predicated region
  $region14: #{_lambda_.41} parent=0 // pred_check
    _
  $region15: #{_lambda_.41} parent=0 // pred_check_branch
    %88 = sbr.rel (0) target = $region17
  $region16: #{_lambda_.41} parent=0 // pred_region
    _
  $region17: #{_lambda_.41} parent=0 // pred_fallthru
    _
  // Predicated region
  $region18: #{_lambda_.41} parent=0 // pred_check
    _
  $region19: #{_lambda_.41} parent=0 // pred_check_branch
    %90 = sbr.rel (0) target = $region21
  $region20: #{_lambda_.41} parent=0 // pred_region
    _
  $region21: #{_lambda_.41} parent=0 // pred_fallthru
    _

// kernel: _lambda_.43
$region0: #{_lambda_.43}
  #allocation0 [shape = 'u32[]', space=smem, size = 0x4, offset = 0x4, fixed_abs, tag = 'smem constant byte address 0x4 - core index']
  #allocation1 [shape = 'u32[144,128]{1,0:T(1,128)}', space=vmem, size = 0x12000, scoped, tag = 'internal scratch']
  %s0 = inlined_call_operand.vmem [shape: bf16[9,16,32], index: 0, kind: input, shape index: {}]
  %s1 = inlined_call_operand.vmem [shape: f32[16,1], index: 1, kind: input, shape index: {}]
  %s2 = inlined_call_operand.vmem [shape: f32[1,32], index: 2, kind: input, shape index: {}]
  %s3 = inlined_call_operand.vmem [shape: f32[1,32], index: 3, kind: input, shape index: {}]
  %s4 = inlined_call_operand.vmem [shape: bf16[16,32], index: 4, kind: output, shape index: {}]
  %s5 = sld [smem:[#allocation0]]
  $region26: #{_lambda_.43} parent=0
    _
  %s7 = ssub.s32 1, %s5
  %s8 = scalar_select 0, %s7, %s5
  // Predicated region
  $region2: #{_lambda_.43} parent=0 // pred_check
    _
  $region3: #{_lambda_.43} parent=0 // pred_check_branch
    %10 = sbr.rel (0) target = $region5
  $region4: #{_lambda_.43} parent=0 // pred_region
    _
  $region5: #{_lambda_.43} parent=0 // pred_fallthru
    _
  // Predicated region
  $region6: #{_lambda_.43} parent=0 // pred_check
    _
  $region7: #{_lambda_.43} parent=0 // pred_check_branch
    %12 = sbr.rel (0) target = $region9
  $region8: #{_lambda_.43} parent=0 // pred_region
    _
  $region9: #{_lambda_.43} parent=0 // pred_fallthru
    _
  // Predicated region
  $region10: #{_lambda_.43} parent=0 // pred_check
    _
  $region11: #{_lambda_.43} parent=0 // pred_check_branch
    %14 = sbr.rel (0) target = $region13
  $region12: #{_lambda_.43} parent=0 // pred_region
    _
  $region13: #{_lambda_.43} parent=0 // pred_fallthru
    _
  // Predicated region
  $region14: #{_lambda_.43} parent=0 // pred_check
    _
  $region15: #{_lambda_.43} parent=0 // pred_check_branch
    %16 = sbr.rel (0) target = $region17
  $region16: #{_lambda_.43} parent=0 // pred_region
    _
  $region17: #{_lambda_.43} parent=0 // pred_fallthru
    _
  %v17 = vld [vmem:[%s0] sm:$0xf]
  %v18 = vld [vmem:[%s0 + $0x4] sm:$0xf]
  %v19 = vunpack.c.l.bf16 %v17
  %v20 = vunpack.c.l.bf16 %v18
  %s21 = scalar_lea.vmem %s0, 8
  %v22 = vld [vmem:[%s21] sm:$0xf]
  %v23 = vld [vmem:[%s21 + $0x4] sm:$0xf]
  %v24 = vunpack.c.l.bf16 %v22
  %v25 = vunpack.c.l.bf16 %v23
  %v26 = vadd.f32 %v19, %v24
  %v27 = vadd.f32 %v20, %v25
  %s28 = scalar_lea.vmem %s0, 16
  %v29 = vld [vmem:[%s28] sm:$0xf]
  %v30 = vld [vmem:[%s28 + $0x4] sm:$0xf]
  %v31 = vunpack.c.l.bf16 %v29
  %v32 = vunpack.c.l.bf16 %v30
  %v33 = vadd.f32 %v26, %v31
  %v34 = vadd.f32 %v27, %v32
  %s35 = scalar_lea.vmem %s0, 24
  %v36 = vld [vmem:[%s35] sm:$0xf]
  %v37 = vld [vmem:[%s35 + $0x4] sm:$0xf]
  %v38 = vunpack.c.l.bf16 %v36
  %v39 = vunpack.c.l.bf16 %v37
  %v40 = vadd.f32 %v33, %v38
  %v41 = vadd.f32 %v34, %v39
  %s42 = scalar_lea.vmem %s0, 32
  %v43 = vld [vmem:[%s42] sm:$0xf]
  %v44 = vld [vmem:[%s42 + $0x4] sm:$0xf]
  %v45 = vunpack.c.l.bf16 %v43
  %v46 = vunpack.c.l.bf16 %v44
  %v47 = vadd.f32 %v40, %v45
  %v48 = vadd.f32 %v41, %v46
  %s49 = scalar_lea.vmem %s0, 40
  %v50 = vld [vmem:[%s49] sm:$0xf]
  %v51 = vld [vmem:[%s49 + $0x4] sm:$0xf]
  %v52 = vunpack.c.l.bf16 %v50
  %v53 = vunpack.c.l.bf16 %v51
  %v54 = vadd.f32 %v47, %v52
  %v55 = vadd.f32 %v48, %v53
  %s56 = scalar_lea.vmem %s0, 48
  %v57 = vld [vmem:[%s56] sm:$0xf]
  %v58 = vld [vmem:[%s56 + $0x4] sm:$0xf]
  %v59 = vunpack.c.l.bf16 %v57
  %v60 = vunpack.c.l.bf16 %v58
  %v61 = vadd.f32 %v54, %v59
  %v62 = vadd.f32 %v55, %v60
  %s63 = scalar_lea.vmem %s0, 56
  %v64 = vld [vmem:[%s63] sm:$0xf]
  %v65 = vld [vmem:[%s63 + $0x4] sm:$0xf]
  %v66 = vunpack.c.l.bf16 %v64
  %v67 = vunpack.c.l.bf16 %v65
  %v68 = vadd.f32 %v61, %v66
  %v69 = vadd.f32 %v62, %v67
  %s70 = scalar_lea.vmem %s0, 64
  %v71 = vld [vmem:[%s70] sm:$0xf]
  %v72 = vld [vmem:[%s70 + $0x4] sm:$0xf]
  %v73 = vunpack.c.l.bf16 %v71
  %v74 = vunpack.c.l.bf16 %v72
  %v75 = vadd.f32 %v68, %v73
  %v76 = vadd.f32 %v69, %v74
  %v77 = vld [vmem:[%s1] sm:$0xff]
  %v78 = vld [vmem:[%s1 + $0x8] sm:$0xff]
  %80 = vset.pattern.permute.xlu0 0
  %81 = vperm.xlu0 %80, %v77
  %v82 = vpop.permute.xlu0 %81
  %85 = vset.pattern.permute.xlu0 0
  %86 = vperm.xlu0 %85, %v78
  %v87 = vpop.permute.xlu0 %86
  %v89 = vmul.f32 %v75, %v82
  %v90 = vmul.f32 %v76, %v87
  %v91 = vld [vmem:[%s2] sm:$0x1]
  %v93 = vlaneseq
  %v94 = vshrl.u32 %v93, 7
  %v95 = vsub.s32 0, %v94
  %v96 = vrot.slane %v91, %v95
  %v98 = vmul.f32 %v89, %v96
  %v99 = vmul.f32 %v90, %v96
  %v100 = vld [vmem:[%s3] sm:$0x1]
  %v102 = vlaneseq
  %v103 = vshrl.u32 %v102, 7
  %v104 = vsub.s32 0, %v103
  %v105 = vrot.slane %v100, %v104
  %v107 = vadd.f32 %v98, %v105
  %v108 = vadd.f32 %v99, %v105
  %v109 = vpack.c.bf16 %v108, %v107
  %v111 = vunpack.c.l.b16 %v109
  %v112 = vunpack.c.h.b16 %v109
  %v113 = vpack.c.b16 %v111, %v111
  %v114 = vpack.c.b16 %v112, %v112
  %vm117 = vcmask 257024
  %118 = vst.msk [vmem:[%s4] sm:$0xf] %vm117, %v113
  %119 = vst.msk [vmem:[%s4 + $0x4] sm:$0xf] %vm117, %v114
  // Predicated region
  $region18: #{_lambda_.43} parent=0 // pred_check
    _
  $region19: #{_lambda_.43} parent=0 // pred_check_branch
    %121 = sbr.rel (0) target = $region21
  $region20: #{_lambda_.43} parent=0 // pred_region
    _
  $region21: #{_lambda_.43} parent=0 // pred_fallthru
    _
  // Predicated region
  $region22: #{_lambda_.43} parent=0 // pred_check
    _
  $region23: #{_lambda_.43} parent=0 // pred_check_branch
    %123 = sbr.rel (0) target = $region25
  $region24: #{_lambda_.43} parent=0 // pred_region
    _
  $region25: #{_lambda_.43} parent=0 // pred_fallthru
    _

// kernel: _lambda_.44
$region0: #{_lambda_.44}
  #allocation0 [shape = 'u32[]', space=smem, size = 0x4, offset = 0x4, fixed_abs, tag = 'smem constant byte address 0x4 - core index']
  #allocation1 [shape = 'u32[144,128]{1,0:T(1,128)}', space=vmem, size = 0x12000, scoped, tag = 'internal scratch']
  %s0 = inlined_call_operand.vmem [shape: bf16[16,288], index: 0, kind: input, shape index: {}]
  %s1 = inlined_call_operand.vmem [shape: bf16[288,32], index: 1, kind: input, shape index: {}]
  %s2 = inlined_call_operand.vmem [shape: f32[1,32], index: 2, kind: input, shape index: {}]
  %s3 = inlined_call_operand.vmem [shape: bf16[16,32], index: 3, kind: output, shape index: {}]
  %s4 = sld [smem:[#allocation0]]
  $region22: #{_lambda_.44} parent=0
    _
  %s6 = ssub.s32 1, %s4
  %s7 = scalar_select 0, %s6, %s4
  // Predicated region
  $region2: #{_lambda_.44} parent=0 // pred_check
    _
  $region3: #{_lambda_.44} parent=0 // pred_check_branch
    %9 = sbr.rel (0) target = $region5
  $region4: #{_lambda_.44} parent=0 // pred_region
    _
  $region5: #{_lambda_.44} parent=0 // pred_fallthru
    _
  // Predicated region
  $region6: #{_lambda_.44} parent=0 // pred_check
    _
  $region7: #{_lambda_.44} parent=0 // pred_check_branch
    %11 = sbr.rel (0) target = $region9
  $region8: #{_lambda_.44} parent=0 // pred_region
    _
  $region9: #{_lambda_.44} parent=0 // pred_fallthru
    _
  // Predicated region
  $region10: #{_lambda_.44} parent=0 // pred_check
    _
  $region11: #{_lambda_.44} parent=0 // pred_check_branch
    %13 = sbr.rel (0) target = $region13
  $region12: #{_lambda_.44} parent=0 // pred_region
    _
  $region13: #{_lambda_.44} parent=0 // pred_fallthru
    _
  %v15 = vld [vmem:[%s0] sm:$0xff]
  %v16 = vld [vmem:[%s0 + $0x8] sm:$0xf]
  %v17 = vld [vmem:[%s0 + $0xc] sm:$0xff]
  %v18 = vld [vmem:[%s0 + $0x14] sm:$0xf]
  %v19 = vld [vmem:[%s1] sm:$0xf]
  %v20 = vld [vmem:[%s1 + $0x4] sm:$0xf]
  %v21 = vld [vmem:[%s1 + $0x8] sm:$0xf]
  %v22 = vld [vmem:[%s1 + $0xc] sm:$0xf]
  %v23 = vld [vmem:[%s1 + $0x10] sm:$0xf]
  %v24 = vld [vmem:[%s1 + $0x14] sm:$0xf]
  %v25 = vld [vmem:[%s1 + $0x18] sm:$0xf]
  %v26 = vld [vmem:[%s1 + $0x1c] sm:$0xf]
  %v27 = vld [vmem:[%s1 + $0x20] sm:$0xf]
  %v28 = vld [vmem:[%s1 + $0x24] sm:$0xf]
  %v29 = vld [vmem:[%s1 + $0x28] sm:$0xf]
  %v30 = vld [vmem:[%s1 + $0x2c] sm:$0xf]
  %v31 = vld [vmem:[%s1 + $0x30] sm:$0xf]
  %v32 = vld [vmem:[%s1 + $0x34] sm:$0xf]
  %v33 = vld [vmem:[%s1 + $0x38] sm:$0xf]
  %v34 = vld [vmem:[%s1 + $0x3c] sm:$0xf]
  %v35 = vld [vmem:[%s1 + $0x40] sm:$0xf]
  %v36 = vld [vmem:[%s1 + $0x44] sm:$0xf]
  %v37 = vld [vmem:[%s1 + $0x48] sm:$0xf]
  %v38 = vld [vmem:[%s1 + $0x4c] sm:$0xf]
  %v39 = vld [vmem:[%s1 + $0x50] sm:$0xf]
  %v40 = vld [vmem:[%s1 + $0x54] sm:$0xf]
  %v41 = vld [vmem:[%s1 + $0x58] sm:$0xf]
  %v42 = vld [vmem:[%s1 + $0x5c] sm:$0xf]
  %v43 = vld [vmem:[%s1 + $0x60] sm:$0xf]
  %v44 = vld [vmem:[%s1 + $0x64] sm:$0xf]
  %v45 = vld [vmem:[%s1 + $0x68] sm:$0xf]
  %v46 = vld [vmem:[%s1 + $0x6c] sm:$0xf]
  %v47 = vld [vmem:[%s1 + $0x70] sm:$0xf]
  %v48 = vld [vmem:[%s1 + $0x74] sm:$0xf]
  %v49 = vld [vmem:[%s1 + $0x78] sm:$0xf]
  %v50 = vld [vmem:[%s1 + $0x7c] sm:$0xf]
  %v51 = vld [vmem:[%s1 + $0x80] sm:$0xf]
  %v52 = vld [vmem:[%s1 + $0x84] sm:$0xf]
  %v53 = vld [vmem:[%s1 + $0x88] sm:$0xf]
  %v54 = vld [vmem:[%s1 + $0x8c] sm:$0xf]
  %v55 = vld [vmem:[%s2] sm:$0x1]
  %v57 = vlaneseq
  %v58 = vshrl.u32 %v57, 7
  %v59 = vsub.s32 0, %v58
  %v60 = vrot.slane %v55, %v59
  %v66 = vunpack.c.l.b16 %v15
  %v67 = vunpack.c.h.b16 %v15
  %v68 = vunpack.c.l.b16 %v16
  %v69 = vunpack.c.l.b16 %v17
  %v70 = vunpack.c.h.b16 %v17
  %v71 = vunpack.c.l.b16 %v18
  %v72 = vpack.c.b16 %v69, %v66
  %v73 = vpack.c.b16 %v70, %v67
  %v74 = vpack.c.b16 %v71, %v68
  %v113 = vunpack.c.l.b16 %v19
  %v114 = vunpack.c.l.b16 %v20
  %v115 = vunpack.c.l.b16 %v21
  %v116 = vunpack.c.l.b16 %v22
  %v117 = vunpack.c.l.b16 %v23
  %v118 = vunpack.c.l.b16 %v24
  %v119 = vunpack.c.l.b16 %v25
  %v120 = vunpack.c.l.b16 %v26
  %v121 = vunpack.c.l.b16 %v27
  %v122 = vunpack.c.l.b16 %v28
  %v123 = vunpack.c.l.b16 %v29
  %v124 = vunpack.c.l.b16 %v30
  %v125 = vunpack.c.l.b16 %v31
  %v126 = vunpack.c.l.b16 %v32
  %v127 = vunpack.c.l.b16 %v33
  %v128 = vunpack.c.l.b16 %v34
  %v129 = vunpack.c.l.b16 %v35
  %v130 = vunpack.c.l.b16 %v36
  %v131 = vunpack.c.l.b16 %v37
  %v132 = vunpack.c.l.b16 %v38
  %v133 = vunpack.c.l.b16 %v39
  %v134 = vunpack.c.l.b16 %v40
  %v135 = vunpack.c.l.b16 %v41
  %v136 = vunpack.c.l.b16 %v42
  %v137 = vunpack.c.l.b16 %v43
  %v138 = vunpack.c.l.b16 %v44
  %v139 = vunpack.c.l.b16 %v45
  %v140 = vunpack.c.l.b16 %v46
  %v141 = vunpack.c.l.b16 %v47
  %v142 = vunpack.c.l.b16 %v48
  %v143 = vunpack.c.l.b16 %v49
  %v144 = vunpack.c.l.b16 %v50
  %v145 = vunpack.c.l.b16 %v51
  %v146 = vunpack.c.l.b16 %v52
  %v147 = vunpack.c.l.b16 %v53
  %v148 = vunpack.c.l.b16 %v54
  %v149 = vpack.c.b16 %v114, %v113
  %v150 = vpack.c.b16 %v116, %v115
  %v151 = vpack.c.b16 %v118, %v117
  %v152 = vpack.c.b16 %v120, %v119
  %v153 = vpack.c.b16 %v122, %v121
  %v154 = vpack.c.b16 %v124, %v123
  %v155 = vpack.c.b16 %v126, %v125
  %v156 = vpack.c.b16 %v128, %v127
  %v157 = vpack.c.b16 %v130, %v129
  %v158 = vpack.c.b16 %v132, %v131
  %v159 = vpack.c.b16 %v134, %v133
  %v160 = vpack.c.b16 %v136, %v135
  %v161 = vpack.c.b16 %v138, %v137
  %v162 = vpack.c.b16 %v140, %v139
  %v163 = vpack.c.b16 %v142, %v141
  %v164 = vpack.c.b16 %v144, %v143
  %v165 = vpack.c.b16 %v146, %v145
  %v166 = vpack.c.b16 %v148, %v147
  %vm185 = vcmask 261120
  %v187 = vsel %vm185, %v74, 0
  %189 = vmatprep.subr.bf16.mxu0 0
  %190 = vmatpush1.bf16.msra.mxu0 %v149
  %191 = vmatprep.subr.bf16.mxu0 0
  %192 = vmatpush1.bf16.msra.mxu0 %v150
  %193 = vmatprep.subr.bf16.mxu0 0
  %194 = vmatpush1.bf16.msra.mxu0 %v151
  %195 = vmatprep.subr.bf16.mxu0 0
  %196 = vmatpush1.bf16.msra.mxu0 %v152
  %197 = vmatprep.subr.bf16.mxu0 0
  %198 = vmatpush1.bf16.msra.mxu0 %v153
  %199 = vmatprep.subr.bf16.mxu0 0
  %200 = vmatpush1.bf16.msra.mxu0 %v154
  %201 = vmatprep.subr.bf16.mxu0 0
  %202 = vmatpush1.bf16.msra.mxu0 %v155
  %203 = vmatprep.subr.bf16.mxu0 0
  %204 = vmatpush1.bf16.msra.mxu0 %v156
  %205 = vmatprep.subr.bf16.mxu0 0
  %206 = vmatpush1.bf16.msra.mxu0 %v157
  %207 = vmatprep.subr.bf16.mxu0 0
  %208 = vmatpush1.bf16.msra.mxu0 %v158
  %209 = vmatprep.subr.bf16.mxu0 0
  %210 = vmatpush1.bf16.msra.mxu0 %v159
  %211 = vmatprep.subr.bf16.mxu0 0
  %212 = vmatpush1.bf16.msra.mxu0 %v160
  %213 = vmatprep.subr.bf16.mxu0 0
  %214 = vmatpush1.bf16.msra.mxu0 %v161
  %215 = vmatprep.subr.bf16.mxu0 0
  %216 = vmatpush1.bf16.msra.mxu0 %v162
  %217 = vmatprep.subr.bf16.mxu0 0
  %218 = vmatpush1.bf16.msra.mxu0 %v163
  %219 = vmatprep.subr.bf16.mxu0 0
  %220 = vmatpush1.bf16.msra.mxu0 %v164
  %221 = vmatprep.mubr.bf16.mxu0 %v73
  %222 = vmatmul.mubr.bf16.gmra.mrb[0].mxu0 %v72
  %v223 = vpop.f32.mrb[0].mxu0
  %v224 = vadd.f32 %v60, %v223
  %v225 = vpop.f32.mrb[0].mxu0
  %v226 = vpop.f32.mrb[0].mxu0
  %v227 = vadd.f32 %v60, %v226
  %v228 = vpop.f32.mrb[0].mxu0
  %229 = vdwg.mxu0
  %230 = vmatprep.subr.bf16.mxu0 0
  %231 = vmatpush1.bf16.msra.mxu0 %v165
  %232 = vmatprep.subr.bf16.mxu0 0
  %233 = vmatpush1.bf16.msra.mxu0 %v166
  %234 = vmatprep.subr.bf16.mxu0 0
  %235 = vmatpush1.bf16.msra.mxu0 0
  %236 = vmatprep.subr.bf16.mxu0 0
  %237 = vmatpush1.bf16.msra.mxu0 0
  %238 = vmatprep.subr.bf16.mxu0 0
  %239 = vmatpush1.bf16.msra.mxu0 0
  %240 = vmatprep.subr.bf16.mxu0 0
  %241 = vmatpush1.bf16.msra.mxu0 0
  %242 = vmatprep.subr.bf16.mxu0 0
  %243 = vmatpush1.bf16.msra.mxu0 0
  %244 = vmatprep.subr.bf16.mxu0 0
  %245 = vmatpush1.bf16.msra.mxu0 0
  %246 = vmatprep.subr.bf16.mxu0 0
  %247 = vmatpush1.bf16.msra.mxu0 0
  %248 = vmatprep.subr.bf16.mxu0 0
  %249 = vmatpush1.bf16.msra.mxu0 0
  %250 = vmatprep.subr.bf16.mxu0 0
  %251 = vmatpush1.bf16.msra.mxu0 0
  %252 = vmatprep.subr.bf16.mxu0 0
  %253 = vmatpush1.bf16.msra.mxu0 0
  %254 = vmatprep.subr.bf16.mxu0 0
  %255 = vmatpush1.bf16.msra.mxu0 0
  %256 = vmatprep.subr.bf16.mxu0 0
  %257 = vmatpush1.bf16.msra.mxu0 0
  %258 = vmatprep.subr.bf16.mxu0 0
  %259 = vmatpush1.bf16.msra.mxu0 0
  %260 = vmatprep.subr.bf16.mxu0 0
  %261 = vmatpush1.bf16.msra.mxu0 0
  %262 = vmatprep.mubr.bf16.mxu0 0
  %263 = vmatmul.mubr.bf16.gmra.mrb[0].mxu0 %v187
  %v264 = vpop.f32.mrb[0].mxu0
  %v265 = vadd.f32 %v224, %v264
  %v266 = vpop.f32.mrb[0].mxu0
  %v267 = vpop.f32.mrb[0].mxu0
  %v268 = vadd.f32 %v227, %v267
  %v269 = vpop.f32.mrb[0].mxu0
  %270 = vdwg.mxu0
  %v271 = vpack.c.bf16 %v268, %v265
  %v273 = vunpack.c.l.b16 %v271
  %v274 = vunpack.c.h.b16 %v271
  %v275 = vpack.c.b16 %v273, %v273
  %v276 = vpack.c.b16 %v274, %v274
  %vm279 = vcmask 257024
  %280 = vst.msk [vmem:[%s3] sm:$0xf] %vm279, %v275
  %281 = vst.msk [vmem:[%s3 + $0x4] sm:$0xf] %vm279, %v276
  // Predicated region
  $region14: #{_lambda_.44} parent=0 // pred_check
    _
  $region15: #{_lambda_.44} parent=0 // pred_check_branch
    %283 = sbr.rel (0) target = $region17
  $region16: #{_lambda_.44} parent=0 // pred_region
    _
  $region17: #{_lambda_.44} parent=0 // pred_fallthru
    _
  // Predicated region
  $region18: #{_lambda_.44} parent=0 // pred_check
    _
  $region19: #{_lambda_.44} parent=0 // pred_check_branch
    %285 = sbr.rel (0) target = $region21
  $region20: #{_lambda_.44} parent=0 // pred_region
    _
  $region21: #{_lambda_.44} parent=0 // pred_fallthru
    _

</llo_original>
